<compile_context>
chip_gen: v6e
topology: v6e:2x2x1
jax: 0.10.0
libtpu: 0.0.40
codegen_flags: <defaults>
</compile_context>

<pallas_src>
import functools

import jax
import jax.numpy as jnp
from jax import lax
from jax.experimental import pallas as pl
from jax.experimental.pallas import tpu as pltpu

EPS = 1e-5
LANE = 128
VMEM_LIMIT = 48 * 1024 * 1024  # leaves headroom on v7x (64 MiB physical VMEM)


# ----------------------------- Pallas kernels ------------------------------ #

def _conv_kernel(*args, fuse_bn: bool, th: int, H: int, W: int, T: int):
    """3x3 SAME conv over one (batch, row-tile) block + per-step BN statistics.

    Refs (in order: inputs, outputs, scratch):
      xwin_ref : (1, th+2, W+2, Cin)  haloed input tile (f32 if fuse_bn else bf16)
      w_ref    : (3, 3, Cin, Cout)    conv weight (bf16)
      b_ref    : (1, Cout)            conv bias (f32)
      scale_ref, shift_ref : (1, 1, Cin)  folded BN1 affine (fuse_bn only)
      y_ref    : (1, th, W, Cout)     conv output (f32)
      stats_ref: (1, 2, Cout)         [sum, sum-of-squares] over this tile
      xact_ref : (th+2, W+2, Cin)     bf16 activated/copied input tile (scratch)
    """
    if fuse_bn:
        (xwin_ref, w_ref, b_ref, scale_ref, shift_ref,
         y_ref, stats_ref, xact_ref) = args
    else:
        xwin_ref, w_ref, b_ref, y_ref, stats_ref, xact_ref = args

    xwin = xwin_ref[0]                                   # (th+2, W+2, Cin)
    if fuse_bn:
        # Fused BN1 + ReLU on the input tile (folded scale/shift, applied once).
        act = jnp.maximum(xwin * scale_ref[...] + shift_ref[...], 0.0)
        # The halo holds spatial zero-padding of the *pre-BN* activation; after
        # BN+ReLU those pixels must be exactly 0 again -> mask them out.
        t = pl.program_id(0) % T
        r = lax.broadcasted_iota(jnp.int32, (th + 2, W + 2, 1), 0) + t * th
        c = lax.broadcasted_iota(jnp.int32, (th + 2, W + 2, 1), 1)
        valid = (r >= 1) & (r <= H) & (c >= 1) & (c <= W)
        act = jnp.where(valid, act, 0.0)
        xact_ref[...] = act.astype(jnp.bfloat16)
    else:
        xact_ref[...] = xwin.astype(jnp.bfloat16)

    cin = xact_ref.shape[-1]
    cout = y_ref.shape[-1]

    # 3x3 conv = 9 shifted bf16 matmuls, f32 accumulation on the MXU.
    acc = jnp.zeros((th * W, cout), jnp.float32)
    for dh in range(3):
        for dw in range(3):
            patch = xact_ref[dh:dh + th, dw:dw + W, :].reshape(th * W, cin)
            acc = acc + jnp.dot(patch, w_ref[dh, dw],
                                preferred_element_type=jnp.float32)
    acc = acc + b_ref[...]

    y_ref[0] = acc.reshape(th, W, cout)

    # Per-grid-step partial BN statistics (final tiny reduction in plain JAX).
    stats_ref[0, 0:1, :] = jnp.sum(acc, axis=0, keepdims=True)
    stats_ref[0, 1:2, :] = jnp.sum(acc * acc, axis=0, keepdims=True)


def _bn_relu_kernel(y_ref, scale_ref, shift_ref, o_ref):
    """Folded BatchNorm affine + ReLU over a lane-dense (tm, C) block."""
    o_ref[...] = jnp.maximum(y_ref[...] * scale_ref[...] + shift_ref[...], 0.0)


# ------------------------------ helpers ------------------------------------ #

def _round_up(x, m):
    return (x + m - 1) // m * m


def _pad_last(a, c):
    p = c - a.shape[-1]
    if p == 0:
        return a
    return jnp.pad(a, [(0, 0)] * (a.ndim - 1) + [(0, p)])


def _pad_weight(w, ci, co):
    return jnp.pad(w, ((0, 0), (0, 0),
                       (0, ci - w.shape[2]), (0, co - w.shape[3])))


def _pad_vec(v, c):
    return jnp.pad(v, (0, c - v.shape[0]))


def _row_windows(x_nhwc, th):
    """(N, H, W, C) -> (N*T, th+2, W+2, C) haloed row windows (SAME padding)."""
    N, H, W, C = x_nhwc.shape
    xp = jnp.pad(x_nhwc, ((0, 0), (1, 1), (1, 1), (0, 0)))
    T = H // th
    wins = [xp[:, t * th:t * th + th + 2] for t in range(T)]
    return jnp.stack(wins, axis=1).reshape(N * T, th + 2, W + 2, C)


def _pick_th(H, W, target_rows=1024):
    """Largest divisor of H keeping ~target_rows output pixels per tile."""
    th = max(1, min(H, target_rows // max(W, 1)))
    while H % th:
        th -= 1
    return th


def _row_tile(rows, cap=2048):
    """Largest multiple-of-8 divisor of `rows` that is <= cap (else rows)."""
    best = rows
    for t in range(8, min(cap, rows) + 1, 8):
        if rows % t == 0:
            best = t
    return best if rows % best == 0 else rows


# ------------------------------ JAX wrappers -------------------------------- #

def _conv3x3(xwin, w, b, *, H, W, th, scale=None, shift=None):
    """One 3x3 SAME conv (+ optional fused input BN+ReLU) + per-tile BN stats."""
    NT = xwin.shape[0]
    Cin_p = xwin.shape[-1]
    Cout_p = w.shape[-1]
    T = H // th
    fuse = scale is not None
    kernel = functools.partial(_conv_kernel, fuse_bn=fuse, th=th, H=H, W=W, T=T)

    in_specs = [
        pl.BlockSpec((1, th + 2, W + 2, Cin_p), lambda i: (i, 0, 0, 0)),
        pl.BlockSpec((3, 3, Cin_p, Cout_p), lambda i: (0, 0, 0, 0)),
        pl.BlockSpec((1, Cout_p), lambda i: (0, 0)),
    ]
    operands = [xwin, w, b]
    if fuse:
        in_specs += [
            pl.BlockSpec((1, 1, Cin_p), lambda i: (0, 0, 0)),
            pl.BlockSpec((1, 1, Cin_p), lambda i: (0, 0, 0)),
        ]
        operands += [scale, shift]

    y, stats = pl.pallas_call(
        kernel,
        out_shape=(
            jax.ShapeDtypeStruct((NT, th, W, Cout_p), jnp.float32),
            jax.ShapeDtypeStruct((NT, 2, Cout_p), jnp.float32),
        ),
        grid_spec=pltpu.PrefetchScalarGridSpec(
            num_scalar_prefetch=0,
            grid=(NT,),
            in_specs=in_specs,
            out_specs=[
                pl.BlockSpec((1, th, W, Cout_p), lambda i: (i, 0, 0, 0)),
                pl.BlockSpec((1, 2, Cout_p), lambda i: (i, 0, 0)),
            ],
            scratch_shapes=[pltpu.VMEM((th + 2, W + 2, Cin_p), jnp.bfloat16)],
        ),
        compiler_params=pltpu.CompilerParams(
            dimension_semantics=("parallel",),   # no cross-step state -> both TCs on v7x
            vmem_limit_bytes=VMEM_LIMIT,
        ),
    )(*operands)
    return y, stats


def _bn_scale_shift(stats, gamma, beta, count):
    """Fold BatchNorm (training mode: batch mean, biased var) into scale/shift."""
    ssum = jnp.sum(stats[:, 0, :], axis=0)
    ssq = jnp.sum(stats[:, 1, :], axis=0)
    mean = ssum / count
    # E[x^2] - E[x]^2 in f32; clamp at 0 to guard against cancellation.
    var = jnp.maximum(ssq / count - mean * mean, 0.0)
    inv = gamma / jnp.sqrt(var + EPS)
    return inv, beta - mean * inv


def _bn_relu(y_flat, scale, shift):
    """Standalone BN + ReLU over a flattened, lane-dense (rows, C) layout."""
    rows, C = y_flat.shape
    tm = _row_tile(rows)
    return pl.pallas_call(
        _bn_relu_kernel,
        out_shape=jax.ShapeDtypeStruct((rows, C), jnp.float32),
        grid_spec=pltpu.PrefetchScalarGridSpec(
            num_scalar_prefetch=0,
            grid=(rows // tm,),
            in_specs=[
                pl.BlockSpec((tm, C), lambda i: (i, 0)),
                pl.BlockSpec((1, C), lambda i: (0, 0)),
                pl.BlockSpec((1, C), lambda i: (0, 0)),
            ],
            out_specs=pl.BlockSpec((tm, C), lambda i: (i, 0)),
        ),
        compiler_params=pltpu.CompilerParams(
            dimension_semantics=("parallel",),
            vmem_limit_bytes=VMEM_LIMIT,
        ),
    )(y_flat, scale.reshape(1, C), shift.reshape(1, C))


def vgg_block_pallas(x_nchw, params, *, th=None):
    """Full VGGBlock forward. Input/output are NCHW to match PyTorch."""
    N, Cin, H, W = x_nchw.shape
    Cmid = params["w1"].shape[-1]
    Cout = params["w2"].shape[-1]
    Ci = _round_up(Cin, LANE)
    Cm = _round_up(Cmid, LANE)
    Co = _round_up(Cout, LANE)
    if th is None:
        th = _pick_th(H, W)
    assert H % th == 0, (H, th)
    count = N * H * W

    # NCHW -> NHWC, zero-pad channels to lane-dense multiples of 128.
    x = _pad_last(jnp.transpose(x_nchw, (0, 2, 3, 1)), Ci)

    w1 = _pad_weight(params["w1"], Ci, Cm).astype(jnp.bfloat16)
    b1 = _pad_vec(params["b1"], Cm).reshape(1, Cm)
    g1 = _pad_vec(params["g1"], Cm)
    be1 = _pad_vec(params["be1"], Cm)
    w2 = _pad_weight(params["w2"], Cm, Co).astype(jnp.bfloat16)
    b2 = _pad_vec(params["b2"], Co).reshape(1, Co)
    g2 = _pad_vec(params["g2"], Co)
    be2 = _pad_vec(params["be2"], Co)

    # ---- layer 1: conv3x3 + per-tile BN stats (BN1+ReLU is fused into conv2).
    xwin = _row_windows(x, th).astype(jnp.bfloat16)       # (N*T, th+2, W+2, Ci)
    y1t, st1 = _conv3x3(xwin, w1, b1, H=H, W=W, th=th)    # (N*T, th, W, Cm)
    sc1, sh1 = _bn_scale_shift(st1, g1, be1, count)
    y1 = y1t.reshape(N, H, W, Cm)                         # (n,t,h',w) == (n,h,w)

    # ---- layer 2: fused (BN1 + ReLU) -> conv3x3 + per-tile BN stats.
    ywin = _row_windows(y1, th)                           # f32; BN1 applied in-kernel
    y2t, st2 = _conv3x3(ywin, w2, b2, H=H, W=W, th=th,
                        scale=sc1.reshape(1, 1, Cm), shift=sh1.reshape(1, 1, Cm))
    sc2, sh2 = _bn_scale_shift(st2, g2, be2, count)

    # ---- final BN2 + ReLU over flattened lane-dense rows.
    out = _bn_relu(y2t.reshape(N * H * W, Co), sc2, sh2)
    out = out.reshape(N, H, W, Co)[..., :Cout]
    # TODO(synk): BatchNorm running_mean/running_var buffer updates (stateful
    # training-side bookkeeping) are not emitted; forward math is unaffected.
    return jnp.transpose(out, (0, 3, 1, 2))               # NHWC -> NCHW


# ------------------------- Pure-JAX reference (check) ----------------------- #

def vgg_block_reference(x_nchw, params):
    def conv(x, w_hwio, b):
        y = lax.conv_general_dilated(
            x, w_hwio, window_strides=(1, 1), padding="SAME",
            dimension_numbers=("NCHW", "HWIO", "NCHW"),
            precision=lax.Precision.HIGHEST)
        return y + b.reshape(1, -1, 1, 1)

    def bn_relu(y, gamma, beta):
        mean = jnp.mean(y, axis=(0, 2, 3), keepdims=True)
        var = jnp.mean((y - mean) ** 2, axis=(0, 2, 3), keepdims=True)
        out = (y - mean) / jnp.sqrt(var + EPS)
        out = out * gamma.reshape(1, -1, 1, 1) + beta.reshape(1, -1, 1, 1)
        return jnp.maximum(out, 0.0)

    y = conv(x_nchw, params["w1"], params["b1"])
    y = bn_relu(y, params["g1"], params["be1"])
    y = conv(y, params["w2"], params["b2"])
    y = bn_relu(y, params["g2"], params["be2"])
    return y


# ---------------------------------- main ------------------------------------ #

if __name__ == "__main__":
    # Small shapes: batch=2, in_channels=4, middle_channels=8, out_channels=4, H=W=16
    N, C_IN, C_MID, C_OUT, H, W = 2, 4, 8, 4, 16, 16

    key = jax.random.PRNGKey(0)
    ks = jax.random.split(key, 9)
    params = {
        # conv weights stored HWIO (kh, kw, cin, cout); torch stores (cout, cin, kh, kw)
        "w1": 0.2 * jax.random.normal(ks[0], (3, 3, C_IN, C_MID), jnp.float32),
        "b1": 0.1 * jax.random.normal(ks[1], (C_MID,), jnp.float32),
        "g1": 1.0 + 0.1 * jax.random.normal(ks[2], (C_MID,), jnp.float32),
        "be1": 0.1 * jax.random.normal(ks[3], (C_MID,), jnp.float32),
        "w2": 0.2 * jax.random.normal(ks[4], (3, 3, C_MID, C_OUT), jnp.float32),
        "b2": 0.1 * jax.random.normal(ks[5], (C_OUT,), jnp.float32),
        "g2": 1.0 + 0.1 * jax.random.normal(ks[6], (C_OUT,), jnp.float32),
        "be2": 0.1 * jax.random.normal(ks[7], (C_OUT,), jnp.float32),
    }
    x = jax.random.normal(ks[8], (N, C_IN, H, W), jnp.float32)   # NCHW, like PyTorch

    fwd = jax.jit(functools.partial(vgg_block_pallas, th=8))     # th=8 -> 2 row tiles
    out = jax.block_until_ready(fwd(x, params))

    ref = jax.block_until_ready(vgg_block_reference(x, params))
    assert out.shape == (N, C_OUT, H, W), out.shape
    # bf16 MXU matmuls vs. the f32 reference -> tolerance at the bf16 level.
    assert jnp.allclose(out, ref, atol=5e-2, rtol=5e-2), float(jnp.abs(out - ref).max())

    print("KERNEL_OK")
</pallas_src>

<mosaic_0001>
module attributes {stable_mosaic.version = 11 : i64} {
  func.func @_conv_kernel(%arg0: i32, %arg1: memref<1x10x18x128xbf16, #tpu.memory_space<vmem>>, %arg2: memref<3x3x128x128xbf16, #tpu.memory_space<vmem>>, %arg3: memref<1x128xf32, #tpu.memory_space<vmem>>, %arg4: memref<1x8x16x128xf32, #tpu.memory_space<vmem>>, %arg5: memref<1x2x128xf32, #tpu.memory_space<vmem>>, %arg6: memref<10x18x128xbf16, #tpu.memory_space<vmem>>) attributes {dimension_semantics = [#tpu.dimension_semantics<parallel>], iteration_bounds = array<i64: 4>, scalar_prefetch = 0 : i64, scratch_operands = 1 : i64, tpu.core_type = #tpu.core_type<tc>, window_params = [{transform_indices = @transform_0, window_bounds = array<i64: 1, 10, 18, 128>}, {pipeline_mode = #tpu.pipeline_mode<synchronous>, transform_indices = @transform_1, window_bounds = array<i64: 3, 3, 128, 128>}, {pipeline_mode = #tpu.pipeline_mode<synchronous>, transform_indices = @transform_2, window_bounds = array<i64: 1, 128>}, {transform_indices = @transform_3, window_bounds = array<i64: 1, 8, 16, 128>}, {transform_indices = @transform_4, window_bounds = array<i64: 1, 2, 128>}]} {
    %c0 = arith.constant 0 : index
    %c0_0 = arith.constant 0 : index
    %c0_1 = arith.constant 0 : index
    %c0_2 = arith.constant 0 : index
    %0 = vector.load %arg1[%c0, %c0_0, %c0_1, %c0_2] : memref<1x10x18x128xbf16, #tpu.memory_space<vmem>>, vector<1x10x18x128xbf16>
    %1 = vector.shape_cast %0 : vector<1x10x18x128xbf16> to vector<10x18x128xbf16>
    %c0_3 = arith.constant 0 : index
    %c0_4 = arith.constant 0 : index
    %c0_5 = arith.constant 0 : index
    %2 = vector.load %arg6[%c0_3, %c0_4, %c0_5] : memref<10x18x128xbf16, #tpu.memory_space<vmem>>, vector<10x18x128xbf16>
    tpu.vector_store %arg6[%c0_3, %c0_4, %c0_5], %1 {strides = array<i32>} : memref<10x18x128xbf16, #tpu.memory_space<vmem>>, vector<10x18x128xbf16>,
    %cst = arith.constant 0.000000e+00 : f32
    %3 = vector.broadcast %cst : f32 to vector<128x128xf32>
    %c0_6 = arith.constant 0 : index
    %c0_7 = arith.constant 0 : index
    %c0_8 = arith.constant 0 : index
    %4 = vector.load %arg6[%c0_6, %c0_7, %c0_8] : memref<10x18x128xbf16, #tpu.memory_space<vmem>>, vector<8x16x128xbf16>
    %5 = vector.shape_cast %4 : vector<8x16x128xbf16> to vector<128x128xbf16>
    %c0_9 = arith.constant 0 : index
    %c0_10 = arith.constant 0 : index
    %c0_11 = arith.constant 0 : index
    %c0_12 = arith.constant 0 : index
    %6 = vector.load %arg2[%c0_9, %c0_10, %c0_11, %c0_12] : memref<3x3x128x128xbf16, #tpu.memory_space<vmem>>, vector<1x1x128x128xbf16>
    %7 = vector.shape_cast %6 : vector<1x1x128x128xbf16> to vector<128x128xbf16>
    %cst_13 = arith.constant dense<0.000000e+00> : vector<128x128xf32>
    %8 = tpu.matmul %5, %7, %cst_13 {dimension_numbers = #tpu.dot_dimension_numbers<[1], [0], [0], [1], [0, 0, 1, 1], [], []>} : vector<128x128xbf16>, vector<128x128xbf16>, vector<128x128xf32> -> vector<128x128xf32>
    %9 = arith.addf %3, %8 : vector<128x128xf32>
    %c0_14 = arith.constant 0 : index
    %c1 = arith.constant 1 : index
    %c0_15 = arith.constant 0 : index
    %10 = vector.load %arg6[%c0_14, %c1, %c0_15] : memref<10x18x128xbf16, #tpu.memory_space<vmem>>, vector<8x16x128xbf16>
    %11 = vector.shape_cast %10 : vector<8x16x128xbf16> to vector<128x128xbf16>
    %c0_16 = arith.constant 0 : index
    %c1_17 = arith.constant 1 : index
    %c0_18 = arith.constant 0 : index
    %c0_19 = arith.constant 0 : index
    %12 = vector.load %arg2[%c0_16, %c1_17, %c0_18, %c0_19] : memref<3x3x128x128xbf16, #tpu.memory_space<vmem>>, vector<1x1x128x128xbf16>
    %13 = vector.shape_cast %12 : vector<1x1x128x128xbf16> to vector<128x128xbf16>
    %cst_20 = arith.constant dense<0.000000e+00> : vector<128x128xf32>
    %14 = tpu.matmul %11, %13, %cst_20 {dimension_numbers = #tpu.dot_dimension_numbers<[1], [0], [0], [1], [0, 0, 1, 1], [], []>} : vector<128x128xbf16>, vector<128x128xbf16>, vector<128x128xf32> -> vector<128x128xf32>
    %15 = arith.addf %9, %14 : vector<128x128xf32>
    %c0_21 = arith.constant 0 : index
    %c2 = arith.constant 2 : index
    %c0_22 = arith.constant 0 : index
    %16 = vector.load %arg6[%c0_21, %c2, %c0_22] : memref<10x18x128xbf16, #tpu.memory_space<vmem>>, vector<8x16x128xbf16>
    %17 = vector.shape_cast %16 : vector<8x16x128xbf16> to vector<128x128xbf16>
    %c0_23 = arith.constant 0 : index
    %c2_24 = arith.constant 2 : index
    %c0_25 = arith.constant 0 : index
    %c0_26 = arith.constant 0 : index
    %18 = vector.load %arg2[%c0_23, %c2_24, %c0_25, %c0_26] : memref<3x3x128x128xbf16, #tpu.memory_space<vmem>>, vector<1x1x128x128xbf16>
    %19 = vector.shape_cast %18 : vector<1x1x128x128xbf16> to vector<128x128xbf16>
    %cst_27 = arith.constant dense<0.000000e+00> : vector<128x128xf32>
    %20 = tpu.matmul %17, %19, %cst_27 {dimension_numbers = #tpu.dot_dimension_numbers<[1], [0], [0], [1], [0, 0, 1, 1], [], []>} : vector<128x128xbf16>, vector<128x128xbf16>, vector<128x128xf32> -> vector<128x128xf32>
    %21 = arith.addf %15, %20 : vector<128x128xf32>
    %c1_28 = arith.constant 1 : index
    %c0_29 = arith.constant 0 : index
    %c0_30 = arith.constant 0 : index
    %22 = vector.load %arg6[%c1_28, %c0_29, %c0_30] : memref<10x18x128xbf16, #tpu.memory_space<vmem>>, vector<8x16x128xbf16>
    %23 = vector.shape_cast %22 : vector<8x16x128xbf16> to vector<128x128xbf16>
    %c1_31 = arith.constant 1 : index
    %c0_32 = arith.constant 0 : index
    %c0_33 = arith.constant 0 : index
    %c0_34 = arith.constant 0 : index
    %24 = vector.load %arg2[%c1_31, %c0_32, %c0_33, %c0_34] : memref<3x3x128x128xbf16, #tpu.memory_space<vmem>>, vector<1x1x128x128xbf16>
    %25 = vector.shape_cast %24 : vector<1x1x128x128xbf16> to vector<128x128xbf16>
    %cst_35 = arith.constant dense<0.000000e+00> : vector<128x128xf32>
    %26 = tpu.matmul %23, %25, %cst_35 {dimension_numbers = #tpu.dot_dimension_numbers<[1], [0], [0], [1], [0, 0, 1, 1], [], []>} : vector<128x128xbf16>, vector<128x128xbf16>, vector<128x128xf32> -> vector<128x128xf32>
    %27 = arith.addf %21, %26 : vector<128x128xf32>
    %c1_36 = arith.constant 1 : index
    %c1_37 = arith.constant 1 : index
    %c0_38 = arith.constant 0 : index
    %28 = vector.load %arg6[%c1_36, %c1_37, %c0_38] : memref<10x18x128xbf16, #tpu.memory_space<vmem>>, vector<8x16x128xbf16>
    %29 = vector.shape_cast %28 : vector<8x16x128xbf16> to vector<128x128xbf16>
    %c1_39 = arith.constant 1 : index
    %c1_40 = arith.constant 1 : index
    %c0_41 = arith.constant 0 : index
    %c0_42 = arith.constant 0 : index
    %30 = vector.load %arg2[%c1_39, %c1_40, %c0_41, %c0_42] : memref<3x3x128x128xbf16, #tpu.memory_space<vmem>>, vector<1x1x128x128xbf16>
    %31 = vector.shape_cast %30 : vector<1x1x128x128xbf16> to vector<128x128xbf16>
    %cst_43 = arith.constant dense<0.000000e+00> : vector<128x128xf32>
    %32 = tpu.matmul %29, %31, %cst_43 {dimension_numbers = #tpu.dot_dimension_numbers<[1], [0], [0], [1], [0, 0, 1, 1], [], []>} : vector<128x128xbf16>, vector<128x128xbf16>, vector<128x128xf32> -> vector<128x128xf32>
    %33 = arith.addf %27, %32 : vector<128x128xf32>
    %c1_44 = arith.constant 1 : index
    %c2_45 = arith.constant 2 : index
    %c0_46 = arith.constant 0 : index
    %34 = vector.load %arg6[%c1_44, %c2_45, %c0_46] : memref<10x18x128xbf16, #tpu.memory_space<vmem>>, vector<8x16x128xbf16>
    %35 = vector.shape_cast %34 : vector<8x16x128xbf16> to vector<128x128xbf16>
    %c1_47 = arith.constant 1 : index
    %c2_48 = arith.constant 2 : index
    %c0_49 = arith.constant 0 : index
    %c0_50 = arith.constant 0 : index
    %36 = vector.load %arg2[%c1_47, %c2_48, %c0_49, %c0_50] : memref<3x3x128x128xbf16, #tpu.memory_space<vmem>>, vector<1x1x128x128xbf16>
    %37 = vector.shape_cast %36 : vector<1x1x128x128xbf16> to vector<128x128xbf16>
    %cst_51 = arith.constant dense<0.000000e+00> : vector<128x128xf32>
    %38 = tpu.matmul %35, %37, %cst_51 {dimension_numbers = #tpu.dot_dimension_numbers<[1], [0], [0], [1], [0, 0, 1, 1], [], []>} : vector<128x128xbf16>, vector<128x128xbf16>, vector<128x128xf32> -> vector<128x128xf32>
    %39 = arith.addf %33, %38 : vector<128x128xf32>
    %c2_52 = arith.constant 2 : index
    %c0_53 = arith.constant 0 : index
    %c0_54 = arith.constant 0 : index
    %40 = vector.load %arg6[%c2_52, %c0_53, %c0_54] : memref<10x18x128xbf16, #tpu.memory_space<vmem>>, vector<8x16x128xbf16>
    %41 = vector.shape_cast %40 : vector<8x16x128xbf16> to vector<128x128xbf16>
    %c2_55 = arith.constant 2 : index
    %c0_56 = arith.constant 0 : index
    %c0_57 = arith.constant 0 : index
    %c0_58 = arith.constant 0 : index
    %42 = vector.load %arg2[%c2_55, %c0_56, %c0_57, %c0_58] : memref<3x3x128x128xbf16, #tpu.memory_space<vmem>>, vector<1x1x128x128xbf16>
    %43 = vector.shape_cast %42 : vector<1x1x128x128xbf16> to vector<128x128xbf16>
    %cst_59 = arith.constant dense<0.000000e+00> : vector<128x128xf32>
    %44 = tpu.matmul %41, %43, %cst_59 {dimension_numbers = #tpu.dot_dimension_numbers<[1], [0], [0], [1], [0, 0, 1, 1], [], []>} : vector<128x128xbf16>, vector<128x128xbf16>, vector<128x128xf32> -> vector<128x128xf32>
    %45 = arith.addf %39, %44 : vector<128x128xf32>
    %c2_60 = arith.constant 2 : index
    %c1_61 = arith.constant 1 : index
    %c0_62 = arith.constant 0 : index
    %46 = vector.load %arg6[%c2_60, %c1_61, %c0_62] : memref<10x18x128xbf16, #tpu.memory_space<vmem>>, vector<8x16x128xbf16>
    %47 = vector.shape_cast %46 : vector<8x16x128xbf16> to vector<128x128xbf16>
    %c2_63 = arith.constant 2 : index
    %c1_64 = arith.constant 1 : index
    %c0_65 = arith.constant 0 : index
    %c0_66 = arith.constant 0 : index
    %48 = vector.load %arg2[%c2_63, %c1_64, %c0_65, %c0_66] : memref<3x3x128x128xbf16, #tpu.memory_space<vmem>>, vector<1x1x128x128xbf16>
    %49 = vector.shape_cast %48 : vector<1x1x128x128xbf16> to vector<128x128xbf16>
    %cst_67 = arith.constant dense<0.000000e+00> : vector<128x128xf32>
    %50 = tpu.matmul %47, %49, %cst_67 {dimension_numbers = #tpu.dot_dimension_numbers<[1], [0], [0], [1], [0, 0, 1, 1], [], []>} : vector<128x128xbf16>, vector<128x128xbf16>, vector<128x128xf32> -> vector<128x128xf32>
    %51 = arith.addf %45, %50 : vector<128x128xf32>
    %c2_68 = arith.constant 2 : index
    %c2_69 = arith.constant 2 : index
    %c0_70 = arith.constant 0 : index
    %52 = vector.load %arg6[%c2_68, %c2_69, %c0_70] : memref<10x18x128xbf16, #tpu.memory_space<vmem>>, vector<8x16x128xbf16>
    %53 = vector.shape_cast %52 : vector<8x16x128xbf16> to vector<128x128xbf16>
    %c2_71 = arith.constant 2 : index
    %c2_72 = arith.constant 2 : index
    %c0_73 = arith.constant 0 : index
    %c0_74 = arith.constant 0 : index
    %54 = vector.load %arg2[%c2_71, %c2_72, %c0_73, %c0_74] : memref<3x3x128x128xbf16, #tpu.memory_space<vmem>>, vector<1x1x128x128xbf16>
    %55 = vector.shape_cast %54 : vector<1x1x128x128xbf16> to vector<128x128xbf16>
    %cst_75 = arith.constant dense<0.000000e+00> : vector<128x128xf32>
    %56 = tpu.matmul %53, %55, %cst_75 {dimension_numbers = #tpu.dot_dimension_numbers<[1], [0], [0], [1], [0, 0, 1, 1], [], []>} : vector<128x128xbf16>, vector<128x128xbf16>, vector<128x128xf32> -> vector<128x128xf32>
    %57 = arith.addf %51, %56 : vector<128x128xf32>
    %c0_76 = arith.constant 0 : index
    %c0_77 = arith.constant 0 : index
    %58 = vector.load %arg3[%c0_76, %c0_77] : memref<1x128xf32, #tpu.memory_space<vmem>>, vector<1x128xf32>
    %59 = vector.broadcast %58 : vector<1x128xf32> to vector<128x128xf32>
    %60 = arith.addf %57, %59 : vector<128x128xf32>
    %61 = vector.shape_cast %60 : vector<128x128xf32> to vector<8x16x128xf32>
    %c0_78 = arith.constant 0 : index
    %c0_79 = arith.constant 0 : index
    %c0_80 = arith.constant 0 : index
    %c0_81 = arith.constant 0 : index
    %62 = vector.load %arg4[%c0_78, %c0_79, %c0_80, %c0_81] : memref<1x8x16x128xf32, #tpu.memory_space<vmem>>, vector<1x8x16x128xf32>
    %63 = vector.shape_cast %62 : vector<1x8x16x128xf32> to vector<8x16x128xf32>
    %64 = vector.shape_cast %61 : vector<8x16x128xf32> to vector<1x8x16x128xf32>
    tpu.vector_store %arg4[%c0_78, %c0_79, %c0_80, %c0_81], %64 {strides = array<i32>} : memref<1x8x16x128xf32, #tpu.memory_space<vmem>>, vector<1x8x16x128xf32>,
    %cst_82 = arith.constant dense<0.000000e+00> : vector<128xf32>
    %65 = vector.multi_reduction <add>, %60, %cst_82 [0] : vector<128x128xf32> to vector<128xf32>
    %66 = vector.shape_cast %65 : vector<128xf32> to vector<1x128xf32>
    %c0_83 = arith.constant 0 : index
    %c0_84 = arith.constant 0 : index
    %c0_85 = arith.constant 0 : index
    %67 = vector.load %arg5[%c0_83, %c0_84, %c0_85] : memref<1x2x128xf32, #tpu.memory_space<vmem>>, vector<1x1x128xf32>
    %68 = vector.shape_cast %67 : vector<1x1x128xf32> to vector<1x128xf32>
    %69 = vector.shape_cast %66 : vector<1x128xf32> to vector<1x1x128xf32>
    tpu.vector_store %arg5[%c0_83, %c0_84, %c0_85], %69 {strides = array<i32>} : memref<1x2x128xf32, #tpu.memory_space<vmem>>, vector<1x1x128xf32>,
    %70 = arith.mulf %60, %60 : vector<128x128xf32>
    %cst_86 = arith.constant dense<0.000000e+00> : vector<128xf32>
    %71 = vector.multi_reduction <add>, %70, %cst_86 [0] : vector<128x128xf32> to vector<128xf32>
    %72 = vector.shape_cast %71 : vector<128xf32> to vector<1x128xf32>
    %c0_87 = arith.constant 0 : index
    %c1_88 = arith.constant 1 : index
    %c0_89 = arith.constant 0 : index
    %73 = vector.load %arg5[%c0_87, %c1_88, %c0_89] : memref<1x2x128xf32, #tpu.memory_space<vmem>>, vector<1x1x128xf32>
    %74 = vector.shape_cast %73 : vector<1x1x128xf32> to vector<1x128xf32>
    %75 = vector.shape_cast %72 : vector<1x128xf32> to vector<1x1x128xf32>
    tpu.vector_store %arg5[%c0_87, %c1_88, %c0_89], %75 {strides = array<i32>} : memref<1x2x128xf32, #tpu.memory_space<vmem>>, vector<1x1x128xf32>,
    return
  }
  func.func @transform_0(%arg0: i32) -> (i32, i32, i32, i32) {
    %c0_i32 = arith.constant 0 : i32
    %c0_i32_0 = arith.constant 0 : i32
    %c0_i32_1 = arith.constant 0 : i32
    %c0_i32_2 = arith.constant 0 : i32
    return %arg0, %c0_i32, %c0_i32_0, %c0_i32_1 : i32, i32, i32, i32
  }
  func.func @transform_1(%arg0: i32) -> (i32, i32, i32, i32) {
    %c0_i32 = arith.constant 0 : i32
    %c0_i32_0 = arith.constant 0 : i32
    %c0_i32_1 = arith.constant 0 : i32
    %c0_i32_2 = arith.constant 0 : i32
    %c0_i32_3 = arith.constant 0 : i32
    return %c0_i32, %c0_i32_0, %c0_i32_1, %c0_i32_2 : i32, i32, i32, i32
  }
  func.func @transform_2(%arg0: i32) -> (i32, i32) {
    %c0_i32 = arith.constant 0 : i32
    %c0_i32_0 = arith.constant 0 : i32
    %c0_i32_1 = arith.constant 0 : i32
    return %c0_i32, %c0_i32_0 : i32, i32
  }
  func.func @transform_3(%arg0: i32) -> (i32, i32, i32, i32) {
    %c0_i32 = arith.constant 0 : i32
    %c0_i32_0 = arith.constant 0 : i32
    %c0_i32_1 = arith.constant 0 : i32
    %c0_i32_2 = arith.constant 0 : i32
    return %arg0, %c0_i32, %c0_i32_0, %c0_i32_1 : i32, i32, i32, i32
  }
  func.func @transform_4(%arg0: i32) -> (i32, i32, i32) {
    %c0_i32 = arith.constant 0 : i32
    %c0_i32_0 = arith.constant 0 : i32
    %c0_i32_1 = arith.constant 0 : i32
    return %arg0, %c0_i32, %c0_i32_0 : i32, i32, i32
  }
}

module attributes {stable_mosaic.version = 11 : i64} {
  func.func @_bn_relu_kernel(%arg0: i32, %arg1: memref<512x128xf32, #tpu.memory_space<vmem>>, %arg2: memref<1x128xf32, #tpu.memory_space<vmem>>, %arg3: memref<1x128xf32, #tpu.memory_space<vmem>>, %arg4: memref<512x128xf32, #tpu.memory_space<vmem>>) attributes {dimension_semantics = [#tpu.dimension_semantics<parallel>], iteration_bounds = array<i64: 1>, scalar_prefetch = 0 : i64, scratch_operands = 0 : i64, tpu.core_type = #tpu.core_type<tc>, window_params = [{transform_indices = @transform_0, window_bounds = array<i64: 512, 128>}, {pipeline_mode = #tpu.pipeline_mode<synchronous>, transform_indices = @transform_1, window_bounds = array<i64: 1, 128>}, {pipeline_mode = #tpu.pipeline_mode<synchronous>, transform_indices = @transform_2, window_bounds = array<i64: 1, 128>}, {transform_indices = @transform_3, window_bounds = array<i64: 512, 128>}]} {
    %c0 = arith.constant 0 : index
    %c0_0 = arith.constant 0 : index
    %0 = vector.load %arg1[%c0, %c0_0] : memref<512x128xf32, #tpu.memory_space<vmem>>, vector<512x128xf32>
    %c0_1 = arith.constant 0 : index
    %c0_2 = arith.constant 0 : index
    %1 = vector.load %arg2[%c0_1, %c0_2] : memref<1x128xf32, #tpu.memory_space<vmem>>, vector<1x128xf32>
    %2 = vector.broadcast %1 : vector<1x128xf32> to vector<512x128xf32>
    %3 = arith.mulf %0, %2 : vector<512x128xf32>
    %c0_3 = arith.constant 0 : index
    %c0_4 = arith.constant 0 : index
    %4 = vector.load %arg3[%c0_3, %c0_4] : memref<1x128xf32, #tpu.memory_space<vmem>>, vector<1x128xf32>
    %5 = vector.broadcast %4 : vector<1x128xf32> to vector<512x128xf32>
    %6 = arith.addf %3, %5 : vector<512x128xf32>
    %cst = arith.constant 0.000000e+00 : f32
    %7 = vector.broadcast %cst : f32 to vector<512x128xf32>
    %8 = arith.maximumf %6, %7 : vector<512x128xf32>
    %c0_5 = arith.constant 0 : index
    %c0_6 = arith.constant 0 : index
    %9 = vector.load %arg4[%c0_5, %c0_6] : memref<512x128xf32, #tpu.memory_space<vmem>>, vector<512x128xf32>
    tpu.vector_store %arg4[%c0_5, %c0_6], %8 {strides = array<i32>} : memref<512x128xf32, #tpu.memory_space<vmem>>, vector<512x128xf32>,
    return
  }
  func.func @transform_0(%arg0: i32) -> (i32, i32) {
    %c0_i32 = arith.constant 0 : i32
    %c0_i32_0 = arith.constant 0 : i32
    return %arg0, %c0_i32 : i32, i32
  }
  func.func @transform_1(%arg0: i32) -> (i32, i32) {
    %c0_i32 = arith.constant 0 : i32
    %c0_i32_0 = arith.constant 0 : i32
    %c0_i32_1 = arith.constant 0 : i32
    return %c0_i32, %c0_i32_0 : i32, i32
  }
  func.func @transform_2(%arg0: i32) -> (i32, i32) {
    %c0_i32 = arith.constant 0 : i32
    %c0_i32_0 = arith.constant 0 : i32
    %c0_i32_1 = arith.constant 0 : i32
    return %c0_i32, %c0_i32_0 : i32, i32
  }
  func.func @transform_3(%arg0: i32) -> (i32, i32) {
    %c0_i32 = arith.constant 0 : i32
    %c0_i32_0 = arith.constant 0 : i32
    return %arg0, %c0_i32 : i32, i32
  }
}

module attributes {stable_mosaic.version = 11 : i64} {
  func.func @_conv_kernel(%arg0: i32, %arg1: memref<1x10x18x128xf32, #tpu.memory_space<vmem>>, %arg2: memref<3x3x128x128xbf16, #tpu.memory_space<vmem>>, %arg3: memref<1x128xf32, #tpu.memory_space<vmem>>, %arg4: memref<1x1x128xf32, #tpu.memory_space<vmem>>, %arg5: memref<1x1x128xf32, #tpu.memory_space<vmem>>, %arg6: memref<1x8x16x128xf32, #tpu.memory_space<vmem>>, %arg7: memref<1x2x128xf32, #tpu.memory_space<vmem>>, %arg8: memref<10x18x128xbf16, #tpu.memory_space<vmem>>) attributes {dimension_semantics = [#tpu.dimension_semantics<parallel>], iteration_bounds = array<i64: 4>, scalar_prefetch = 0 : i64, scratch_operands = 1 : i64, tpu.core_type = #tpu.core_type<tc>, window_params = [{transform_indices = @transform_0, window_bounds = array<i64: 1, 10, 18, 128>}, {pipeline_mode = #tpu.pipeline_mode<synchronous>, transform_indices = @transform_1, window_bounds = array<i64: 3, 3, 128, 128>}, {pipeline_mode = #tpu.pipeline_mode<synchronous>, transform_indices = @transform_2, window_bounds = array<i64: 1, 128>}, {pipeline_mode = #tpu.pipeline_mode<synchronous>, transform_indices = @transform_3, window_bounds = array<i64: 1, 1, 128>}, {pipeline_mode = #tpu.pipeline_mode<synchronous>, transform_indices = @transform_4, window_bounds = array<i64: 1, 1, 128>}, {transform_indices = @transform_5, window_bounds = array<i64: 1, 8, 16, 128>}, {transform_indices = @transform_6, window_bounds = array<i64: 1, 2, 128>}]} {
    %c0 = arith.constant 0 : index
    %c0_0 = arith.constant 0 : index
    %c0_1 = arith.constant 0 : index
    %c0_2 = arith.constant 0 : index
    %0 = vector.load %arg1[%c0, %c0_0, %c0_1, %c0_2] : memref<1x10x18x128xf32, #tpu.memory_space<vmem>>, vector<1x10x18x128xf32>
    %1 = vector.shape_cast %0 : vector<1x10x18x128xf32> to vector<10x18x128xf32>
    %c0_3 = arith.constant 0 : index
    %c0_4 = arith.constant 0 : index
    %c0_5 = arith.constant 0 : index
    %2 = vector.load %arg4[%c0_3, %c0_4, %c0_5] : memref<1x1x128xf32, #tpu.memory_space<vmem>>, vector<1x1x128xf32>
    %3 = vector.broadcast %2 : vector<1x1x128xf32> to vector<10x18x128xf32>
    %4 = arith.mulf %1, %3 : vector<10x18x128xf32>
    %c0_6 = arith.constant 0 : index
    %c0_7 = arith.constant 0 : index
    %c0_8 = arith.constant 0 : index
    %5 = vector.load %arg5[%c0_6, %c0_7, %c0_8] : memref<1x1x128xf32, #tpu.memory_space<vmem>>, vector<1x1x128xf32>
    %6 = vector.broadcast %5 : vector<1x1x128xf32> to vector<10x18x128xf32>
    %7 = arith.addf %4, %6 : vector<10x18x128xf32>
    %cst = arith.constant 0.000000e+00 : f32
    %8 = vector.broadcast %cst : f32 to vector<10x18x128xf32>
    %9 = arith.maximumf %7, %8 : vector<10x18x128xf32>
    %c2_i32 = arith.constant 2 : i32
    %c0_i32 = arith.constant 0 : i32
    %10 = arith.cmpi eq, %c2_i32, %c0_i32 : i32
    %c1_i32 = arith.constant 1 : i32
    %11 = arith.select %10, %c1_i32, %c2_i32 : i32
    %12 = arith.remsi %arg0, %11 : i32
    %c0_i32_9 = arith.constant 0 : i32
    %13 = arith.cmpi ne, %12, %c0_i32_9 : i32
    %c0_i32_10 = arith.constant 0 : i32
    %14 = arith.cmpi slt, %12, %c0_i32_10 : i32
    %c0_i32_11 = arith.constant 0 : i32
    %15 = arith.cmpi slt, %11, %c0_i32_11 : i32
    %16 = arith.xori %14, %15 : i1
    %17 = arith.andi %16, %13 : i1
    %18 = arith.addi %12, %11 : i32
    %19 = arith.select %17, %18, %12 : i32
    %20 = tpu.iota {dimensions = array<i32: 0>} : vector<10x18x1xi32>
    %c8_i32 = arith.constant 8 : i32
    %21 = arith.muli %19, %c8_i32 : i32
    %22 = vector.broadcast %21 : i32 to vector<10x18x1xi32>
    %23 = arith.addi %20, %22 : vector<10x18x1xi32>
    %24 = tpu.iota {dimensions = array<i32: 1>} : vector<10x18x1xi32>
    %c1_i32_12 = arith.constant 1 : i32
    %25 = vector.broadcast %c1_i32_12 : i32 to vector<10x18x1xi32>
    %26 = arith.cmpi sge, %23, %25 : vector<10x18x1xi32>
    %c16_i32 = arith.constant 16 : i32
    %27 = vector.broadcast %c16_i32 : i32 to vector<10x18x1xi32>
    %28 = arith.cmpi sle, %23, %27 : vector<10x18x1xi32>
    %29 = arith.andi %26, %28 : vector<10x18x1xi1>
    %c1_i32_13 = arith.constant 1 : i32
    %30 = vector.broadcast %c1_i32_13 : i32 to vector<10x18x1xi32>
    %31 = arith.cmpi sge, %24, %30 : vector<10x18x1xi32>
    %32 = arith.andi %29, %31 : vector<10x18x1xi1>
    %c16_i32_14 = arith.constant 16 : i32
    %33 = vector.broadcast %c16_i32_14 : i32 to vector<10x18x1xi32>
    %34 = arith.cmpi sle, %24, %33 : vector<10x18x1xi32>
    %35 = arith.andi %32, %34 : vector<10x18x1xi1>
    %cst_15 = arith.constant 0.000000e+00 : f32
    %36 = vector.shape_cast %35 : vector<10x18x1xi1> to vector<10x18x1xi1>
    %37 = vector.broadcast %36 : vector<10x18x1xi1> to vector<10x18x128xi1>
    %38 = vector.broadcast %cst_15 : f32 to vector<10x18x128xf32>
    %39 = arith.select %37, %9, %38 : vector<10x18x128xi1>, vector<10x18x128xf32>
    %40 = arith.truncf %39 : vector<10x18x128xf32> to vector<10x18x128xbf16>
    %c0_16 = arith.constant 0 : index
    %c0_17 = arith.constant 0 : index
    %c0_18 = arith.constant 0 : index
    %41 = vector.load %arg8[%c0_16, %c0_17, %c0_18] : memref<10x18x128xbf16, #tpu.memory_space<vmem>>, vector<10x18x128xbf16>
    tpu.vector_store %arg8[%c0_16, %c0_17, %c0_18], %40 {strides = array<i32>} : memref<10x18x128xbf16, #tpu.memory_space<vmem>>, vector<10x18x128xbf16>,
    %cst_19 = arith.constant 0.000000e+00 : f32
    %42 = vector.broadcast %cst_19 : f32 to vector<128x128xf32>
    %c0_20 = arith.constant 0 : index
    %c0_21 = arith.constant 0 : index
    %c0_22 = arith.constant 0 : index
    %43 = vector.load %arg8[%c0_20, %c0_21, %c0_22] : memref<10x18x128xbf16, #tpu.memory_space<vmem>>, vector<8x16x128xbf16>
    %44 = vector.shape_cast %43 : vector<8x16x128xbf16> to vector<128x128xbf16>
    %c0_23 = arith.constant 0 : index
    %c0_24 = arith.constant 0 : index
    %c0_25 = arith.constant 0 : index
    %c0_26 = arith.constant 0 : index
    %45 = vector.load %arg2[%c0_23, %c0_24, %c0_25, %c0_26] : memref<3x3x128x128xbf16, #tpu.memory_space<vmem>>, vector<1x1x128x128xbf16>
    %46 = vector.shape_cast %45 : vector<1x1x128x128xbf16> to vector<128x128xbf16>
    %cst_27 = arith.constant dense<0.000000e+00> : vector<128x128xf32>
    %47 = tpu.matmul %44, %46, %cst_27 {dimension_numbers = #tpu.dot_dimension_numbers<[1], [0], [0], [1], [0, 0, 1, 1], [], []>} : vector<128x128xbf16>, vector<128x128xbf16>, vector<128x128xf32> -> vector<128x128xf32>
    %48 = arith.addf %42, %47 : vector<128x128xf32>
    %c0_28 = arith.constant 0 : index
    %c1 = arith.constant 1 : index
    %c0_29 = arith.constant 0 : index
    %49 = vector.load %arg8[%c0_28, %c1, %c0_29] : memref<10x18x128xbf16, #tpu.memory_space<vmem>>, vector<8x16x128xbf16>
    %50 = vector.shape_cast %49 : vector<8x16x128xbf16> to vector<128x128xbf16>
    %c0_30 = arith.constant 0 : index
    %c1_31 = arith.constant 1 : index
    %c0_32 = arith.constant 0 : index
    %c0_33 = arith.constant 0 : index
    %51 = vector.load %arg2[%c0_30, %c1_31, %c0_32, %c0_33] : memref<3x3x128x128xbf16, #tpu.memory_space<vmem>>, vector<1x1x128x128xbf16>
    %52 = vector.shape_cast %51 : vector<1x1x128x128xbf16> to vector<128x128xbf16>
    %cst_34 = arith.constant dense<0.000000e+00> : vector<128x128xf32>
    %53 = tpu.matmul %50, %52, %cst_34 {dimension_numbers = #tpu.dot_dimension_numbers<[1], [0], [0], [1], [0, 0, 1, 1], [], []>} : vector<128x128xbf16>, vector<128x128xbf16>, vector<128x128xf32> -> vector<128x128xf32>
    %54 = arith.addf %48, %53 : vector<128x128xf32>
    %c0_35 = arith.constant 0 : index
    %c2 = arith.constant 2 : index
    %c0_36 = arith.constant 0 : index
    %55 = vector.load %arg8[%c0_35, %c2, %c0_36] : memref<10x18x128xbf16, #tpu.memory_space<vmem>>, vector<8x16x128xbf16>
    %56 = vector.shape_cast %55 : vector<8x16x128xbf16> to vector<128x128xbf16>
    %c0_37 = arith.constant 0 : index
    %c2_38 = arith.constant 2 : index
    %c0_39 = arith.constant 0 : index
    %c0_40 = arith.constant 0 : index
    %57 = vector.load %arg2[%c0_37, %c2_38, %c0_39, %c0_40] : memref<3x3x128x128xbf16, #tpu.memory_space<vmem>>, vector<1x1x128x128xbf16>
    %58 = vector.shape_cast %57 : vector<1x1x128x128xbf16> to vector<128x128xbf16>
    %cst_41 = arith.constant dense<0.000000e+00> : vector<128x128xf32>
    %59 = tpu.matmul %56, %58, %cst_41 {dimension_numbers = #tpu.dot_dimension_numbers<[1], [0], [0], [1], [0, 0, 1, 1], [], []>} : vector<128x128xbf16>, vector<128x128xbf16>, vector<128x128xf32> -> vector<128x128xf32>
    %60 = arith.addf %54, %59 : vector<128x128xf32>
    %c1_42 = arith.constant 1 : index
    %c0_43 = arith.constant 0 : index
    %c0_44 = arith.constant 0 : index
    %61 = vector.load %arg8[%c1_42, %c0_43, %c0_44] : memref<10x18x128xbf16, #tpu.memory_space<vmem>>, vector<8x16x128xbf16>
    %62 = vector.shape_cast %61 : vector<8x16x128xbf16> to vector<128x128xbf16>
    %c1_45 = arith.constant 1 : index
    %c0_46 = arith.constant 0 : index
    %c0_47 = arith.constant 0 : index
    %c0_48 = arith.constant 0 : index
    %63 = vector.load %arg2[%c1_45, %c0_46, %c0_47, %c0_48] : memref<3x3x128x128xbf16, #tpu.memory_space<vmem>>, vector<1x1x128x128xbf16>
    %64 = vector.shape_cast %63 : vector<1x1x128x128xbf16> to vector<128x128xbf16>
    %cst_49 = arith.constant dense<0.000000e+00> : vector<128x128xf32>
    %65 = tpu.matmul %62, %64, %cst_49 {dimension_numbers = #tpu.dot_dimension_numbers<[1], [0], [0], [1], [0, 0, 1, 1], [], []>} : vector<128x128xbf16>, vector<128x128xbf16>, vector<128x128xf32> -> vector<128x128xf32>
    %66 = arith.addf %60, %65 : vector<128x128xf32>
    %c1_50 = arith.constant 1 : index
    %c1_51 = arith.constant 1 : index
    %c0_52 = arith.constant 0 : index
    %67 = vector.load %arg8[%c1_50, %c1_51, %c0_52] : memref<10x18x128xbf16, #tpu.memory_space<vmem>>, vector<8x16x128xbf16>
    %68 = vector.shape_cast %67 : vector<8x16x128xbf16> to vector<128x128xbf16>
    %c1_53 = arith.constant 1 : index
    %c1_54 = arith.constant 1 : index
    %c0_55 = arith.constant 0 : index
    %c0_56 = arith.constant 0 : index
    %69 = vector.load %arg2[%c1_53, %c1_54, %c0_55, %c0_56] : memref<3x3x128x128xbf16, #tpu.memory_space<vmem>>, vector<1x1x128x128xbf16>
    %70 = vector.shape_cast %69 : vector<1x1x128x128xbf16> to vector<128x128xbf16>
    %cst_57 = arith.constant dense<0.000000e+00> : vector<128x128xf32>
    %71 = tpu.matmul %68, %70, %cst_57 {dimension_numbers = #tpu.dot_dimension_numbers<[1], [0], [0], [1], [0, 0, 1, 1], [], []>} : vector<128x128xbf16>, vector<128x128xbf16>, vector<128x128xf32> -> vector<128x128xf32>
    %72 = arith.addf %66, %71 : vector<128x128xf32>
    %c1_58 = arith.constant 1 : index
    %c2_59 = arith.constant 2 : index
    %c0_60 = arith.constant 0 : index
    %73 = vector.load %arg8[%c1_58, %c2_59, %c0_60] : memref<10x18x128xbf16, #tpu.memory_space<vmem>>, vector<8x16x128xbf16>
    %74 = vector.shape_cast %73 : vector<8x16x128xbf16> to vector<128x128xbf16>
    %c1_61 = arith.constant 1 : index
    %c2_62 = arith.constant 2 : index
    %c0_63 = arith.constant 0 : index
    %c0_64 = arith.constant 0 : index
    %75 = vector.load %arg2[%c1_61, %c2_62, %c0_63, %c0_64] : memref<3x3x128x128xbf16, #tpu.memory_space<vmem>>, vector<1x1x128x128xbf16>
    %76 = vector.shape_cast %75 : vector<1x1x128x128xbf16> to vector<128x128xbf16>
    %cst_65 = arith.constant dense<0.000000e+00> : vector<128x128xf32>
    %77 = tpu.matmul %74, %76, %cst_65 {dimension_numbers = #tpu.dot_dimension_numbers<[1], [0], [0], [1], [0, 0, 1, 1], [], []>} : vector<128x128xbf16>, vector<128x128xbf16>, vector<128x128xf32> -> vector<128x128xf32>
    %78 = arith.addf %72, %77 : vector<128x128xf32>
    %c2_66 = arith.constant 2 : index
    %c0_67 = arith.constant 0 : index
    %c0_68 = arith.constant 0 : index
    %79 = vector.load %arg8[%c2_66, %c0_67, %c0_68] : memref<10x18x128xbf16, #tpu.memory_space<vmem>>, vector<8x16x128xbf16>
    %80 = vector.shape_cast %79 : vector<8x16x128xbf16> to vector<128x128xbf16>
    %c2_69 = arith.constant 2 : index
    %c0_70 = arith.constant 0 : index
    %c0_71 = arith.constant 0 : index
    %c0_72 = arith.constant 0 : index
    %81 = vector.load %arg2[%c2_69, %c0_70, %c0_71, %c0_72] : memref<3x3x128x128xbf16, #tpu.memory_space<vmem>>, vector<1x1x128x128xbf16>
    %82 = vector.shape_cast %81 : vector<1x1x128x128xbf16> to vector<128x128xbf16>
    %cst_73 = arith.constant dense<0.000000e+00> : vector<128x128xf32>
    %83 = tpu.matmul %80, %82, %cst_73 {dimension_numbers = #tpu.dot_dimension_numbers<[1], [0], [0], [1], [0, 0, 1, 1], [], []>} : vector<128x128xbf16>, vector<128x128xbf16>, vector<128x128xf32> -> vector<128x128xf32>
    %84 = arith.addf %78, %83 : vector<128x128xf32>
    %c2_74 = arith.constant 2 : index
    %c1_75 = arith.constant 1 : index
    %c0_76 = arith.constant 0 : index
    %85 = vector.load %arg8[%c2_74, %c1_75, %c0_76] : memref<10x18x128xbf16, #tpu.memory_space<vmem>>, vector<8x16x128xbf16>
    %86 = vector.shape_cast %85 : vector<8x16x128xbf16> to vector<128x128xbf16>
    %c2_77 = arith.constant 2 : index
    %c1_78 = arith.constant 1 : index
    %c0_79 = arith.constant 0 : index
    %c0_80 = arith.constant 0 : index
    %87 = vector.load %arg2[%c2_77, %c1_78, %c0_79, %c0_80] : memref<3x3x128x128xbf16, #tpu.memory_space<vmem>>, vector<1x1x128x128xbf16>
    %88 = vector.shape_cast %87 : vector<1x1x128x128xbf16> to vector<128x128xbf16>
    %cst_81 = arith.constant dense<0.000000e+00> : vector<128x128xf32>
    %89 = tpu.matmul %86, %88, %cst_81 {dimension_numbers = #tpu.dot_dimension_numbers<[1], [0], [0], [1], [0, 0, 1, 1], [], []>} : vector<128x128xbf16>, vector<128x128xbf16>, vector<128x128xf32> -> vector<128x128xf32>
    %90 = arith.addf %84, %89 : vector<128x128xf32>
    %c2_82 = arith.constant 2 : index
    %c2_83 = arith.constant 2 : index
    %c0_84 = arith.constant 0 : index
    %91 = vector.load %arg8[%c2_82, %c2_83, %c0_84] : memref<10x18x128xbf16, #tpu.memory_space<vmem>>, vector<8x16x128xbf16>
    %92 = vector.shape_cast %91 : vector<8x16x128xbf16> to vector<128x128xbf16>
    %c2_85 = arith.constant 2 : index
    %c2_86 = arith.constant 2 : index
    %c0_87 = arith.constant 0 : index
    %c0_88 = arith.constant 0 : index
    %93 = vector.load %arg2[%c2_85, %c2_86, %c0_87, %c0_88] : memref<3x3x128x128xbf16, #tpu.memory_space<vmem>>, vector<1x1x128x128xbf16>
    %94 = vector.shape_cast %93 : vector<1x1x128x128xbf16> to vector<128x128xbf16>
    %cst_89 = arith.constant dense<0.000000e+00> : vector<128x128xf32>
    %95 = tpu.matmul %92, %94, %cst_89 {dimension_numbers = #tpu.dot_dimension_numbers<[1], [0], [0], [1], [0, 0, 1, 1], [], []>} : vector<128x128xbf16>, vector<128x128xbf16>, vector<128x128xf32> -> vector<128x128xf32>
    %96 = arith.addf %90, %95 : vector<128x128xf32>
    %c0_90 = arith.constant 0 : index
    %c0_91 = arith.constant 0 : index
    %97 = vector.load %arg3[%c0_90, %c0_91] : memref<1x128xf32, #tpu.memory_space<vmem>>, vector<1x128xf32>
    %98 = vector.broadcast %97 : vector<1x128xf32> to vector<128x128xf32>
    %99 = arith.addf %96, %98 : vector<128x128xf32>
    %100 = vector.shape_cast %99 : vector<128x128xf32> to vector<8x16x128xf32>
    %c0_92 = arith.constant 0 : index
    %c0_93 = arith.constant 0 : index
    %c0_94 = arith.constant 0 : index
    %c0_95 = arith.constant 0 : index
    %101 = vector.load %arg6[%c0_92, %c0_93, %c0_94, %c0_95] : memref<1x8x16x128xf32, #tpu.memory_space<vmem>>, vector<1x8x16x128xf32>
    %102 = vector.shape_cast %101 : vector<1x8x16x128xf32> to vector<8x16x128xf32>
    %103 = vector.shape_cast %100 : vector<8x16x128xf32> to vector<1x8x16x128xf32>
    tpu.vector_store %arg6[%c0_92, %c0_93, %c0_94, %c0_95], %103 {strides = array<i32>} : memref<1x8x16x128xf32, #tpu.memory_space<vmem>>, vector<1x8x16x128xf32>,
    %cst_96 = arith.constant dense<0.000000e+00> : vector<128xf32>
    %104 = vector.multi_reduction <add>, %99, %cst_96 [0] : vector<128x128xf32> to vector<128xf32>
    %105 = vector.shape_cast %104 : vector<128xf32> to vector<1x128xf32>
    %c0_97 = arith.constant 0 : index
    %c0_98 = arith.constant 0 : index
    %c0_99 = arith.constant 0 : index
    %106 = vector.load %arg7[%c0_97, %c0_98, %c0_99] : memref<1x2x128xf32, #tpu.memory_space<vmem>>, vector<1x1x128xf32>
    %107 = vector.shape_cast %106 : vector<1x1x128xf32> to vector<1x128xf32>
    %108 = vector.shape_cast %105 : vector<1x128xf32> to vector<1x1x128xf32>
    tpu.vector_store %arg7[%c0_97, %c0_98, %c0_99], %108 {strides = array<i32>} : memref<1x2x128xf32, #tpu.memory_space<vmem>>, vector<1x1x128xf32>,
    %109 = arith.mulf %99, %99 : vector<128x128xf32>
    %cst_100 = arith.constant dense<0.000000e+00> : vector<128xf32>
    %110 = vector.multi_reduction <add>, %109, %cst_100 [0] : vector<128x128xf32> to vector<128xf32>
    %111 = vector.shape_cast %110 : vector<128xf32> to vector<1x128xf32>
    %c0_101 = arith.constant 0 : index
    %c1_102 = arith.constant 1 : index
    %c0_103 = arith.constant 0 : index
    %112 = vector.load %arg7[%c0_101, %c1_102, %c0_103] : memref<1x2x128xf32, #tpu.memory_space<vmem>>, vector<1x1x128xf32>
    %113 = vector.shape_cast %112 : vector<1x1x128xf32> to vector<1x128xf32>
    %114 = vector.shape_cast %111 : vector<1x128xf32> to vector<1x1x128xf32>
    tpu.vector_store %arg7[%c0_101, %c1_102, %c0_103], %114 {strides = array<i32>} : memref<1x2x128xf32, #tpu.memory_space<vmem>>, vector<1x1x128xf32>,
    return
  }
  func.func @transform_0(%arg0: i32) -> (i32, i32, i32, i32) {
    %c0_i32 = arith.constant 0 : i32
    %c0_i32_0 = arith.constant 0 : i32
    %c0_i32_1 = arith.constant 0 : i32
    %c0_i32_2 = arith.constant 0 : i32
    return %arg0, %c0_i32, %c0_i32_0, %c0_i32_1 : i32, i32, i32, i32
  }
  func.func @transform_1(%arg0: i32) -> (i32, i32, i32, i32) {
    %c0_i32 = arith.constant 0 : i32
    %c0_i32_0 = arith.constant 0 : i32
    %c0_i32_1 = arith.constant 0 : i32
    %c0_i32_2 = arith.constant 0 : i32
    %c0_i32_3 = arith.constant 0 : i32
    return %c0_i32, %c0_i32_0, %c0_i32_1, %c0_i32_2 : i32, i32, i32, i32
  }
  func.func @transform_2(%arg0: i32) -> (i32, i32) {
    %c0_i32 = arith.constant 0 : i32
    %c0_i32_0 = arith.constant 0 : i32
    %c0_i32_1 = arith.constant 0 : i32
    return %c0_i32, %c0_i32_0 : i32, i32
  }
  func.func @transform_3(%arg0: i32) -> (i32, i32, i32) {
    %c0_i32 = arith.constant 0 : i32
    %c0_i32_0 = arith.constant 0 : i32
    %c0_i32_1 = arith.constant 0 : i32
    %c0_i32_2 = arith.constant 0 : i32
    return %c0_i32, %c0_i32_0, %c0_i32_1 : i32, i32, i32
  }
  func.func @transform_4(%arg0: i32) -> (i32, i32, i32) {
    %c0_i32 = arith.constant 0 : i32
    %c0_i32_0 = arith.constant 0 : i32
    %c0_i32_1 = arith.constant 0 : i32
    %c0_i32_2 = arith.constant 0 : i32
    return %c0_i32, %c0_i32_0, %c0_i32_1 : i32, i32, i32
  }
  func.func @transform_5(%arg0: i32) -> (i32, i32, i32, i32) {
    %c0_i32 = arith.constant 0 : i32
    %c0_i32_0 = arith.constant 0 : i32
    %c0_i32_1 = arith.constant 0 : i32
    %c0_i32_2 = arith.constant 0 : i32
    return %arg0, %c0_i32, %c0_i32_0, %c0_i32_1 : i32, i32, i32, i32
  }
  func.func @transform_6(%arg0: i32) -> (i32, i32, i32) {
    %c0_i32 = arith.constant 0 : i32
    %c0_i32_0 = arith.constant 0 : i32
    %c0_i32_1 = arith.constant 0 : i32
    return %arg0, %c0_i32, %c0_i32_0 : i32, i32, i32
  }
}

</mosaic_0001>

<llo_original>
// kernel: vgg_block_pallas.5
$region0: #{vgg_block_pallas.5}
  #allocation0 [shape = 'u32[]', space=smem, size = 0x4, offset = 0x4, fixed_abs, tag = 'smem constant byte address 0x4 - core index']
  #allocation1 [shape = 'u32[144,128]{1,0:T(1,128)}', space=vmem, size = 0x12000, scoped, tag = 'internal scratch']
  %s0 = inlined_call_operand.vmem [shape: f32[512,128], index: 0, kind: input, shape index: {}]
  %s1 = inlined_call_operand.vmem [shape: f32[1,128], index: 1, kind: input, shape index: {}]
  %s2 = inlined_call_operand.vmem [shape: f32[1,128], index: 2, kind: input, shape index: {}]
  %s3 = inlined_call_operand.vmem [shape: f32[512,128], index: 3, kind: output, shape index: {}]
  %s4 = sld [smem:[#allocation0]]
  $region22: #{vgg_block_pallas.5} parent=0
    _
  %s6 = ssub.s32 1, %s4
  %s7 = scalar_select 0, %s6, %s4
  // Predicated region
  $region2: #{vgg_block_pallas.5} parent=0 // pred_check
    _
  $region3: #{vgg_block_pallas.5} parent=0 // pred_check_branch
    %9 = sbr.rel (0) target = $region5
  $region4: #{vgg_block_pallas.5} parent=0 // pred_region
    _
  $region5: #{vgg_block_pallas.5} parent=0 // pred_fallthru
    _
  // Predicated region
  $region6: #{vgg_block_pallas.5} parent=0 // pred_check
    _
  $region7: #{vgg_block_pallas.5} parent=0 // pred_check_branch
    %11 = sbr.rel (0) target = $region9
  $region8: #{vgg_block_pallas.5} parent=0 // pred_region
    _
  $region9: #{vgg_block_pallas.5} parent=0 // pred_fallthru
    _
  // Predicated region
  $region10: #{vgg_block_pallas.5} parent=0 // pred_check
    _
  $region11: #{vgg_block_pallas.5} parent=0 // pred_check_branch
    %13 = sbr.rel (0) target = $region13
  $region12: #{vgg_block_pallas.5} parent=0 // pred_region
    _
  $region13: #{vgg_block_pallas.5} parent=0 // pred_fallthru
    _
  %v14 = vld [vmem:[%s0] sm:$0xff]
  %v15 = vld [vmem:[%s0 + $0x8] sm:$0xff]
  %v16 = vld [vmem:[%s0 + $0x10] sm:$0xff]
  %v17 = vld [vmem:[%s0 + $0x18] sm:$0xff]
  %v18 = vld [vmem:[%s0 + $0x20] sm:$0xff]
  %v19 = vld [vmem:[%s0 + $0x28] sm:$0xff]
  %v20 = vld [vmem:[%s0 + $0x30] sm:$0xff]
  %v21 = vld [vmem:[%s0 + $0x38] sm:$0xff]
  %v22 = vld [vmem:[%s0 + $0x40] sm:$0xff]
  %v23 = vld [vmem:[%s0 + $0x48] sm:$0xff]
  %v24 = vld [vmem:[%s0 + $0x50] sm:$0xff]
  %v25 = vld [vmem:[%s0 + $0x58] sm:$0xff]
  %v26 = vld [vmem:[%s0 + $0x60] sm:$0xff]
  %v27 = vld [vmem:[%s0 + $0x68] sm:$0xff]
  %v28 = vld [vmem:[%s0 + $0x70] sm:$0xff]
  %v29 = vld [vmem:[%s0 + $0x78] sm:$0xff]
  %v30 = vld [vmem:[%s0 + $0x80] sm:$0xff]
  %v31 = vld [vmem:[%s0 + $0x88] sm:$0xff]
  %v32 = vld [vmem:[%s0 + $0x90] sm:$0xff]
  %v33 = vld [vmem:[%s0 + $0x98] sm:$0xff]
  %v34 = vld [vmem:[%s0 + $0xa0] sm:$0xff]
  %v35 = vld [vmem:[%s0 + $0xa8] sm:$0xff]
  %v36 = vld [vmem:[%s0 + $0xb0] sm:$0xff]
  %v37 = vld [vmem:[%s0 + $0xb8] sm:$0xff]
  %v38 = vld [vmem:[%s0 + $0xc0] sm:$0xff]
  %v39 = vld [vmem:[%s0 + $0xc8] sm:$0xff]
  %v40 = vld [vmem:[%s0 + $0xd0] sm:$0xff]
  %v41 = vld [vmem:[%s0 + $0xd8] sm:$0xff]
  %v42 = vld [vmem:[%s0 + $0xe0] sm:$0xff]
  %v43 = vld [vmem:[%s0 + $0xe8] sm:$0xff]
  %v44 = vld [vmem:[%s0 + $0xf0] sm:$0xff]
  %v45 = vld [vmem:[%s0 + $0xf8] sm:$0xff]
  %v46 = vld [vmem:[%s0 + $0x100] sm:$0xff]
  %v47 = vld [vmem:[%s0 + $0x108] sm:$0xff]
  %v48 = vld [vmem:[%s0 + $0x110] sm:$0xff]
  %v49 = vld [vmem:[%s0 + $0x118] sm:$0xff]
  %v50 = vld [vmem:[%s0 + $0x120] sm:$0xff]
  %v51 = vld [vmem:[%s0 + $0x128] sm:$0xff]
  %v52 = vld [vmem:[%s0 + $0x130] sm:$0xff]
  %v53 = vld [vmem:[%s0 + $0x138] sm:$0xff]
  %v54 = vld [vmem:[%s0 + $0x140] sm:$0xff]
  %v55 = vld [vmem:[%s0 + $0x148] sm:$0xff]
  %v56 = vld [vmem:[%s0 + $0x150] sm:$0xff]
  %v57 = vld [vmem:[%s0 + $0x158] sm:$0xff]
  %v58 = vld [vmem:[%s0 + $0x160] sm:$0xff]
  %v59 = vld [vmem:[%s0 + $0x168] sm:$0xff]
  %v60 = vld [vmem:[%s0 + $0x170] sm:$0xff]
  %v61 = vld [vmem:[%s0 + $0x178] sm:$0xff]
  %v62 = vld [vmem:[%s0 + $0x180] sm:$0xff]
  %v63 = vld [vmem:[%s0 + $0x188] sm:$0xff]
  %v64 = vld [vmem:[%s0 + $0x190] sm:$0xff]
  %v65 = vld [vmem:[%s0 + $0x198] sm:$0xff]
  %v66 = vld [vmem:[%s0 + $0x1a0] sm:$0xff]
  %v67 = vld [vmem:[%s0 + $0x1a8] sm:$0xff]
  %v68 = vld [vmem:[%s0 + $0x1b0] sm:$0xff]
  %v69 = vld [vmem:[%s0 + $0x1b8] sm:$0xff]
  %v70 = vld [vmem:[%s0 + $0x1c0] sm:$0xff]
  %v71 = vld [vmem:[%s0 + $0x1c8] sm:$0xff]
  %v72 = vld [vmem:[%s0 + $0x1d0] sm:$0xff]
  %v73 = vld [vmem:[%s0 + $0x1d8] sm:$0xff]
  %v74 = vld [vmem:[%s0 + $0x1e0] sm:$0xff]
  %v75 = vld [vmem:[%s0 + $0x1e8] sm:$0xff]
  %v76 = vld [vmem:[%s0 + $0x1f0] sm:$0xff]
  %v77 = vld [vmem:[%s0 + $0x1f8] sm:$0xff]
  %v78 = vld [vmem:[%s1] sm:$0x1]
  %v80 = vlaneseq
  %v81 = vshrl.u32 %v80, 7
  %v82 = vsub.s32 0, %v81
  %v83 = vrot.slane %v78, %v82
  %v85 = vmul.f32 %v14, %v83
  %v86 = vmul.f32 %v15, %v83
  %v87 = vmul.f32 %v16, %v83
  %v88 = vmul.f32 %v17, %v83
  %v89 = vmul.f32 %v18, %v83
  %v90 = vmul.f32 %v19, %v83
  %v91 = vmul.f32 %v20, %v83
  %v92 = vmul.f32 %v21, %v83
  %v93 = vmul.f32 %v22, %v83
  %v94 = vmul.f32 %v23, %v83
  %v95 = vmul.f32 %v24, %v83
  %v96 = vmul.f32 %v25, %v83
  %v97 = vmul.f32 %v26, %v83
  %v98 = vmul.f32 %v27, %v83
  %v99 = vmul.f32 %v28, %v83
  %v100 = vmul.f32 %v29, %v83
  %v101 = vmul.f32 %v30, %v83
  %v102 = vmul.f32 %v31, %v83
  %v103 = vmul.f32 %v32, %v83
  %v104 = vmul.f32 %v33, %v83
  %v105 = vmul.f32 %v34, %v83
  %v106 = vmul.f32 %v35, %v83
  %v107 = vmul.f32 %v36, %v83
  %v108 = vmul.f32 %v37, %v83
  %v109 = vmul.f32 %v38, %v83
  %v110 = vmul.f32 %v39, %v83
  %v111 = vmul.f32 %v40, %v83
  %v112 = vmul.f32 %v41, %v83
  %v113 = vmul.f32 %v42, %v83
  %v114 = vmul.f32 %v43, %v83
  %v115 = vmul.f32 %v44, %v83
  %v116 = vmul.f32 %v45, %v83
  %v117 = vmul.f32 %v46, %v83
  %v118 = vmul.f32 %v47, %v83
  %v119 = vmul.f32 %v48, %v83
  %v120 = vmul.f32 %v49, %v83
  %v121 = vmul.f32 %v50, %v83
  %v122 = vmul.f32 %v51, %v83
  %v123 = vmul.f32 %v52, %v83
  %v124 = vmul.f32 %v53, %v83
  %v125 = vmul.f32 %v54, %v83
  %v126 = vmul.f32 %v55, %v83
  %v127 = vmul.f32 %v56, %v83
  %v128 = vmul.f32 %v57, %v83
  %v129 = vmul.f32 %v58, %v83
  %v130 = vmul.f32 %v59, %v83
  %v131 = vmul.f32 %v60, %v83
  %v132 = vmul.f32 %v61, %v83
  %v133 = vmul.f32 %v62, %v83
  %v134 = vmul.f32 %v63, %v83
  %v135 = vmul.f32 %v64, %v83
  %v136 = vmul.f32 %v65, %v83
  %v137 = vmul.f32 %v66, %v83
  %v138 = vmul.f32 %v67, %v83
  %v139 = vmul.f32 %v68, %v83
  %v140 = vmul.f32 %v69, %v83
  %v141 = vmul.f32 %v70, %v83
  %v142 = vmul.f32 %v71, %v83
  %v143 = vmul.f32 %v72, %v83
  %v144 = vmul.f32 %v73, %v83
  %v145 = vmul.f32 %v74, %v83
  %v146 = vmul.f32 %v75, %v83
  %v147 = vmul.f32 %v76, %v83
  %v148 = vmul.f32 %v77, %v83
  %v149 = vld [vmem:[%s2] sm:$0x1]
  %v151 = vlaneseq
  %v152 = vshrl.u32 %v151, 7
  %v153 = vsub.s32 0, %v152
  %v154 = vrot.slane %v149, %v153
  %v156 = vadd.f32 %v85, %v154
  %v157 = vadd.f32 %v86, %v154
  %v158 = vadd.f32 %v87, %v154
  %v159 = vadd.f32 %v88, %v154
  %v160 = vadd.f32 %v89, %v154
  %v161 = vadd.f32 %v90, %v154
  %v162 = vadd.f32 %v91, %v154
  %v163 = vadd.f32 %v92, %v154
  %v164 = vadd.f32 %v93, %v154
  %v165 = vadd.f32 %v94, %v154
  %v166 = vadd.f32 %v95, %v154
  %v167 = vadd.f32 %v96, %v154
  %v168 = vadd.f32 %v97, %v154
  %v169 = vadd.f32 %v98, %v154
  %v170 = vadd.f32 %v99, %v154
  %v171 = vadd.f32 %v100, %v154
  %v172 = vadd.f32 %v101, %v154
  %v173 = vadd.f32 %v102, %v154
  %v174 = vadd.f32 %v103, %v154
  %v175 = vadd.f32 %v104, %v154
  %v176 = vadd.f32 %v105, %v154
  %v177 = vadd.f32 %v106, %v154
  %v178 = vadd.f32 %v107, %v154
  %v179 = vadd.f32 %v108, %v154
  %v180 = vadd.f32 %v109, %v154
  %v181 = vadd.f32 %v110, %v154
  %v182 = vadd.f32 %v111, %v154
  %v183 = vadd.f32 %v112, %v154
  %v184 = vadd.f32 %v113, %v154
  %v185 = vadd.f32 %v114, %v154
  %v186 = vadd.f32 %v115, %v154
  %v187 = vadd.f32 %v116, %v154
  %v188 = vadd.f32 %v117, %v154
  %v189 = vadd.f32 %v118, %v154
  %v190 = vadd.f32 %v119, %v154
  %v191 = vadd.f32 %v120, %v154
  %v192 = vadd.f32 %v121, %v154
  %v193 = vadd.f32 %v122, %v154
  %v194 = vadd.f32 %v123, %v154
  %v195 = vadd.f32 %v124, %v154
  %v196 = vadd.f32 %v125, %v154
  %v197 = vadd.f32 %v126, %v154
  %v198 = vadd.f32 %v127, %v154
  %v199 = vadd.f32 %v128, %v154
  %v200 = vadd.f32 %v129, %v154
  %v201 = vadd.f32 %v130, %v154
  %v202 = vadd.f32 %v131, %v154
  %v203 = vadd.f32 %v132, %v154
  %v204 = vadd.f32 %v133, %v154
  %v205 = vadd.f32 %v134, %v154
  %v206 = vadd.f32 %v135, %v154
  %v207 = vadd.f32 %v136, %v154
  %v208 = vadd.f32 %v137, %v154
  %v209 = vadd.f32 %v138, %v154
  %v210 = vadd.f32 %v139, %v154
  %v211 = vadd.f32 %v140, %v154
  %v212 = vadd.f32 %v141, %v154
  %v213 = vadd.f32 %v142, %v154
  %v214 = vadd.f32 %v143, %v154
  %v215 = vadd.f32 %v144, %v154
  %v216 = vadd.f32 %v145, %v154
  %v217 = vadd.f32 %v146, %v154
  %v218 = vadd.f32 %v147, %v154
  %v219 = vadd.f32 %v148, %v154
  %v220 = vmax.f32 %v156, 0.0
  %v221 = vmax.f32 %v157, 0.0
  %v222 = vmax.f32 %v158, 0.0
  %v223 = vmax.f32 %v159, 0.0
  %v224 = vmax.f32 %v160, 0.0
  %v225 = vmax.f32 %v161, 0.0
  %v226 = vmax.f32 %v162, 0.0
  %v227 = vmax.f32 %v163, 0.0
  %v228 = vmax.f32 %v164, 0.0
  %v229 = vmax.f32 %v165, 0.0
  %v230 = vmax.f32 %v166, 0.0
  %v231 = vmax.f32 %v167, 0.0
  %v232 = vmax.f32 %v168, 0.0
  %v233 = vmax.f32 %v169, 0.0
  %v234 = vmax.f32 %v170, 0.0
  %v235 = vmax.f32 %v171, 0.0
  %v236 = vmax.f32 %v172, 0.0
  %v237 = vmax.f32 %v173, 0.0
  %v238 = vmax.f32 %v174, 0.0
  %v239 = vmax.f32 %v175, 0.0
  %v240 = vmax.f32 %v176, 0.0
  %v241 = vmax.f32 %v177, 0.0
  %v242 = vmax.f32 %v178, 0.0
  %v243 = vmax.f32 %v179, 0.0
  %v244 = vmax.f32 %v180, 0.0
  %v245 = vmax.f32 %v181, 0.0
  %v246 = vmax.f32 %v182, 0.0
  %v247 = vmax.f32 %v183, 0.0
  %v248 = vmax.f32 %v184, 0.0
  %v249 = vmax.f32 %v185, 0.0
  %v250 = vmax.f32 %v186, 0.0
  %v251 = vmax.f32 %v187, 0.0
  %v252 = vmax.f32 %v188, 0.0
  %v253 = vmax.f32 %v189, 0.0
  %v254 = vmax.f32 %v190, 0.0
  %v255 = vmax.f32 %v191, 0.0
  %v256 = vmax.f32 %v192, 0.0
  %v257 = vmax.f32 %v193, 0.0
  %v258 = vmax.f32 %v194, 0.0
  %v259 = vmax.f32 %v195, 0.0
  %v260 = vmax.f32 %v196, 0.0
  %v261 = vmax.f32 %v197, 0.0
  %v262 = vmax.f32 %v198, 0.0
  %v263 = vmax.f32 %v199, 0.0
  %v264 = vmax.f32 %v200, 0.0
  %v265 = vmax.f32 %v201, 0.0
  %v266 = vmax.f32 %v202, 0.0
  %v267 = vmax.f32 %v203, 0.0
  %v268 = vmax.f32 %v204, 0.0
  %v269 = vmax.f32 %v205, 0.0
  %v270 = vmax.f32 %v206, 0.0
  %v271 = vmax.f32 %v207, 0.0
  %v272 = vmax.f32 %v208, 0.0
  %v273 = vmax.f32 %v209, 0.0
  %v274 = vmax.f32 %v210, 0.0
  %v275 = vmax.f32 %v211, 0.0
  %v276 = vmax.f32 %v212, 0.0
  %v277 = vmax.f32 %v213, 0.0
  %v278 = vmax.f32 %v214, 0.0
  %v279 = vmax.f32 %v215, 0.0
  %v280 = vmax.f32 %v216, 0.0
  %v281 = vmax.f32 %v217, 0.0
  %v282 = vmax.f32 %v218, 0.0
  %v283 = vmax.f32 %v219, 0.0
  %284 = vst [vmem:[%s3] sm:$0xff] %v220
  %285 = vst [vmem:[%s3 + $0x8] sm:$0xff] %v221
  %286 = vst [vmem:[%s3 + $0x10] sm:$0xff] %v222
  %287 = vst [vmem:[%s3 + $0x18] sm:$0xff] %v223
  %288 = vst [vmem:[%s3 + $0x20] sm:$0xff] %v224
  %289 = vst [vmem:[%s3 + $0x28] sm:$0xff] %v225
  %290 = vst [vmem:[%s3 + $0x30] sm:$0xff] %v226
  %291 = vst [vmem:[%s3 + $0x38] sm:$0xff] %v227
  %292 = vst [vmem:[%s3 + $0x40] sm:$0xff] %v228
  %293 = vst [vmem:[%s3 + $0x48] sm:$0xff] %v229
  %294 = vst [vmem:[%s3 + $0x50] sm:$0xff] %v230
  %295 = vst [vmem:[%s3 + $0x58] sm:$0xff] %v231
  %296 = vst [vmem:[%s3 + $0x60] sm:$0xff] %v232
  %297 = vst [vmem:[%s3 + $0x68] sm:$0xff] %v233
  %298 = vst [vmem:[%s3 + $0x70] sm:$0xff] %v234
  %299 = vst [vmem:[%s3 + $0x78] sm:$0xff] %v235
  %300 = vst [vmem:[%s3 + $0x80] sm:$0xff] %v236
  %301 = vst [vmem:[%s3 + $0x88] sm:$0xff] %v237
  %302 = vst [vmem:[%s3 + $0x90] sm:$0xff] %v238
  %303 = vst [vmem:[%s3 + $0x98] sm:$0xff] %v239
  %304 = vst [vmem:[%s3 + $0xa0] sm:$0xff] %v240
  %305 = vst [vmem:[%s3 + $0xa8] sm:$0xff] %v241
  %306 = vst [vmem:[%s3 + $0xb0] sm:$0xff] %v242
  %307 = vst [vmem:[%s3 + $0xb8] sm:$0xff] %v243
  %308 = vst [vmem:[%s3 + $0xc0] sm:$0xff] %v244
  %309 = vst [vmem:[%s3 + $0xc8] sm:$0xff] %v245
  %310 = vst [vmem:[%s3 + $0xd0] sm:$0xff] %v246
  %311 = vst [vmem:[%s3 + $0xd8] sm:$0xff] %v247
  %312 = vst [vmem:[%s3 + $0xe0] sm:$0xff] %v248
  %313 = vst [vmem:[%s3 + $0xe8] sm:$0xff] %v249
  %314 = vst [vmem:[%s3 + $0xf0] sm:$0xff] %v250
  %315 = vst [vmem:[%s3 + $0xf8] sm:$0xff] %v251
  %316 = vst [vmem:[%s3 + $0x100] sm:$0xff] %v252
  %317 = vst [vmem:[%s3 + $0x108] sm:$0xff] %v253
  %318 = vst [vmem:[%s3 + $0x110] sm:$0xff] %v254
  %319 = vst [vmem:[%s3 + $0x118] sm:$0xff] %v255
  %320 = vst [vmem:[%s3 + $0x120] sm:$0xff] %v256
  %321 = vst [vmem:[%s3 + $0x128] sm:$0xff] %v257
  %322 = vst [vmem:[%s3 + $0x130] sm:$0xff] %v258
  %323 = vst [vmem:[%s3 + $0x138] sm:$0xff] %v259
  %324 = vst [vmem:[%s3 + $0x140] sm:$0xff] %v260
  %325 = vst [vmem:[%s3 + $0x148] sm:$0xff] %v261
  %326 = vst [vmem:[%s3 + $0x150] sm:$0xff] %v262
  %327 = vst [vmem:[%s3 + $0x158] sm:$0xff] %v263
  %328 = vst [vmem:[%s3 + $0x160] sm:$0xff] %v264
  %329 = vst [vmem:[%s3 + $0x168] sm:$0xff] %v265
  %330 = vst [vmem:[%s3 + $0x170] sm:$0xff] %v266
  %331 = vst [vmem:[%s3 + $0x178] sm:$0xff] %v267
  %332 = vst [vmem:[%s3 + $0x180] sm:$0xff] %v268
  %333 = vst [vmem:[%s3 + $0x188] sm:$0xff] %v269
  %334 = vst [vmem:[%s3 + $0x190] sm:$0xff] %v270
  %335 = vst [vmem:[%s3 + $0x198] sm:$0xff] %v271
  %336 = vst [vmem:[%s3 + $0x1a0] sm:$0xff] %v272
  %337 = vst [vmem:[%s3 + $0x1a8] sm:$0xff] %v273
  %338 = vst [vmem:[%s3 + $0x1b0] sm:$0xff] %v274
  %339 = vst [vmem:[%s3 + $0x1b8] sm:$0xff] %v275
  %340 = vst [vmem:[%s3 + $0x1c0] sm:$0xff] %v276
  %341 = vst [vmem:[%s3 + $0x1c8] sm:$0xff] %v277
  %342 = vst [vmem:[%s3 + $0x1d0] sm:$0xff] %v278
  %343 = vst [vmem:[%s3 + $0x1d8] sm:$0xff] %v279
  %344 = vst [vmem:[%s3 + $0x1e0] sm:$0xff] %v280
  %345 = vst [vmem:[%s3 + $0x1e8] sm:$0xff] %v281
  %346 = vst [vmem:[%s3 + $0x1f0] sm:$0xff] %v282
  %347 = vst [vmem:[%s3 + $0x1f8] sm:$0xff] %v283
  // Predicated region
  $region14: #{vgg_block_pallas.5} parent=0 // pred_check
    _
  $region15: #{vgg_block_pallas.5} parent=0 // pred_check_branch
    %349 = sbr.rel (0) target = $region17
  $region16: #{vgg_block_pallas.5} parent=0 // pred_region
    _
  $region17: #{vgg_block_pallas.5} parent=0 // pred_fallthru
    _
  // Predicated region
  $region18: #{vgg_block_pallas.5} parent=0 // pred_check
    _
  $region19: #{vgg_block_pallas.5} parent=0 // pred_check_branch
    %351 = sbr.rel (0) target = $region21
  $region20: #{vgg_block_pallas.5} parent=0 // pred_region
    _
  $region21: #{vgg_block_pallas.5} parent=0 // pred_fallthru
    _

// kernel: vgg_block_pallas.3
$region0: #{vgg_block_pallas.3}
  #allocation0 [shape = 'u32[]', space=smem, size = 0x4, offset = 0x4, fixed_abs, tag = 'smem constant byte address 0x4 - core index']
  #allocation1 [shape = 'u32[144,128]{1,0:T(1,128)}', space=vmem, size = 0x12000, scoped, tag = 'internal scratch']
  #allocation2 [shape = 'bf16[10,18,128]{2,1,0:T(8,128)(2,1)}', space=vmem, size = 0xf000, scoped, tag = 'scratch operand']
  %s0 = inlined_call_operand.vmem [shape: bf16[4,10,18,128], index: 0, kind: input, shape index: {}]
  %s1 = inlined_call_operand.vmem [shape: bf16[3,3,128,128], index: 1, kind: input, shape index: {}]
  %s2 = inlined_call_operand.vmem [shape: f32[1,128], index: 2, kind: input, shape index: {}]
  %s3 = inlined_call_operand.vmem [shape: f32[4,8,16,128], index: 3, kind: output, shape index: {0}]
  %s4 = inlined_call_operand.vmem [shape: f32[4,2,128], index: 4, kind: output, shape index: {1}]
  %5 = xla_tuple %s3, %s4
  %s6 = sld [smem:[#allocation0]]
  $region53: #{vgg_block_pallas.3} parent=0
    _
  %s8 = ssub.s32 1, %s6
  %s9 = scalar_select 0, %s8, %s6
  loop: start=0, step=1, limit=6
  $region2: #{vgg_block_pallas.3} parent=0 // loop_pre_header
    _
  $region3: #{vgg_block_pallas.3} parent=0 // loop_header
    %s11 = sphi 0, %s15
    %p12 = scmp.ge.s32.totalorder %s11, 6
    %s21 = sphi 0, %s23
    %s24 = sphi 0, %s21
    %s25 = sphi 0, %s24
    %s41 = sphi 0, %s25
    %s45 = sphi 0, %s45
    %s47 = sphi 0, %s45
    %s48 = sphi 0, %s47
    %s62 = sphi 0, %s48
    %s66 = sphi 0, %s66
    %s68 = sphi 0, %s66
    %s69 = sphi 0, %s68
    %s83 = sphi 0, %s69
    %s89 = sphi 0, %s91
    %s92 = sphi 0, %s89
    %s93 = sphi 0, %s92
    %s109 = sphi 0, %s93
    %s115 = sphi 0, %s117
    %s118 = sphi 0, %s115
    %s119 = sphi 0, %s118
    %s135 = sphi 0, %s119
  $region4: #{vgg_block_pallas.3} parent=0 // loop_header_branch
    %14 = sbr.rel (%p12) target = $region8
  $region5: #{vgg_block_pallas.3} parent=0 // loop_body
    %s16 = ssub.s32 %s11, 1
    %s17 = ssub.s32 %s11, 2
    %s18 = sadd.s32 %s11, 1
    %s19 = ssub.s32 %s11, %s18
    %p20 = scmp.eq.s32.totalorder %s19, 0
    %s22 = sadd.s32 %s21, 1
    %s23 = scalar_select %p20, %s21, %s22
    %p26 = pneg %p20
    %p27 = scmp.eq.s32.totalorder %s11, 3
    %p28 = por %p26, %p27
    %p29 = scmp.ne.s32.totalorder %s21, %s24
    %p30 = scmp.eq.s32.totalorder %s11, 0
    %p31 = por %p29, %p30
    %p32 = scmp.ne.s32.totalorder %s21, %s24
    %p33 = scmp.eq.s32.totalorder %s16, 3
    %p34 = por %p32, %p33
    %p35 = scmp.ne.s32.totalorder %s24, %s25
    %p36 = scmp.eq.s32.totalorder %s16, 0
    %p37 = por %p35, %p36
    %p38 = scmp.ne.s32.totalorder %s24, %s25
    %p39 = scmp.eq.s32.totalorder %s17, 3
    %p40 = por %p38, %p39
    %p42 = scmp.ne.s32.totalorder %s25, %s41
    %p43 = scmp.eq.s32.totalorder %s17, 0
    %p44 = por %p42, %p43
    %s46 = sadd.s32 %s45, 1
    %p49 = scmp.eq.s32.totalorder %s11, 3
    %p50 = scmp.ne.s32.totalorder %s45, %s47
    %p51 = scmp.eq.s32.totalorder %s11, 0
    %p52 = por %p50, %p51
    %p53 = scmp.ne.s32.totalorder %s45, %s47
    %p54 = scmp.eq.s32.totalorder %s16, 3
    %p55 = por %p53, %p54
    %p56 = scmp.ne.s32.totalorder %s47, %s48
    %p57 = scmp.eq.s32.totalorder %s16, 0
    %p58 = por %p56, %p57
    %p59 = scmp.ne.s32.totalorder %s47, %s48
    %p60 = scmp.eq.s32.totalorder %s17, 3
    %p61 = por %p59, %p60
    %p63 = scmp.ne.s32.totalorder %s48, %s62
    %p64 = scmp.eq.s32.totalorder %s17, 0
    %p65 = por %p63, %p64
    %s67 = sadd.s32 %s66, 1
    %p70 = scmp.eq.s32.totalorder %s11, 3
    %p71 = scmp.ne.s32.totalorder %s66, %s68
    %p72 = scmp.eq.s32.totalorder %s11, 0
    %p73 = por %p71, %p72
    %p74 = scmp.ne.s32.totalorder %s66, %s68
    %p75 = scmp.eq.s32.totalorder %s16, 3
    %p76 = por %p74, %p75
    %p77 = scmp.ne.s32.totalorder %s68, %s69
    %p78 = scmp.eq.s32.totalorder %s16, 0
    %p79 = por %p77, %p78
    %p80 = scmp.ne.s32.totalorder %s68, %s69
    %p81 = scmp.eq.s32.totalorder %s17, 3
    %p82 = por %p80, %p81
    %p84 = scmp.ne.s32.totalorder %s69, %s83
    %p85 = scmp.eq.s32.totalorder %s17, 0
    %p86 = por %p84, %p85
    %s87 = ssub.s32 %s11, %s18
    %p88 = scmp.eq.s32.totalorder %s87, 0
    %s90 = sadd.s32 %s89, 1
    %s91 = scalar_select %p88, %s89, %s90
    %p94 = pneg %p88
    %p95 = scmp.eq.s32.totalorder %s11, 3
    %p96 = por %p94, %p95
    %p97 = scmp.ne.s32.totalorder %s89, %s92
    %p98 = scmp.eq.s32.totalorder %s11, 0
    %p99 = por %p97, %p98
    %p100 = scmp.ne.s32.totalorder %s89, %s92
    %p101 = scmp.eq.s32.totalorder %s16, 3
    %p102 = por %p100, %p101
    %p103 = scmp.ne.s32.totalorder %s92, %s93
    %p104 = scmp.eq.s32.totalorder %s16, 0
    %p105 = por %p103, %p104
    %p106 = scmp.ne.s32.totalorder %s92, %s93
    %p107 = scmp.eq.s32.totalorder %s17, 3
    %p108 = por %p106, %p107
    %p110 = scmp.ne.s32.totalorder %s93, %s109
    %p111 = scmp.eq.s32.totalorder %s17, 0
    %p112 = por %p110, %p111
    %s113 = ssub.s32 %s11, %s18
    %p114 = scmp.eq.s32.totalorder %s113, 0
    %s116 = sadd.s32 %s115, 1
    %s117 = scalar_select %p114, %s115, %s116
    %p120 = pneg %p114
    %p121 = scmp.eq.s32.totalorder %s11, 3
    %p122 = por %p120, %p121
    %p123 = scmp.ne.s32.totalorder %s115, %s118
    %p124 = scmp.eq.s32.totalorder %s11, 0
    %p125 = por %p123, %p124
    %p126 = scmp.ne.s32.totalorder %s115, %s118
    %p127 = scmp.eq.s32.totalorder %s16, 3
    %p128 = por %p126, %p127
    %p129 = scmp.ne.s32.totalorder %s118, %s119
    %p130 = scmp.eq.s32.totalorder %s16, 0
    %p131 = por %p129, %p130
    %p132 = scmp.ne.s32.totalorder %s118, %s119
    %p133 = scmp.eq.s32.totalorder %s17, 3
    %p134 = por %p132, %p133
    %p136 = scmp.ne.s32.totalorder %s119, %s135
    %p137 = scmp.eq.s32.totalorder %s17, 0
    %p138 = por %p136, %p137
    %p139 = scmp.le.s32.totalorder 1, %s11
    %p140 = scmp.lt.s32.totalorder %s11, 5
    %p141 = pnand %p139, %p140
    %p142 = pneg %p141
    // Predicated region
    $region9: #{vgg_block_pallas.3} parent=5 // pred_check
      _
    $region10: #{vgg_block_pallas.3} parent=5 // pred_check_branch
      %144 = sbr.rel (%p141) target = $region12
    $region11: #{vgg_block_pallas.3} parent=5 // pred_region
      %s145 = ssub.s32 %s11, 1
      // Predicated region
      $region13: #{vgg_block_pallas.3} parent=11 // pred_check
        %p146 = pneg %p58
      $region14: #{vgg_block_pallas.3} parent=11 // pred_check_branch
        %148 = sbr.rel (%p146) target = $region16
      $region15: #{vgg_block_pallas.3} parent=11 // pred_region
        _
      $region16: #{vgg_block_pallas.3} parent=11 // pred_fallthru
        _
      // Predicated region
      $region17: #{vgg_block_pallas.3} parent=11 // pred_check
        %p149 = pneg %p79
      $region18: #{vgg_block_pallas.3} parent=11 // pred_check_branch
        %151 = sbr.rel (%p149) target = $region20
      $region19: #{vgg_block_pallas.3} parent=11 // pred_region
        _
      $region20: #{vgg_block_pallas.3} parent=11 // pred_fallthru
        _
    $region12: #{vgg_block_pallas.3} parent=5 // pred_fallthru
      _
    %p152 = scmp.lt.s32.totalorder %s11, 4
    // Predicated region
    $region21: #{vgg_block_pallas.3} parent=5 // pred_check
      %p153 = pneg %p152
    $region22: #{vgg_block_pallas.3} parent=5 // pred_check_branch
      %155 = sbr.rel (%p153) target = $region24
    $region23: #{vgg_block_pallas.3} parent=5 // pred_region
      // Predicated region
      $region25: #{vgg_block_pallas.3} parent=23 // pred_check
        %p156 = pneg %p31
      $region26: #{vgg_block_pallas.3} parent=23 // pred_check_branch
        %158 = sbr.rel (%p156) target = $region28
      $region27: #{vgg_block_pallas.3} parent=23 // pred_region
        %p159 = scmp.lt.s32.totalorder %s11, 3
        %s160 = scalar_select %p159, %s11, 3
        %s161 = smul.addr %s160, 30
        %s162 = smul.addr %s161, 4
        %s163 = scalar_lea.vmem %s0, %s162
      $region28: #{vgg_block_pallas.3} parent=23 // pred_fallthru
        _
    $region24: #{vgg_block_pallas.3} parent=5 // pred_fallthru
      _
    %p164 = scmp.le.s32.totalorder 1, %s11
    %p165 = scmp.lt.s32.totalorder %s11, 5
    %p166 = pnand %p164, %p165
    %p167 = pneg %p166
    // Predicated region
    $region29: #{vgg_block_pallas.3} parent=5 // pred_check
      _
    $region30: #{vgg_block_pallas.3} parent=5 // pred_check_branch
      %169 = sbr.rel (%p166) target = $region32
    $region31: #{vgg_block_pallas.3} parent=5 // pred_region
      %s170 = ssub.s32 %s11, 1
      %p171 = scmp.lt.s32.totalorder %s16, 3
      %s172 = scalar_select %p171, %s16, 3
      %s173 = smul.addr %s172, 30
      %s174 = smul.addr %s173, 4
      %s175 = scalar_lea.vmem %s0, %s174
      %p176 = pneg %p37
      %p177 = pneg %p34
      %p178 = pneg %p58
      %p179 = pneg %p55
      %p180 = pneg %p79
      %p181 = pneg %p76
      %p182 = pneg %p105
      %p183 = pneg %p102
      %p184 = scmp.lt.s32.totalorder %s16, 3
      %s185 = scalar_select %p184, %s16, 3
      %s186 = smul.addr %s185, 16
      %s187 = smul.addr %s186, 8
      %s188 = scalar_lea.vmem %s3, %s187
      %p189 = pneg %p131
      %p190 = pneg %p128
      %p191 = scmp.lt.s32.totalorder %s16, 3
      %s192 = scalar_select %p191, %s16, 3
      %s193 = smul.addr %s192, 2
      %s194 = scalar_lea.vmem %s4, %s193
      %p195 = scmp.lt.s32.totalorder %s16, 3
      %s196 = scalar_select %p195, %s16, 3
      %s197 = smul.addr %s196, 30
      %s198 = smul.addr %s197, 4
      %s199 = scalar_lea.vmem %s0, %s198
      %p200 = scmp.lt.s32.totalorder %s16, 3
      %s201 = scalar_select %p200, %s16, 3
      %s202 = smul.addr %s201, 16
      %s203 = smul.addr %s202, 8
      %s204 = scalar_lea.vmem %s3, %s203
      %p205 = scmp.lt.s32.totalorder %s16, 3
      %s206 = scalar_select %p205, %s16, 3
      %s207 = smul.addr %s206, 2
      %s208 = scalar_lea.vmem %s4, %s207
      %v210 = vld [vmem:[%s199] sm:$0xf]
      %v211 = vld [vmem:[%s199 + $0x4] sm:$0xf]
      %v212 = vld [vmem:[%s199 + $0x8] sm:$0x1]
      %v213 = vld [vmem:[%s199 + $0xc] sm:$0xf]
      %v214 = vld [vmem:[%s199 + $0x10] sm:$0xf]
      %v215 = vld [vmem:[%s199 + $0x14] sm:$0x1]
      %v216 = vld [vmem:[%s199 + $0x18] sm:$0xf]
      %v217 = vld [vmem:[%s199 + $0x1c] sm:$0xf]
      %v218 = vld [vmem:[%s199 + $0x20] sm:$0x1]
      %v219 = vld [vmem:[%s199 + $0x24] sm:$0xf]
      %v220 = vld [vmem:[%s199 + $0x28] sm:$0xf]
      %v221 = vld [vmem:[%s199 + $0x2c] sm:$0x1]
      %v222 = vld [vmem:[%s199 + $0x30] sm:$0xf]
      %v223 = vld [vmem:[%s199 + $0x34] sm:$0xf]
      %v224 = vld [vmem:[%s199 + $0x38] sm:$0x1]
      %v225 = vld [vmem:[%s199 + $0x3c] sm:$0xf]
      %v226 = vld [vmem:[%s199 + $0x40] sm:$0xf]
      %v227 = vld [vmem:[%s199 + $0x44] sm:$0x1]
      %v228 = vld [vmem:[%s199 + $0x48] sm:$0xf]
      %v229 = vld [vmem:[%s199 + $0x4c] sm:$0xf]
      %v230 = vld [vmem:[%s199 + $0x50] sm:$0x1]
      %v231 = vld [vmem:[%s199 + $0x54] sm:$0xf]
      %v232 = vld [vmem:[%s199 + $0x58] sm:$0xf]
      %v233 = vld [vmem:[%s199 + $0x5c] sm:$0x1]
      %v234 = vld [vmem:[%s199 + $0x60] sm:$0xf]
      %v235 = vld [vmem:[%s199 + $0x64] sm:$0xf]
      %v236 = vld [vmem:[%s199 + $0x68] sm:$0x1]
      %v237 = vld [vmem:[%s199 + $0x6c] sm:$0xf]
      %v238 = vld [vmem:[%s199 + $0x70] sm:$0xf]
      %v239 = vld [vmem:[%s199 + $0x74] sm:$0x1]
      %240 = vst [vmem:[#allocation2] sm:$0xf] %v210
      %241 = vst [vmem:[#allocation2 + $0x4] sm:$0xf] %v211
      %242 = vst [vmem:[#allocation2 + $0x8] sm:$0x1] %v212
      %243 = vst [vmem:[#allocation2 + $0xc] sm:$0xf] %v213
      %244 = vst [vmem:[#allocation2 + $0x10] sm:$0xf] %v214
      %245 = vst [vmem:[#allocation2 + $0x14] sm:$0x1] %v215
      %246 = vst [vmem:[#allocation2 + $0x18] sm:$0xf] %v216
      %247 = vst [vmem:[#allocation2 + $0x1c] sm:$0xf] %v217
      %248 = vst [vmem:[#allocation2 + $0x20] sm:$0x1] %v218
      %249 = vst [vmem:[#allocation2 + $0x24] sm:$0xf] %v219
      %250 = vst [vmem:[#allocation2 + $0x28] sm:$0xf] %v220
      %251 = vst [vmem:[#allocation2 + $0x2c] sm:$0x1] %v221
      %252 = vst [vmem:[#allocation2 + $0x30] sm:$0xf] %v222
      %253 = vst [vmem:[#allocation2 + $0x34] sm:$0xf] %v223
      %254 = vst [vmem:[#allocation2 + $0x38] sm:$0x1] %v224
      %255 = vst [vmem:[#allocation2 + $0x3c] sm:$0xf] %v225
      %256 = vst [vmem:[#allocation2 + $0x40] sm:$0xf] %v226
      %257 = vst [vmem:[#allocation2 + $0x44] sm:$0x1] %v227
      %258 = vst [vmem:[#allocation2 + $0x48] sm:$0xf] %v228
      %259 = vst [vmem:[#allocation2 + $0x4c] sm:$0xf] %v229
      %260 = vst [vmem:[#allocation2 + $0x50] sm:$0x1] %v230
      %261 = vst [vmem:[#allocation2 + $0x54] sm:$0xf] %v231
      %262 = vst [vmem:[#allocation2 + $0x58] sm:$0xf] %v232
      %263 = vst [vmem:[#allocation2 + $0x5c] sm:$0x1] %v233
      %264 = vst [vmem:[#allocation2 + $0x60] sm:$0xf] %v234
      %265 = vst [vmem:[#allocation2 + $0x64] sm:$0xf] %v235
      %266 = vst [vmem:[#allocation2 + $0x68] sm:$0x1] %v236
      %267 = vst [vmem:[#allocation2 + $0x6c] sm:$0xf] %v237
      %268 = vst [vmem:[#allocation2 + $0x70] sm:$0xf] %v238
      %269 = vst [vmem:[#allocation2 + $0x74] sm:$0x1] %v239
      %v270 = vld [vmem:[#allocation2] sm:$0xf]
      %v271 = vld [vmem:[#allocation2 + $0x4] sm:$0xf]
      %v272 = vld [vmem:[#allocation2 + $0xc] sm:$0xf]
      %v273 = vld [vmem:[#allocation2 + $0x10] sm:$0xf]
      %v274 = vld [vmem:[#allocation2 + $0x18] sm:$0xf]
      %v275 = vld [vmem:[#allocation2 + $0x1c] sm:$0xf]
      %v276 = vld [vmem:[#allocation2 + $0x24] sm:$0xf]
      %v277 = vld [vmem:[#allocation2 + $0x28] sm:$0xf]
      %v278 = vld [vmem:[#allocation2 + $0x30] sm:$0xf]
      %v279 = vld [vmem:[#allocation2 + $0x34] sm:$0xf]
      %v280 = vld [vmem:[#allocation2 + $0x3c] sm:$0xf]
      %v281 = vld [vmem:[#allocation2 + $0x40] sm:$0xf]
      %v282 = vld [vmem:[#allocation2 + $0x48] sm:$0xf]
      %v283 = vld [vmem:[#allocation2 + $0x4c] sm:$0xf]
      %v284 = vld [vmem:[#allocation2 + $0x54] sm:$0xf]
      %v285 = vld [vmem:[#allocation2 + $0x58] sm:$0xf]
      %v286 = vld [vmem:[%s1] sm:$0xf]
      %v287 = vld [vmem:[%s1 + $0x4] sm:$0xf]
      %v288 = vld [vmem:[%s1 + $0x8] sm:$0xf]
      %v289 = vld [vmem:[%s1 + $0xc] sm:$0xf]
      %v290 = vld [vmem:[%s1 + $0x10] sm:$0xf]
      %v291 = vld [vmem:[%s1 + $0x14] sm:$0xf]
      %v292 = vld [vmem:[%s1 + $0x18] sm:$0xf]
      %v293 = vld [vmem:[%s1 + $0x1c] sm:$0xf]
      %v294 = vld [vmem:[%s1 + $0x20] sm:$0xf]
      %v295 = vld [vmem:[%s1 + $0x24] sm:$0xf]
      %v296 = vld [vmem:[%s1 + $0x28] sm:$0xf]
      %v297 = vld [vmem:[%s1 + $0x2c] sm:$0xf]
      %v298 = vld [vmem:[%s1 + $0x30] sm:$0xf]
      %v299 = vld [vmem:[%s1 + $0x34] sm:$0xf]
      %v300 = vld [vmem:[%s1 + $0x38] sm:$0xf]
      %v301 = vld [vmem:[%s1 + $0x3c] sm:$0xf]
      %v302 = vld [vmem:[#allocation2 + $0x8] sm:$0x1]
      %v303 = vld [vmem:[#allocation2 + $0x14] sm:$0x1]
      %v304 = vld [vmem:[#allocation2 + $0x20] sm:$0x1]
      %v305 = vld [vmem:[#allocation2 + $0x2c] sm:$0x1]
      %v306 = vld [vmem:[#allocation2 + $0x38] sm:$0x1]
      %v307 = vld [vmem:[#allocation2 + $0x44] sm:$0x1]
      %v308 = vld [vmem:[#allocation2 + $0x50] sm:$0x1]
      %v309 = vld [vmem:[#allocation2 + $0x5c] sm:$0x1]
      %vm310 = vsmask.f32 3328
      %vm311 = vsmask.f32 7440
      %vm312 = vmor %vm310, %vm311
      %v314 = vshrl.u32 %v270, 16
      %v316 = vrot.slane %v314, 4
      %v317 = vshll.u32 %v270, 16
      %v319 = vrot.slane %v317, 5
      %v320 = vor.u32 %v316, %v319
      %v321 = vrot.slane %v320, 4
      %v323 = vshll.u32 %v271, 16
      %v325 = vrot.slane %v323, 5
      %v326 = vsel %vm312, %v321, %v325
      %v327 = vshrl.u32 %v271, 16
      %v329 = vrot.slane %v327, 4
      %v330 = vor.u32 %v329, %v325
      %v331 = vrot.slane %v330, 4
      %v333 = vshll.u32 %v302, 16
      %v335 = vrot.slane %v333, 5
      %v336 = vsel %vm312, %v331, %v335
      %v338 = vshrl.u32 %v272, 16
      %v340 = vrot.slane %v338, 4
      %v341 = vshll.u32 %v272, 16
      %v343 = vrot.slane %v341, 5
      %v344 = vor.u32 %v340, %v343
      %v345 = vrot.slane %v344, 4
      %v347 = vshll.u32 %v273, 16
      %v349 = vrot.slane %v347, 5
      %v350 = vsel %vm312, %v345, %v349
      %v351 = vshrl.u32 %v273, 16
      %v353 = vrot.slane %v351, 4
      %v354 = vor.u32 %v353, %v349
      %v355 = vrot.slane %v354, 4
      %v357 = vshll.u32 %v303, 16
      %v359 = vrot.slane %v357, 5
      %v360 = vsel %vm312, %v355, %v359
      %v362 = vshrl.u32 %v274, 16
      %v364 = vrot.slane %v362, 4
      %v365 = vshll.u32 %v274, 16
      %v367 = vrot.slane %v365, 5
      %v368 = vor.u32 %v364, %v367
      %v369 = vrot.slane %v368, 4
      %v371 = vshll.u32 %v275, 16
      %v373 = vrot.slane %v371, 5
      %v374 = vsel %vm312, %v369, %v373
      %v375 = vshrl.u32 %v275, 16
      %v377 = vrot.slane %v375, 4
      %v378 = vor.u32 %v377, %v373
      %v379 = vrot.slane %v378, 4
      %v381 = vshll.u32 %v304, 16
      %v383 = vrot.slane %v381, 5
      %v384 = vsel %vm312, %v379, %v383
      %v386 = vshrl.u32 %v276, 16
      %v388 = vrot.slane %v386, 4
      %v389 = vshll.u32 %v276, 16
      %v391 = vrot.slane %v389, 5
      %v392 = vor.u32 %v388, %v391
      %v393 = vrot.slane %v392, 4
      %v395 = vshll.u32 %v277, 16
      %v397 = vrot.slane %v395, 5
      %v398 = vsel %vm312, %v393, %v397
      %v399 = vshrl.u32 %v277, 16
      %v401 = vrot.slane %v399, 4
      %v402 = vor.u32 %v401, %v397
      %v403 = vrot.slane %v402, 4
      %v405 = vshll.u32 %v305, 16
      %v407 = vrot.slane %v405, 5
      %v408 = vsel %vm312, %v403, %v407
      %v410 = vshrl.u32 %v278, 16
      %v412 = vrot.slane %v410, 4
      %v413 = vshll.u32 %v278, 16
      %v415 = vrot.slane %v413, 5
      %v416 = vor.u32 %v412, %v415
      %v417 = vrot.slane %v416, 4
      %v419 = vshll.u32 %v279, 16
      %v421 = vrot.slane %v419, 5
      %v422 = vsel %vm312, %v417, %v421
      %v423 = vshrl.u32 %v279, 16
      %v425 = vrot.slane %v423, 4
      %v426 = vor.u32 %v425, %v421
      %v427 = vrot.slane %v426, 4
      %v429 = vshll.u32 %v306, 16
      %v431 = vrot.slane %v429, 5
      %v432 = vsel %vm312, %v427, %v431
      %v434 = vshrl.u32 %v280, 16
      %v436 = vrot.slane %v434, 4
      %v437 = vshll.u32 %v280, 16
      %v439 = vrot.slane %v437, 5
      %v440 = vor.u32 %v436, %v439
      %v441 = vrot.slane %v440, 4
      %v443 = vshll.u32 %v281, 16
      %v445 = vrot.slane %v443, 5
      %v446 = vsel %vm312, %v441, %v445
      %v447 = vshrl.u32 %v281, 16
      %v449 = vrot.slane %v447, 4
      %v450 = vor.u32 %v449, %v445
      %v451 = vrot.slane %v450, 4
      %v453 = vshll.u32 %v307, 16
      %v455 = vrot.slane %v453, 5
      %v456 = vsel %vm312, %v451, %v455
      %v458 = vshrl.u32 %v282, 16
      %v460 = vrot.slane %v458, 4
      %v461 = vshll.u32 %v282, 16
      %v463 = vrot.slane %v461, 5
      %v464 = vor.u32 %v460, %v463
      %v465 = vrot.slane %v464, 4
      %v467 = vshll.u32 %v283, 16
      %v469 = vrot.slane %v467, 5
      %v470 = vsel %vm312, %v465, %v469
      %v471 = vshrl.u32 %v283, 16
      %v473 = vrot.slane %v471, 4
      %v474 = vor.u32 %v473, %v469
      %v475 = vrot.slane %v474, 4
      %v477 = vshll.u32 %v308, 16
      %v479 = vrot.slane %v477, 5
      %v480 = vsel %vm312, %v475, %v479
      %v482 = vshrl.u32 %v284, 16
      %v484 = vrot.slane %v482, 4
      %v485 = vshll.u32 %v284, 16
      %v487 = vrot.slane %v485, 5
      %v488 = vor.u32 %v484, %v487
      %v489 = vrot.slane %v488, 4
      %v491 = vshll.u32 %v285, 16
      %v493 = vrot.slane %v491, 5
      %v494 = vsel %vm312, %v489, %v493
      %v495 = vshrl.u32 %v285, 16
      %v497 = vrot.slane %v495, 4
      %v498 = vor.u32 %v497, %v493
      %v499 = vrot.slane %v498, 4
      %v501 = vshll.u32 %v309, 16
      %v503 = vrot.slane %v501, 5
      %v504 = vsel %vm312, %v499, %v503
      %s505 = scalar_lea.vmem %s1, 64
      %v506 = vld [vmem:[%s505] sm:$0xf]
      %v507 = vld [vmem:[%s505 + $0x4] sm:$0xf]
      %v508 = vld [vmem:[%s505 + $0x8] sm:$0xf]
      %v509 = vld [vmem:[%s505 + $0xc] sm:$0xf]
      %v510 = vld [vmem:[%s505 + $0x10] sm:$0xf]
      %v511 = vld [vmem:[%s505 + $0x14] sm:$0xf]
      %v512 = vld [vmem:[%s505 + $0x18] sm:$0xf]
      %v513 = vld [vmem:[%s505 + $0x1c] sm:$0xf]
      %v514 = vld [vmem:[%s505 + $0x20] sm:$0xf]
      %v515 = vld [vmem:[%s505 + $0x24] sm:$0xf]
      %v516 = vld [vmem:[%s505 + $0x28] sm:$0xf]
      %v517 = vld [vmem:[%s505 + $0x2c] sm:$0xf]
      %v518 = vld [vmem:[%s505 + $0x30] sm:$0xf]
      %v519 = vld [vmem:[%s505 + $0x34] sm:$0xf]
      %v520 = vld [vmem:[%s505 + $0x38] sm:$0xf]
      %v521 = vld [vmem:[%s505 + $0x3c] sm:$0xf]
      %v522 = vunpack.c.l.b16 %v326
      %v523 = vunpack.c.l.b16 %v336
      %v524 = vunpack.c.l.b16 %v350
      %v525 = vunpack.c.l.b16 %v360
      %v526 = vunpack.c.l.b16 %v374
      %v527 = vunpack.c.l.b16 %v384
      %v528 = vunpack.c.l.b16 %v398
      %v529 = vunpack.c.l.b16 %v408
      %v530 = vunpack.c.l.b16 %v422
      %v531 = vunpack.c.l.b16 %v432
      %v532 = vunpack.c.l.b16 %v446
      %v533 = vunpack.c.l.b16 %v456
      %v534 = vunpack.c.l.b16 %v470
      %v535 = vunpack.c.l.b16 %v480
      %v536 = vunpack.c.l.b16 %v494
      %v537 = vunpack.c.l.b16 %v504
      %v538 = vpack.c.b16 %v523, %v522
      %v539 = vpack.c.b16 %v525, %v524
      %v540 = vpack.c.b16 %v527, %v526
      %v541 = vpack.c.b16 %v529, %v528
      %v542 = vpack.c.b16 %v531, %v530
      %v543 = vpack.c.b16 %v533, %v532
      %v544 = vpack.c.b16 %v535, %v534
      %v545 = vpack.c.b16 %v537, %v536
      %v570 = vunpack.c.l.b16 %v506
      %v571 = vunpack.c.l.b16 %v507
      %v572 = vunpack.c.l.b16 %v508
      %v573 = vunpack.c.l.b16 %v509
      %v574 = vunpack.c.l.b16 %v510
      %v575 = vunpack.c.l.b16 %v511
      %v576 = vunpack.c.l.b16 %v512
      %v577 = vunpack.c.l.b16 %v513
      %v578 = vunpack.c.l.b16 %v514
      %v579 = vunpack.c.l.b16 %v515
      %v580 = vunpack.c.l.b16 %v516
      %v581 = vunpack.c.l.b16 %v517
      %v582 = vunpack.c.l.b16 %v518
      %v583 = vunpack.c.l.b16 %v519
      %v584 = vunpack.c.l.b16 %v520
      %v585 = vunpack.c.l.b16 %v521
      %v586 = vpack.c.b16 %v571, %v570
      %v587 = vpack.c.b16 %v573, %v572
      %v588 = vpack.c.b16 %v575, %v574
      %v589 = vpack.c.b16 %v577, %v576
      %v590 = vpack.c.b16 %v579, %v578
      %v591 = vpack.c.b16 %v581, %v580
      %v592 = vpack.c.b16 %v583, %v582
      %v593 = vpack.c.b16 %v585, %v584
      %602 = vmatprep.subr.bf16.mxu0 0
      %603 = vmatpush1.bf16.msra.mxu0 %v593
      %604 = vmatprep.subr.bf16.mxu0 0
      %605 = vmatpush1.bf16.msra.mxu0 %v592
      %606 = vmatprep.subr.bf16.mxu0 0
      %607 = vmatpush1.bf16.msra.mxu0 %v591
      %608 = vmatprep.subr.bf16.mxu0 0
      %609 = vmatpush1.bf16.msra.mxu0 %v590
      %610 = vmatprep.subr.bf16.mxu0 0
      %611 = vmatpush1.bf16.msra.mxu0 %v589
      %612 = vmatprep.subr.bf16.mxu0 0
      %613 = vmatpush1.bf16.msra.mxu0 %v588
      %614 = vmatprep.subr.bf16.mxu0 0
      %615 = vmatpush1.bf16.msra.mxu0 %v587
      %616 = vmatprep.subr.bf16.mxu0 0
      %617 = vmatpush1.bf16.msra.mxu0 %v586
      %618 = vmatprep.subr.bf16.mxu0 0
      %619 = vmatpush2.bf16.msra.mxu0 0
      %620 = vmatprep.subr.bf16.mxu0 0
      %621 = vmatpush2.bf16.msra.mxu0 0
      %622 = vmatprep.subr.bf16.mxu0 0
      %623 = vmatpush2.bf16.msra.mxu0 0
      %624 = vmatprep.subr.bf16.mxu0 0
      %625 = vmatpush2.bf16.msra.mxu0 0
      %626 = vmatprep.subr.bf16.mxu0 0
      %627 = vmatpush2.bf16.msra.mxu0 0
      %628 = vmatprep.subr.bf16.mxu0 0
      %629 = vmatpush2.bf16.msra.mxu0 0
      %630 = vmatprep.subr.bf16.mxu0 0
      %631 = vmatpush2.bf16.msra.mxu0 0
      %632 = vmatprep.subr.bf16.mxu0 0
      %633 = vmatpush2.bf16.msra.mxu0 0
      %634 = vmatprep.mubr.bf16.mxu0 0
      %635 = vmatmul.mubr.bf16.gmra.mxu0 %v538
      %v636 = vpop.f32.mrf.mxu0
      %v637 = vadd.f32 0.0, %v636
      %v638 = vpop.f32.mrf.mxu0
      %v639 = vpop.f32.mrf.mxu0
      %v640 = vadd.f32 0.0, %v639
      %v641 = vpop.f32.mrf.mxu0
      %642 = vmatprep.mubr.bf16.mxu0 0
      %643 = vmatmul.mubr.bf16.gmra.mxu0 %v539
      %v644 = vpop.f32.mrf.mxu0
      %v645 = vadd.f32 0.0, %v644
      %v646 = vpop.f32.mrf.mxu0
      %v647 = vpop.f32.mrf.mxu0
      %v648 = vadd.f32 0.0, %v647
      %v649 = vpop.f32.mrf.mxu0
      %650 = vmatprep.mubr.bf16.mxu0 0
      %651 = vmatmul.mubr.bf16.gmra.mxu0 %v540
      %v652 = vpop.f32.mrf.mxu0
      %v653 = vadd.f32 0.0, %v652
      %v654 = vpop.f32.mrf.mxu0
      %v655 = vpop.f32.mrf.mxu0
      %v656 = vadd.f32 0.0, %v655
      %v657 = vpop.f32.mrf.mxu0
      %658 = vmatprep.mubr.bf16.mxu0 0
      %659 = vmatmul.mubr.bf16.gmra.mxu0 %v541
      %v660 = vpop.f32.mrf.mxu0
      %v661 = vadd.f32 0.0, %v660
      %v662 = vpop.f32.mrf.mxu0
      %v663 = vpop.f32.mrf.mxu0
      %v664 = vadd.f32 0.0, %v663
      %v665 = vpop.f32.mrf.mxu0
      %666 = vmatprep.mubr.bf16.mxu0 0
      %667 = vmatmul.mubr.bf16.gmra.mxu0 %v542
      %v668 = vpop.f32.mrf.mxu0
      %v669 = vadd.f32 0.0, %v668
      %v670 = vpop.f32.mrf.mxu0
      %v671 = vpop.f32.mrf.mxu0
      %v672 = vadd.f32 0.0, %v671
      %v673 = vpop.f32.mrf.mxu0
      %674 = vmatprep.mubr.bf16.mxu0 0
      %675 = vmatmul.mubr.bf16.gmra.mxu0 %v543
      %v676 = vpop.f32.mrf.mxu0
      %v677 = vadd.f32 0.0, %v676
      %v678 = vpop.f32.mrf.mxu0
      %v679 = vpop.f32.mrf.mxu0
      %v680 = vadd.f32 0.0, %v679
      %v681 = vpop.f32.mrf.mxu0
      %682 = vmatprep.mubr.bf16.mxu0 0
      %683 = vmatmul.mubr.bf16.gmra.mxu0 %v544
      %v684 = vpop.f32.mrf.mxu0
      %v685 = vadd.f32 0.0, %v684
      %v686 = vpop.f32.mrf.mxu0
      %v687 = vpop.f32.mrf.mxu0
      %v688 = vadd.f32 0.0, %v687
      %v689 = vpop.f32.mrf.mxu0
      %690 = vmatprep.mubr.bf16.mxu0 0
      %691 = vmatmul.mubr.bf16.gmra.mxu0 %v545
      %v692 = vpop.f32.mrf.mxu0
      %v693 = vadd.f32 0.0, %v692
      %v694 = vpop.f32.mrf.mxu0
      %v695 = vpop.f32.mrf.mxu0
      %v696 = vadd.f32 0.0, %v695
      %v697 = vpop.f32.mrf.mxu0
      %698 = vdwg.mxu0
      %v715 = vunpack.c.l.b16 %v270
      %v716 = vunpack.c.l.b16 %v271
      %v717 = vunpack.c.l.b16 %v272
      %v718 = vunpack.c.l.b16 %v273
      %v719 = vunpack.c.l.b16 %v274
      %v720 = vunpack.c.l.b16 %v275
      %v721 = vunpack.c.l.b16 %v276
      %v722 = vunpack.c.l.b16 %v277
      %v723 = vunpack.c.l.b16 %v278
      %v724 = vunpack.c.l.b16 %v279
      %v725 = vunpack.c.l.b16 %v280
      %v726 = vunpack.c.l.b16 %v281
      %v727 = vunpack.c.l.b16 %v282
      %v728 = vunpack.c.l.b16 %v283
      %v729 = vunpack.c.l.b16 %v284
      %v730 = vunpack.c.l.b16 %v285
      %v731 = vpack.c.b16 %v716, %v715
      %v732 = vpack.c.b16 %v718, %v717
      %v733 = vpack.c.b16 %v720, %v719
      %v734 = vpack.c.b16 %v722, %v721
      %v735 = vpack.c.b16 %v724, %v723
      %v736 = vpack.c.b16 %v726, %v725
      %v737 = vpack.c.b16 %v728, %v727
      %v738 = vpack.c.b16 %v730, %v729
      %v763 = vunpack.c.l.b16 %v286
      %v764 = vunpack.c.l.b16 %v287
      %v765 = vunpack.c.l.b16 %v288
      %v766 = vunpack.c.l.b16 %v289
      %v767 = vunpack.c.l.b16 %v290
      %v768 = vunpack.c.l.b16 %v291
      %v769 = vunpack.c.l.b16 %v292
      %v770 = vunpack.c.l.b16 %v293
      %v771 = vunpack.c.l.b16 %v294
      %v772 = vunpack.c.l.b16 %v295
      %v773 = vunpack.c.l.b16 %v296
      %v774 = vunpack.c.l.b16 %v297
      %v775 = vunpack.c.l.b16 %v298
      %v776 = vunpack.c.l.b16 %v299
      %v777 = vunpack.c.l.b16 %v300
      %v778 = vunpack.c.l.b16 %v301
      %v779 = vpack.c.b16 %v764, %v763
      %v780 = vpack.c.b16 %v766, %v765
      %v781 = vpack.c.b16 %v768, %v767
      %v782 = vpack.c.b16 %v770, %v769
      %v783 = vpack.c.b16 %v772, %v771
      %v784 = vpack.c.b16 %v774, %v773
      %v785 = vpack.c.b16 %v776, %v775
      %v786 = vpack.c.b16 %v778, %v777
      %795 = vmatprep.subr.bf16.mxu0 0
      %796 = vmatpush1.bf16.msra.mxu0 %v786
      %797 = vmatprep.subr.bf16.mxu0 0
      %798 = vmatpush1.bf16.msra.mxu0 %v785
      %799 = vmatprep.subr.bf16.mxu0 0
      %800 = vmatpush1.bf16.msra.mxu0 %v784
      %801 = vmatprep.subr.bf16.mxu0 0
      %802 = vmatpush1.bf16.msra.mxu0 %v783
      %803 = vmatprep.subr.bf16.mxu0 0
      %804 = vmatpush1.bf16.msra.mxu0 %v782
      %805 = vmatprep.subr.bf16.mxu0 0
      %806 = vmatpush1.bf16.msra.mxu0 %v781
      %807 = vmatprep.subr.bf16.mxu0 0
      %808 = vmatpush1.bf16.msra.mxu0 %v780
      %809 = vmatprep.subr.bf16.mxu0 0
      %810 = vmatpush1.bf16.msra.mxu0 %v779
      %811 = vmatprep.subr.bf16.mxu0 0
      %812 = vmatpush2.bf16.msra.mxu0 0
      %813 = vmatprep.subr.bf16.mxu0 0
      %814 = vmatpush2.bf16.msra.mxu0 0
      %815 = vmatprep.subr.bf16.mxu0 0
      %816 = vmatpush2.bf16.msra.mxu0 0
      %817 = vmatprep.subr.bf16.mxu0 0
      %818 = vmatpush2.bf16.msra.mxu0 0
      %819 = vmatprep.subr.bf16.mxu0 0
      %820 = vmatpush2.bf16.msra.mxu0 0
      %821 = vmatprep.subr.bf16.mxu0 0
      %822 = vmatpush2.bf16.msra.mxu0 0
      %823 = vmatprep.subr.bf16.mxu0 0
      %824 = vmatpush2.bf16.msra.mxu0 0
      %825 = vmatprep.subr.bf16.mxu0 0
      %826 = vmatpush2.bf16.msra.mxu0 0
      %827 = vmatprep.mubr.bf16.mxu0 0
      %828 = vmatmul.mubr.bf16.gmra.mxu0 %v731
      %v829 = vpop.f32.mrf.mxu0
      %v830 = vadd.f32 %v637, %v829
      %v831 = vpop.f32.mrf.mxu0
      %v832 = vpop.f32.mrf.mxu0
      %v833 = vadd.f32 %v640, %v832
      %v834 = vpop.f32.mrf.mxu0
      %835 = vmatprep.mubr.bf16.mxu0 0
      %836 = vmatmul.mubr.bf16.gmra.mxu0 %v732
      %v837 = vpop.f32.mrf.mxu0
      %v838 = vadd.f32 %v645, %v837
      %v839 = vpop.f32.mrf.mxu0
      %v840 = vpop.f32.mrf.mxu0
      %v841 = vadd.f32 %v648, %v840
      %v842 = vpop.f32.mrf.mxu0
      %843 = vmatprep.mubr.bf16.mxu0 0
      %844 = vmatmul.mubr.bf16.gmra.mxu0 %v733
      %v845 = vpop.f32.mrf.mxu0
      %v846 = vadd.f32 %v653, %v845
      %v847 = vpop.f32.mrf.mxu0
      %v848 = vpop.f32.mrf.mxu0
      %v849 = vadd.f32 %v656, %v848
      %v850 = vpop.f32.mrf.mxu0
      %851 = vmatprep.mubr.bf16.mxu0 0
      %852 = vmatmul.mubr.bf16.gmra.mxu0 %v734
      %v853 = vpop.f32.mrf.mxu0
      %v854 = vadd.f32 %v661, %v853
      %v855 = vpop.f32.mrf.mxu0
      %v856 = vpop.f32.mrf.mxu0
      %v857 = vadd.f32 %v664, %v856
      %v858 = vpop.f32.mrf.mxu0
      %859 = vmatprep.mubr.bf16.mxu0 0
      %860 = vmatmul.mubr.bf16.gmra.mxu0 %v735
      %v861 = vpop.f32.mrf.mxu0
      %v862 = vadd.f32 %v669, %v861
      %v863 = vpop.f32.mrf.mxu0
      %v864 = vpop.f32.mrf.mxu0
      %v865 = vadd.f32 %v672, %v864
      %v866 = vpop.f32.mrf.mxu0
      %867 = vmatprep.mubr.bf16.mxu0 0
      %868 = vmatmul.mubr.bf16.gmra.mxu0 %v736
      %v869 = vpop.f32.mrf.mxu0
      %v870 = vadd.f32 %v677, %v869
      %v871 = vpop.f32.mrf.mxu0
      %v872 = vpop.f32.mrf.mxu0
      %v873 = vadd.f32 %v680, %v872
      %v874 = vpop.f32.mrf.mxu0
      %875 = vmatprep.mubr.bf16.mxu0 0
      %876 = vmatmul.mubr.bf16.gmra.mxu0 %v737
      %v877 = vpop.f32.mrf.mxu0
      %v878 = vadd.f32 %v685, %v877
      %v879 = vpop.f32.mrf.mxu0
      %v880 = vpop.f32.mrf.mxu0
      %v881 = vadd.f32 %v688, %v880
      %v882 = vpop.f32.mrf.mxu0
      %883 = vmatprep.mubr.bf16.mxu0 0
      %884 = vmatmul.mubr.bf16.gmra.mxu0 %v738
      %v885 = vpop.f32.mrf.mxu0
      %v886 = vadd.f32 %v693, %v885
      %v887 = vpop.f32.mrf.mxu0
      %v888 = vpop.f32.mrf.mxu0
      %v889 = vadd.f32 %v696, %v888
      %v890 = vpop.f32.mrf.mxu0
      %891 = vdwg.mxu0
      %v892 = vld [vmem:[#allocation2] sm:$0xe]
      %v893 = vld [vmem:[#allocation2 + $0xc] sm:$0xe]
      %v894 = vld [vmem:[#allocation2 + $0x18] sm:$0xe]
      %v895 = vld [vmem:[#allocation2 + $0x24] sm:$0xe]
      %v896 = vld [vmem:[#allocation2 + $0x30] sm:$0xe]
      %v897 = vld [vmem:[#allocation2 + $0x3c] sm:$0xe]
      %v898 = vld [vmem:[#allocation2 + $0x48] sm:$0xe]
      %v899 = vld [vmem:[#allocation2 + $0x54] sm:$0xe]
      %vm916 = vcmask 1042432
      %vm917 = vcmask 1046532
      %vm918 = vmor %vm916, %vm917
      %v919 = vrot.slane %v892, 5
      %v920 = vrot.slane %v919, 4
      %v921 = vrot.slane %v271, 5
      %v922 = vsel %vm918, %v920, %v921
      %v923 = vrot.slane %v921, 4
      %v924 = vrot.slane %v302, 5
      %v925 = vsel %vm918, %v923, %v924
      %v926 = vrot.slane %v893, 5
      %v927 = vrot.slane %v926, 4
      %v928 = vrot.slane %v273, 5
      %v929 = vsel %vm918, %v927, %v928
      %v930 = vrot.slane %v928, 4
      %v931 = vrot.slane %v303, 5
      %v932 = vsel %vm918, %v930, %v931
      %v933 = vrot.slane %v894, 5
      %v934 = vrot.slane %v933, 4
      %v935 = vrot.slane %v275, 5
      %v936 = vsel %vm918, %v934, %v935
      %v937 = vrot.slane %v935, 4
      %v938 = vrot.slane %v304, 5
      %v939 = vsel %vm918, %v937, %v938
      %v940 = vrot.slane %v895, 5
      %v941 = vrot.slane %v940, 4
      %v942 = vrot.slane %v277, 5
      %v943 = vsel %vm918, %v941, %v942
      %v944 = vrot.slane %v942, 4
      %v945 = vrot.slane %v305, 5
      %v946 = vsel %vm918, %v944, %v945
      %v947 = vrot.slane %v896, 5
      %v948 = vrot.slane %v947, 4
      %v949 = vrot.slane %v279, 5
      %v950 = vsel %vm918, %v948, %v949
      %v951 = vrot.slane %v949, 4
      %v952 = vrot.slane %v306, 5
      %v953 = vsel %vm918, %v951, %v952
      %v954 = vrot.slane %v897, 5
      %v955 = vrot.slane %v954, 4
      %v956 = vrot.slane %v281, 5
      %v957 = vsel %vm918, %v955, %v956
      %v958 = vrot.slane %v956, 4
      %v959 = vrot.slane %v307, 5
      %v960 = vsel %vm918, %v958, %v959
      %v961 = vrot.slane %v898, 5
      %v962 = vrot.slane %v961, 4
      %v963 = vrot.slane %v283, 5
      %v964 = vsel %vm918, %v962, %v963
      %v965 = vrot.slane %v963, 4
      %v966 = vrot.slane %v308, 5
      %v967 = vsel %vm918, %v965, %v966
      %v968 = vrot.slane %v899, 5
      %v969 = vrot.slane %v968, 4
      %v970 = vrot.slane %v285, 5
      %v971 = vsel %vm918, %v969, %v970
      %v972 = vrot.slane %v970, 4
      %v973 = vrot.slane %v309, 5
      %v974 = vsel %vm918, %v972, %v973
      %s975 = scalar_lea.vmem %s1, 128
      %v976 = vld [vmem:[%s975] sm:$0xf]
      %v977 = vld [vmem:[%s975 + $0x4] sm:$0xf]
      %v978 = vld [vmem:[%s975 + $0x8] sm:$0xf]
      %v979 = vld [vmem:[%s975 + $0xc] sm:$0xf]
      %v980 = vld [vmem:[%s975 + $0x10] sm:$0xf]
      %v981 = vld [vmem:[%s975 + $0x14] sm:$0xf]
      %v982 = vld [vmem:[%s975 + $0x18] sm:$0xf]
      %v983 = vld [vmem:[%s975 + $0x1c] sm:$0xf]
      %v984 = vld [vmem:[%s975 + $0x20] sm:$0xf]
      %v985 = vld [vmem:[%s975 + $0x24] sm:$0xf]
      %v986 = vld [vmem:[%s975 + $0x28] sm:$0xf]
      %v987 = vld [vmem:[%s975 + $0x2c] sm:$0xf]
      %v988 = vld [vmem:[%s975 + $0x30] sm:$0xf]
      %v989 = vld [vmem:[%s975 + $0x34] sm:$0xf]
      %v990 = vld [vmem:[%s975 + $0x38] sm:$0xf]
      %v991 = vld [vmem:[%s975 + $0x3c] sm:$0xf]
      %v992 = vunpack.c.l.b16 %v922
      %v993 = vunpack.c.l.b16 %v925
      %v994 = vunpack.c.l.b16 %v929
      %v995 = vunpack.c.l.b16 %v932
      %v996 = vunpack.c.l.b16 %v936
      %v997 = vunpack.c.l.b16 %v939
      %v998 = vunpack.c.l.b16 %v943
      %v999 = vunpack.c.l.b16 %v946
      %v1000 = vunpack.c.l.b16 %v950
      %v1001 = vunpack.c.l.b16 %v953
      %v1002 = vunpack.c.l.b16 %v957
      %v1003 = vunpack.c.l.b16 %v960
      %v1004 = vunpack.c.l.b16 %v964
      %v1005 = vunpack.c.l.b16 %v967
      %v1006 = vunpack.c.l.b16 %v971
      %v1007 = vunpack.c.l.b16 %v974
      %v1008 = vpack.c.b16 %v993, %v992
      %v1009 = vpack.c.b16 %v995, %v994
      %v1010 = vpack.c.b16 %v997, %v996
      %v1011 = vpack.c.b16 %v999, %v998
      %v1012 = vpack.c.b16 %v1001, %v1000
      %v1013 = vpack.c.b16 %v1003, %v1002
      %v1014 = vpack.c.b16 %v1005, %v1004
      %v1015 = vpack.c.b16 %v1007, %v1006
      %v1040 = vunpack.c.l.b16 %v976
      %v1041 = vunpack.c.l.b16 %v977
      %v1042 = vunpack.c.l.b16 %v978
      %v1043 = vunpack.c.l.b16 %v979
      %v1044 = vunpack.c.l.b16 %v980
      %v1045 = vunpack.c.l.b16 %v981
      %v1046 = vunpack.c.l.b16 %v982
      %v1047 = vunpack.c.l.b16 %v983
      %v1048 = vunpack.c.l.b16 %v984
      %v1049 = vunpack.c.l.b16 %v985
      %v1050 = vunpack.c.l.b16 %v986
      %v1051 = vunpack.c.l.b16 %v987
      %v1052 = vunpack.c.l.b16 %v988
      %v1053 = vunpack.c.l.b16 %v989
      %v1054 = vunpack.c.l.b16 %v990
      %v1055 = vunpack.c.l.b16 %v991
      %v1056 = vpack.c.b16 %v1041, %v1040
      %v1057 = vpack.c.b16 %v1043, %v1042
      %v1058 = vpack.c.b16 %v1045, %v1044
      %v1059 = vpack.c.b16 %v1047, %v1046
      %v1060 = vpack.c.b16 %v1049, %v1048
      %v1061 = vpack.c.b16 %v1051, %v1050
      %v1062 = vpack.c.b16 %v1053, %v1052
      %v1063 = vpack.c.b16 %v1055, %v1054
      %1072 = vmatprep.subr.bf16.mxu0 0
      %1073 = vmatpush1.bf16.msra.mxu0 %v1063
      %1074 = vmatprep.subr.bf16.mxu0 0
      %1075 = vmatpush1.bf16.msra.mxu0 %v1062
      %1076 = vmatprep.subr.bf16.mxu0 0
      %1077 = vmatpush1.bf16.msra.mxu0 %v1061
      %1078 = vmatprep.subr.bf16.mxu0 0
      %1079 = vmatpush1.bf16.msra.mxu0 %v1060
      %1080 = vmatprep.subr.bf16.mxu0 0
      %1081 = vmatpush1.bf16.msra.mxu0 %v1059
      %1082 = vmatprep.subr.bf16.mxu0 0
      %1083 = vmatpush1.bf16.msra.mxu0 %v1058
      %1084 = vmatprep.subr.bf16.mxu0 0
      %1085 = vmatpush1.bf16.msra.mxu0 %v1057
      %1086 = vmatprep.subr.bf16.mxu0 0
      %1087 = vmatpush1.bf16.msra.mxu0 %v1056
      %1088 = vmatprep.subr.bf16.mxu0 0
      %1089 = vmatpush2.bf16.msra.mxu0 0
      %1090 = vmatprep.subr.bf16.mxu0 0
      %1091 = vmatpush2.bf16.msra.mxu0 0
      %1092 = vmatprep.subr.bf16.mxu0 0
      %1093 = vmatpush2.bf16.msra.mxu0 0
      %1094 = vmatprep.subr.bf16.mxu0 0
      %1095 = vmatpush2.bf16.msra.mxu0 0
      %1096 = vmatprep.subr.bf16.mxu0 0
      %1097 = vmatpush2.bf16.msra.mxu0 0
      %1098 = vmatprep.subr.bf16.mxu0 0
      %1099 = vmatpush2.bf16.msra.mxu0 0
      %1100 = vmatprep.subr.bf16.mxu0 0
      %1101 = vmatpush2.bf16.msra.mxu0 0
      %1102 = vmatprep.subr.bf16.mxu0 0
      %1103 = vmatpush2.bf16.msra.mxu0 0
      %1104 = vmatprep.mubr.bf16.mxu0 0
      %1105 = vmatmul.mubr.bf16.gmra.mxu0 %v1008
      %v1106 = vpop.f32.mrf.mxu0
      %v1107 = vadd.f32 0.0, %v1106
      %v1108 = vpop.f32.mrf.mxu0
      %v1109 = vpop.f32.mrf.mxu0
      %v1110 = vadd.f32 0.0, %v1109
      %v1111 = vpop.f32.mrf.mxu0
      %1112 = vmatprep.mubr.bf16.mxu0 0
      %1113 = vmatmul.mubr.bf16.gmra.mxu0 %v1009
      %v1114 = vpop.f32.mrf.mxu0
      %v1115 = vadd.f32 0.0, %v1114
      %v1116 = vpop.f32.mrf.mxu0
      %v1117 = vpop.f32.mrf.mxu0
      %v1118 = vadd.f32 0.0, %v1117
      %v1119 = vpop.f32.mrf.mxu0
      %1120 = vmatprep.mubr.bf16.mxu0 0
      %1121 = vmatmul.mubr.bf16.gmra.mxu0 %v1010
      %v1122 = vpop.f32.mrf.mxu0
      %v1123 = vadd.f32 0.0, %v1122
      %v1124 = vpop.f32.mrf.mxu0
      %v1125 = vpop.f32.mrf.mxu0
      %v1126 = vadd.f32 0.0, %v1125
      %v1127 = vpop.f32.mrf.mxu0
      %1128 = vmatprep.mubr.bf16.mxu0 0
      %1129 = vmatmul.mubr.bf16.gmra.mxu0 %v1011
      %v1130 = vpop.f32.mrf.mxu0
      %v1131 = vadd.f32 0.0, %v1130
      %v1132 = vpop.f32.mrf.mxu0
      %v1133 = vpop.f32.mrf.mxu0
      %v1134 = vadd.f32 0.0, %v1133
      %v1135 = vpop.f32.mrf.mxu0
      %1136 = vmatprep.mubr.bf16.mxu0 0
      %1137 = vmatmul.mubr.bf16.gmra.mxu0 %v1012
      %v1138 = vpop.f32.mrf.mxu0
      %v1139 = vadd.f32 0.0, %v1138
      %v1140 = vpop.f32.mrf.mxu0
      %v1141 = vpop.f32.mrf.mxu0
      %v1142 = vadd.f32 0.0, %v1141
      %v1143 = vpop.f32.mrf.mxu0
      %1144 = vmatprep.mubr.bf16.mxu0 0
      %1145 = vmatmul.mubr.bf16.gmra.mxu0 %v1013
      %v1146 = vpop.f32.mrf.mxu0
      %v1147 = vadd.f32 0.0, %v1146
      %v1148 = vpop.f32.mrf.mxu0
      %v1149 = vpop.f32.mrf.mxu0
      %v1150 = vadd.f32 0.0, %v1149
      %v1151 = vpop.f32.mrf.mxu0
      %1152 = vmatprep.mubr.bf16.mxu0 0
      %1153 = vmatmul.mubr.bf16.gmra.mxu0 %v1014
      %v1154 = vpop.f32.mrf.mxu0
      %v1155 = vadd.f32 0.0, %v1154
      %v1156 = vpop.f32.mrf.mxu0
      %v1157 = vpop.f32.mrf.mxu0
      %v1158 = vadd.f32 0.0, %v1157
      %v1159 = vpop.f32.mrf.mxu0
      %1160 = vmatprep.mubr.bf16.mxu0 0
      %1161 = vmatmul.mubr.bf16.gmra.mxu0 %v1015
      %v1162 = vpop.f32.mrf.mxu0
      %v1163 = vadd.f32 0.0, %v1162
      %v1164 = vpop.f32.mrf.mxu0
      %v1165 = vpop.f32.mrf.mxu0
      %v1166 = vadd.f32 0.0, %v1165
      %v1167 = vpop.f32.mrf.mxu0
      %1168 = vdwg.mxu0
      %v1169 = vadd.f32 %v830, %v1107
      %v1170 = vadd.f32 %v833, %v1110
      %v1171 = vadd.f32 %v838, %v1115
      %v1172 = vadd.f32 %v841, %v1118
      %v1173 = vadd.f32 %v846, %v1123
      %v1174 = vadd.f32 %v849, %v1126
      %v1175 = vadd.f32 %v854, %v1131
      %v1176 = vadd.f32 %v857, %v1134
      %v1177 = vadd.f32 %v862, %v1139
      %v1178 = vadd.f32 %v865, %v1142
      %v1179 = vadd.f32 %v870, %v1147
      %v1180 = vadd.f32 %v873, %v1150
      %v1181 = vadd.f32 %v878, %v1155
      %v1182 = vadd.f32 %v881, %v1158
      %v1183 = vadd.f32 %v886, %v1163
      %v1184 = vadd.f32 %v889, %v1166
      %s1185 = scalar_lea.vmem [#allocation2], 12
      %v1186 = vld [vmem:[%s1185] sm:$0xf]
      %v1187 = vld [vmem:[%s1185 + $0x4] sm:$0xf]
      %v1188 = vld [vmem:[%s1185 + $0xc] sm:$0xf]
      %v1189 = vld [vmem:[%s1185 + $0x10] sm:$0xf]
      %v1190 = vld [vmem:[%s1185 + $0x18] sm:$0xf]
      %v1191 = vld [vmem:[%s1185 + $0x1c] sm:$0xf]
      %v1192 = vld [vmem:[%s1185 + $0x24] sm:$0xf]
      %v1193 = vld [vmem:[%s1185 + $0x28] sm:$0xf]
      %v1194 = vld [vmem:[%s1185 + $0x30] sm:$0xf]
      %v1195 = vld [vmem:[%s1185 + $0x34] sm:$0xf]
      %v1196 = vld [vmem:[%s1185 + $0x3c] sm:$0xf]
      %v1197 = vld [vmem:[%s1185 + $0x40] sm:$0xf]
      %v1198 = vld [vmem:[%s1185 + $0x48] sm:$0xf]
      %v1199 = vld [vmem:[%s1185 + $0x4c] sm:$0xf]
      %v1200 = vld [vmem:[%s1185 + $0x54] sm:$0xf]
      %v1201 = vld [vmem:[%s1185 + $0x58] sm:$0xf]
      %s1202 = scalar_lea.vmem %s1, 192
      %v1203 = vld [vmem:[%s1202] sm:$0xf]
      %v1204 = vld [vmem:[%s1202 + $0x4] sm:$0xf]
      %v1205 = vld [vmem:[%s1202 + $0x8] sm:$0xf]
      %v1206 = vld [vmem:[%s1202 + $0xc] sm:$0xf]
      %v1207 = vld [vmem:[%s1202 + $0x10] sm:$0xf]
      %v1208 = vld [vmem:[%s1202 + $0x14] sm:$0xf]
      %v1209 = vld [vmem:[%s1202 + $0x18] sm:$0xf]
      %v1210 = vld [vmem:[%s1202 + $0x1c] sm:$0xf]
      %v1211 = vld [vmem:[%s1202 + $0x20] sm:$0xf]
      %v1212 = vld [vmem:[%s1202 + $0x24] sm:$0xf]
      %v1213 = vld [vmem:[%s1202 + $0x28] sm:$0xf]
      %v1214 = vld [vmem:[%s1202 + $0x2c] sm:$0xf]
      %v1215 = vld [vmem:[%s1202 + $0x30] sm:$0xf]
      %v1216 = vld [vmem:[%s1202 + $0x34] sm:$0xf]
      %v1217 = vld [vmem:[%s1202 + $0x38] sm:$0xf]
      %v1218 = vld [vmem:[%s1202 + $0x3c] sm:$0xf]
      %v1235 = vunpack.c.l.b16 %v1186
      %v1236 = vunpack.c.l.b16 %v1187
      %v1237 = vunpack.c.l.b16 %v1188
      %v1238 = vunpack.c.l.b16 %v1189
      %v1239 = vunpack.c.l.b16 %v1190
      %v1240 = vunpack.c.l.b16 %v1191
      %v1241 = vunpack.c.l.b16 %v1192
      %v1242 = vunpack.c.l.b16 %v1193
      %v1243 = vunpack.c.l.b16 %v1194
      %v1244 = vunpack.c.l.b16 %v1195
      %v1245 = vunpack.c.l.b16 %v1196
      %v1246 = vunpack.c.l.b16 %v1197
      %v1247 = vunpack.c.l.b16 %v1198
      %v1248 = vunpack.c.l.b16 %v1199
      %v1249 = vunpack.c.l.b16 %v1200
      %v1250 = vunpack.c.l.b16 %v1201
      %v1251 = vpack.c.b16 %v1236, %v1235
      %v1252 = vpack.c.b16 %v1238, %v1237
      %v1253 = vpack.c.b16 %v1240, %v1239
      %v1254 = vpack.c.b16 %v1242, %v1241
      %v1255 = vpack.c.b16 %v1244, %v1243
      %v1256 = vpack.c.b16 %v1246, %v1245
      %v1257 = vpack.c.b16 %v1248, %v1247
      %v1258 = vpack.c.b16 %v1250, %v1249
      %v1283 = vunpack.c.l.b16 %v1203
      %v1284 = vunpack.c.l.b16 %v1204
      %v1285 = vunpack.c.l.b16 %v1205
      %v1286 = vunpack.c.l.b16 %v1206
      %v1287 = vunpack.c.l.b16 %v1207
      %v1288 = vunpack.c.l.b16 %v1208
      %v1289 = vunpack.c.l.b16 %v1209
      %v1290 = vunpack.c.l.b16 %v1210
      %v1291 = vunpack.c.l.b16 %v1211
      %v1292 = vunpack.c.l.b16 %v1212
      %v1293 = vunpack.c.l.b16 %v1213
      %v1294 = vunpack.c.l.b16 %v1214
      %v1295 = vunpack.c.l.b16 %v1215
      %v1296 = vunpack.c.l.b16 %v1216
      %v1297 = vunpack.c.l.b16 %v1217
      %v1298 = vunpack.c.l.b16 %v1218
      %v1299 = vpack.c.b16 %v1284, %v1283
      %v1300 = vpack.c.b16 %v1286, %v1285
      %v1301 = vpack.c.b16 %v1288, %v1287
      %v1302 = vpack.c.b16 %v1290, %v1289
      %v1303 = vpack.c.b16 %v1292, %v1291
      %v1304 = vpack.c.b16 %v1294, %v1293
      %v1305 = vpack.c.b16 %v1296, %v1295
      %v1306 = vpack.c.b16 %v1298, %v1297
      %1315 = vmatprep.subr.bf16.mxu0 0
      %1316 = vmatpush1.bf16.msra.mxu0 %v1306
      %1317 = vmatprep.subr.bf16.mxu0 0
      %1318 = vmatpush1.bf16.msra.mxu0 %v1305
      %1319 = vmatprep.subr.bf16.mxu0 0
      %1320 = vmatpush1.bf16.msra.mxu0 %v1304
      %1321 = vmatprep.subr.bf16.mxu0 0
      %1322 = vmatpush1.bf16.msra.mxu0 %v1303
      %1323 = vmatprep.subr.bf16.mxu0 0
      %1324 = vmatpush1.bf16.msra.mxu0 %v1302
      %1325 = vmatprep.subr.bf16.mxu0 0
      %1326 = vmatpush1.bf16.msra.mxu0 %v1301
      %1327 = vmatprep.subr.bf16.mxu0 0
      %1328 = vmatpush1.bf16.msra.mxu0 %v1300
      %1329 = vmatprep.subr.bf16.mxu0 0
      %1330 = vmatpush1.bf16.msra.mxu0 %v1299
      %1331 = vmatprep.subr.bf16.mxu0 0
      %1332 = vmatpush2.bf16.msra.mxu0 0
      %1333 = vmatprep.subr.bf16.mxu0 0
      %1334 = vmatpush2.bf16.msra.mxu0 0
      %1335 = vmatprep.subr.bf16.mxu0 0
      %1336 = vmatpush2.bf16.msra.mxu0 0
      %1337 = vmatprep.subr.bf16.mxu0 0
      %1338 = vmatpush2.bf16.msra.mxu0 0
      %1339 = vmatprep.subr.bf16.mxu0 0
      %1340 = vmatpush2.bf16.msra.mxu0 0
      %1341 = vmatprep.subr.bf16.mxu0 0
      %1342 = vmatpush2.bf16.msra.mxu0 0
      %1343 = vmatprep.subr.bf16.mxu0 0
      %1344 = vmatpush2.bf16.msra.mxu0 0
      %1345 = vmatprep.subr.bf16.mxu0 0
      %1346 = vmatpush2.bf16.msra.mxu0 0
      %1347 = vmatprep.mubr.bf16.mxu0 0
      %1348 = vmatmul.mubr.bf16.gmra.mxu0 %v1251
      %v1349 = vpop.f32.mrf.mxu0
      %v1350 = vadd.f32 0.0, %v1349
      %v1351 = vpop.f32.mrf.mxu0
      %v1352 = vpop.f32.mrf.mxu0
      %v1353 = vadd.f32 0.0, %v1352
      %v1354 = vpop.f32.mrf.mxu0
      %1355 = vmatprep.mubr.bf16.mxu0 0
      %1356 = vmatmul.mubr.bf16.gmra.mxu0 %v1252
      %v1357 = vpop.f32.mrf.mxu0
      %v1358 = vadd.f32 0.0, %v1357
      %v1359 = vpop.f32.mrf.mxu0
      %v1360 = vpop.f32.mrf.mxu0
      %v1361 = vadd.f32 0.0, %v1360
      %v1362 = vpop.f32.mrf.mxu0
      %1363 = vmatprep.mubr.bf16.mxu0 0
      %1364 = vmatmul.mubr.bf16.gmra.mxu0 %v1253
      %v1365 = vpop.f32.mrf.mxu0
      %v1366 = vadd.f32 0.0, %v1365
      %v1367 = vpop.f32.mrf.mxu0
      %v1368 = vpop.f32.mrf.mxu0
      %v1369 = vadd.f32 0.0, %v1368
      %v1370 = vpop.f32.mrf.mxu0
      %1371 = vmatprep.mubr.bf16.mxu0 0
      %1372 = vmatmul.mubr.bf16.gmra.mxu0 %v1254
      %v1373 = vpop.f32.mrf.mxu0
      %v1374 = vadd.f32 0.0, %v1373
      %v1375 = vpop.f32.mrf.mxu0
      %v1376 = vpop.f32.mrf.mxu0
      %v1377 = vadd.f32 0.0, %v1376
      %v1378 = vpop.f32.mrf.mxu0
      %1379 = vmatprep.mubr.bf16.mxu0 0
      %1380 = vmatmul.mubr.bf16.gmra.mxu0 %v1255
      %v1381 = vpop.f32.mrf.mxu0
      %v1382 = vadd.f32 0.0, %v1381
      %v1383 = vpop.f32.mrf.mxu0
      %v1384 = vpop.f32.mrf.mxu0
      %v1385 = vadd.f32 0.0, %v1384
      %v1386 = vpop.f32.mrf.mxu0
      %1387 = vmatprep.mubr.bf16.mxu0 0
      %1388 = vmatmul.mubr.bf16.gmra.mxu0 %v1256
      %v1389 = vpop.f32.mrf.mxu0
      %v1390 = vadd.f32 0.0, %v1389
      %v1391 = vpop.f32.mrf.mxu0
      %v1392 = vpop.f32.mrf.mxu0
      %v1393 = vadd.f32 0.0, %v1392
      %v1394 = vpop.f32.mrf.mxu0
      %1395 = vmatprep.mubr.bf16.mxu0 0
      %1396 = vmatmul.mubr.bf16.gmra.mxu0 %v1257
      %v1397 = vpop.f32.mrf.mxu0
      %v1398 = vadd.f32 0.0, %v1397
      %v1399 = vpop.f32.mrf.mxu0
      %v1400 = vpop.f32.mrf.mxu0
      %v1401 = vadd.f32 0.0, %v1400
      %v1402 = vpop.f32.mrf.mxu0
      %1403 = vmatprep.mubr.bf16.mxu0 0
      %1404 = vmatmul.mubr.bf16.gmra.mxu0 %v1258
      %v1405 = vpop.f32.mrf.mxu0
      %v1406 = vadd.f32 0.0, %v1405
      %v1407 = vpop.f32.mrf.mxu0
      %v1408 = vpop.f32.mrf.mxu0
      %v1409 = vadd.f32 0.0, %v1408
      %v1410 = vpop.f32.mrf.mxu0
      %1411 = vdwg.mxu0
      %v1412 = vadd.f32 %v1169, %v1350
      %v1413 = vadd.f32 %v1170, %v1353
      %v1414 = vadd.f32 %v1171, %v1358
      %v1415 = vadd.f32 %v1172, %v1361
      %v1416 = vadd.f32 %v1173, %v1366
      %v1417 = vadd.f32 %v1174, %v1369
      %v1418 = vadd.f32 %v1175, %v1374
      %v1419 = vadd.f32 %v1176, %v1377
      %v1420 = vadd.f32 %v1177, %v1382
      %v1421 = vadd.f32 %v1178, %v1385
      %v1422 = vadd.f32 %v1179, %v1390
      %v1423 = vadd.f32 %v1180, %v1393
      %v1424 = vadd.f32 %v1181, %v1398
      %v1425 = vadd.f32 %v1182, %v1401
      %v1426 = vadd.f32 %v1183, %v1406
      %v1427 = vadd.f32 %v1184, %v1409
      %v1428 = vld [vmem:[%s1185] sm:$0xf]
      %v1429 = vld [vmem:[%s1185 + $0x4] sm:$0xf]
      %v1430 = vld [vmem:[%s1185 + $0x8] sm:$0x1]
      %v1431 = vld [vmem:[%s1185 + $0xc] sm:$0xf]
      %v1432 = vld [vmem:[%s1185 + $0x10] sm:$0xf]
      %v1433 = vld [vmem:[%s1185 + $0x14] sm:$0x1]
      %v1434 = vld [vmem:[%s1185 + $0x18] sm:$0xf]
      %v1435 = vld [vmem:[%s1185 + $0x1c] sm:$0xf]
      %v1436 = vld [vmem:[%s1185 + $0x20] sm:$0x1]
      %v1437 = vld [vmem:[%s1185 + $0x24] sm:$0xf]
      %v1438 = vld [vmem:[%s1185 + $0x28] sm:$0xf]
      %v1439 = vld [vmem:[%s1185 + $0x2c] sm:$0x1]
      %v1440 = vld [vmem:[%s1185 + $0x30] sm:$0xf]
      %v1441 = vld [vmem:[%s1185 + $0x34] sm:$0xf]
      %v1442 = vld [vmem:[%s1185 + $0x38] sm:$0x1]
      %v1443 = vld [vmem:[%s1185 + $0x3c] sm:$0xf]
      %v1444 = vld [vmem:[%s1185 + $0x40] sm:$0xf]
      %v1445 = vld [vmem:[%s1185 + $0x44] sm:$0x1]
      %v1446 = vld [vmem:[%s1185 + $0x48] sm:$0xf]
      %v1447 = vld [vmem:[%s1185 + $0x4c] sm:$0xf]
      %v1448 = vld [vmem:[%s1185 + $0x50] sm:$0x1]
      %v1449 = vld [vmem:[%s1185 + $0x54] sm:$0xf]
      %v1450 = vld [vmem:[%s1185 + $0x58] sm:$0xf]
      %v1451 = vld [vmem:[%s1185 + $0x5c] sm:$0x1]
      %v1453 = vshrl.u32 %v1428, 16
      %v1455 = vrot.slane %v1453, 4
      %v1456 = vshll.u32 %v1428, 16
      %v1458 = vrot.slane %v1456, 5
      %v1459 = vor.u32 %v1455, %v1458
      %v1460 = vrot.slane %v1459, 4
      %v1462 = vshll.u32 %v1429, 16
      %v1464 = vrot.slane %v1462, 5
      %v1465 = vsel %vm312, %v1460, %v1464
      %v1466 = vshrl.u32 %v1429, 16
      %v1468 = vrot.slane %v1466, 4
      %v1469 = vor.u32 %v1468, %v1464
      %v1470 = vrot.slane %v1469, 4
      %v1472 = vshll.u32 %v1430, 16
      %v1474 = vrot.slane %v1472, 5
      %v1475 = vsel %vm312, %v1470, %v1474
      %v1477 = vshrl.u32 %v1431, 16
      %v1479 = vrot.slane %v1477, 4
      %v1480 = vshll.u32 %v1431, 16
      %v1482 = vrot.slane %v1480, 5
      %v1483 = vor.u32 %v1479, %v1482
      %v1484 = vrot.slane %v1483, 4
      %v1486 = vshll.u32 %v1432, 16
      %v1488 = vrot.slane %v1486, 5
      %v1489 = vsel %vm312, %v1484, %v1488
      %v1490 = vshrl.u32 %v1432, 16
      %v1492 = vrot.slane %v1490, 4
      %v1493 = vor.u32 %v1492, %v1488
      %v1494 = vrot.slane %v1493, 4
      %v1496 = vshll.u32 %v1433, 16
      %v1498 = vrot.slane %v1496, 5
      %v1499 = vsel %vm312, %v1494, %v1498
      %v1501 = vshrl.u32 %v1434, 16
      %v1503 = vrot.slane %v1501, 4
      %v1504 = vshll.u32 %v1434, 16
      %v1506 = vrot.slane %v1504, 5
      %v1507 = vor.u32 %v1503, %v1506
      %v1508 = vrot.slane %v1507, 4
      %v1510 = vshll.u32 %v1435, 16
      %v1512 = vrot.slane %v1510, 5
      %v1513 = vsel %vm312, %v1508, %v1512
      %v1514 = vshrl.u32 %v1435, 16
      %v1516 = vrot.slane %v1514, 4
      %v1517 = vor.u32 %v1516, %v1512
      %v1518 = vrot.slane %v1517, 4
      %v1520 = vshll.u32 %v1436, 16
      %v1522 = vrot.slane %v1520, 5
      %v1523 = vsel %vm312, %v1518, %v1522
      %v1525 = vshrl.u32 %v1437, 16
      %v1527 = vrot.slane %v1525, 4
      %v1528 = vshll.u32 %v1437, 16
      %v1530 = vrot.slane %v1528, 5
      %v1531 = vor.u32 %v1527, %v1530
      %v1532 = vrot.slane %v1531, 4
      %v1534 = vshll.u32 %v1438, 16
      %v1536 = vrot.slane %v1534, 5
      %v1537 = vsel %vm312, %v1532, %v1536
      %v1538 = vshrl.u32 %v1438, 16
      %v1540 = vrot.slane %v1538, 4
      %v1541 = vor.u32 %v1540, %v1536
      %v1542 = vrot.slane %v1541, 4
      %v1544 = vshll.u32 %v1439, 16
      %v1546 = vrot.slane %v1544, 5
      %v1547 = vsel %vm312, %v1542, %v1546
      %v1549 = vshrl.u32 %v1440, 16
      %v1551 = vrot.slane %v1549, 4
      %v1552 = vshll.u32 %v1440, 16
      %v1554 = vrot.slane %v1552, 5
      %v1555 = vor.u32 %v1551, %v1554
      %v1556 = vrot.slane %v1555, 4
      %v1558 = vshll.u32 %v1441, 16
      %v1560 = vrot.slane %v1558, 5
      %v1561 = vsel %vm312, %v1556, %v1560
      %v1562 = vshrl.u32 %v1441, 16
      %v1564 = vrot.slane %v1562, 4
      %v1565 = vor.u32 %v1564, %v1560
      %v1566 = vrot.slane %v1565, 4
      %v1568 = vshll.u32 %v1442, 16
      %v1570 = vrot.slane %v1568, 5
      %v1571 = vsel %vm312, %v1566, %v1570
      %v1573 = vshrl.u32 %v1443, 16
      %v1575 = vrot.slane %v1573, 4
      %v1576 = vshll.u32 %v1443, 16
      %v1578 = vrot.slane %v1576, 5
      %v1579 = vor.u32 %v1575, %v1578
      %v1580 = vrot.slane %v1579, 4
      %v1582 = vshll.u32 %v1444, 16
      %v1584 = vrot.slane %v1582, 5
      %v1585 = vsel %vm312, %v1580, %v1584
      %v1586 = vshrl.u32 %v1444, 16
      %v1588 = vrot.slane %v1586, 4
      %v1589 = vor.u32 %v1588, %v1584
      %v1590 = vrot.slane %v1589, 4
      %v1592 = vshll.u32 %v1445, 16
      %v1594 = vrot.slane %v1592, 5
      %v1595 = vsel %vm312, %v1590, %v1594
      %v1597 = vshrl.u32 %v1446, 16
      %v1599 = vrot.slane %v1597, 4
      %v1600 = vshll.u32 %v1446, 16
      %v1602 = vrot.slane %v1600, 5
      %v1603 = vor.u32 %v1599, %v1602
      %v1604 = vrot.slane %v1603, 4
      %v1606 = vshll.u32 %v1447, 16
      %v1608 = vrot.slane %v1606, 5
      %v1609 = vsel %vm312, %v1604, %v1608
      %v1610 = vshrl.u32 %v1447, 16
      %v1612 = vrot.slane %v1610, 4
      %v1613 = vor.u32 %v1612, %v1608
      %v1614 = vrot.slane %v1613, 4
      %v1616 = vshll.u32 %v1448, 16
      %v1618 = vrot.slane %v1616, 5
      %v1619 = vsel %vm312, %v1614, %v1618
      %v1621 = vshrl.u32 %v1449, 16
      %v1623 = vrot.slane %v1621, 4
      %v1624 = vshll.u32 %v1449, 16
      %v1626 = vrot.slane %v1624, 5
      %v1627 = vor.u32 %v1623, %v1626
      %v1628 = vrot.slane %v1627, 4
      %v1630 = vshll.u32 %v1450, 16
      %v1632 = vrot.slane %v1630, 5
      %v1633 = vsel %vm312, %v1628, %v1632
      %v1634 = vshrl.u32 %v1450, 16
      %v1636 = vrot.slane %v1634, 4
      %v1637 = vor.u32 %v1636, %v1632
      %v1638 = vrot.slane %v1637, 4
      %v1640 = vshll.u32 %v1451, 16
      %v1642 = vrot.slane %v1640, 5
      %v1643 = vsel %vm312, %v1638, %v1642
      %s1644 = scalar_lea.vmem %s1, 256
      %v1645 = vld [vmem:[%s1644] sm:$0xf]
      %v1646 = vld [vmem:[%s1644 + $0x4] sm:$0xf]
      %v1647 = vld [vmem:[%s1644 + $0x8] sm:$0xf]
      %v1648 = vld [vmem:[%s1644 + $0xc] sm:$0xf]
      %v1649 = vld [vmem:[%s1644 + $0x10] sm:$0xf]
      %v1650 = vld [vmem:[%s1644 + $0x14] sm:$0xf]
      %v1651 = vld [vmem:[%s1644 + $0x18] sm:$0xf]
      %v1652 = vld [vmem:[%s1644 + $0x1c] sm:$0xf]
      %v1653 = vld [vmem:[%s1644 + $0x20] sm:$0xf]
      %v1654 = vld [vmem:[%s1644 + $0x24] sm:$0xf]
      %v1655 = vld [vmem:[%s1644 + $0x28] sm:$0xf]
      %v1656 = vld [vmem:[%s1644 + $0x2c] sm:$0xf]
      %v1657 = vld [vmem:[%s1644 + $0x30] sm:$0xf]
      %v1658 = vld [vmem:[%s1644 + $0x34] sm:$0xf]
      %v1659 = vld [vmem:[%s1644 + $0x38] sm:$0xf]
      %v1660 = vld [vmem:[%s1644 + $0x3c] sm:$0xf]
      %v1661 = vunpack.c.l.b16 %v1465
      %v1662 = vunpack.c.l.b16 %v1475
      %v1663 = vunpack.c.l.b16 %v1489
      %v1664 = vunpack.c.l.b16 %v1499
      %v1665 = vunpack.c.l.b16 %v1513
      %v1666 = vunpack.c.l.b16 %v1523
      %v1667 = vunpack.c.l.b16 %v1537
      %v1668 = vunpack.c.l.b16 %v1547
      %v1669 = vunpack.c.l.b16 %v1561
      %v1670 = vunpack.c.l.b16 %v1571
      %v1671 = vunpack.c.l.b16 %v1585
      %v1672 = vunpack.c.l.b16 %v1595
      %v1673 = vunpack.c.l.b16 %v1609
      %v1674 = vunpack.c.l.b16 %v1619
      %v1675 = vunpack.c.l.b16 %v1633
      %v1676 = vunpack.c.l.b16 %v1643
      %v1677 = vpack.c.b16 %v1662, %v1661
      %v1678 = vpack.c.b16 %v1664, %v1663
      %v1679 = vpack.c.b16 %v1666, %v1665
      %v1680 = vpack.c.b16 %v1668, %v1667
      %v1681 = vpack.c.b16 %v1670, %v1669
      %v1682 = vpack.c.b16 %v1672, %v1671
      %v1683 = vpack.c.b16 %v1674, %v1673
      %v1684 = vpack.c.b16 %v1676, %v1675
      %v1709 = vunpack.c.l.b16 %v1645
      %v1710 = vunpack.c.l.b16 %v1646
      %v1711 = vunpack.c.l.b16 %v1647
      %v1712 = vunpack.c.l.b16 %v1648
      %v1713 = vunpack.c.l.b16 %v1649
      %v1714 = vunpack.c.l.b16 %v1650
      %v1715 = vunpack.c.l.b16 %v1651
      %v1716 = vunpack.c.l.b16 %v1652
      %v1717 = vunpack.c.l.b16 %v1653
      %v1718 = vunpack.c.l.b16 %v1654
      %v1719 = vunpack.c.l.b16 %v1655
      %v1720 = vunpack.c.l.b16 %v1656
      %v1721 = vunpack.c.l.b16 %v1657
      %v1722 = vunpack.c.l.b16 %v1658
      %v1723 = vunpack.c.l.b16 %v1659
      %v1724 = vunpack.c.l.b16 %v1660
      %v1725 = vpack.c.b16 %v1710, %v1709
      %v1726 = vpack.c.b16 %v1712, %v1711
      %v1727 = vpack.c.b16 %v1714, %v1713
      %v1728 = vpack.c.b16 %v1716, %v1715
      %v1729 = vpack.c.b16 %v1718, %v1717
      %v1730 = vpack.c.b16 %v1720, %v1719
      %v1731 = vpack.c.b16 %v1722, %v1721
      %v1732 = vpack.c.b16 %v1724, %v1723
      %1741 = vmatprep.subr.bf16.mxu0 0
      %1742 = vmatpush1.bf16.msra.mxu0 %v1732
      %1743 = vmatprep.subr.bf16.mxu0 0
      %1744 = vmatpush1.bf16.msra.mxu0 %v1731
      %1745 = vmatprep.subr.bf16.mxu0 0
      %1746 = vmatpush1.bf16.msra.mxu0 %v1730
      %1747 = vmatprep.subr.bf16.mxu0 0
      %1748 = vmatpush1.bf16.msra.mxu0 %v1729
      %1749 = vmatprep.subr.bf16.mxu0 0
      %1750 = vmatpush1.bf16.msra.mxu0 %v1728
      %1751 = vmatprep.subr.bf16.mxu0 0
      %1752 = vmatpush1.bf16.msra.mxu0 %v1727
      %1753 = vmatprep.subr.bf16.mxu0 0
      %1754 = vmatpush1.bf16.msra.mxu0 %v1726
      %1755 = vmatprep.subr.bf16.mxu0 0
      %1756 = vmatpush1.bf16.msra.mxu0 %v1725
      %1757 = vmatprep.subr.bf16.mxu0 0
      %1758 = vmatpush2.bf16.msra.mxu0 0
      %1759 = vmatprep.subr.bf16.mxu0 0
      %1760 = vmatpush2.bf16.msra.mxu0 0
      %1761 = vmatprep.subr.bf16.mxu0 0
      %1762 = vmatpush2.bf16.msra.mxu0 0
      %1763 = vmatprep.subr.bf16.mxu0 0
      %1764 = vmatpush2.bf16.msra.mxu0 0
      %1765 = vmatprep.subr.bf16.mxu0 0
      %1766 = vmatpush2.bf16.msra.mxu0 0
      %1767 = vmatprep.subr.bf16.mxu0 0
      %1768 = vmatpush2.bf16.msra.mxu0 0
      %1769 = vmatprep.subr.bf16.mxu0 0
      %1770 = vmatpush2.bf16.msra.mxu0 0
      %1771 = vmatprep.subr.bf16.mxu0 0
      %1772 = vmatpush2.bf16.msra.mxu0 0
      %1773 = vmatprep.mubr.bf16.mxu0 0
      %1774 = vmatmul.mubr.bf16.gmra.mxu0 %v1677
      %v1775 = vpop.f32.mrf.mxu0
      %v1776 = vadd.f32 0.0, %v1775
      %v1777 = vpop.f32.mrf.mxu0
      %v1778 = vpop.f32.mrf.mxu0
      %v1779 = vadd.f32 0.0, %v1778
      %v1780 = vpop.f32.mrf.mxu0
      %1781 = vmatprep.mubr.bf16.mxu0 0
      %1782 = vmatmul.mubr.bf16.gmra.mxu0 %v1678
      %v1783 = vpop.f32.mrf.mxu0
      %v1784 = vadd.f32 0.0, %v1783
      %v1785 = vpop.f32.mrf.mxu0
      %v1786 = vpop.f32.mrf.mxu0
      %v1787 = vadd.f32 0.0, %v1786
      %v1788 = vpop.f32.mrf.mxu0
      %1789 = vmatprep.mubr.bf16.mxu0 0
      %1790 = vmatmul.mubr.bf16.gmra.mxu0 %v1679
      %v1791 = vpop.f32.mrf.mxu0
      %v1792 = vadd.f32 0.0, %v1791
      %v1793 = vpop.f32.mrf.mxu0
      %v1794 = vpop.f32.mrf.mxu0
      %v1795 = vadd.f32 0.0, %v1794
      %v1796 = vpop.f32.mrf.mxu0
      %1797 = vmatprep.mubr.bf16.mxu0 0
      %1798 = vmatmul.mubr.bf16.gmra.mxu0 %v1680
      %v1799 = vpop.f32.mrf.mxu0
      %v1800 = vadd.f32 0.0, %v1799
      %v1801 = vpop.f32.mrf.mxu0
      %v1802 = vpop.f32.mrf.mxu0
      %v1803 = vadd.f32 0.0, %v1802
      %v1804 = vpop.f32.mrf.mxu0
      %1805 = vmatprep.mubr.bf16.mxu0 0
      %1806 = vmatmul.mubr.bf16.gmra.mxu0 %v1681
      %v1807 = vpop.f32.mrf.mxu0
      %v1808 = vadd.f32 0.0, %v1807
      %v1809 = vpop.f32.mrf.mxu0
      %v1810 = vpop.f32.mrf.mxu0
      %v1811 = vadd.f32 0.0, %v1810
      %v1812 = vpop.f32.mrf.mxu0
      %1813 = vmatprep.mubr.bf16.mxu0 0
      %1814 = vmatmul.mubr.bf16.gmra.mxu0 %v1682
      %v1815 = vpop.f32.mrf.mxu0
      %v1816 = vadd.f32 0.0, %v1815
      %v1817 = vpop.f32.mrf.mxu0
      %v1818 = vpop.f32.mrf.mxu0
      %v1819 = vadd.f32 0.0, %v1818
      %v1820 = vpop.f32.mrf.mxu0
      %1821 = vmatprep.mubr.bf16.mxu0 0
      %1822 = vmatmul.mubr.bf16.gmra.mxu0 %v1683
      %v1823 = vpop.f32.mrf.mxu0
      %v1824 = vadd.f32 0.0, %v1823
      %v1825 = vpop.f32.mrf.mxu0
      %v1826 = vpop.f32.mrf.mxu0
      %v1827 = vadd.f32 0.0, %v1826
      %v1828 = vpop.f32.mrf.mxu0
      %1829 = vmatprep.mubr.bf16.mxu0 0
      %1830 = vmatmul.mubr.bf16.gmra.mxu0 %v1684
      %v1831 = vpop.f32.mrf.mxu0
      %v1832 = vadd.f32 0.0, %v1831
      %v1833 = vpop.f32.mrf.mxu0
      %v1834 = vpop.f32.mrf.mxu0
      %v1835 = vadd.f32 0.0, %v1834
      %v1836 = vpop.f32.mrf.mxu0
      %1837 = vdwg.mxu0
      %v1838 = vadd.f32 %v1412, %v1776
      %v1839 = vadd.f32 %v1413, %v1779
      %v1840 = vadd.f32 %v1414, %v1784
      %v1841 = vadd.f32 %v1415, %v1787
      %v1842 = vadd.f32 %v1416, %v1792
      %v1843 = vadd.f32 %v1417, %v1795
      %v1844 = vadd.f32 %v1418, %v1800
      %v1845 = vadd.f32 %v1419, %v1803
      %v1846 = vadd.f32 %v1420, %v1808
      %v1847 = vadd.f32 %v1421, %v1811
      %v1848 = vadd.f32 %v1422, %v1816
      %v1849 = vadd.f32 %v1423, %v1819
      %v1850 = vadd.f32 %v1424, %v1824
      %v1851 = vadd.f32 %v1425, %v1827
      %v1852 = vadd.f32 %v1426, %v1832
      %v1853 = vadd.f32 %v1427, %v1835
      %v1854 = vld [vmem:[%s1185] sm:$0xe]
      %v1855 = vld [vmem:[%s1185 + $0xc] sm:$0xe]
      %v1856 = vld [vmem:[%s1185 + $0x18] sm:$0xe]
      %v1857 = vld [vmem:[%s1185 + $0x24] sm:$0xe]
      %v1858 = vld [vmem:[%s1185 + $0x30] sm:$0xe]
      %v1859 = vld [vmem:[%s1185 + $0x3c] sm:$0xe]
      %v1860 = vld [vmem:[%s1185 + $0x48] sm:$0xe]
      %v1861 = vld [vmem:[%s1185 + $0x54] sm:$0xe]
      %v1886 = vrot.slane %v1854, 5
      %v1887 = vrot.slane %v1886, 4
      %v1888 = vrot.slane %v1429, 5
      %v1889 = vsel %vm918, %v1887, %v1888
      %v1890 = vrot.slane %v1888, 4
      %v1891 = vrot.slane %v1430, 5
      %v1892 = vsel %vm918, %v1890, %v1891
      %v1893 = vrot.slane %v1855, 5
      %v1894 = vrot.slane %v1893, 4
      %v1895 = vrot.slane %v1432, 5
      %v1896 = vsel %vm918, %v1894, %v1895
      %v1897 = vrot.slane %v1895, 4
      %v1898 = vrot.slane %v1433, 5
      %v1899 = vsel %vm918, %v1897, %v1898
      %v1900 = vrot.slane %v1856, 5
      %v1901 = vrot.slane %v1900, 4
      %v1902 = vrot.slane %v1435, 5
      %v1903 = vsel %vm918, %v1901, %v1902
      %v1904 = vrot.slane %v1902, 4
      %v1905 = vrot.slane %v1436, 5
      %v1906 = vsel %vm918, %v1904, %v1905
      %v1907 = vrot.slane %v1857, 5
      %v1908 = vrot.slane %v1907, 4
      %v1909 = vrot.slane %v1438, 5
      %v1910 = vsel %vm918, %v1908, %v1909
      %v1911 = vrot.slane %v1909, 4
      %v1912 = vrot.slane %v1439, 5
      %v1913 = vsel %vm918, %v1911, %v1912
      %v1914 = vrot.slane %v1858, 5
      %v1915 = vrot.slane %v1914, 4
      %v1916 = vrot.slane %v1441, 5
      %v1917 = vsel %vm918, %v1915, %v1916
      %v1918 = vrot.slane %v1916, 4
      %v1919 = vrot.slane %v1442, 5
      %v1920 = vsel %vm918, %v1918, %v1919
      %v1921 = vrot.slane %v1859, 5
      %v1922 = vrot.slane %v1921, 4
      %v1923 = vrot.slane %v1444, 5
      %v1924 = vsel %vm918, %v1922, %v1923
      %v1925 = vrot.slane %v1923, 4
      %v1926 = vrot.slane %v1445, 5
      %v1927 = vsel %vm918, %v1925, %v1926
      %v1928 = vrot.slane %v1860, 5
      %v1929 = vrot.slane %v1928, 4
      %v1930 = vrot.slane %v1447, 5
      %v1931 = vsel %vm918, %v1929, %v1930
      %v1932 = vrot.slane %v1930, 4
      %v1933 = vrot.slane %v1448, 5
      %v1934 = vsel %vm918, %v1932, %v1933
      %v1935 = vrot.slane %v1861, 5
      %v1936 = vrot.slane %v1935, 4
      %v1937 = vrot.slane %v1450, 5
      %v1938 = vsel %vm918, %v1936, %v1937
      %v1939 = vrot.slane %v1937, 4
      %v1940 = vrot.slane %v1451, 5
      %v1941 = vsel %vm918, %v1939, %v1940
      %s1942 = scalar_lea.vmem %s1, 320
      %v1943 = vld [vmem:[%s1942] sm:$0xf]
      %v1944 = vld [vmem:[%s1942 + $0x4] sm:$0xf]
      %v1945 = vld [vmem:[%s1942 + $0x8] sm:$0xf]
      %v1946 = vld [vmem:[%s1942 + $0xc] sm:$0xf]
      %v1947 = vld [vmem:[%s1942 + $0x10] sm:$0xf]
      %v1948 = vld [vmem:[%s1942 + $0x14] sm:$0xf]
      %v1949 = vld [vmem:[%s1942 + $0x18] sm:$0xf]
      %v1950 = vld [vmem:[%s1942 + $0x1c] sm:$0xf]
      %v1951 = vld [vmem:[%s1942 + $0x20] sm:$0xf]
      %v1952 = vld [vmem:[%s1942 + $0x24] sm:$0xf]
      %v1953 = vld [vmem:[%s1942 + $0x28] sm:$0xf]
      %v1954 = vld [vmem:[%s1942 + $0x2c] sm:$0xf]
      %v1955 = vld [vmem:[%s1942 + $0x30] sm:$0xf]
      %v1956 = vld [vmem:[%s1942 + $0x34] sm:$0xf]
      %v1957 = vld [vmem:[%s1942 + $0x38] sm:$0xf]
      %v1958 = vld [vmem:[%s1942 + $0x3c] sm:$0xf]
      %v1959 = vunpack.c.l.b16 %v1889
      %v1960 = vunpack.c.l.b16 %v1892
      %v1961 = vunpack.c.l.b16 %v1896
      %v1962 = vunpack.c.l.b16 %v1899
      %v1963 = vunpack.c.l.b16 %v1903
      %v1964 = vunpack.c.l.b16 %v1906
      %v1965 = vunpack.c.l.b16 %v1910
      %v1966 = vunpack.c.l.b16 %v1913
      %v1967 = vunpack.c.l.b16 %v1917
      %v1968 = vunpack.c.l.b16 %v1920
      %v1969 = vunpack.c.l.b16 %v1924
      %v1970 = vunpack.c.l.b16 %v1927
      %v1971 = vunpack.c.l.b16 %v1931
      %v1972 = vunpack.c.l.b16 %v1934
      %v1973 = vunpack.c.l.b16 %v1938
      %v1974 = vunpack.c.l.b16 %v1941
      %v1975 = vpack.c.b16 %v1960, %v1959
      %v1976 = vpack.c.b16 %v1962, %v1961
      %v1977 = vpack.c.b16 %v1964, %v1963
      %v1978 = vpack.c.b16 %v1966, %v1965
      %v1979 = vpack.c.b16 %v1968, %v1967
      %v1980 = vpack.c.b16 %v1970, %v1969
      %v1981 = vpack.c.b16 %v1972, %v1971
      %v1982 = vpack.c.b16 %v1974, %v1973
      %v2007 = vunpack.c.l.b16 %v1943
      %v2008 = vunpack.c.l.b16 %v1944
      %v2009 = vunpack.c.l.b16 %v1945
      %v2010 = vunpack.c.l.b16 %v1946
      %v2011 = vunpack.c.l.b16 %v1947
      %v2012 = vunpack.c.l.b16 %v1948
      %v2013 = vunpack.c.l.b16 %v1949
      %v2014 = vunpack.c.l.b16 %v1950
      %v2015 = vunpack.c.l.b16 %v1951
      %v2016 = vunpack.c.l.b16 %v1952
      %v2017 = vunpack.c.l.b16 %v1953
      %v2018 = vunpack.c.l.b16 %v1954
      %v2019 = vunpack.c.l.b16 %v1955
      %v2020 = vunpack.c.l.b16 %v1956
      %v2021 = vunpack.c.l.b16 %v1957
      %v2022 = vunpack.c.l.b16 %v1958
      %v2023 = vpack.c.b16 %v2008, %v2007
      %v2024 = vpack.c.b16 %v2010, %v2009
      %v2025 = vpack.c.b16 %v2012, %v2011
      %v2026 = vpack.c.b16 %v2014, %v2013
      %v2027 = vpack.c.b16 %v2016, %v2015
      %v2028 = vpack.c.b16 %v2018, %v2017
      %v2029 = vpack.c.b16 %v2020, %v2019
      %v2030 = vpack.c.b16 %v2022, %v2021
      %2039 = vmatprep.subr.bf16.mxu0 0
      %2040 = vmatpush1.bf16.msra.mxu0 %v2030
      %2041 = vmatprep.subr.bf16.mxu0 0
      %2042 = vmatpush1.bf16.msra.mxu0 %v2029
      %2043 = vmatprep.subr.bf16.mxu0 0
      %2044 = vmatpush1.bf16.msra.mxu0 %v2028
      %2045 = vmatprep.subr.bf16.mxu0 0
      %2046 = vmatpush1.bf16.msra.mxu0 %v2027
      %2047 = vmatprep.subr.bf16.mxu0 0
      %2048 = vmatpush1.bf16.msra.mxu0 %v2026
      %2049 = vmatprep.subr.bf16.mxu0 0
      %2050 = vmatpush1.bf16.msra.mxu0 %v2025
      %2051 = vmatprep.subr.bf16.mxu0 0
      %2052 = vmatpush1.bf16.msra.mxu0 %v2024
      %2053 = vmatprep.subr.bf16.mxu0 0
      %2054 = vmatpush1.bf16.msra.mxu0 %v2023
      %2055 = vmatprep.subr.bf16.mxu0 0
      %2056 = vmatpush2.bf16.msra.mxu0 0
      %2057 = vmatprep.subr.bf16.mxu0 0
      %2058 = vmatpush2.bf16.msra.mxu0 0
      %2059 = vmatprep.subr.bf16.mxu0 0
      %2060 = vmatpush2.bf16.msra.mxu0 0
      %2061 = vmatprep.subr.bf16.mxu0 0
      %2062 = vmatpush2.bf16.msra.mxu0 0
      %2063 = vmatprep.subr.bf16.mxu0 0
      %2064 = vmatpush2.bf16.msra.mxu0 0
      %2065 = vmatprep.subr.bf16.mxu0 0
      %2066 = vmatpush2.bf16.msra.mxu0 0
      %2067 = vmatprep.subr.bf16.mxu0 0
      %2068 = vmatpush2.bf16.msra.mxu0 0
      %2069 = vmatprep.subr.bf16.mxu0 0
      %2070 = vmatpush2.bf16.msra.mxu0 0
      %2071 = vmatprep.mubr.bf16.mxu0 0
      %2072 = vmatmul.mubr.bf16.gmra.mxu0 %v1975
      %v2073 = vpop.f32.mrf.mxu0
      %v2074 = vadd.f32 0.0, %v2073
      %v2075 = vpop.f32.mrf.mxu0
      %v2076 = vpop.f32.mrf.mxu0
      %v2077 = vadd.f32 0.0, %v2076
      %v2078 = vpop.f32.mrf.mxu0
      %2079 = vmatprep.mubr.bf16.mxu0 0
      %2080 = vmatmul.mubr.bf16.gmra.mxu0 %v1976
      %v2081 = vpop.f32.mrf.mxu0
      %v2082 = vadd.f32 0.0, %v2081
      %v2083 = vpop.f32.mrf.mxu0
      %v2084 = vpop.f32.mrf.mxu0
      %v2085 = vadd.f32 0.0, %v2084
      %v2086 = vpop.f32.mrf.mxu0
      %2087 = vmatprep.mubr.bf16.mxu0 0
      %2088 = vmatmul.mubr.bf16.gmra.mxu0 %v1977
      %v2089 = vpop.f32.mrf.mxu0
      %v2090 = vadd.f32 0.0, %v2089
      %v2091 = vpop.f32.mrf.mxu0
      %v2092 = vpop.f32.mrf.mxu0
      %v2093 = vadd.f32 0.0, %v2092
      %v2094 = vpop.f32.mrf.mxu0
      %2095 = vmatprep.mubr.bf16.mxu0 0
      %2096 = vmatmul.mubr.bf16.gmra.mxu0 %v1978
      %v2097 = vpop.f32.mrf.mxu0
      %v2098 = vadd.f32 0.0, %v2097
      %v2099 = vpop.f32.mrf.mxu0
      %v2100 = vpop.f32.mrf.mxu0
      %v2101 = vadd.f32 0.0, %v2100
      %v2102 = vpop.f32.mrf.mxu0
      %2103 = vmatprep.mubr.bf16.mxu0 0
      %2104 = vmatmul.mubr.bf16.gmra.mxu0 %v1979
      %v2105 = vpop.f32.mrf.mxu0
      %v2106 = vadd.f32 0.0, %v2105
      %v2107 = vpop.f32.mrf.mxu0
      %v2108 = vpop.f32.mrf.mxu0
      %v2109 = vadd.f32 0.0, %v2108
      %v2110 = vpop.f32.mrf.mxu0
      %2111 = vmatprep.mubr.bf16.mxu0 0
      %2112 = vmatmul.mubr.bf16.gmra.mxu0 %v1980
      %v2113 = vpop.f32.mrf.mxu0
      %v2114 = vadd.f32 0.0, %v2113
      %v2115 = vpop.f32.mrf.mxu0
      %v2116 = vpop.f32.mrf.mxu0
      %v2117 = vadd.f32 0.0, %v2116
      %v2118 = vpop.f32.mrf.mxu0
      %2119 = vmatprep.mubr.bf16.mxu0 0
      %2120 = vmatmul.mubr.bf16.gmra.mxu0 %v1981
      %v2121 = vpop.f32.mrf.mxu0
      %v2122 = vadd.f32 0.0, %v2121
      %v2123 = vpop.f32.mrf.mxu0
      %v2124 = vpop.f32.mrf.mxu0
      %v2125 = vadd.f32 0.0, %v2124
      %v2126 = vpop.f32.mrf.mxu0
      %2127 = vmatprep.mubr.bf16.mxu0 0
      %2128 = vmatmul.mubr.bf16.gmra.mxu0 %v1982
      %v2129 = vpop.f32.mrf.mxu0
      %v2130 = vadd.f32 0.0, %v2129
      %v2131 = vpop.f32.mrf.mxu0
      %v2132 = vpop.f32.mrf.mxu0
      %v2133 = vadd.f32 0.0, %v2132
      %v2134 = vpop.f32.mrf.mxu0
      %2135 = vdwg.mxu0
      %v2136 = vadd.f32 %v1838, %v2074
      %v2137 = vadd.f32 %v1839, %v2077
      %v2138 = vadd.f32 %v1840, %v2082
      %v2139 = vadd.f32 %v1841, %v2085
      %v2140 = vadd.f32 %v1842, %v2090
      %v2141 = vadd.f32 %v1843, %v2093
      %v2142 = vadd.f32 %v1844, %v2098
      %v2143 = vadd.f32 %v1845, %v2101
      %v2144 = vadd.f32 %v1846, %v2106
      %v2145 = vadd.f32 %v1847, %v2109
      %v2146 = vadd.f32 %v1848, %v2114
      %v2147 = vadd.f32 %v1849, %v2117
      %v2148 = vadd.f32 %v1850, %v2122
      %v2149 = vadd.f32 %v1851, %v2125
      %v2150 = vadd.f32 %v1852, %v2130
      %v2151 = vadd.f32 %v1853, %v2133
      %s2152 = scalar_lea.vmem [#allocation2], 24
      %v2153 = vld [vmem:[%s2152] sm:$0xf]
      %v2154 = vld [vmem:[%s2152 + $0x4] sm:$0xf]
      %v2155 = vld [vmem:[%s2152 + $0xc] sm:$0xf]
      %v2156 = vld [vmem:[%s2152 + $0x10] sm:$0xf]
      %v2157 = vld [vmem:[%s2152 + $0x18] sm:$0xf]
      %v2158 = vld [vmem:[%s2152 + $0x1c] sm:$0xf]
      %v2159 = vld [vmem:[%s2152 + $0x24] sm:$0xf]
      %v2160 = vld [vmem:[%s2152 + $0x28] sm:$0xf]
      %v2161 = vld [vmem:[%s2152 + $0x30] sm:$0xf]
      %v2162 = vld [vmem:[%s2152 + $0x34] sm:$0xf]
      %v2163 = vld [vmem:[%s2152 + $0x3c] sm:$0xf]
      %v2164 = vld [vmem:[%s2152 + $0x40] sm:$0xf]
      %v2165 = vld [vmem:[%s2152 + $0x48] sm:$0xf]
      %v2166 = vld [vmem:[%s2152 + $0x4c] sm:$0xf]
      %v2167 = vld [vmem:[%s2152 + $0x54] sm:$0xf]
      %v2168 = vld [vmem:[%s2152 + $0x58] sm:$0xf]
      %s2169 = scalar_lea.vmem %s1, 384
      %v2170 = vld [vmem:[%s2169] sm:$0xf]
      %v2171 = vld [vmem:[%s2169 + $0x4] sm:$0xf]
      %v2172 = vld [vmem:[%s2169 + $0x8] sm:$0xf]
      %v2173 = vld [vmem:[%s2169 + $0xc] sm:$0xf]
      %v2174 = vld [vmem:[%s2169 + $0x10] sm:$0xf]
      %v2175 = vld [vmem:[%s2169 + $0x14] sm:$0xf]
      %v2176 = vld [vmem:[%s2169 + $0x18] sm:$0xf]
      %v2177 = vld [vmem:[%s2169 + $0x1c] sm:$0xf]
      %v2178 = vld [vmem:[%s2169 + $0x20] sm:$0xf]
      %v2179 = vld [vmem:[%s2169 + $0x24] sm:$0xf]
      %v2180 = vld [vmem:[%s2169 + $0x28] sm:$0xf]
      %v2181 = vld [vmem:[%s2169 + $0x2c] sm:$0xf]
      %v2182 = vld [vmem:[%s2169 + $0x30] sm:$0xf]
      %v2183 = vld [vmem:[%s2169 + $0x34] sm:$0xf]
      %v2184 = vld [vmem:[%s2169 + $0x38] sm:$0xf]
      %v2185 = vld [vmem:[%s2169 + $0x3c] sm:$0xf]
      %v2202 = vunpack.c.l.b16 %v2153
      %v2203 = vunpack.c.l.b16 %v2154
      %v2204 = vunpack.c.l.b16 %v2155
      %v2205 = vunpack.c.l.b16 %v2156
      %v2206 = vunpack.c.l.b16 %v2157
      %v2207 = vunpack.c.l.b16 %v2158
      %v2208 = vunpack.c.l.b16 %v2159
      %v2209 = vunpack.c.l.b16 %v2160
      %v2210 = vunpack.c.l.b16 %v2161
      %v2211 = vunpack.c.l.b16 %v2162
      %v2212 = vunpack.c.l.b16 %v2163
      %v2213 = vunpack.c.l.b16 %v2164
      %v2214 = vunpack.c.l.b16 %v2165
      %v2215 = vunpack.c.l.b16 %v2166
      %v2216 = vunpack.c.l.b16 %v2167
      %v2217 = vunpack.c.l.b16 %v2168
      %v2218 = vpack.c.b16 %v2203, %v2202
      %v2219 = vpack.c.b16 %v2205, %v2204
      %v2220 = vpack.c.b16 %v2207, %v2206
      %v2221 = vpack.c.b16 %v2209, %v2208
      %v2222 = vpack.c.b16 %v2211, %v2210
      %v2223 = vpack.c.b16 %v2213, %v2212
      %v2224 = vpack.c.b16 %v2215, %v2214
      %v2225 = vpack.c.b16 %v2217, %v2216
      %v2250 = vunpack.c.l.b16 %v2170
      %v2251 = vunpack.c.l.b16 %v2171
      %v2252 = vunpack.c.l.b16 %v2172
      %v2253 = vunpack.c.l.b16 %v2173
      %v2254 = vunpack.c.l.b16 %v2174
      %v2255 = vunpack.c.l.b16 %v2175
      %v2256 = vunpack.c.l.b16 %v2176
      %v2257 = vunpack.c.l.b16 %v2177
      %v2258 = vunpack.c.l.b16 %v2178
      %v2259 = vunpack.c.l.b16 %v2179
      %v2260 = vunpack.c.l.b16 %v2180
      %v2261 = vunpack.c.l.b16 %v2181
      %v2262 = vunpack.c.l.b16 %v2182
      %v2263 = vunpack.c.l.b16 %v2183
      %v2264 = vunpack.c.l.b16 %v2184
      %v2265 = vunpack.c.l.b16 %v2185
      %v2266 = vpack.c.b16 %v2251, %v2250
      %v2267 = vpack.c.b16 %v2253, %v2252
      %v2268 = vpack.c.b16 %v2255, %v2254
      %v2269 = vpack.c.b16 %v2257, %v2256
      %v2270 = vpack.c.b16 %v2259, %v2258
      %v2271 = vpack.c.b16 %v2261, %v2260
      %v2272 = vpack.c.b16 %v2263, %v2262
      %v2273 = vpack.c.b16 %v2265, %v2264
      %2282 = vmatprep.subr.bf16.mxu0 0
      %2283 = vmatpush1.bf16.msra.mxu0 %v2273
      %2284 = vmatprep.subr.bf16.mxu0 0
      %2285 = vmatpush1.bf16.msra.mxu0 %v2272
      %2286 = vmatprep.subr.bf16.mxu0 0
      %2287 = vmatpush1.bf16.msra.mxu0 %v2271
      %2288 = vmatprep.subr.bf16.mxu0 0
      %2289 = vmatpush1.bf16.msra.mxu0 %v2270
      %2290 = vmatprep.subr.bf16.mxu0 0
      %2291 = vmatpush1.bf16.msra.mxu0 %v2269
      %2292 = vmatprep.subr.bf16.mxu0 0
      %2293 = vmatpush1.bf16.msra.mxu0 %v2268
      %2294 = vmatprep.subr.bf16.mxu0 0
      %2295 = vmatpush1.bf16.msra.mxu0 %v2267
      %2296 = vmatprep.subr.bf16.mxu0 0
      %2297 = vmatpush1.bf16.msra.mxu0 %v2266
      %2298 = vmatprep.subr.bf16.mxu0 0
      %2299 = vmatpush2.bf16.msra.mxu0 0
      %2300 = vmatprep.subr.bf16.mxu0 0
      %2301 = vmatpush2.bf16.msra.mxu0 0
      %2302 = vmatprep.subr.bf16.mxu0 0
      %2303 = vmatpush2.bf16.msra.mxu0 0
      %2304 = vmatprep.subr.bf16.mxu0 0
      %2305 = vmatpush2.bf16.msra.mxu0 0
      %2306 = vmatprep.subr.bf16.mxu0 0
      %2307 = vmatpush2.bf16.msra.mxu0 0
      %2308 = vmatprep.subr.bf16.mxu0 0
      %2309 = vmatpush2.bf16.msra.mxu0 0
      %2310 = vmatprep.subr.bf16.mxu0 0
      %2311 = vmatpush2.bf16.msra.mxu0 0
      %2312 = vmatprep.subr.bf16.mxu0 0
      %2313 = vmatpush2.bf16.msra.mxu0 0
      %2314 = vmatprep.mubr.bf16.mxu0 0
      %2315 = vmatmul.mubr.bf16.gmra.mxu0 %v2218
      %v2316 = vpop.f32.mrf.mxu0
      %v2317 = vadd.f32 0.0, %v2316
      %v2318 = vpop.f32.mrf.mxu0
      %v2319 = vpop.f32.mrf.mxu0
      %v2320 = vadd.f32 0.0, %v2319
      %v2321 = vpop.f32.mrf.mxu0
      %2322 = vmatprep.mubr.bf16.mxu0 0
      %2323 = vmatmul.mubr.bf16.gmra.mxu0 %v2219
      %v2324 = vpop.f32.mrf.mxu0
      %v2325 = vadd.f32 0.0, %v2324
      %v2326 = vpop.f32.mrf.mxu0
      %v2327 = vpop.f32.mrf.mxu0
      %v2328 = vadd.f32 0.0, %v2327
      %v2329 = vpop.f32.mrf.mxu0
      %2330 = vmatprep.mubr.bf16.mxu0 0
      %2331 = vmatmul.mubr.bf16.gmra.mxu0 %v2220
      %v2332 = vpop.f32.mrf.mxu0
      %v2333 = vadd.f32 0.0, %v2332
      %v2334 = vpop.f32.mrf.mxu0
      %v2335 = vpop.f32.mrf.mxu0
      %v2336 = vadd.f32 0.0, %v2335
      %v2337 = vpop.f32.mrf.mxu0
      %2338 = vmatprep.mubr.bf16.mxu0 0
      %2339 = vmatmul.mubr.bf16.gmra.mxu0 %v2221
      %v2340 = vpop.f32.mrf.mxu0
      %v2341 = vadd.f32 0.0, %v2340
      %v2342 = vpop.f32.mrf.mxu0
      %v2343 = vpop.f32.mrf.mxu0
      %v2344 = vadd.f32 0.0, %v2343
      %v2345 = vpop.f32.mrf.mxu0
      %2346 = vmatprep.mubr.bf16.mxu0 0
      %2347 = vmatmul.mubr.bf16.gmra.mxu0 %v2222
      %v2348 = vpop.f32.mrf.mxu0
      %v2349 = vadd.f32 0.0, %v2348
      %v2350 = vpop.f32.mrf.mxu0
      %v2351 = vpop.f32.mrf.mxu0
      %v2352 = vadd.f32 0.0, %v2351
      %v2353 = vpop.f32.mrf.mxu0
      %2354 = vmatprep.mubr.bf16.mxu0 0
      %2355 = vmatmul.mubr.bf16.gmra.mxu0 %v2223
      %v2356 = vpop.f32.mrf.mxu0
      %v2357 = vadd.f32 0.0, %v2356
      %v2358 = vpop.f32.mrf.mxu0
      %v2359 = vpop.f32.mrf.mxu0
      %v2360 = vadd.f32 0.0, %v2359
      %v2361 = vpop.f32.mrf.mxu0
      %2362 = vmatprep.mubr.bf16.mxu0 0
      %2363 = vmatmul.mubr.bf16.gmra.mxu0 %v2224
      %v2364 = vpop.f32.mrf.mxu0
      %v2365 = vadd.f32 0.0, %v2364
      %v2366 = vpop.f32.mrf.mxu0
      %v2367 = vpop.f32.mrf.mxu0
      %v2368 = vadd.f32 0.0, %v2367
      %v2369 = vpop.f32.mrf.mxu0
      %2370 = vmatprep.mubr.bf16.mxu0 0
      %2371 = vmatmul.mubr.bf16.gmra.mxu0 %v2225
      %v2372 = vpop.f32.mrf.mxu0
      %v2373 = vadd.f32 0.0, %v2372
      %v2374 = vpop.f32.mrf.mxu0
      %v2375 = vpop.f32.mrf.mxu0
      %v2376 = vadd.f32 0.0, %v2375
      %v2377 = vpop.f32.mrf.mxu0
      %2378 = vdwg.mxu0
      %v2379 = vadd.f32 %v2136, %v2317
      %v2380 = vadd.f32 %v2137, %v2320
      %v2381 = vadd.f32 %v2138, %v2325
      %v2382 = vadd.f32 %v2139, %v2328
      %v2383 = vadd.f32 %v2140, %v2333
      %v2384 = vadd.f32 %v2141, %v2336
      %v2385 = vadd.f32 %v2142, %v2341
      %v2386 = vadd.f32 %v2143, %v2344
      %v2387 = vadd.f32 %v2144, %v2349
      %v2388 = vadd.f32 %v2145, %v2352
      %v2389 = vadd.f32 %v2146, %v2357
      %v2390 = vadd.f32 %v2147, %v2360
      %v2391 = vadd.f32 %v2148, %v2365
      %v2392 = vadd.f32 %v2149, %v2368
      %v2393 = vadd.f32 %v2150, %v2373
      %v2394 = vadd.f32 %v2151, %v2376
      %v2395 = vld [vmem:[%s2152] sm:$0xf]
      %v2396 = vld [vmem:[%s2152 + $0x4] sm:$0xf]
      %v2397 = vld [vmem:[%s2152 + $0x8] sm:$0x1]
      %v2398 = vld [vmem:[%s2152 + $0xc] sm:$0xf]
      %v2399 = vld [vmem:[%s2152 + $0x10] sm:$0xf]
      %v2400 = vld [vmem:[%s2152 + $0x14] sm:$0x1]
      %v2401 = vld [vmem:[%s2152 + $0x18] sm:$0xf]
      %v2402 = vld [vmem:[%s2152 + $0x1c] sm:$0xf]
      %v2403 = vld [vmem:[%s2152 + $0x20] sm:$0x1]
      %v2404 = vld [vmem:[%s2152 + $0x24] sm:$0xf]
      %v2405 = vld [vmem:[%s2152 + $0x28] sm:$0xf]
      %v2406 = vld [vmem:[%s2152 + $0x2c] sm:$0x1]
      %v2407 = vld [vmem:[%s2152 + $0x30] sm:$0xf]
      %v2408 = vld [vmem:[%s2152 + $0x34] sm:$0xf]
      %v2409 = vld [vmem:[%s2152 + $0x38] sm:$0x1]
      %v2410 = vld [vmem:[%s2152 + $0x3c] sm:$0xf]
      %v2411 = vld [vmem:[%s2152 + $0x40] sm:$0xf]
      %v2412 = vld [vmem:[%s2152 + $0x44] sm:$0x1]
      %v2413 = vld [vmem:[%s2152 + $0x48] sm:$0xf]
      %v2414 = vld [vmem:[%s2152 + $0x4c] sm:$0xf]
      %v2415 = vld [vmem:[%s2152 + $0x50] sm:$0x1]
      %v2416 = vld [vmem:[%s2152 + $0x54] sm:$0xf]
      %v2417 = vld [vmem:[%s2152 + $0x58] sm:$0xf]
      %v2418 = vld [vmem:[%s2152 + $0x5c] sm:$0x1]
      %v2420 = vshrl.u32 %v2395, 16
      %v2422 = vrot.slane %v2420, 4
      %v2423 = vshll.u32 %v2395, 16
      %v2425 = vrot.slane %v2423, 5
      %v2426 = vor.u32 %v2422, %v2425
      %v2427 = vrot.slane %v2426, 4
      %v2429 = vshll.u32 %v2396, 16
      %v2431 = vrot.slane %v2429, 5
      %v2432 = vsel %vm312, %v2427, %v2431
      %v2433 = vshrl.u32 %v2396, 16
      %v2435 = vrot.slane %v2433, 4
      %v2436 = vor.u32 %v2435, %v2431
      %v2437 = vrot.slane %v2436, 4
      %v2439 = vshll.u32 %v2397, 16
      %v2441 = vrot.slane %v2439, 5
      %v2442 = vsel %vm312, %v2437, %v2441
      %v2444 = vshrl.u32 %v2398, 16
      %v2446 = vrot.slane %v2444, 4
      %v2447 = vshll.u32 %v2398, 16
      %v2449 = vrot.slane %v2447, 5
      %v2450 = vor.u32 %v2446, %v2449
      %v2451 = vrot.slane %v2450, 4
      %v2453 = vshll.u32 %v2399, 16
      %v2455 = vrot.slane %v2453, 5
      %v2456 = vsel %vm312, %v2451, %v2455
      %v2457 = vshrl.u32 %v2399, 16
      %v2459 = vrot.slane %v2457, 4
      %v2460 = vor.u32 %v2459, %v2455
      %v2461 = vrot.slane %v2460, 4
      %v2463 = vshll.u32 %v2400, 16
      %v2465 = vrot.slane %v2463, 5
      %v2466 = vsel %vm312, %v2461, %v2465
      %v2468 = vshrl.u32 %v2401, 16
      %v2470 = vrot.slane %v2468, 4
      %v2471 = vshll.u32 %v2401, 16
      %v2473 = vrot.slane %v2471, 5
      %v2474 = vor.u32 %v2470, %v2473
      %v2475 = vrot.slane %v2474, 4
      %v2477 = vshll.u32 %v2402, 16
      %v2479 = vrot.slane %v2477, 5
      %v2480 = vsel %vm312, %v2475, %v2479
      %v2481 = vshrl.u32 %v2402, 16
      %v2483 = vrot.slane %v2481, 4
      %v2484 = vor.u32 %v2483, %v2479
      %v2485 = vrot.slane %v2484, 4
      %v2487 = vshll.u32 %v2403, 16
      %v2489 = vrot.slane %v2487, 5
      %v2490 = vsel %vm312, %v2485, %v2489
      %v2492 = vshrl.u32 %v2404, 16
      %v2494 = vrot.slane %v2492, 4
      %v2495 = vshll.u32 %v2404, 16
      %v2497 = vrot.slane %v2495, 5
      %v2498 = vor.u32 %v2494, %v2497
      %v2499 = vrot.slane %v2498, 4
      %v2501 = vshll.u32 %v2405, 16
      %v2503 = vrot.slane %v2501, 5
      %v2504 = vsel %vm312, %v2499, %v2503
      %v2505 = vshrl.u32 %v2405, 16
      %v2507 = vrot.slane %v2505, 4
      %v2508 = vor.u32 %v2507, %v2503
      %v2509 = vrot.slane %v2508, 4
      %v2511 = vshll.u32 %v2406, 16
      %v2513 = vrot.slane %v2511, 5
      %v2514 = vsel %vm312, %v2509, %v2513
      %v2516 = vshrl.u32 %v2407, 16
      %v2518 = vrot.slane %v2516, 4
      %v2519 = vshll.u32 %v2407, 16
      %v2521 = vrot.slane %v2519, 5
      %v2522 = vor.u32 %v2518, %v2521
      %v2523 = vrot.slane %v2522, 4
      %v2525 = vshll.u32 %v2408, 16
      %v2527 = vrot.slane %v2525, 5
      %v2528 = vsel %vm312, %v2523, %v2527
      %v2529 = vshrl.u32 %v2408, 16
      %v2531 = vrot.slane %v2529, 4
      %v2532 = vor.u32 %v2531, %v2527
      %v2533 = vrot.slane %v2532, 4
      %v2535 = vshll.u32 %v2409, 16
      %v2537 = vrot.slane %v2535, 5
      %v2538 = vsel %vm312, %v2533, %v2537
      %v2540 = vshrl.u32 %v2410, 16
      %v2542 = vrot.slane %v2540, 4
      %v2543 = vshll.u32 %v2410, 16
      %v2545 = vrot.slane %v2543, 5
      %v2546 = vor.u32 %v2542, %v2545
      %v2547 = vrot.slane %v2546, 4
      %v2549 = vshll.u32 %v2411, 16
      %v2551 = vrot.slane %v2549, 5
      %v2552 = vsel %vm312, %v2547, %v2551
      %v2553 = vshrl.u32 %v2411, 16
      %v2555 = vrot.slane %v2553, 4
      %v2556 = vor.u32 %v2555, %v2551
      %v2557 = vrot.slane %v2556, 4
      %v2559 = vshll.u32 %v2412, 16
      %v2561 = vrot.slane %v2559, 5
      %v2562 = vsel %vm312, %v2557, %v2561
      %v2564 = vshrl.u32 %v2413, 16
      %v2566 = vrot.slane %v2564, 4
      %v2567 = vshll.u32 %v2413, 16
      %v2569 = vrot.slane %v2567, 5
      %v2570 = vor.u32 %v2566, %v2569
      %v2571 = vrot.slane %v2570, 4
      %v2573 = vshll.u32 %v2414, 16
      %v2575 = vrot.slane %v2573, 5
      %v2576 = vsel %vm312, %v2571, %v2575
      %v2577 = vshrl.u32 %v2414, 16
      %v2579 = vrot.slane %v2577, 4
      %v2580 = vor.u32 %v2579, %v2575
      %v2581 = vrot.slane %v2580, 4
      %v2583 = vshll.u32 %v2415, 16
      %v2585 = vrot.slane %v2583, 5
      %v2586 = vsel %vm312, %v2581, %v2585
      %v2588 = vshrl.u32 %v2416, 16
      %v2590 = vrot.slane %v2588, 4
      %v2591 = vshll.u32 %v2416, 16
      %v2593 = vrot.slane %v2591, 5
      %v2594 = vor.u32 %v2590, %v2593
      %v2595 = vrot.slane %v2594, 4
      %v2597 = vshll.u32 %v2417, 16
      %v2599 = vrot.slane %v2597, 5
      %v2600 = vsel %vm312, %v2595, %v2599
      %v2601 = vshrl.u32 %v2417, 16
      %v2603 = vrot.slane %v2601, 4
      %v2604 = vor.u32 %v2603, %v2599
      %v2605 = vrot.slane %v2604, 4
      %v2607 = vshll.u32 %v2418, 16
      %v2609 = vrot.slane %v2607, 5
      %v2610 = vsel %vm312, %v2605, %v2609
      %s2611 = scalar_lea.vmem %s1, 448
      %v2612 = vld [vmem:[%s2611] sm:$0xf]
      %v2613 = vld [vmem:[%s2611 + $0x4] sm:$0xf]
      %v2614 = vld [vmem:[%s2611 + $0x8] sm:$0xf]
      %v2615 = vld [vmem:[%s2611 + $0xc] sm:$0xf]
      %v2616 = vld [vmem:[%s2611 + $0x10] sm:$0xf]
      %v2617 = vld [vmem:[%s2611 + $0x14] sm:$0xf]
      %v2618 = vld [vmem:[%s2611 + $0x18] sm:$0xf]
      %v2619 = vld [vmem:[%s2611 + $0x1c] sm:$0xf]
      %v2620 = vld [vmem:[%s2611 + $0x20] sm:$0xf]
      %v2621 = vld [vmem:[%s2611 + $0x24] sm:$0xf]
      %v2622 = vld [vmem:[%s2611 + $0x28] sm:$0xf]
      %v2623 = vld [vmem:[%s2611 + $0x2c] sm:$0xf]
      %v2624 = vld [vmem:[%s2611 + $0x30] sm:$0xf]
      %v2625 = vld [vmem:[%s2611 + $0x34] sm:$0xf]
      %v2626 = vld [vmem:[%s2611 + $0x38] sm:$0xf]
      %v2627 = vld [vmem:[%s2611 + $0x3c] sm:$0xf]
      %v2628 = vunpack.c.l.b16 %v2432
      %v2629 = vunpack.c.l.b16 %v2442
      %v2630 = vunpack.c.l.b16 %v2456
      %v2631 = vunpack.c.l.b16 %v2466
      %v2632 = vunpack.c.l.b16 %v2480
      %v2633 = vunpack.c.l.b16 %v2490
      %v2634 = vunpack.c.l.b16 %v2504
      %v2635 = vunpack.c.l.b16 %v2514
      %v2636 = vunpack.c.l.b16 %v2528
      %v2637 = vunpack.c.l.b16 %v2538
      %v2638 = vunpack.c.l.b16 %v2552
      %v2639 = vunpack.c.l.b16 %v2562
      %v2640 = vunpack.c.l.b16 %v2576
      %v2641 = vunpack.c.l.b16 %v2586
      %v2642 = vunpack.c.l.b16 %v2600
      %v2643 = vunpack.c.l.b16 %v2610
      %v2644 = vpack.c.b16 %v2629, %v2628
      %v2645 = vpack.c.b16 %v2631, %v2630
      %v2646 = vpack.c.b16 %v2633, %v2632
      %v2647 = vpack.c.b16 %v2635, %v2634
      %v2648 = vpack.c.b16 %v2637, %v2636
      %v2649 = vpack.c.b16 %v2639, %v2638
      %v2650 = vpack.c.b16 %v2641, %v2640
      %v2651 = vpack.c.b16 %v2643, %v2642
      %v2676 = vunpack.c.l.b16 %v2612
      %v2677 = vunpack.c.l.b16 %v2613
      %v2678 = vunpack.c.l.b16 %v2614
      %v2679 = vunpack.c.l.b16 %v2615
      %v2680 = vunpack.c.l.b16 %v2616
      %v2681 = vunpack.c.l.b16 %v2617
      %v2682 = vunpack.c.l.b16 %v2618
      %v2683 = vunpack.c.l.b16 %v2619
      %v2684 = vunpack.c.l.b16 %v2620
      %v2685 = vunpack.c.l.b16 %v2621
      %v2686 = vunpack.c.l.b16 %v2622
      %v2687 = vunpack.c.l.b16 %v2623
      %v2688 = vunpack.c.l.b16 %v2624
      %v2689 = vunpack.c.l.b16 %v2625
      %v2690 = vunpack.c.l.b16 %v2626
      %v2691 = vunpack.c.l.b16 %v2627
      %v2692 = vpack.c.b16 %v2677, %v2676
      %v2693 = vpack.c.b16 %v2679, %v2678
      %v2694 = vpack.c.b16 %v2681, %v2680
      %v2695 = vpack.c.b16 %v2683, %v2682
      %v2696 = vpack.c.b16 %v2685, %v2684
      %v2697 = vpack.c.b16 %v2687, %v2686
      %v2698 = vpack.c.b16 %v2689, %v2688
      %v2699 = vpack.c.b16 %v2691, %v2690
      %2708 = vmatprep.subr.bf16.mxu0 0
      %2709 = vmatpush1.bf16.msra.mxu0 %v2699
      %2710 = vmatprep.subr.bf16.mxu0 0
      %2711 = vmatpush1.bf16.msra.mxu0 %v2698
      %2712 = vmatprep.subr.bf16.mxu0 0
      %2713 = vmatpush1.bf16.msra.mxu0 %v2697
      %2714 = vmatprep.subr.bf16.mxu0 0
      %2715 = vmatpush1.bf16.msra.mxu0 %v2696
      %2716 = vmatprep.subr.bf16.mxu0 0
      %2717 = vmatpush1.bf16.msra.mxu0 %v2695
      %2718 = vmatprep.subr.bf16.mxu0 0
      %2719 = vmatpush1.bf16.msra.mxu0 %v2694
      %2720 = vmatprep.subr.bf16.mxu0 0
      %2721 = vmatpush1.bf16.msra.mxu0 %v2693
      %2722 = vmatprep.subr.bf16.mxu0 0
      %2723 = vmatpush1.bf16.msra.mxu0 %v2692
      %2724 = vmatprep.subr.bf16.mxu0 0
      %2725 = vmatpush2.bf16.msra.mxu0 0
      %2726 = vmatprep.subr.bf16.mxu0 0
      %2727 = vmatpush2.bf16.msra.mxu0 0
      %2728 = vmatprep.subr.bf16.mxu0 0
      %2729 = vmatpush2.bf16.msra.mxu0 0
      %2730 = vmatprep.subr.bf16.mxu0 0
      %2731 = vmatpush2.bf16.msra.mxu0 0
      %2732 = vmatprep.subr.bf16.mxu0 0
      %2733 = vmatpush2.bf16.msra.mxu0 0
      %2734 = vmatprep.subr.bf16.mxu0 0
      %2735 = vmatpush2.bf16.msra.mxu0 0
      %2736 = vmatprep.subr.bf16.mxu0 0
      %2737 = vmatpush2.bf16.msra.mxu0 0
      %2738 = vmatprep.subr.bf16.mxu0 0
      %2739 = vmatpush2.bf16.msra.mxu0 0
      %2740 = vmatprep.mubr.bf16.mxu0 0
      %2741 = vmatmul.mubr.bf16.gmra.mxu0 %v2644
      %v2742 = vpop.f32.mrf.mxu0
      %v2743 = vadd.f32 0.0, %v2742
      %v2744 = vpop.f32.mrf.mxu0
      %v2745 = vpop.f32.mrf.mxu0
      %v2746 = vadd.f32 0.0, %v2745
      %v2747 = vpop.f32.mrf.mxu0
      %2748 = vmatprep.mubr.bf16.mxu0 0
      %2749 = vmatmul.mubr.bf16.gmra.mxu0 %v2645
      %v2750 = vpop.f32.mrf.mxu0
      %v2751 = vadd.f32 0.0, %v2750
      %v2752 = vpop.f32.mrf.mxu0
      %v2753 = vpop.f32.mrf.mxu0
      %v2754 = vadd.f32 0.0, %v2753
      %v2755 = vpop.f32.mrf.mxu0
      %2756 = vmatprep.mubr.bf16.mxu0 0
      %2757 = vmatmul.mubr.bf16.gmra.mxu0 %v2646
      %v2758 = vpop.f32.mrf.mxu0
      %v2759 = vadd.f32 0.0, %v2758
      %v2760 = vpop.f32.mrf.mxu0
      %v2761 = vpop.f32.mrf.mxu0
      %v2762 = vadd.f32 0.0, %v2761
      %v2763 = vpop.f32.mrf.mxu0
      %2764 = vmatprep.mubr.bf16.mxu0 0
      %2765 = vmatmul.mubr.bf16.gmra.mxu0 %v2647
      %v2766 = vpop.f32.mrf.mxu0
      %v2767 = vadd.f32 0.0, %v2766
      %v2768 = vpop.f32.mrf.mxu0
      %v2769 = vpop.f32.mrf.mxu0
      %v2770 = vadd.f32 0.0, %v2769
      %v2771 = vpop.f32.mrf.mxu0
      %2772 = vmatprep.mubr.bf16.mxu0 0
      %2773 = vmatmul.mubr.bf16.gmra.mxu0 %v2648
      %v2774 = vpop.f32.mrf.mxu0
      %v2775 = vadd.f32 0.0, %v2774
      %v2776 = vpop.f32.mrf.mxu0
      %v2777 = vpop.f32.mrf.mxu0
      %v2778 = vadd.f32 0.0, %v2777
      %v2779 = vpop.f32.mrf.mxu0
      %2780 = vmatprep.mubr.bf16.mxu0 0
      %2781 = vmatmul.mubr.bf16.gmra.mxu0 %v2649
      %v2782 = vpop.f32.mrf.mxu0
      %v2783 = vadd.f32 0.0, %v2782
      %v2784 = vpop.f32.mrf.mxu0
      %v2785 = vpop.f32.mrf.mxu0
      %v2786 = vadd.f32 0.0, %v2785
      %v2787 = vpop.f32.mrf.mxu0
      %2788 = vmatprep.mubr.bf16.mxu0 0
      %2789 = vmatmul.mubr.bf16.gmra.mxu0 %v2650
      %v2790 = vpop.f32.mrf.mxu0
      %v2791 = vadd.f32 0.0, %v2790
      %v2792 = vpop.f32.mrf.mxu0
      %v2793 = vpop.f32.mrf.mxu0
      %v2794 = vadd.f32 0.0, %v2793
      %v2795 = vpop.f32.mrf.mxu0
      %2796 = vmatprep.mubr.bf16.mxu0 0
      %2797 = vmatmul.mubr.bf16.gmra.mxu0 %v2651
      %v2798 = vpop.f32.mrf.mxu0
      %v2799 = vadd.f32 0.0, %v2798
      %v2800 = vpop.f32.mrf.mxu0
      %v2801 = vpop.f32.mrf.mxu0
      %v2802 = vadd.f32 0.0, %v2801
      %v2803 = vpop.f32.mrf.mxu0
      %2804 = vdwg.mxu0
      %v2805 = vadd.f32 %v2379, %v2743
      %v2806 = vadd.f32 %v2380, %v2746
      %v2807 = vadd.f32 %v2381, %v2751
      %v2808 = vadd.f32 %v2382, %v2754
      %v2809 = vadd.f32 %v2383, %v2759
      %v2810 = vadd.f32 %v2384, %v2762
      %v2811 = vadd.f32 %v2385, %v2767
      %v2812 = vadd.f32 %v2386, %v2770
      %v2813 = vadd.f32 %v2387, %v2775
      %v2814 = vadd.f32 %v2388, %v2778
      %v2815 = vadd.f32 %v2389, %v2783
      %v2816 = vadd.f32 %v2390, %v2786
      %v2817 = vadd.f32 %v2391, %v2791
      %v2818 = vadd.f32 %v2392, %v2794
      %v2819 = vadd.f32 %v2393, %v2799
      %v2820 = vadd.f32 %v2394, %v2802
      %v2821 = vld [vmem:[%s2152] sm:$0xe]
      %v2822 = vld [vmem:[%s2152 + $0xc] sm:$0xe]
      %v2823 = vld [vmem:[%s2152 + $0x18] sm:$0xe]
      %v2824 = vld [vmem:[%s2152 + $0x24] sm:$0xe]
      %v2825 = vld [vmem:[%s2152 + $0x30] sm:$0xe]
      %v2826 = vld [vmem:[%s2152 + $0x3c] sm:$0xe]
      %v2827 = vld [vmem:[%s2152 + $0x48] sm:$0xe]
      %v2828 = vld [vmem:[%s2152 + $0x54] sm:$0xe]
      %v2853 = vrot.slane %v2821, 5
      %v2854 = vrot.slane %v2853, 4
      %v2855 = vrot.slane %v2396, 5
      %v2856 = vsel %vm918, %v2854, %v2855
      %v2857 = vrot.slane %v2855, 4
      %v2858 = vrot.slane %v2397, 5
      %v2859 = vsel %vm918, %v2857, %v2858
      %v2860 = vrot.slane %v2822, 5
      %v2861 = vrot.slane %v2860, 4
      %v2862 = vrot.slane %v2399, 5
      %v2863 = vsel %vm918, %v2861, %v2862
      %v2864 = vrot.slane %v2862, 4
      %v2865 = vrot.slane %v2400, 5
      %v2866 = vsel %vm918, %v2864, %v2865
      %v2867 = vrot.slane %v2823, 5
      %v2868 = vrot.slane %v2867, 4
      %v2869 = vrot.slane %v2402, 5
      %v2870 = vsel %vm918, %v2868, %v2869
      %v2871 = vrot.slane %v2869, 4
      %v2872 = vrot.slane %v2403, 5
      %v2873 = vsel %vm918, %v2871, %v2872
      %v2874 = vrot.slane %v2824, 5
      %v2875 = vrot.slane %v2874, 4
      %v2876 = vrot.slane %v2405, 5
      %v2877 = vsel %vm918, %v2875, %v2876
      %v2878 = vrot.slane %v2876, 4
      %v2879 = vrot.slane %v2406, 5
      %v2880 = vsel %vm918, %v2878, %v2879
      %v2881 = vrot.slane %v2825, 5
      %v2882 = vrot.slane %v2881, 4
      %v2883 = vrot.slane %v2408, 5
      %v2884 = vsel %vm918, %v2882, %v2883
      %v2885 = vrot.slane %v2883, 4
      %v2886 = vrot.slane %v2409, 5
      %v2887 = vsel %vm918, %v2885, %v2886
      %v2888 = vrot.slane %v2826, 5
      %v2889 = vrot.slane %v2888, 4
      %v2890 = vrot.slane %v2411, 5
      %v2891 = vsel %vm918, %v2889, %v2890
      %v2892 = vrot.slane %v2890, 4
      %v2893 = vrot.slane %v2412, 5
      %v2894 = vsel %vm918, %v2892, %v2893
      %v2895 = vrot.slane %v2827, 5
      %v2896 = vrot.slane %v2895, 4
      %v2897 = vrot.slane %v2414, 5
      %v2898 = vsel %vm918, %v2896, %v2897
      %v2899 = vrot.slane %v2897, 4
      %v2900 = vrot.slane %v2415, 5
      %v2901 = vsel %vm918, %v2899, %v2900
      %v2902 = vrot.slane %v2828, 5
      %v2903 = vrot.slane %v2902, 4
      %v2904 = vrot.slane %v2417, 5
      %v2905 = vsel %vm918, %v2903, %v2904
      %v2906 = vrot.slane %v2904, 4
      %v2907 = vrot.slane %v2418, 5
      %v2908 = vsel %vm918, %v2906, %v2907
      %s2909 = scalar_lea.vmem %s1, 512
      %v2910 = vld [vmem:[%s2909] sm:$0xf]
      %v2911 = vld [vmem:[%s2909 + $0x4] sm:$0xf]
      %v2912 = vld [vmem:[%s2909 + $0x8] sm:$0xf]
      %v2913 = vld [vmem:[%s2909 + $0xc] sm:$0xf]
      %v2914 = vld [vmem:[%s2909 + $0x10] sm:$0xf]
      %v2915 = vld [vmem:[%s2909 + $0x14] sm:$0xf]
      %v2916 = vld [vmem:[%s2909 + $0x18] sm:$0xf]
      %v2917 = vld [vmem:[%s2909 + $0x1c] sm:$0xf]
      %v2918 = vld [vmem:[%s2909 + $0x20] sm:$0xf]
      %v2919 = vld [vmem:[%s2909 + $0x24] sm:$0xf]
      %v2920 = vld [vmem:[%s2909 + $0x28] sm:$0xf]
      %v2921 = vld [vmem:[%s2909 + $0x2c] sm:$0xf]
      %v2922 = vld [vmem:[%s2909 + $0x30] sm:$0xf]
      %v2923 = vld [vmem:[%s2909 + $0x34] sm:$0xf]
      %v2924 = vld [vmem:[%s2909 + $0x38] sm:$0xf]
      %v2925 = vld [vmem:[%s2909 + $0x3c] sm:$0xf]
      %v2926 = vunpack.c.l.b16 %v2856
      %v2927 = vunpack.c.l.b16 %v2859
      %v2928 = vunpack.c.l.b16 %v2863
      %v2929 = vunpack.c.l.b16 %v2866
      %v2930 = vunpack.c.l.b16 %v2870
      %v2931 = vunpack.c.l.b16 %v2873
      %v2932 = vunpack.c.l.b16 %v2877
      %v2933 = vunpack.c.l.b16 %v2880
      %v2934 = vunpack.c.l.b16 %v2884
      %v2935 = vunpack.c.l.b16 %v2887
      %v2936 = vunpack.c.l.b16 %v2891
      %v2937 = vunpack.c.l.b16 %v2894
      %v2938 = vunpack.c.l.b16 %v2898
      %v2939 = vunpack.c.l.b16 %v2901
      %v2940 = vunpack.c.l.b16 %v2905
      %v2941 = vunpack.c.l.b16 %v2908
      %v2942 = vpack.c.b16 %v2927, %v2926
      %v2943 = vpack.c.b16 %v2929, %v2928
      %v2944 = vpack.c.b16 %v2931, %v2930
      %v2945 = vpack.c.b16 %v2933, %v2932
      %v2946 = vpack.c.b16 %v2935, %v2934
      %v2947 = vpack.c.b16 %v2937, %v2936
      %v2948 = vpack.c.b16 %v2939, %v2938
      %v2949 = vpack.c.b16 %v2941, %v2940
      %v2974 = vunpack.c.l.b16 %v2910
      %v2975 = vunpack.c.l.b16 %v2911
      %v2976 = vunpack.c.l.b16 %v2912
      %v2977 = vunpack.c.l.b16 %v2913
      %v2978 = vunpack.c.l.b16 %v2914
      %v2979 = vunpack.c.l.b16 %v2915
      %v2980 = vunpack.c.l.b16 %v2916
      %v2981 = vunpack.c.l.b16 %v2917
      %v2982 = vunpack.c.l.b16 %v2918
      %v2983 = vunpack.c.l.b16 %v2919
      %v2984 = vunpack.c.l.b16 %v2920
      %v2985 = vunpack.c.l.b16 %v2921
      %v2986 = vunpack.c.l.b16 %v2922
      %v2987 = vunpack.c.l.b16 %v2923
      %v2988 = vunpack.c.l.b16 %v2924
      %v2989 = vunpack.c.l.b16 %v2925
      %v2990 = vpack.c.b16 %v2975, %v2974
      %v2991 = vpack.c.b16 %v2977, %v2976
      %v2992 = vpack.c.b16 %v2979, %v2978
      %v2993 = vpack.c.b16 %v2981, %v2980
      %v2994 = vpack.c.b16 %v2983, %v2982
      %v2995 = vpack.c.b16 %v2985, %v2984
      %v2996 = vpack.c.b16 %v2987, %v2986
      %v2997 = vpack.c.b16 %v2989, %v2988
      %3006 = vmatprep.subr.bf16.mxu0 0
      %3007 = vmatpush1.bf16.msra.mxu0 %v2997
      %3008 = vmatprep.subr.bf16.mxu0 0
      %3009 = vmatpush1.bf16.msra.mxu0 %v2996
      %3010 = vmatprep.subr.bf16.mxu0 0
      %3011 = vmatpush1.bf16.msra.mxu0 %v2995
      %3012 = vmatprep.subr.bf16.mxu0 0
      %3013 = vmatpush1.bf16.msra.mxu0 %v2994
      %3014 = vmatprep.subr.bf16.mxu0 0
      %3015 = vmatpush1.bf16.msra.mxu0 %v2993
      %3016 = vmatprep.subr.bf16.mxu0 0
      %3017 = vmatpush1.bf16.msra.mxu0 %v2992
      %3018 = vmatprep.subr.bf16.mxu0 0
      %3019 = vmatpush1.bf16.msra.mxu0 %v2991
      %3020 = vmatprep.subr.bf16.mxu0 0
      %3021 = vmatpush1.bf16.msra.mxu0 %v2990
      %3022 = vmatprep.subr.bf16.mxu0 0
      %3023 = vmatpush2.bf16.msra.mxu0 0
      %3024 = vmatprep.subr.bf16.mxu0 0
      %3025 = vmatpush2.bf16.msra.mxu0 0
      %3026 = vmatprep.subr.bf16.mxu0 0
      %3027 = vmatpush2.bf16.msra.mxu0 0
      %3028 = vmatprep.subr.bf16.mxu0 0
      %3029 = vmatpush2.bf16.msra.mxu0 0
      %3030 = vmatprep.subr.bf16.mxu0 0
      %3031 = vmatpush2.bf16.msra.mxu0 0
      %3032 = vmatprep.subr.bf16.mxu0 0
      %3033 = vmatpush2.bf16.msra.mxu0 0
      %3034 = vmatprep.subr.bf16.mxu0 0
      %3035 = vmatpush2.bf16.msra.mxu0 0
      %3036 = vmatprep.subr.bf16.mxu0 0
      %3037 = vmatpush2.bf16.msra.mxu0 0
      %3038 = vmatprep.mubr.bf16.mxu0 0
      %3039 = vmatmul.mubr.bf16.gmra.mxu0 %v2942
      %v3040 = vpop.f32.mrf.mxu0
      %v3041 = vadd.f32 0.0, %v3040
      %v3042 = vpop.f32.mrf.mxu0
      %v3043 = vpop.f32.mrf.mxu0
      %v3044 = vadd.f32 0.0, %v3043
      %v3045 = vpop.f32.mrf.mxu0
      %3046 = vmatprep.mubr.bf16.mxu0 0
      %3047 = vmatmul.mubr.bf16.gmra.mxu0 %v2943
      %v3048 = vpop.f32.mrf.mxu0
      %v3049 = vadd.f32 0.0, %v3048
      %v3050 = vpop.f32.mrf.mxu0
      %v3051 = vpop.f32.mrf.mxu0
      %v3052 = vadd.f32 0.0, %v3051
      %v3053 = vpop.f32.mrf.mxu0
      %3054 = vmatprep.mubr.bf16.mxu0 0
      %3055 = vmatmul.mubr.bf16.gmra.mxu0 %v2944
      %v3056 = vpop.f32.mrf.mxu0
      %v3057 = vadd.f32 0.0, %v3056
      %v3058 = vpop.f32.mrf.mxu0
      %v3059 = vpop.f32.mrf.mxu0
      %v3060 = vadd.f32 0.0, %v3059
      %v3061 = vpop.f32.mrf.mxu0
      %3062 = vmatprep.mubr.bf16.mxu0 0
      %3063 = vmatmul.mubr.bf16.gmra.mxu0 %v2945
      %v3064 = vpop.f32.mrf.mxu0
      %v3065 = vadd.f32 0.0, %v3064
      %v3066 = vpop.f32.mrf.mxu0
      %v3067 = vpop.f32.mrf.mxu0
      %v3068 = vadd.f32 0.0, %v3067
      %v3069 = vpop.f32.mrf.mxu0
      %3070 = vmatprep.mubr.bf16.mxu0 0
      %3071 = vmatmul.mubr.bf16.gmra.mxu0 %v2946
      %v3072 = vpop.f32.mrf.mxu0
      %v3073 = vadd.f32 0.0, %v3072
      %v3074 = vpop.f32.mrf.mxu0
      %v3075 = vpop.f32.mrf.mxu0
      %v3076 = vadd.f32 0.0, %v3075
      %v3077 = vpop.f32.mrf.mxu0
      %3078 = vmatprep.mubr.bf16.mxu0 0
      %3079 = vmatmul.mubr.bf16.gmra.mxu0 %v2947
      %v3080 = vpop.f32.mrf.mxu0
      %v3081 = vadd.f32 0.0, %v3080
      %v3082 = vpop.f32.mrf.mxu0
      %v3083 = vpop.f32.mrf.mxu0
      %v3084 = vadd.f32 0.0, %v3083
      %v3085 = vpop.f32.mrf.mxu0
      %3086 = vmatprep.mubr.bf16.mxu0 0
      %3087 = vmatmul.mubr.bf16.gmra.mxu0 %v2948
      %v3088 = vpop.f32.mrf.mxu0
      %v3089 = vadd.f32 0.0, %v3088
      %v3090 = vpop.f32.mrf.mxu0
      %v3091 = vpop.f32.mrf.mxu0
      %v3092 = vadd.f32 0.0, %v3091
      %v3093 = vpop.f32.mrf.mxu0
      %3094 = vmatprep.mubr.bf16.mxu0 0
      %3095 = vmatmul.mubr.bf16.gmra.mxu0 %v2949
      %v3096 = vpop.f32.mrf.mxu0
      %v3097 = vadd.f32 0.0, %v3096
      %v3098 = vpop.f32.mrf.mxu0
      %v3099 = vpop.f32.mrf.mxu0
      %v3100 = vadd.f32 0.0, %v3099
      %v3101 = vpop.f32.mrf.mxu0
      %3102 = vdwg.mxu0
      %v3103 = vadd.f32 %v2805, %v3041
      %v3104 = vadd.f32 %v2806, %v3044
      %v3105 = vadd.f32 %v2807, %v3049
      %v3106 = vadd.f32 %v2808, %v3052
      %v3107 = vadd.f32 %v2809, %v3057
      %v3108 = vadd.f32 %v2810, %v3060
      %v3109 = vadd.f32 %v2811, %v3065
      %v3110 = vadd.f32 %v2812, %v3068
      %v3111 = vadd.f32 %v2813, %v3073
      %v3112 = vadd.f32 %v2814, %v3076
      %v3113 = vadd.f32 %v2815, %v3081
      %v3114 = vadd.f32 %v2816, %v3084
      %v3115 = vadd.f32 %v2817, %v3089
      %v3116 = vadd.f32 %v2818, %v3092
      %v3117 = vadd.f32 %v2819, %v3097
      %v3118 = vadd.f32 %v2820, %v3100
      %v3119 = vld [vmem:[%s2] sm:$0x1]
      %v3121 = vlaneseq
      %v3122 = vshrl.u32 %v3121, 7
      %v3123 = vsub.s32 0, %v3122
      %v3124 = vrot.slane %v3119, %v3123
      %v3126 = vadd.f32 %v3103, %v3124
      %v3127 = vadd.f32 %v3104, %v3124
      %v3128 = vadd.f32 %v3105, %v3124
      %v3129 = vadd.f32 %v3106, %v3124
      %v3130 = vadd.f32 %v3107, %v3124
      %v3131 = vadd.f32 %v3108, %v3124
      %v3132 = vadd.f32 %v3109, %v3124
      %v3133 = vadd.f32 %v3110, %v3124
      %v3134 = vadd.f32 %v3111, %v3124
      %v3135 = vadd.f32 %v3112, %v3124
      %v3136 = vadd.f32 %v3113, %v3124
      %v3137 = vadd.f32 %v3114, %v3124
      %v3138 = vadd.f32 %v3115, %v3124
      %v3139 = vadd.f32 %v3116, %v3124
      %v3140 = vadd.f32 %v3117, %v3124
      %v3141 = vadd.f32 %v3118, %v3124
      %3142 = vst [vmem:[%s204] sm:$0xff] %v3126
      %3143 = vst [vmem:[%s204 + $0x8] sm:$0xff] %v3127
      %3144 = vst [vmem:[%s204 + $0x10] sm:$0xff] %v3128
      %3145 = vst [vmem:[%s204 + $0x18] sm:$0xff] %v3129
      %3146 = vst [vmem:[%s204 + $0x20] sm:$0xff] %v3130
      %3147 = vst [vmem:[%s204 + $0x28] sm:$0xff] %v3131
      %3148 = vst [vmem:[%s204 + $0x30] sm:$0xff] %v3132
      %3149 = vst [vmem:[%s204 + $0x38] sm:$0xff] %v3133
      %3150 = vst [vmem:[%s204 + $0x40] sm:$0xff] %v3134
      %3151 = vst [vmem:[%s204 + $0x48] sm:$0xff] %v3135
      %3152 = vst [vmem:[%s204 + $0x50] sm:$0xff] %v3136
      %3153 = vst [vmem:[%s204 + $0x58] sm:$0xff] %v3137
      %3154 = vst [vmem:[%s204 + $0x60] sm:$0xff] %v3138
      %3155 = vst [vmem:[%s204 + $0x68] sm:$0xff] %v3139
      %3156 = vst [vmem:[%s204 + $0x70] sm:$0xff] %v3140
      %3157 = vst [vmem:[%s204 + $0x78] sm:$0xff] %v3141
      %v3158 = vadd.f32 %v3126, %v3127
      %v3159 = vadd.f32 %v3158, %v3128
      %v3160 = vadd.f32 %v3159, %v3129
      %v3161 = vadd.f32 %v3160, %v3130
      %v3162 = vadd.f32 %v3161, %v3131
      %v3163 = vadd.f32 %v3162, %v3132
      %v3164 = vadd.f32 %v3163, %v3133
      %v3165 = vadd.f32 %v3164, %v3134
      %v3166 = vadd.f32 %v3165, %v3135
      %v3167 = vadd.f32 %v3166, %v3136
      %v3168 = vadd.f32 %v3167, %v3137
      %v3169 = vadd.f32 %v3168, %v3138
      %v3170 = vadd.f32 %v3169, %v3139
      %v3171 = vadd.f32 %v3170, %v3140
      %v3172 = vadd.f32 %v3171, %v3141
      %v3173 = vrot.slane %v3172, 4
      %v3174 = vadd.f32 %v3172, %v3173
      %v3175 = vrot.slane %v3174, 2
      %v3176 = vadd.f32 %v3174, %v3175
      %v3177 = vrot.slane %v3176, 1
      %v3178 = vadd.f32 %v3176, %v3177
      %3179 = vst [vmem:[%s208] sm:$0x1] %v3178
      %v3180 = vmul.f32 %v3126, %v3126
      %v3181 = vmul.f32 %v3127, %v3127
      %v3182 = vmul.f32 %v3128, %v3128
      %v3183 = vmul.f32 %v3129, %v3129
      %v3184 = vmul.f32 %v3130, %v3130
      %v3185 = vmul.f32 %v3131, %v3131
      %v3186 = vmul.f32 %v3132, %v3132
      %v3187 = vmul.f32 %v3133, %v3133
      %v3188 = vmul.f32 %v3134, %v3134
      %v3189 = vmul.f32 %v3135, %v3135
      %v3190 = vmul.f32 %v3136, %v3136
      %v3191 = vmul.f32 %v3137, %v3137
      %v3192 = vmul.f32 %v3138, %v3138
      %v3193 = vmul.f32 %v3139, %v3139
      %v3194 = vmul.f32 %v3140, %v3140
      %v3195 = vmul.f32 %v3141, %v3141
      %v3196 = vadd.f32 %v3180, %v3181
      %v3197 = vadd.f32 %v3196, %v3182
      %v3198 = vadd.f32 %v3197, %v3183
      %v3199 = vadd.f32 %v3198, %v3184
      %v3200 = vadd.f32 %v3199, %v3185
      %v3201 = vadd.f32 %v3200, %v3186
      %v3202 = vadd.f32 %v3201, %v3187
      %v3203 = vadd.f32 %v3202, %v3188
      %v3204 = vadd.f32 %v3203, %v3189
      %v3205 = vadd.f32 %v3204, %v3190
      %v3206 = vadd.f32 %v3205, %v3191
      %v3207 = vadd.f32 %v3206, %v3192
      %v3208 = vadd.f32 %v3207, %v3193
      %v3209 = vadd.f32 %v3208, %v3194
      %v3210 = vadd.f32 %v3209, %v3195
      %v3211 = vrot.slane %v3210, 4
      %v3212 = vadd.f32 %v3210, %v3211
      %v3213 = vrot.slane %v3212, 2
      %v3214 = vadd.f32 %v3212, %v3213
      %v3215 = vrot.slane %v3214, 1
      %v3216 = vadd.f32 %v3214, %v3215
      %3217 = vst [vmem:[%s208 + $0x1] sm:$0x1] %v3216
      %p3218 = scmp.lt.s32.totalorder %s16, 3
      %s3219 = scalar_select %p3218, %s16, 3
      %s3220 = smul.addr %s3219, 16
      %s3221 = smul.addr %s3220, 8
      %s3222 = scalar_lea.vmem %s3, %s3221
      %p3223 = scmp.lt.s32.totalorder %s16, 3
      %s3224 = scalar_select %p3223, %s16, 3
      %s3225 = smul.addr %s3224, 2
      %s3226 = scalar_lea.vmem %s4, %s3225
      // Predicated region
      $region33: #{vgg_block_pallas.3} parent=31 // pred_check
        %p3227 = pneg %p102
      $region34: #{vgg_block_pallas.3} parent=31 // pred_check_branch
        %3229 = sbr.rel (%p3227) target = $region36
      $region35: #{vgg_block_pallas.3} parent=31 // pred_region
        _
      $region36: #{vgg_block_pallas.3} parent=31 // pred_fallthru
        _
      // Predicated region
      $region37: #{vgg_block_pallas.3} parent=31 // pred_check
        %p3230 = pneg %p128
      $region38: #{vgg_block_pallas.3} parent=31 // pred_check_branch
        %3232 = sbr.rel (%p3230) target = $region40
      $region39: #{vgg_block_pallas.3} parent=31 // pred_region
        _
      $region40: #{vgg_block_pallas.3} parent=31 // pred_fallthru
        _
    $region32: #{vgg_block_pallas.3} parent=5 // pred_fallthru
      _
    %p3233 = scmp.le.s32.totalorder 2, %s11
    // Predicated region
    $region41: #{vgg_block_pallas.3} parent=5 // pred_check
      %p3234 = pneg %p3233
    $region42: #{vgg_block_pallas.3} parent=5 // pred_check_branch
      %3236 = sbr.rel (%p3234) target = $region44
    $region43: #{vgg_block_pallas.3} parent=5 // pred_region
      %s3237 = ssub.s32 %s11, 2
      // Predicated region
      $region45: #{vgg_block_pallas.3} parent=43 // pred_check
        %p3238 = pneg %p108
      $region46: #{vgg_block_pallas.3} parent=43 // pred_check_branch
        %3240 = sbr.rel (%p3238) target = $region48
      $region47: #{vgg_block_pallas.3} parent=43 // pred_region
        %p3241 = scmp.lt.s32.totalorder %s17, 3
        %s3242 = scalar_select %p3241, %s17, 3
        %s3243 = smul.addr %s3242, 16
        %s3244 = smul.addr %s3243, 8
        %s3245 = scalar_lea.vmem %s3, %s3244
      $region48: #{vgg_block_pallas.3} parent=43 // pred_fallthru
        _
      // Predicated region
      $region49: #{vgg_block_pallas.3} parent=43 // pred_check
        %p3246 = pneg %p134
      $region50: #{vgg_block_pallas.3} parent=43 // pred_check_branch
        %3248 = sbr.rel (%p3246) target = $region52
      $region51: #{vgg_block_pallas.3} parent=43 // pred_region
        %p3249 = scmp.lt.s32.totalorder %s17, 3
        %s3250 = scalar_select %p3249, %s17, 3
        %s3251 = smul.addr %s3250, 2
        %s3252 = scalar_lea.vmem %s4, %s3251
      $region52: #{vgg_block_pallas.3} parent=43 // pred_fallthru
        _
    $region44: #{vgg_block_pallas.3} parent=5 // pred_fallthru
      _
  $region6: #{vgg_block_pallas.3} parent=0 // loop_footer
    %s15 = sadd.s32 1, %s11
  $region7: #{vgg_block_pallas.3} parent=0 // loop_footer_branch
    %10 = sbr.rel target = $region3
  $region8: #{vgg_block_pallas.3} parent=0 // loop_exit
    _

// kernel: vgg_block_pallas.4
$region0: #{vgg_block_pallas.4}
  #allocation0 [shape = 'u32[]', space=smem, size = 0x4, offset = 0x4, fixed_abs, tag = 'smem constant byte address 0x4 - core index']
  #allocation1 [shape = 'u32[144,128]{1,0:T(1,128)}', space=vmem, size = 0x12000, scoped, tag = 'internal scratch']
  #allocation2 [shape = 'bf16[10,18,128]{2,1,0:T(8,128)(2,1)}', space=vmem, size = 0xf000, scoped, tag = 'scratch operand']
  %s0 = inlined_call_operand.vmem [shape: f32[4,10,18,128], index: 0, kind: input, shape index: {}]
  %s1 = inlined_call_operand.vmem [shape: bf16[3,3,128,128], index: 1, kind: input, shape index: {}]
  %s2 = inlined_call_operand.vmem [shape: f32[1,128], index: 2, kind: input, shape index: {}]
  %s3 = inlined_call_operand.vmem [shape: f32[1,1,128], index: 3, kind: input, shape index: {}]
  %s4 = inlined_call_operand.vmem [shape: f32[1,1,128], index: 4, kind: input, shape index: {}]
  %s5 = inlined_call_operand.vmem [shape: f32[4,8,16,128], index: 5, kind: output, shape index: {0}]
  %s6 = inlined_call_operand.vmem [shape: f32[4,2,128], index: 6, kind: output, shape index: {1}]
  %7 = xla_tuple %s5, %s6
  %s8 = sld [smem:[#allocation0]]
  $region61: #{vgg_block_pallas.4} parent=0
    _
  %s10 = ssub.s32 1, %s8
  %s11 = scalar_select 0, %s10, %s8
  loop: start=0, step=1, limit=6
  $region2: #{vgg_block_pallas.4} parent=0 // loop_pre_header
    _
  $region3: #{vgg_block_pallas.4} parent=0 // loop_header
    %s13 = sphi 0, %s17
    %p14 = scmp.ge.s32.totalorder %s13, 6
    %s23 = sphi 0, %s25
    %s26 = sphi 0, %s23
    %s27 = sphi 0, %s26
    %s43 = sphi 0, %s27
    %s47 = sphi 0, %s47
    %s49 = sphi 0, %s47
    %s50 = sphi 0, %s49
    %s64 = sphi 0, %s50
    %s68 = sphi 0, %s68
    %s70 = sphi 0, %s68
    %s71 = sphi 0, %s70
    %s85 = sphi 0, %s71
    %s89 = sphi 0, %s89
    %s91 = sphi 0, %s89
    %s92 = sphi 0, %s91
    %s106 = sphi 0, %s92
    %s110 = sphi 0, %s110
    %s112 = sphi 0, %s110
    %s113 = sphi 0, %s112
    %s127 = sphi 0, %s113
    %s133 = sphi 0, %s135
    %s136 = sphi 0, %s133
    %s137 = sphi 0, %s136
    %s153 = sphi 0, %s137
    %s159 = sphi 0, %s161
    %s162 = sphi 0, %s159
    %s163 = sphi 0, %s162
    %s179 = sphi 0, %s163
  $region4: #{vgg_block_pallas.4} parent=0 // loop_header_branch
    %16 = sbr.rel (%p14) target = $region8
  $region5: #{vgg_block_pallas.4} parent=0 // loop_body
    %s18 = ssub.s32 %s13, 1
    %s19 = ssub.s32 %s13, 2
    %s20 = sadd.s32 %s13, 1
    %s21 = ssub.s32 %s13, %s20
    %p22 = scmp.eq.s32.totalorder %s21, 0
    %s24 = sadd.s32 %s23, 1
    %s25 = scalar_select %p22, %s23, %s24
    %p28 = pneg %p22
    %p29 = scmp.eq.s32.totalorder %s13, 3
    %p30 = por %p28, %p29
    %p31 = scmp.ne.s32.totalorder %s23, %s26
    %p32 = scmp.eq.s32.totalorder %s13, 0
    %p33 = por %p31, %p32
    %p34 = scmp.ne.s32.totalorder %s23, %s26
    %p35 = scmp.eq.s32.totalorder %s18, 3
    %p36 = por %p34, %p35
    %p37 = scmp.ne.s32.totalorder %s26, %s27
    %p38 = scmp.eq.s32.totalorder %s18, 0
    %p39 = por %p37, %p38
    %p40 = scmp.ne.s32.totalorder %s26, %s27
    %p41 = scmp.eq.s32.totalorder %s19, 3
    %p42 = por %p40, %p41
    %p44 = scmp.ne.s32.totalorder %s27, %s43
    %p45 = scmp.eq.s32.totalorder %s19, 0
    %p46 = por %p44, %p45
    %s48 = sadd.s32 %s47, 1
    %p51 = scmp.eq.s32.totalorder %s13, 3
    %p52 = scmp.ne.s32.totalorder %s47, %s49
    %p53 = scmp.eq.s32.totalorder %s13, 0
    %p54 = por %p52, %p53
    %p55 = scmp.ne.s32.totalorder %s47, %s49
    %p56 = scmp.eq.s32.totalorder %s18, 3
    %p57 = por %p55, %p56
    %p58 = scmp.ne.s32.totalorder %s49, %s50
    %p59 = scmp.eq.s32.totalorder %s18, 0
    %p60 = por %p58, %p59
    %p61 = scmp.ne.s32.totalorder %s49, %s50
    %p62 = scmp.eq.s32.totalorder %s19, 3
    %p63 = por %p61, %p62
    %p65 = scmp.ne.s32.totalorder %s50, %s64
    %p66 = scmp.eq.s32.totalorder %s19, 0
    %p67 = por %p65, %p66
    %s69 = sadd.s32 %s68, 1
    %p72 = scmp.eq.s32.totalorder %s13, 3
    %p73 = scmp.ne.s32.totalorder %s68, %s70
    %p74 = scmp.eq.s32.totalorder %s13, 0
    %p75 = por %p73, %p74
    %p76 = scmp.ne.s32.totalorder %s68, %s70
    %p77 = scmp.eq.s32.totalorder %s18, 3
    %p78 = por %p76, %p77
    %p79 = scmp.ne.s32.totalorder %s70, %s71
    %p80 = scmp.eq.s32.totalorder %s18, 0
    %p81 = por %p79, %p80
    %p82 = scmp.ne.s32.totalorder %s70, %s71
    %p83 = scmp.eq.s32.totalorder %s19, 3
    %p84 = por %p82, %p83
    %p86 = scmp.ne.s32.totalorder %s71, %s85
    %p87 = scmp.eq.s32.totalorder %s19, 0
    %p88 = por %p86, %p87
    %s90 = sadd.s32 %s89, 1
    %p93 = scmp.eq.s32.totalorder %s13, 3
    %p94 = scmp.ne.s32.totalorder %s89, %s91
    %p95 = scmp.eq.s32.totalorder %s13, 0
    %p96 = por %p94, %p95
    %p97 = scmp.ne.s32.totalorder %s89, %s91
    %p98 = scmp.eq.s32.totalorder %s18, 3
    %p99 = por %p97, %p98
    %p100 = scmp.ne.s32.totalorder %s91, %s92
    %p101 = scmp.eq.s32.totalorder %s18, 0
    %p102 = por %p100, %p101
    %p103 = scmp.ne.s32.totalorder %s91, %s92
    %p104 = scmp.eq.s32.totalorder %s19, 3
    %p105 = por %p103, %p104
    %p107 = scmp.ne.s32.totalorder %s92, %s106
    %p108 = scmp.eq.s32.totalorder %s19, 0
    %p109 = por %p107, %p108
    %s111 = sadd.s32 %s110, 1
    %p114 = scmp.eq.s32.totalorder %s13, 3
    %p115 = scmp.ne.s32.totalorder %s110, %s112
    %p116 = scmp.eq.s32.totalorder %s13, 0
    %p117 = por %p115, %p116
    %p118 = scmp.ne.s32.totalorder %s110, %s112
    %p119 = scmp.eq.s32.totalorder %s18, 3
    %p120 = por %p118, %p119
    %p121 = scmp.ne.s32.totalorder %s112, %s113
    %p122 = scmp.eq.s32.totalorder %s18, 0
    %p123 = por %p121, %p122
    %p124 = scmp.ne.s32.totalorder %s112, %s113
    %p125 = scmp.eq.s32.totalorder %s19, 3
    %p126 = por %p124, %p125
    %p128 = scmp.ne.s32.totalorder %s113, %s127
    %p129 = scmp.eq.s32.totalorder %s19, 0
    %p130 = por %p128, %p129
    %s131 = ssub.s32 %s13, %s20
    %p132 = scmp.eq.s32.totalorder %s131, 0
    %s134 = sadd.s32 %s133, 1
    %s135 = scalar_select %p132, %s133, %s134
    %p138 = pneg %p132
    %p139 = scmp.eq.s32.totalorder %s13, 3
    %p140 = por %p138, %p139
    %p141 = scmp.ne.s32.totalorder %s133, %s136
    %p142 = scmp.eq.s32.totalorder %s13, 0
    %p143 = por %p141, %p142
    %p144 = scmp.ne.s32.totalorder %s133, %s136
    %p145 = scmp.eq.s32.totalorder %s18, 3
    %p146 = por %p144, %p145
    %p147 = scmp.ne.s32.totalorder %s136, %s137
    %p148 = scmp.eq.s32.totalorder %s18, 0
    %p149 = por %p147, %p148
    %p150 = scmp.ne.s32.totalorder %s136, %s137
    %p151 = scmp.eq.s32.totalorder %s19, 3
    %p152 = por %p150, %p151
    %p154 = scmp.ne.s32.totalorder %s137, %s153
    %p155 = scmp.eq.s32.totalorder %s19, 0
    %p156 = por %p154, %p155
    %s157 = ssub.s32 %s13, %s20
    %p158 = scmp.eq.s32.totalorder %s157, 0
    %s160 = sadd.s32 %s159, 1
    %s161 = scalar_select %p158, %s159, %s160
    %p164 = pneg %p158
    %p165 = scmp.eq.s32.totalorder %s13, 3
    %p166 = por %p164, %p165
    %p167 = scmp.ne.s32.totalorder %s159, %s162
    %p168 = scmp.eq.s32.totalorder %s13, 0
    %p169 = por %p167, %p168
    %p170 = scmp.ne.s32.totalorder %s159, %s162
    %p171 = scmp.eq.s32.totalorder %s18, 3
    %p172 = por %p170, %p171
    %p173 = scmp.ne.s32.totalorder %s162, %s163
    %p174 = scmp.eq.s32.totalorder %s18, 0
    %p175 = por %p173, %p174
    %p176 = scmp.ne.s32.totalorder %s162, %s163
    %p177 = scmp.eq.s32.totalorder %s19, 3
    %p178 = por %p176, %p177
    %p180 = scmp.ne.s32.totalorder %s163, %s179
    %p181 = scmp.eq.s32.totalorder %s19, 0
    %p182 = por %p180, %p181
    %p183 = scmp.le.s32.totalorder 1, %s13
    %p184 = scmp.lt.s32.totalorder %s13, 5
    %p185 = pnand %p183, %p184
    %p186 = pneg %p185
    // Predicated region
    $region9: #{vgg_block_pallas.4} parent=5 // pred_check
      _
    $region10: #{vgg_block_pallas.4} parent=5 // pred_check_branch
      %188 = sbr.rel (%p185) target = $region12
    $region11: #{vgg_block_pallas.4} parent=5 // pred_region
      %s189 = ssub.s32 %s13, 1
      // Predicated region
      $region13: #{vgg_block_pallas.4} parent=11 // pred_check
        %p190 = pneg %p60
      $region14: #{vgg_block_pallas.4} parent=11 // pred_check_branch
        %192 = sbr.rel (%p190) target = $region16
      $region15: #{vgg_block_pallas.4} parent=11 // pred_region
        _
      $region16: #{vgg_block_pallas.4} parent=11 // pred_fallthru
        _
      // Predicated region
      $region17: #{vgg_block_pallas.4} parent=11 // pred_check
        %p193 = pneg %p81
      $region18: #{vgg_block_pallas.4} parent=11 // pred_check_branch
        %195 = sbr.rel (%p193) target = $region20
      $region19: #{vgg_block_pallas.4} parent=11 // pred_region
        _
      $region20: #{vgg_block_pallas.4} parent=11 // pred_fallthru
        _
      // Predicated region
      $region21: #{vgg_block_pallas.4} parent=11 // pred_check
        %p196 = pneg %p102
      $region22: #{vgg_block_pallas.4} parent=11 // pred_check_branch
        %198 = sbr.rel (%p196) target = $region24
      $region23: #{vgg_block_pallas.4} parent=11 // pred_region
        _
      $region24: #{vgg_block_pallas.4} parent=11 // pred_fallthru
        _
      // Predicated region
      $region25: #{vgg_block_pallas.4} parent=11 // pred_check
        %p199 = pneg %p123
      $region26: #{vgg_block_pallas.4} parent=11 // pred_check_branch
        %201 = sbr.rel (%p199) target = $region28
      $region27: #{vgg_block_pallas.4} parent=11 // pred_region
        _
      $region28: #{vgg_block_pallas.4} parent=11 // pred_fallthru
        _
    $region12: #{vgg_block_pallas.4} parent=5 // pred_fallthru
      _
    %p202 = scmp.lt.s32.totalorder %s13, 4
    // Predicated region
    $region29: #{vgg_block_pallas.4} parent=5 // pred_check
      %p203 = pneg %p202
    $region30: #{vgg_block_pallas.4} parent=5 // pred_check_branch
      %205 = sbr.rel (%p203) target = $region32
    $region31: #{vgg_block_pallas.4} parent=5 // pred_region
      // Predicated region
      $region33: #{vgg_block_pallas.4} parent=31 // pred_check
        %p206 = pneg %p33
      $region34: #{vgg_block_pallas.4} parent=31 // pred_check_branch
        %208 = sbr.rel (%p206) target = $region36
      $region35: #{vgg_block_pallas.4} parent=31 // pred_region
        %p209 = scmp.lt.s32.totalorder %s13, 3
        %s210 = scalar_select %p209, %s13, 3
        %s211 = smul.addr %s210, 30
        %s212 = smul.addr %s211, 8
        %s213 = scalar_lea.vmem %s0, %s212
      $region36: #{vgg_block_pallas.4} parent=31 // pred_fallthru
        _
    $region32: #{vgg_block_pallas.4} parent=5 // pred_fallthru
      _
    %p214 = scmp.le.s32.totalorder 1, %s13
    %p215 = scmp.lt.s32.totalorder %s13, 5
    %p216 = pnand %p214, %p215
    %p217 = pneg %p216
    // Predicated region
    $region37: #{vgg_block_pallas.4} parent=5 // pred_check
      _
    $region38: #{vgg_block_pallas.4} parent=5 // pred_check_branch
      %219 = sbr.rel (%p216) target = $region40
    $region39: #{vgg_block_pallas.4} parent=5 // pred_region
      %s220 = ssub.s32 %s13, 1
      %p221 = scmp.lt.s32.totalorder %s18, 3
      %s222 = scalar_select %p221, %s18, 3
      %s223 = smul.addr %s222, 30
      %s224 = smul.addr %s223, 8
      %s225 = scalar_lea.vmem %s0, %s224
      %p226 = pneg %p39
      %p227 = pneg %p36
      %p228 = pneg %p60
      %p229 = pneg %p57
      %p230 = pneg %p81
      %p231 = pneg %p78
      %p232 = pneg %p102
      %p233 = pneg %p99
      %p234 = pneg %p123
      %p235 = pneg %p120
      %p236 = pneg %p149
      %p237 = pneg %p146
      %p238 = scmp.lt.s32.totalorder %s18, 3
      %s239 = scalar_select %p238, %s18, 3
      %s240 = smul.addr %s239, 16
      %s241 = smul.addr %s240, 8
      %s242 = scalar_lea.vmem %s5, %s241
      %p243 = pneg %p175
      %p244 = pneg %p172
      %p245 = scmp.lt.s32.totalorder %s18, 3
      %s246 = scalar_select %p245, %s18, 3
      %s247 = smul.addr %s246, 2
      %s248 = scalar_lea.vmem %s6, %s247
      %p249 = scmp.lt.s32.totalorder %s18, 3
      %s250 = scalar_select %p249, %s18, 3
      %s251 = smul.addr %s250, 30
      %s252 = smul.addr %s251, 8
      %s253 = scalar_lea.vmem %s0, %s252
      %p254 = scmp.lt.s32.totalorder %s18, 3
      %s255 = scalar_select %p254, %s18, 3
      %s256 = smul.addr %s255, 16
      %s257 = smul.addr %s256, 8
      %s258 = scalar_lea.vmem %s5, %s257
      %p259 = scmp.lt.s32.totalorder %s18, 3
      %s260 = scalar_select %p259, %s18, 3
      %s261 = smul.addr %s260, 2
      %s262 = scalar_lea.vmem %s6, %s261
      %v264 = vld [vmem:[%s253] sm:$0xff]
      %v265 = vld [vmem:[%s253 + $0x8] sm:$0xff]
      %v266 = vld [vmem:[%s253 + $0x10] sm:$0x3]
      %v267 = vld [vmem:[%s253 + $0x18] sm:$0xff]
      %v268 = vld [vmem:[%s253 + $0x20] sm:$0xff]
      %v269 = vld [vmem:[%s253 + $0x28] sm:$0x3]
      %v270 = vld [vmem:[%s253 + $0x30] sm:$0xff]
      %v271 = vld [vmem:[%s253 + $0x38] sm:$0xff]
      %v272 = vld [vmem:[%s253 + $0x40] sm:$0x3]
      %v273 = vld [vmem:[%s253 + $0x48] sm:$0xff]
      %v274 = vld [vmem:[%s253 + $0x50] sm:$0xff]
      %v275 = vld [vmem:[%s253 + $0x58] sm:$0x3]
      %v276 = vld [vmem:[%s253 + $0x60] sm:$0xff]
      %v277 = vld [vmem:[%s253 + $0x68] sm:$0xff]
      %v278 = vld [vmem:[%s253 + $0x70] sm:$0x3]
      %v279 = vld [vmem:[%s253 + $0x78] sm:$0xff]
      %v280 = vld [vmem:[%s253 + $0x80] sm:$0xff]
      %v281 = vld [vmem:[%s253 + $0x88] sm:$0x3]
      %v282 = vld [vmem:[%s253 + $0x90] sm:$0xff]
      %v283 = vld [vmem:[%s253 + $0x98] sm:$0xff]
      %v284 = vld [vmem:[%s253 + $0xa0] sm:$0x3]
      %v285 = vld [vmem:[%s253 + $0xa8] sm:$0xff]
      %v286 = vld [vmem:[%s253 + $0xb0] sm:$0xff]
      %v287 = vld [vmem:[%s253 + $0xb8] sm:$0x3]
      %v288 = vld [vmem:[%s253 + $0xc0] sm:$0xff]
      %v289 = vld [vmem:[%s253 + $0xc8] sm:$0xff]
      %v290 = vld [vmem:[%s253 + $0xd0] sm:$0x3]
      %v291 = vld [vmem:[%s253 + $0xd8] sm:$0xff]
      %v292 = vld [vmem:[%s253 + $0xe0] sm:$0xff]
      %v293 = vld [vmem:[%s253 + $0xe8] sm:$0x3]
      %v294 = vld [vmem:[%s3] sm:$0x1]
      %v296 = vlaneseq
      %v297 = vshrl.u32 %v296, 7
      %v298 = vsub.s32 0, %v297
      %v299 = vrot.slane %v294, %v298
      %v301 = vmul.f32 %v264, %v299
      %v302 = vmul.f32 %v265, %v299
      %v303 = vmul.f32 %v266, %v299
      %v304 = vmul.f32 %v267, %v299
      %v305 = vmul.f32 %v268, %v299
      %v306 = vmul.f32 %v269, %v299
      %v307 = vmul.f32 %v270, %v299
      %v308 = vmul.f32 %v271, %v299
      %v309 = vmul.f32 %v272, %v299
      %v310 = vmul.f32 %v273, %v299
      %v311 = vmul.f32 %v274, %v299
      %v312 = vmul.f32 %v275, %v299
      %v313 = vmul.f32 %v276, %v299
      %v314 = vmul.f32 %v277, %v299
      %v315 = vmul.f32 %v278, %v299
      %v316 = vmul.f32 %v279, %v299
      %v317 = vmul.f32 %v280, %v299
      %v318 = vmul.f32 %v281, %v299
      %v319 = vmul.f32 %v282, %v299
      %v320 = vmul.f32 %v283, %v299
      %v321 = vmul.f32 %v284, %v299
      %v322 = vmul.f32 %v285, %v299
      %v323 = vmul.f32 %v286, %v299
      %v324 = vmul.f32 %v287, %v299
      %v325 = vmul.f32 %v288, %v299
      %v326 = vmul.f32 %v289, %v299
      %v327 = vmul.f32 %v290, %v299
      %v328 = vmul.f32 %v291, %v299
      %v329 = vmul.f32 %v292, %v299
      %v330 = vmul.f32 %v293, %v299
      %v331 = vld [vmem:[%s4] sm:$0x1]
      %v333 = vlaneseq
      %v334 = vshrl.u32 %v333, 7
      %v335 = vsub.s32 0, %v334
      %v336 = vrot.slane %v331, %v335
      %v338 = vadd.f32 %v301, %v336
      %v339 = vadd.f32 %v302, %v336
      %v340 = vadd.f32 %v303, %v336
      %v341 = vadd.f32 %v304, %v336
      %v342 = vadd.f32 %v305, %v336
      %v343 = vadd.f32 %v306, %v336
      %v344 = vadd.f32 %v307, %v336
      %v345 = vadd.f32 %v308, %v336
      %v346 = vadd.f32 %v309, %v336
      %v347 = vadd.f32 %v310, %v336
      %v348 = vadd.f32 %v311, %v336
      %v349 = vadd.f32 %v312, %v336
      %v350 = vadd.f32 %v313, %v336
      %v351 = vadd.f32 %v314, %v336
      %v352 = vadd.f32 %v315, %v336
      %v353 = vadd.f32 %v316, %v336
      %v354 = vadd.f32 %v317, %v336
      %v355 = vadd.f32 %v318, %v336
      %v356 = vadd.f32 %v319, %v336
      %v357 = vadd.f32 %v320, %v336
      %v358 = vadd.f32 %v321, %v336
      %v359 = vadd.f32 %v322, %v336
      %v360 = vadd.f32 %v323, %v336
      %v361 = vadd.f32 %v324, %v336
      %v362 = vadd.f32 %v325, %v336
      %v363 = vadd.f32 %v326, %v336
      %v364 = vadd.f32 %v327, %v336
      %v365 = vadd.f32 %v328, %v336
      %v366 = vadd.f32 %v329, %v336
      %v367 = vadd.f32 %v330, %v336
      %v368 = vmax.f32 %v338, 0.0
      %v369 = vmax.f32 %v339, 0.0
      %v370 = vmax.f32 %v340, 0.0
      %v371 = vmax.f32 %v341, 0.0
      %v372 = vmax.f32 %v342, 0.0
      %v373 = vmax.f32 %v343, 0.0
      %v374 = vmax.f32 %v344, 0.0
      %v375 = vmax.f32 %v345, 0.0
      %v376 = vmax.f32 %v346, 0.0
      %v377 = vmax.f32 %v347, 0.0
      %v378 = vmax.f32 %v348, 0.0
      %v379 = vmax.f32 %v349, 0.0
      %v380 = vmax.f32 %v350, 0.0
      %v381 = vmax.f32 %v351, 0.0
      %v382 = vmax.f32 %v352, 0.0
      %v383 = vmax.f32 %v353, 0.0
      %v384 = vmax.f32 %v354, 0.0
      %v385 = vmax.f32 %v355, 0.0
      %v386 = vmax.f32 %v356, 0.0
      %v387 = vmax.f32 %v357, 0.0
      %v388 = vmax.f32 %v358, 0.0
      %v389 = vmax.f32 %v359, 0.0
      %v390 = vmax.f32 %v360, 0.0
      %v391 = vmax.f32 %v361, 0.0
      %v392 = vmax.f32 %v362, 0.0
      %v393 = vmax.f32 %v363, 0.0
      %v394 = vmax.f32 %v364, 0.0
      %v395 = vmax.f32 %v365, 0.0
      %v396 = vmax.f32 %v366, 0.0
      %v397 = vmax.f32 %v367, 0.0
      %p398 = scmp.lt.s32.totalorder %s18, 0
      %s399 = ssub.s32 0, %s18
      %s400 = scalar_select %p398, %s399, %s18
      %s401 = sand.u32 %s400, 1
      %s402 = ssub.s32 0, %s401
      %s403 = scalar_select %p398, %s402, %s401
      %p404 = scmp.ne.s32.totalorder %s403, 0
      %p405 = scmp.lt.s32.totalorder %s403, 0
      %p406 = pnand %p405, %p404
      %p407 = pneg %p406
      %s408 = sadd.s32 %s403, 2
      %s409 = scalar_select %p407, %s408, %s403
      %s410 = smul.u32 %s409, 8
      %v411 = vstv %s410
      %v412 = vadd.s32 %v411, 1
      %v413 = vadd.s32 %v411, 2
      %v414 = vadd.s32 %v411, 3
      %v415 = vadd.s32 %v411, 4
      %v416 = vadd.s32 %v411, 5
      %v417 = vadd.s32 %v411, 6
      %v418 = vadd.s32 %v411, 7
      %v419 = vadd.s32 %v411, 8
      %v420 = vadd.s32 %v411, 9
      %v421 = vlaneseq
      %v422 = vshrl.u32 %v421, 7
      %v423 = vadd.s32 %v422, 8
      %v424 = vadd.s32 %v422, 16
      %vm425 = vcmp.ge.s32.totalorder %v411, 1
      %vm426 = vcmp.ge.s32.totalorder %v412, 1
      %vm427 = vcmp.ge.s32.totalorder %v413, 1
      %vm428 = vcmp.ge.s32.totalorder %v414, 1
      %vm429 = vcmp.ge.s32.totalorder %v415, 1
      %vm430 = vcmp.ge.s32.totalorder %v416, 1
      %vm431 = vcmp.ge.s32.totalorder %v417, 1
      %vm432 = vcmp.ge.s32.totalorder %v418, 1
      %vm433 = vcmp.ge.s32.totalorder %v419, 1
      %vm434 = vcmp.ge.s32.totalorder %v420, 1
      %vm435 = vcmp.le.s32.totalorder %v411, 16
      %vm436 = vcmp.le.s32.totalorder %v412, 16
      %vm437 = vcmp.le.s32.totalorder %v413, 16
      %vm438 = vcmp.le.s32.totalorder %v414, 16
      %vm439 = vcmp.le.s32.totalorder %v415, 16
      %vm440 = vcmp.le.s32.totalorder %v416, 16
      %vm441 = vcmp.le.s32.totalorder %v417, 16
      %vm442 = vcmp.le.s32.totalorder %v418, 16
      %vm443 = vcmp.le.s32.totalorder %v419, 16
      %vm444 = vcmp.le.s32.totalorder %v420, 16
      %vm445 = vmand %vm425, %vm435
      %vm446 = vmand %vm426, %vm436
      %vm447 = vmand %vm427, %vm437
      %vm448 = vmand %vm428, %vm438
      %vm449 = vmand %vm429, %vm439
      %vm450 = vmand %vm430, %vm440
      %vm451 = vmand %vm431, %vm441
      %vm452 = vmand %vm432, %vm442
      %vm453 = vmand %vm433, %vm443
      %vm454 = vmand %vm434, %vm444
      %vm455 = vcmp.ge.s32.totalorder %v422, 1
      %vm456 = vcmp.ge.s32.totalorder %v423, 1
      %vm457 = vcmp.ge.s32.totalorder %v424, 1
      %vm458 = vmand %vm445, %vm455
      %vm459 = vmand %vm445, %vm456
      %vm460 = vmand %vm445, %vm457
      %vm461 = vmand %vm446, %vm455
      %vm462 = vmand %vm446, %vm456
      %vm463 = vmand %vm446, %vm457
      %vm464 = vmand %vm447, %vm455
      %vm465 = vmand %vm447, %vm456
      %vm466 = vmand %vm447, %vm457
      %vm467 = vmand %vm448, %vm455
      %vm468 = vmand %vm448, %vm456
      %vm469 = vmand %vm448, %vm457
      %vm470 = vmand %vm449, %vm455
      %vm471 = vmand %vm449, %vm456
      %vm472 = vmand %vm449, %vm457
      %vm473 = vmand %vm450, %vm455
      %vm474 = vmand %vm450, %vm456
      %vm475 = vmand %vm450, %vm457
      %vm476 = vmand %vm451, %vm455
      %vm477 = vmand %vm451, %vm456
      %vm478 = vmand %vm451, %vm457
      %vm479 = vmand %vm452, %vm455
      %vm480 = vmand %vm452, %vm456
      %vm481 = vmand %vm452, %vm457
      %vm482 = vmand %vm453, %vm455
      %vm483 = vmand %vm453, %vm456
      %vm484 = vmand %vm453, %vm457
      %vm485 = vmand %vm454, %vm455
      %vm486 = vmand %vm454, %vm456
      %vm487 = vmand %vm454, %vm457
      %vm488 = vcmp.le.s32.totalorder %v422, 16
      %vm489 = vcmp.le.s32.totalorder %v423, 16
      %vm490 = vcmp.le.s32.totalorder %v424, 16
      %vm491 = vmand %vm458, %vm488
      %vm492 = vmand %vm459, %vm489
      %vm493 = vmand %vm460, %vm490
      %vm494 = vmand %vm461, %vm488
      %vm495 = vmand %vm462, %vm489
      %vm496 = vmand %vm463, %vm490
      %vm497 = vmand %vm464, %vm488
      %vm498 = vmand %vm465, %vm489
      %vm499 = vmand %vm466, %vm490
      %vm500 = vmand %vm467, %vm488
      %vm501 = vmand %vm468, %vm489
      %vm502 = vmand %vm469, %vm490
      %vm503 = vmand %vm470, %vm488
      %vm504 = vmand %vm471, %vm489
      %vm505 = vmand %vm472, %vm490
      %vm506 = vmand %vm473, %vm488
      %vm507 = vmand %vm474, %vm489
      %vm508 = vmand %vm475, %vm490
      %vm509 = vmand %vm476, %vm488
      %vm510 = vmand %vm477, %vm489
      %vm511 = vmand %vm478, %vm490
      %vm512 = vmand %vm479, %vm488
      %vm513 = vmand %vm480, %vm489
      %vm514 = vmand %vm481, %vm490
      %vm515 = vmand %vm482, %vm488
      %vm516 = vmand %vm483, %vm489
      %vm517 = vmand %vm484, %vm490
      %vm518 = vmand %vm485, %vm488
      %vm519 = vmand %vm486, %vm489
      %vm520 = vmand %vm487, %vm490
      %v521 = vsel %vm491, 1, 0
      %v522 = vsel %vm492, 1, 0
      %v523 = vsel %vm493, 1, 0
      %v524 = vsel %vm494, 1, 0
      %v525 = vsel %vm495, 1, 0
      %v526 = vsel %vm496, 1, 0
      %v527 = vsel %vm497, 1, 0
      %v528 = vsel %vm498, 1, 0
      %v529 = vsel %vm499, 1, 0
      %v530 = vsel %vm500, 1, 0
      %v531 = vsel %vm501, 1, 0
      %v532 = vsel %vm502, 1, 0
      %v533 = vsel %vm503, 1, 0
      %v534 = vsel %vm504, 1, 0
      %v535 = vsel %vm505, 1, 0
      %v536 = vsel %vm506, 1, 0
      %v537 = vsel %vm507, 1, 0
      %v538 = vsel %vm508, 1, 0
      %v539 = vsel %vm509, 1, 0
      %v540 = vsel %vm510, 1, 0
      %v541 = vsel %vm511, 1, 0
      %v542 = vsel %vm512, 1, 0
      %v543 = vsel %vm513, 1, 0
      %v544 = vsel %vm514, 1, 0
      %v545 = vsel %vm515, 1, 0
      %v546 = vsel %vm516, 1, 0
      %v547 = vsel %vm517, 1, 0
      %v548 = vsel %vm518, 1, 0
      %v549 = vsel %vm519, 1, 0
      %v550 = vsel %vm520, 1, 0
      %vm551 = vcmp.eq.s32.totalorder %v521, 1
      %vm552 = vcmp.eq.s32.totalorder %v522, 1
      %vm553 = vcmp.eq.s32.totalorder %v523, 1
      %vm554 = vcmp.eq.s32.totalorder %v524, 1
      %vm555 = vcmp.eq.s32.totalorder %v525, 1
      %vm556 = vcmp.eq.s32.totalorder %v526, 1
      %vm557 = vcmp.eq.s32.totalorder %v527, 1
      %vm558 = vcmp.eq.s32.totalorder %v528, 1
      %vm559 = vcmp.eq.s32.totalorder %v529, 1
      %vm560 = vcmp.eq.s32.totalorder %v530, 1
      %vm561 = vcmp.eq.s32.totalorder %v531, 1
      %vm562 = vcmp.eq.s32.totalorder %v532, 1
      %vm563 = vcmp.eq.s32.totalorder %v533, 1
      %vm564 = vcmp.eq.s32.totalorder %v534, 1
      %vm565 = vcmp.eq.s32.totalorder %v535, 1
      %vm566 = vcmp.eq.s32.totalorder %v536, 1
      %vm567 = vcmp.eq.s32.totalorder %v537, 1
      %vm568 = vcmp.eq.s32.totalorder %v538, 1
      %vm569 = vcmp.eq.s32.totalorder %v539, 1
      %vm570 = vcmp.eq.s32.totalorder %v540, 1
      %vm571 = vcmp.eq.s32.totalorder %v541, 1
      %vm572 = vcmp.eq.s32.totalorder %v542, 1
      %vm573 = vcmp.eq.s32.totalorder %v543, 1
      %vm574 = vcmp.eq.s32.totalorder %v544, 1
      %vm575 = vcmp.eq.s32.totalorder %v545, 1
      %vm576 = vcmp.eq.s32.totalorder %v546, 1
      %vm577 = vcmp.eq.s32.totalorder %v547, 1
      %vm578 = vcmp.eq.s32.totalorder %v548, 1
      %vm579 = vcmp.eq.s32.totalorder %v549, 1
      %vm580 = vcmp.eq.s32.totalorder %v550, 1
      %v581 = vsel %vm551, %v368, 0.0
      %v582 = vsel %vm552, %v369, 0.0
      %v583 = vsel %vm553, %v370, 0.0
      %v584 = vsel %vm554, %v371, 0.0
      %v585 = vsel %vm555, %v372, 0.0
      %v586 = vsel %vm556, %v373, 0.0
      %v587 = vsel %vm557, %v374, 0.0
      %v588 = vsel %vm558, %v375, 0.0
      %v589 = vsel %vm559, %v376, 0.0
      %v590 = vsel %vm560, %v377, 0.0
      %v591 = vsel %vm561, %v378, 0.0
      %v592 = vsel %vm562, %v379, 0.0
      %v593 = vsel %vm563, %v380, 0.0
      %v594 = vsel %vm564, %v381, 0.0
      %v595 = vsel %vm565, %v382, 0.0
      %v596 = vsel %vm566, %v383, 0.0
      %v597 = vsel %vm567, %v384, 0.0
      %v598 = vsel %vm568, %v385, 0.0
      %v599 = vsel %vm569, %v386, 0.0
      %v600 = vsel %vm570, %v387, 0.0
      %v601 = vsel %vm571, %v388, 0.0
      %v602 = vsel %vm572, %v389, 0.0
      %v603 = vsel %vm573, %v390, 0.0
      %v604 = vsel %vm574, %v391, 0.0
      %v605 = vsel %vm575, %v392, 0.0
      %v606 = vsel %vm576, %v393, 0.0
      %v607 = vsel %vm577, %v394, 0.0
      %v608 = vsel %vm578, %v395, 0.0
      %v609 = vsel %vm579, %v396, 0.0
      %v610 = vsel %vm580, %v397, 0.0
      %v611 = vpack.c.bf16 %v582, %v581
      %v612 = vpack.c.bf16 %v583, %v583
      %v613 = vpack.c.bf16 %v585, %v584
      %v614 = vpack.c.bf16 %v586, %v586
      %v615 = vpack.c.bf16 %v588, %v587
      %v616 = vpack.c.bf16 %v589, %v589
      %v617 = vpack.c.bf16 %v591, %v590
      %v618 = vpack.c.bf16 %v592, %v592
      %v619 = vpack.c.bf16 %v594, %v593
      %v620 = vpack.c.bf16 %v595, %v595
      %v621 = vpack.c.bf16 %v597, %v596
      %v622 = vpack.c.bf16 %v598, %v598
      %v623 = vpack.c.bf16 %v600, %v599
      %v624 = vpack.c.bf16 %v601, %v601
      %v625 = vpack.c.bf16 %v603, %v602
      %v626 = vpack.c.bf16 %v604, %v604
      %v627 = vpack.c.bf16 %v606, %v605
      %v628 = vpack.c.bf16 %v607, %v607
      %v629 = vpack.c.bf16 %v609, %v608
      %v630 = vpack.c.bf16 %v610, %v610
      %v651 = vunpack.c.l.b16 %v611
      %v652 = vunpack.c.h.b16 %v611
      %v653 = vunpack.c.l.b16 %v612
      %v654 = vunpack.c.l.b16 %v613
      %v655 = vunpack.c.h.b16 %v613
      %v656 = vunpack.c.l.b16 %v614
      %v657 = vunpack.c.l.b16 %v615
      %v658 = vunpack.c.h.b16 %v615
      %v659 = vunpack.c.l.b16 %v616
      %v660 = vunpack.c.l.b16 %v617
      %v661 = vunpack.c.h.b16 %v617
      %v662 = vunpack.c.l.b16 %v618
      %v663 = vunpack.c.l.b16 %v619
      %v664 = vunpack.c.h.b16 %v619
      %v665 = vunpack.c.l.b16 %v620
      %v666 = vunpack.c.l.b16 %v621
      %v667 = vunpack.c.h.b16 %v621
      %v668 = vunpack.c.l.b16 %v622
      %v669 = vunpack.c.l.b16 %v623
      %v670 = vunpack.c.h.b16 %v623
      %v671 = vunpack.c.l.b16 %v624
      %v672 = vunpack.c.l.b16 %v625
      %v673 = vunpack.c.h.b16 %v625
      %v674 = vunpack.c.l.b16 %v626
      %v675 = vunpack.c.l.b16 %v627
      %v676 = vunpack.c.h.b16 %v627
      %v677 = vunpack.c.l.b16 %v628
      %v678 = vunpack.c.l.b16 %v629
      %v679 = vunpack.c.h.b16 %v629
      %v680 = vunpack.c.l.b16 %v630
      %v681 = vpack.c.b16 %v651, %v651
      %v682 = vpack.c.b16 %v652, %v652
      %v683 = vpack.c.b16 %v653, %v653
      %v684 = vpack.c.b16 %v654, %v654
      %v685 = vpack.c.b16 %v655, %v655
      %v686 = vpack.c.b16 %v656, %v656
      %v687 = vpack.c.b16 %v657, %v657
      %v688 = vpack.c.b16 %v658, %v658
      %v689 = vpack.c.b16 %v659, %v659
      %v690 = vpack.c.b16 %v660, %v660
      %v691 = vpack.c.b16 %v661, %v661
      %v692 = vpack.c.b16 %v662, %v662
      %v693 = vpack.c.b16 %v663, %v663
      %v694 = vpack.c.b16 %v664, %v664
      %v695 = vpack.c.b16 %v665, %v665
      %v696 = vpack.c.b16 %v666, %v666
      %v697 = vpack.c.b16 %v667, %v667
      %v698 = vpack.c.b16 %v668, %v668
      %v699 = vpack.c.b16 %v669, %v669
      %v700 = vpack.c.b16 %v670, %v670
      %v701 = vpack.c.b16 %v671, %v671
      %v702 = vpack.c.b16 %v672, %v672
      %v703 = vpack.c.b16 %v673, %v673
      %v704 = vpack.c.b16 %v674, %v674
      %v705 = vpack.c.b16 %v675, %v675
      %v706 = vpack.c.b16 %v676, %v676
      %v707 = vpack.c.b16 %v677, %v677
      %v708 = vpack.c.b16 %v678, %v678
      %v709 = vpack.c.b16 %v679, %v679
      %v710 = vpack.c.b16 %v680, %v680
      %741 = vst [vmem:[#allocation2] sm:$0xf] %v681
      %742 = vst [vmem:[#allocation2 + $0x4] sm:$0xf] %v682
      %743 = vst [vmem:[#allocation2 + $0x8] sm:$0x1] %v683
      %744 = vst [vmem:[#allocation2 + $0xc] sm:$0xf] %v684
      %745 = vst [vmem:[#allocation2 + $0x10] sm:$0xf] %v685
      %746 = vst [vmem:[#allocation2 + $0x14] sm:$0x1] %v686
      %747 = vst [vmem:[#allocation2 + $0x18] sm:$0xf] %v687
      %748 = vst [vmem:[#allocation2 + $0x1c] sm:$0xf] %v688
      %749 = vst [vmem:[#allocation2 + $0x20] sm:$0x1] %v689
      %750 = vst [vmem:[#allocation2 + $0x24] sm:$0xf] %v690
      %751 = vst [vmem:[#allocation2 + $0x28] sm:$0xf] %v691
      %752 = vst [vmem:[#allocation2 + $0x2c] sm:$0x1] %v692
      %753 = vst [vmem:[#allocation2 + $0x30] sm:$0xf] %v693
      %754 = vst [vmem:[#allocation2 + $0x34] sm:$0xf] %v694
      %755 = vst [vmem:[#allocation2 + $0x38] sm:$0x1] %v695
      %756 = vst [vmem:[#allocation2 + $0x3c] sm:$0xf] %v696
      %757 = vst [vmem:[#allocation2 + $0x40] sm:$0xf] %v697
      %758 = vst [vmem:[#allocation2 + $0x44] sm:$0x1] %v698
      %759 = vst [vmem:[#allocation2 + $0x48] sm:$0xf] %v699
      %760 = vst [vmem:[#allocation2 + $0x4c] sm:$0xf] %v700
      %761 = vst [vmem:[#allocation2 + $0x50] sm:$0x1] %v701
      %762 = vst [vmem:[#allocation2 + $0x54] sm:$0xf] %v702
      %763 = vst [vmem:[#allocation2 + $0x58] sm:$0xf] %v703
      %764 = vst [vmem:[#allocation2 + $0x5c] sm:$0x1] %v704
      %765 = vst [vmem:[#allocation2 + $0x60] sm:$0xf] %v705
      %766 = vst [vmem:[#allocation2 + $0x64] sm:$0xf] %v706
      %767 = vst [vmem:[#allocation2 + $0x68] sm:$0x1] %v707
      %768 = vst [vmem:[#allocation2 + $0x6c] sm:$0xf] %v708
      %769 = vst [vmem:[#allocation2 + $0x70] sm:$0xf] %v709
      %770 = vst [vmem:[#allocation2 + $0x74] sm:$0x1] %v710
      %v771 = vld [vmem:[#allocation2] sm:$0xf]
      %v772 = vld [vmem:[#allocation2 + $0x4] sm:$0xf]
      %v773 = vld [vmem:[#allocation2 + $0xc] sm:$0xf]
      %v774 = vld [vmem:[#allocation2 + $0x10] sm:$0xf]
      %v775 = vld [vmem:[#allocation2 + $0x18] sm:$0xf]
      %v776 = vld [vmem:[#allocation2 + $0x1c] sm:$0xf]
      %v777 = vld [vmem:[#allocation2 + $0x24] sm:$0xf]
      %v778 = vld [vmem:[#allocation2 + $0x28] sm:$0xf]
      %v779 = vld [vmem:[#allocation2 + $0x30] sm:$0xf]
      %v780 = vld [vmem:[#allocation2 + $0x34] sm:$0xf]
      %v781 = vld [vmem:[#allocation2 + $0x3c] sm:$0xf]
      %v782 = vld [vmem:[#allocation2 + $0x40] sm:$0xf]
      %v783 = vld [vmem:[#allocation2 + $0x48] sm:$0xf]
      %v784 = vld [vmem:[#allocation2 + $0x4c] sm:$0xf]
      %v785 = vld [vmem:[#allocation2 + $0x54] sm:$0xf]
      %v786 = vld [vmem:[#allocation2 + $0x58] sm:$0xf]
      %v787 = vld [vmem:[%s1] sm:$0xf]
      %v788 = vld [vmem:[%s1 + $0x4] sm:$0xf]
      %v789 = vld [vmem:[%s1 + $0x8] sm:$0xf]
      %v790 = vld [vmem:[%s1 + $0xc] sm:$0xf]
      %v791 = vld [vmem:[%s1 + $0x10] sm:$0xf]
      %v792 = vld [vmem:[%s1 + $0x14] sm:$0xf]
      %v793 = vld [vmem:[%s1 + $0x18] sm:$0xf]
      %v794 = vld [vmem:[%s1 + $0x1c] sm:$0xf]
      %v795 = vld [vmem:[%s1 + $0x20] sm:$0xf]
      %v796 = vld [vmem:[%s1 + $0x24] sm:$0xf]
      %v797 = vld [vmem:[%s1 + $0x28] sm:$0xf]
      %v798 = vld [vmem:[%s1 + $0x2c] sm:$0xf]
      %v799 = vld [vmem:[%s1 + $0x30] sm:$0xf]
      %v800 = vld [vmem:[%s1 + $0x34] sm:$0xf]
      %v801 = vld [vmem:[%s1 + $0x38] sm:$0xf]
      %v802 = vld [vmem:[%s1 + $0x3c] sm:$0xf]
      %v803 = vld [vmem:[#allocation2 + $0x8] sm:$0x1]
      %v804 = vld [vmem:[#allocation2 + $0x14] sm:$0x1]
      %v805 = vld [vmem:[#allocation2 + $0x20] sm:$0x1]
      %v806 = vld [vmem:[#allocation2 + $0x2c] sm:$0x1]
      %v807 = vld [vmem:[#allocation2 + $0x38] sm:$0x1]
      %v808 = vld [vmem:[#allocation2 + $0x44] sm:$0x1]
      %v809 = vld [vmem:[#allocation2 + $0x50] sm:$0x1]
      %v810 = vld [vmem:[#allocation2 + $0x5c] sm:$0x1]
      %vm811 = vsmask.f32 3328
      %vm812 = vsmask.f32 7440
      %vm813 = vmor %vm811, %vm812
      %v815 = vshrl.u32 %v771, 16
      %v817 = vrot.slane %v815, 4
      %v818 = vshll.u32 %v771, 16
      %v820 = vrot.slane %v818, 5
      %v821 = vor.u32 %v817, %v820
      %v822 = vrot.slane %v821, 4
      %v824 = vshll.u32 %v772, 16
      %v826 = vrot.slane %v824, 5
      %v827 = vsel %vm813, %v822, %v826
      %v828 = vshrl.u32 %v772, 16
      %v830 = vrot.slane %v828, 4
      %v831 = vor.u32 %v830, %v826
      %v832 = vrot.slane %v831, 4
      %v834 = vshll.u32 %v803, 16
      %v836 = vrot.slane %v834, 5
      %v837 = vsel %vm813, %v832, %v836
      %v839 = vshrl.u32 %v773, 16
      %v841 = vrot.slane %v839, 4
      %v842 = vshll.u32 %v773, 16
      %v844 = vrot.slane %v842, 5
      %v845 = vor.u32 %v841, %v844
      %v846 = vrot.slane %v845, 4
      %v848 = vshll.u32 %v774, 16
      %v850 = vrot.slane %v848, 5
      %v851 = vsel %vm813, %v846, %v850
      %v852 = vshrl.u32 %v774, 16
      %v854 = vrot.slane %v852, 4
      %v855 = vor.u32 %v854, %v850
      %v856 = vrot.slane %v855, 4
      %v858 = vshll.u32 %v804, 16
      %v860 = vrot.slane %v858, 5
      %v861 = vsel %vm813, %v856, %v860
      %v863 = vshrl.u32 %v775, 16
      %v865 = vrot.slane %v863, 4
      %v866 = vshll.u32 %v775, 16
      %v868 = vrot.slane %v866, 5
      %v869 = vor.u32 %v865, %v868
      %v870 = vrot.slane %v869, 4
      %v872 = vshll.u32 %v776, 16
      %v874 = vrot.slane %v872, 5
      %v875 = vsel %vm813, %v870, %v874
      %v876 = vshrl.u32 %v776, 16
      %v878 = vrot.slane %v876, 4
      %v879 = vor.u32 %v878, %v874
      %v880 = vrot.slane %v879, 4
      %v882 = vshll.u32 %v805, 16
      %v884 = vrot.slane %v882, 5
      %v885 = vsel %vm813, %v880, %v884
      %v887 = vshrl.u32 %v777, 16
      %v889 = vrot.slane %v887, 4
      %v890 = vshll.u32 %v777, 16
      %v892 = vrot.slane %v890, 5
      %v893 = vor.u32 %v889, %v892
      %v894 = vrot.slane %v893, 4
      %v896 = vshll.u32 %v778, 16
      %v898 = vrot.slane %v896, 5
      %v899 = vsel %vm813, %v894, %v898
      %v900 = vshrl.u32 %v778, 16
      %v902 = vrot.slane %v900, 4
      %v903 = vor.u32 %v902, %v898
      %v904 = vrot.slane %v903, 4
      %v906 = vshll.u32 %v806, 16
      %v908 = vrot.slane %v906, 5
      %v909 = vsel %vm813, %v904, %v908
      %v911 = vshrl.u32 %v779, 16
      %v913 = vrot.slane %v911, 4
      %v914 = vshll.u32 %v779, 16
      %v916 = vrot.slane %v914, 5
      %v917 = vor.u32 %v913, %v916
      %v918 = vrot.slane %v917, 4
      %v920 = vshll.u32 %v780, 16
      %v922 = vrot.slane %v920, 5
      %v923 = vsel %vm813, %v918, %v922
      %v924 = vshrl.u32 %v780, 16
      %v926 = vrot.slane %v924, 4
      %v927 = vor.u32 %v926, %v922
      %v928 = vrot.slane %v927, 4
      %v930 = vshll.u32 %v807, 16
      %v932 = vrot.slane %v930, 5
      %v933 = vsel %vm813, %v928, %v932
      %v935 = vshrl.u32 %v781, 16
      %v937 = vrot.slane %v935, 4
      %v938 = vshll.u32 %v781, 16
      %v940 = vrot.slane %v938, 5
      %v941 = vor.u32 %v937, %v940
      %v942 = vrot.slane %v941, 4
      %v944 = vshll.u32 %v782, 16
      %v946 = vrot.slane %v944, 5
      %v947 = vsel %vm813, %v942, %v946
      %v948 = vshrl.u32 %v782, 16
      %v950 = vrot.slane %v948, 4
      %v951 = vor.u32 %v950, %v946
      %v952 = vrot.slane %v951, 4
      %v954 = vshll.u32 %v808, 16
      %v956 = vrot.slane %v954, 5
      %v957 = vsel %vm813, %v952, %v956
      %v959 = vshrl.u32 %v783, 16
      %v961 = vrot.slane %v959, 4
      %v962 = vshll.u32 %v783, 16
      %v964 = vrot.slane %v962, 5
      %v965 = vor.u32 %v961, %v964
      %v966 = vrot.slane %v965, 4
      %v968 = vshll.u32 %v784, 16
      %v970 = vrot.slane %v968, 5
      %v971 = vsel %vm813, %v966, %v970
      %v972 = vshrl.u32 %v784, 16
      %v974 = vrot.slane %v972, 4
      %v975 = vor.u32 %v974, %v970
      %v976 = vrot.slane %v975, 4
      %v978 = vshll.u32 %v809, 16
      %v980 = vrot.slane %v978, 5
      %v981 = vsel %vm813, %v976, %v980
      %v983 = vshrl.u32 %v785, 16
      %v985 = vrot.slane %v983, 4
      %v986 = vshll.u32 %v785, 16
      %v988 = vrot.slane %v986, 5
      %v989 = vor.u32 %v985, %v988
      %v990 = vrot.slane %v989, 4
      %v992 = vshll.u32 %v786, 16
      %v994 = vrot.slane %v992, 5
      %v995 = vsel %vm813, %v990, %v994
      %v996 = vshrl.u32 %v786, 16
      %v998 = vrot.slane %v996, 4
      %v999 = vor.u32 %v998, %v994
      %v1000 = vrot.slane %v999, 4
      %v1002 = vshll.u32 %v810, 16
      %v1004 = vrot.slane %v1002, 5
      %v1005 = vsel %vm813, %v1000, %v1004
      %s1006 = scalar_lea.vmem %s1, 64
      %v1007 = vld [vmem:[%s1006] sm:$0xf]
      %v1008 = vld [vmem:[%s1006 + $0x4] sm:$0xf]
      %v1009 = vld [vmem:[%s1006 + $0x8] sm:$0xf]
      %v1010 = vld [vmem:[%s1006 + $0xc] sm:$0xf]
      %v1011 = vld [vmem:[%s1006 + $0x10] sm:$0xf]
      %v1012 = vld [vmem:[%s1006 + $0x14] sm:$0xf]
      %v1013 = vld [vmem:[%s1006 + $0x18] sm:$0xf]
      %v1014 = vld [vmem:[%s1006 + $0x1c] sm:$0xf]
      %v1015 = vld [vmem:[%s1006 + $0x20] sm:$0xf]
      %v1016 = vld [vmem:[%s1006 + $0x24] sm:$0xf]
      %v1017 = vld [vmem:[%s1006 + $0x28] sm:$0xf]
      %v1018 = vld [vmem:[%s1006 + $0x2c] sm:$0xf]
      %v1019 = vld [vmem:[%s1006 + $0x30] sm:$0xf]
      %v1020 = vld [vmem:[%s1006 + $0x34] sm:$0xf]
      %v1021 = vld [vmem:[%s1006 + $0x38] sm:$0xf]
      %v1022 = vld [vmem:[%s1006 + $0x3c] sm:$0xf]
      %v1023 = vunpack.c.l.b16 %v827
      %v1024 = vunpack.c.l.b16 %v837
      %v1025 = vunpack.c.l.b16 %v851
      %v1026 = vunpack.c.l.b16 %v861
      %v1027 = vunpack.c.l.b16 %v875
      %v1028 = vunpack.c.l.b16 %v885
      %v1029 = vunpack.c.l.b16 %v899
      %v1030 = vunpack.c.l.b16 %v909
      %v1031 = vunpack.c.l.b16 %v923
      %v1032 = vunpack.c.l.b16 %v933
      %v1033 = vunpack.c.l.b16 %v947
      %v1034 = vunpack.c.l.b16 %v957
      %v1035 = vunpack.c.l.b16 %v971
      %v1036 = vunpack.c.l.b16 %v981
      %v1037 = vunpack.c.l.b16 %v995
      %v1038 = vunpack.c.l.b16 %v1005
      %v1039 = vpack.c.b16 %v1024, %v1023
      %v1040 = vpack.c.b16 %v1026, %v1025
      %v1041 = vpack.c.b16 %v1028, %v1027
      %v1042 = vpack.c.b16 %v1030, %v1029
      %v1043 = vpack.c.b16 %v1032, %v1031
      %v1044 = vpack.c.b16 %v1034, %v1033
      %v1045 = vpack.c.b16 %v1036, %v1035
      %v1046 = vpack.c.b16 %v1038, %v1037
      %v1071 = vunpack.c.l.b16 %v1007
      %v1072 = vunpack.c.l.b16 %v1008
      %v1073 = vunpack.c.l.b16 %v1009
      %v1074 = vunpack.c.l.b16 %v1010
      %v1075 = vunpack.c.l.b16 %v1011
      %v1076 = vunpack.c.l.b16 %v1012
      %v1077 = vunpack.c.l.b16 %v1013
      %v1078 = vunpack.c.l.b16 %v1014
      %v1079 = vunpack.c.l.b16 %v1015
      %v1080 = vunpack.c.l.b16 %v1016
      %v1081 = vunpack.c.l.b16 %v1017
      %v1082 = vunpack.c.l.b16 %v1018
      %v1083 = vunpack.c.l.b16 %v1019
      %v1084 = vunpack.c.l.b16 %v1020
      %v1085 = vunpack.c.l.b16 %v1021
      %v1086 = vunpack.c.l.b16 %v1022
      %v1087 = vpack.c.b16 %v1072, %v1071
      %v1088 = vpack.c.b16 %v1074, %v1073
      %v1089 = vpack.c.b16 %v1076, %v1075
      %v1090 = vpack.c.b16 %v1078, %v1077
      %v1091 = vpack.c.b16 %v1080, %v1079
      %v1092 = vpack.c.b16 %v1082, %v1081
      %v1093 = vpack.c.b16 %v1084, %v1083
      %v1094 = vpack.c.b16 %v1086, %v1085
      %1103 = vmatprep.subr.bf16.mxu0 0
      %1104 = vmatpush1.bf16.msra.mxu0 %v1094
      %1105 = vmatprep.subr.bf16.mxu0 0
      %1106 = vmatpush1.bf16.msra.mxu0 %v1093
      %1107 = vmatprep.subr.bf16.mxu0 0
      %1108 = vmatpush1.bf16.msra.mxu0 %v1092
      %1109 = vmatprep.subr.bf16.mxu0 0
      %1110 = vmatpush1.bf16.msra.mxu0 %v1091
      %1111 = vmatprep.subr.bf16.mxu0 0
      %1112 = vmatpush1.bf16.msra.mxu0 %v1090
      %1113 = vmatprep.subr.bf16.mxu0 0
      %1114 = vmatpush1.bf16.msra.mxu0 %v1089
      %1115 = vmatprep.subr.bf16.mxu0 0
      %1116 = vmatpush1.bf16.msra.mxu0 %v1088
      %1117 = vmatprep.subr.bf16.mxu0 0
      %1118 = vmatpush1.bf16.msra.mxu0 %v1087
      %1119 = vmatprep.subr.bf16.mxu0 0
      %1120 = vmatpush2.bf16.msra.mxu0 0
      %1121 = vmatprep.subr.bf16.mxu0 0
      %1122 = vmatpush2.bf16.msra.mxu0 0
      %1123 = vmatprep.subr.bf16.mxu0 0
      %1124 = vmatpush2.bf16.msra.mxu0 0
      %1125 = vmatprep.subr.bf16.mxu0 0
      %1126 = vmatpush2.bf16.msra.mxu0 0
      %1127 = vmatprep.subr.bf16.mxu0 0
      %1128 = vmatpush2.bf16.msra.mxu0 0
      %1129 = vmatprep.subr.bf16.mxu0 0
      %1130 = vmatpush2.bf16.msra.mxu0 0
      %1131 = vmatprep.subr.bf16.mxu0 0
      %1132 = vmatpush2.bf16.msra.mxu0 0
      %1133 = vmatprep.subr.bf16.mxu0 0
      %1134 = vmatpush2.bf16.msra.mxu0 0
      %1135 = vmatprep.mubr.bf16.mxu0 0
      %1136 = vmatmul.mubr.bf16.gmra.mxu0 %v1039
      %v1137 = vpop.f32.mrf.mxu0
      %v1138 = vadd.f32 0.0, %v1137
      %v1139 = vpop.f32.mrf.mxu0
      %v1140 = vpop.f32.mrf.mxu0
      %v1141 = vadd.f32 0.0, %v1140
      %v1142 = vpop.f32.mrf.mxu0
      %1143 = vmatprep.mubr.bf16.mxu0 0
      %1144 = vmatmul.mubr.bf16.gmra.mxu0 %v1040
      %v1145 = vpop.f32.mrf.mxu0
      %v1146 = vadd.f32 0.0, %v1145
      %v1147 = vpop.f32.mrf.mxu0
      %v1148 = vpop.f32.mrf.mxu0
      %v1149 = vadd.f32 0.0, %v1148
      %v1150 = vpop.f32.mrf.mxu0
      %1151 = vmatprep.mubr.bf16.mxu0 0
      %1152 = vmatmul.mubr.bf16.gmra.mxu0 %v1041
      %v1153 = vpop.f32.mrf.mxu0
      %v1154 = vadd.f32 0.0, %v1153
      %v1155 = vpop.f32.mrf.mxu0
      %v1156 = vpop.f32.mrf.mxu0
      %v1157 = vadd.f32 0.0, %v1156
      %v1158 = vpop.f32.mrf.mxu0
      %1159 = vmatprep.mubr.bf16.mxu0 0
      %1160 = vmatmul.mubr.bf16.gmra.mxu0 %v1042
      %v1161 = vpop.f32.mrf.mxu0
      %v1162 = vadd.f32 0.0, %v1161
      %v1163 = vpop.f32.mrf.mxu0
      %v1164 = vpop.f32.mrf.mxu0
      %v1165 = vadd.f32 0.0, %v1164
      %v1166 = vpop.f32.mrf.mxu0
      %1167 = vmatprep.mubr.bf16.mxu0 0
      %1168 = vmatmul.mubr.bf16.gmra.mxu0 %v1043
      %v1169 = vpop.f32.mrf.mxu0
      %v1170 = vadd.f32 0.0, %v1169
      %v1171 = vpop.f32.mrf.mxu0
      %v1172 = vpop.f32.mrf.mxu0
      %v1173 = vadd.f32 0.0, %v1172
      %v1174 = vpop.f32.mrf.mxu0
      %1175 = vmatprep.mubr.bf16.mxu0 0
      %1176 = vmatmul.mubr.bf16.gmra.mxu0 %v1044
      %v1177 = vpop.f32.mrf.mxu0
      %v1178 = vadd.f32 0.0, %v1177
      %v1179 = vpop.f32.mrf.mxu0
      %v1180 = vpop.f32.mrf.mxu0
      %v1181 = vadd.f32 0.0, %v1180
      %v1182 = vpop.f32.mrf.mxu0
      %1183 = vmatprep.mubr.bf16.mxu0 0
      %1184 = vmatmul.mubr.bf16.gmra.mxu0 %v1045
      %v1185 = vpop.f32.mrf.mxu0
      %v1186 = vadd.f32 0.0, %v1185
      %v1187 = vpop.f32.mrf.mxu0
      %v1188 = vpop.f32.mrf.mxu0
      %v1189 = vadd.f32 0.0, %v1188
      %v1190 = vpop.f32.mrf.mxu0
      %1191 = vmatprep.mubr.bf16.mxu0 0
      %1192 = vmatmul.mubr.bf16.gmra.mxu0 %v1046
      %v1193 = vpop.f32.mrf.mxu0
      %v1194 = vadd.f32 0.0, %v1193
      %v1195 = vpop.f32.mrf.mxu0
      %v1196 = vpop.f32.mrf.mxu0
      %v1197 = vadd.f32 0.0, %v1196
      %v1198 = vpop.f32.mrf.mxu0
      %1199 = vdwg.mxu0
      %v1216 = vunpack.c.l.b16 %v771
      %v1217 = vunpack.c.l.b16 %v772
      %v1218 = vunpack.c.l.b16 %v773
      %v1219 = vunpack.c.l.b16 %v774
      %v1220 = vunpack.c.l.b16 %v775
      %v1221 = vunpack.c.l.b16 %v776
      %v1222 = vunpack.c.l.b16 %v777
      %v1223 = vunpack.c.l.b16 %v778
      %v1224 = vunpack.c.l.b16 %v779
      %v1225 = vunpack.c.l.b16 %v780
      %v1226 = vunpack.c.l.b16 %v781
      %v1227 = vunpack.c.l.b16 %v782
      %v1228 = vunpack.c.l.b16 %v783
      %v1229 = vunpack.c.l.b16 %v784
      %v1230 = vunpack.c.l.b16 %v785
      %v1231 = vunpack.c.l.b16 %v786
      %v1232 = vpack.c.b16 %v1217, %v1216
      %v1233 = vpack.c.b16 %v1219, %v1218
      %v1234 = vpack.c.b16 %v1221, %v1220
      %v1235 = vpack.c.b16 %v1223, %v1222
      %v1236 = vpack.c.b16 %v1225, %v1224
      %v1237 = vpack.c.b16 %v1227, %v1226
      %v1238 = vpack.c.b16 %v1229, %v1228
      %v1239 = vpack.c.b16 %v1231, %v1230
      %v1264 = vunpack.c.l.b16 %v787
      %v1265 = vunpack.c.l.b16 %v788
      %v1266 = vunpack.c.l.b16 %v789
      %v1267 = vunpack.c.l.b16 %v790
      %v1268 = vunpack.c.l.b16 %v791
      %v1269 = vunpack.c.l.b16 %v792
      %v1270 = vunpack.c.l.b16 %v793
      %v1271 = vunpack.c.l.b16 %v794
      %v1272 = vunpack.c.l.b16 %v795
      %v1273 = vunpack.c.l.b16 %v796
      %v1274 = vunpack.c.l.b16 %v797
      %v1275 = vunpack.c.l.b16 %v798
      %v1276 = vunpack.c.l.b16 %v799
      %v1277 = vunpack.c.l.b16 %v800
      %v1278 = vunpack.c.l.b16 %v801
      %v1279 = vunpack.c.l.b16 %v802
      %v1280 = vpack.c.b16 %v1265, %v1264
      %v1281 = vpack.c.b16 %v1267, %v1266
      %v1282 = vpack.c.b16 %v1269, %v1268
      %v1283 = vpack.c.b16 %v1271, %v1270
      %v1284 = vpack.c.b16 %v1273, %v1272
      %v1285 = vpack.c.b16 %v1275, %v1274
      %v1286 = vpack.c.b16 %v1277, %v1276
      %v1287 = vpack.c.b16 %v1279, %v1278
      %1296 = vmatprep.subr.bf16.mxu0 0
      %1297 = vmatpush1.bf16.msra.mxu0 %v1287
      %1298 = vmatprep.subr.bf16.mxu0 0
      %1299 = vmatpush1.bf16.msra.mxu0 %v1286
      %1300 = vmatprep.subr.bf16.mxu0 0
      %1301 = vmatpush1.bf16.msra.mxu0 %v1285
      %1302 = vmatprep.subr.bf16.mxu0 0
      %1303 = vmatpush1.bf16.msra.mxu0 %v1284
      %1304 = vmatprep.subr.bf16.mxu0 0
      %1305 = vmatpush1.bf16.msra.mxu0 %v1283
      %1306 = vmatprep.subr.bf16.mxu0 0
      %1307 = vmatpush1.bf16.msra.mxu0 %v1282
      %1308 = vmatprep.subr.bf16.mxu0 0
      %1309 = vmatpush1.bf16.msra.mxu0 %v1281
      %1310 = vmatprep.subr.bf16.mxu0 0
      %1311 = vmatpush1.bf16.msra.mxu0 %v1280
      %1312 = vmatprep.subr.bf16.mxu0 0
      %1313 = vmatpush2.bf16.msra.mxu0 0
      %1314 = vmatprep.subr.bf16.mxu0 0
      %1315 = vmatpush2.bf16.msra.mxu0 0
      %1316 = vmatprep.subr.bf16.mxu0 0
      %1317 = vmatpush2.bf16.msra.mxu0 0
      %1318 = vmatprep.subr.bf16.mxu0 0
      %1319 = vmatpush2.bf16.msra.mxu0 0
      %1320 = vmatprep.subr.bf16.mxu0 0
      %1321 = vmatpush2.bf16.msra.mxu0 0
      %1322 = vmatprep.subr.bf16.mxu0 0
      %1323 = vmatpush2.bf16.msra.mxu0 0
      %1324 = vmatprep.subr.bf16.mxu0 0
      %1325 = vmatpush2.bf16.msra.mxu0 0
      %1326 = vmatprep.subr.bf16.mxu0 0
      %1327 = vmatpush2.bf16.msra.mxu0 0
      %1328 = vmatprep.mubr.bf16.mxu0 0
      %1329 = vmatmul.mubr.bf16.gmra.mxu0 %v1232
      %v1330 = vpop.f32.mrf.mxu0
      %v1331 = vadd.f32 %v1138, %v1330
      %v1332 = vpop.f32.mrf.mxu0
      %v1333 = vpop.f32.mrf.mxu0
      %v1334 = vadd.f32 %v1141, %v1333
      %v1335 = vpop.f32.mrf.mxu0
      %1336 = vmatprep.mubr.bf16.mxu0 0
      %1337 = vmatmul.mubr.bf16.gmra.mxu0 %v1233
      %v1338 = vpop.f32.mrf.mxu0
      %v1339 = vadd.f32 %v1146, %v1338
      %v1340 = vpop.f32.mrf.mxu0
      %v1341 = vpop.f32.mrf.mxu0
      %v1342 = vadd.f32 %v1149, %v1341
      %v1343 = vpop.f32.mrf.mxu0
      %1344 = vmatprep.mubr.bf16.mxu0 0
      %1345 = vmatmul.mubr.bf16.gmra.mxu0 %v1234
      %v1346 = vpop.f32.mrf.mxu0
      %v1347 = vadd.f32 %v1154, %v1346
      %v1348 = vpop.f32.mrf.mxu0
      %v1349 = vpop.f32.mrf.mxu0
      %v1350 = vadd.f32 %v1157, %v1349
      %v1351 = vpop.f32.mrf.mxu0
      %1352 = vmatprep.mubr.bf16.mxu0 0
      %1353 = vmatmul.mubr.bf16.gmra.mxu0 %v1235
      %v1354 = vpop.f32.mrf.mxu0
      %v1355 = vadd.f32 %v1162, %v1354
      %v1356 = vpop.f32.mrf.mxu0
      %v1357 = vpop.f32.mrf.mxu0
      %v1358 = vadd.f32 %v1165, %v1357
      %v1359 = vpop.f32.mrf.mxu0
      %1360 = vmatprep.mubr.bf16.mxu0 0
      %1361 = vmatmul.mubr.bf16.gmra.mxu0 %v1236
      %v1362 = vpop.f32.mrf.mxu0
      %v1363 = vadd.f32 %v1170, %v1362
      %v1364 = vpop.f32.mrf.mxu0
      %v1365 = vpop.f32.mrf.mxu0
      %v1366 = vadd.f32 %v1173, %v1365
      %v1367 = vpop.f32.mrf.mxu0
      %1368 = vmatprep.mubr.bf16.mxu0 0
      %1369 = vmatmul.mubr.bf16.gmra.mxu0 %v1237
      %v1370 = vpop.f32.mrf.mxu0
      %v1371 = vadd.f32 %v1178, %v1370
      %v1372 = vpop.f32.mrf.mxu0
      %v1373 = vpop.f32.mrf.mxu0
      %v1374 = vadd.f32 %v1181, %v1373
      %v1375 = vpop.f32.mrf.mxu0
      %1376 = vmatprep.mubr.bf16.mxu0 0
      %1377 = vmatmul.mubr.bf16.gmra.mxu0 %v1238
      %v1378 = vpop.f32.mrf.mxu0
      %v1379 = vadd.f32 %v1186, %v1378
      %v1380 = vpop.f32.mrf.mxu0
      %v1381 = vpop.f32.mrf.mxu0
      %v1382 = vadd.f32 %v1189, %v1381
      %v1383 = vpop.f32.mrf.mxu0
      %1384 = vmatprep.mubr.bf16.mxu0 0
      %1385 = vmatmul.mubr.bf16.gmra.mxu0 %v1239
      %v1386 = vpop.f32.mrf.mxu0
      %v1387 = vadd.f32 %v1194, %v1386
      %v1388 = vpop.f32.mrf.mxu0
      %v1389 = vpop.f32.mrf.mxu0
      %v1390 = vadd.f32 %v1197, %v1389
      %v1391 = vpop.f32.mrf.mxu0
      %1392 = vdwg.mxu0
      %v1393 = vld [vmem:[#allocation2] sm:$0xe]
      %v1394 = vld [vmem:[#allocation2 + $0xc] sm:$0xe]
      %v1395 = vld [vmem:[#allocation2 + $0x18] sm:$0xe]
      %v1396 = vld [vmem:[#allocation2 + $0x24] sm:$0xe]
      %v1397 = vld [vmem:[#allocation2 + $0x30] sm:$0xe]
      %v1398 = vld [vmem:[#allocation2 + $0x3c] sm:$0xe]
      %v1399 = vld [vmem:[#allocation2 + $0x48] sm:$0xe]
      %v1400 = vld [vmem:[#allocation2 + $0x54] sm:$0xe]
      %vm1417 = vcmask 1042432
      %vm1418 = vcmask 1046532
      %vm1419 = vmor %vm1417, %vm1418
      %v1420 = vrot.slane %v1393, 5
      %v1421 = vrot.slane %v1420, 4
      %v1422 = vrot.slane %v772, 5
      %v1423 = vsel %vm1419, %v1421, %v1422
      %v1424 = vrot.slane %v1422, 4
      %v1425 = vrot.slane %v803, 5
      %v1426 = vsel %vm1419, %v1424, %v1425
      %v1427 = vrot.slane %v1394, 5
      %v1428 = vrot.slane %v1427, 4
      %v1429 = vrot.slane %v774, 5
      %v1430 = vsel %vm1419, %v1428, %v1429
      %v1431 = vrot.slane %v1429, 4
      %v1432 = vrot.slane %v804, 5
      %v1433 = vsel %vm1419, %v1431, %v1432
      %v1434 = vrot.slane %v1395, 5
      %v1435 = vrot.slane %v1434, 4
      %v1436 = vrot.slane %v776, 5
      %v1437 = vsel %vm1419, %v1435, %v1436
      %v1438 = vrot.slane %v1436, 4
      %v1439 = vrot.slane %v805, 5
      %v1440 = vsel %vm1419, %v1438, %v1439
      %v1441 = vrot.slane %v1396, 5
      %v1442 = vrot.slane %v1441, 4
      %v1443 = vrot.slane %v778, 5
      %v1444 = vsel %vm1419, %v1442, %v1443
      %v1445 = vrot.slane %v1443, 4
      %v1446 = vrot.slane %v806, 5
      %v1447 = vsel %vm1419, %v1445, %v1446
      %v1448 = vrot.slane %v1397, 5
      %v1449 = vrot.slane %v1448, 4
      %v1450 = vrot.slane %v780, 5
      %v1451 = vsel %vm1419, %v1449, %v1450
      %v1452 = vrot.slane %v1450, 4
      %v1453 = vrot.slane %v807, 5
      %v1454 = vsel %vm1419, %v1452, %v1453
      %v1455 = vrot.slane %v1398, 5
      %v1456 = vrot.slane %v1455, 4
      %v1457 = vrot.slane %v782, 5
      %v1458 = vsel %vm1419, %v1456, %v1457
      %v1459 = vrot.slane %v1457, 4
      %v1460 = vrot.slane %v808, 5
      %v1461 = vsel %vm1419, %v1459, %v1460
      %v1462 = vrot.slane %v1399, 5
      %v1463 = vrot.slane %v1462, 4
      %v1464 = vrot.slane %v784, 5
      %v1465 = vsel %vm1419, %v1463, %v1464
      %v1466 = vrot.slane %v1464, 4
      %v1467 = vrot.slane %v809, 5
      %v1468 = vsel %vm1419, %v1466, %v1467
      %v1469 = vrot.slane %v1400, 5
      %v1470 = vrot.slane %v1469, 4
      %v1471 = vrot.slane %v786, 5
      %v1472 = vsel %vm1419, %v1470, %v1471
      %v1473 = vrot.slane %v1471, 4
      %v1474 = vrot.slane %v810, 5
      %v1475 = vsel %vm1419, %v1473, %v1474
      %s1476 = scalar_lea.vmem %s1, 128
      %v1477 = vld [vmem:[%s1476] sm:$0xf]
      %v1478 = vld [vmem:[%s1476 + $0x4] sm:$0xf]
      %v1479 = vld [vmem:[%s1476 + $0x8] sm:$0xf]
      %v1480 = vld [vmem:[%s1476 + $0xc] sm:$0xf]
      %v1481 = vld [vmem:[%s1476 + $0x10] sm:$0xf]
      %v1482 = vld [vmem:[%s1476 + $0x14] sm:$0xf]
      %v1483 = vld [vmem:[%s1476 + $0x18] sm:$0xf]
      %v1484 = vld [vmem:[%s1476 + $0x1c] sm:$0xf]
      %v1485 = vld [vmem:[%s1476 + $0x20] sm:$0xf]
      %v1486 = vld [vmem:[%s1476 + $0x24] sm:$0xf]
      %v1487 = vld [vmem:[%s1476 + $0x28] sm:$0xf]
      %v1488 = vld [vmem:[%s1476 + $0x2c] sm:$0xf]
      %v1489 = vld [vmem:[%s1476 + $0x30] sm:$0xf]
      %v1490 = vld [vmem:[%s1476 + $0x34] sm:$0xf]
      %v1491 = vld [vmem:[%s1476 + $0x38] sm:$0xf]
      %v1492 = vld [vmem:[%s1476 + $0x3c] sm:$0xf]
      %v1493 = vunpack.c.l.b16 %v1423
      %v1494 = vunpack.c.l.b16 %v1426
      %v1495 = vunpack.c.l.b16 %v1430
      %v1496 = vunpack.c.l.b16 %v1433
      %v1497 = vunpack.c.l.b16 %v1437
      %v1498 = vunpack.c.l.b16 %v1440
      %v1499 = vunpack.c.l.b16 %v1444
      %v1500 = vunpack.c.l.b16 %v1447
      %v1501 = vunpack.c.l.b16 %v1451
      %v1502 = vunpack.c.l.b16 %v1454
      %v1503 = vunpack.c.l.b16 %v1458
      %v1504 = vunpack.c.l.b16 %v1461
      %v1505 = vunpack.c.l.b16 %v1465
      %v1506 = vunpack.c.l.b16 %v1468
      %v1507 = vunpack.c.l.b16 %v1472
      %v1508 = vunpack.c.l.b16 %v1475
      %v1509 = vpack.c.b16 %v1494, %v1493
      %v1510 = vpack.c.b16 %v1496, %v1495
      %v1511 = vpack.c.b16 %v1498, %v1497
      %v1512 = vpack.c.b16 %v1500, %v1499
      %v1513 = vpack.c.b16 %v1502, %v1501
      %v1514 = vpack.c.b16 %v1504, %v1503
      %v1515 = vpack.c.b16 %v1506, %v1505
      %v1516 = vpack.c.b16 %v1508, %v1507
      %v1541 = vunpack.c.l.b16 %v1477
      %v1542 = vunpack.c.l.b16 %v1478
      %v1543 = vunpack.c.l.b16 %v1479
      %v1544 = vunpack.c.l.b16 %v1480
      %v1545 = vunpack.c.l.b16 %v1481
      %v1546 = vunpack.c.l.b16 %v1482
      %v1547 = vunpack.c.l.b16 %v1483
      %v1548 = vunpack.c.l.b16 %v1484
      %v1549 = vunpack.c.l.b16 %v1485
      %v1550 = vunpack.c.l.b16 %v1486
      %v1551 = vunpack.c.l.b16 %v1487
      %v1552 = vunpack.c.l.b16 %v1488
      %v1553 = vunpack.c.l.b16 %v1489
      %v1554 = vunpack.c.l.b16 %v1490
      %v1555 = vunpack.c.l.b16 %v1491
      %v1556 = vunpack.c.l.b16 %v1492
      %v1557 = vpack.c.b16 %v1542, %v1541
      %v1558 = vpack.c.b16 %v1544, %v1543
      %v1559 = vpack.c.b16 %v1546, %v1545
      %v1560 = vpack.c.b16 %v1548, %v1547
      %v1561 = vpack.c.b16 %v1550, %v1549
      %v1562 = vpack.c.b16 %v1552, %v1551
      %v1563 = vpack.c.b16 %v1554, %v1553
      %v1564 = vpack.c.b16 %v1556, %v1555
      %1573 = vmatprep.subr.bf16.mxu0 0
      %1574 = vmatpush1.bf16.msra.mxu0 %v1564
      %1575 = vmatprep.subr.bf16.mxu0 0
      %1576 = vmatpush1.bf16.msra.mxu0 %v1563
      %1577 = vmatprep.subr.bf16.mxu0 0
      %1578 = vmatpush1.bf16.msra.mxu0 %v1562
      %1579 = vmatprep.subr.bf16.mxu0 0
      %1580 = vmatpush1.bf16.msra.mxu0 %v1561
      %1581 = vmatprep.subr.bf16.mxu0 0
      %1582 = vmatpush1.bf16.msra.mxu0 %v1560
      %1583 = vmatprep.subr.bf16.mxu0 0
      %1584 = vmatpush1.bf16.msra.mxu0 %v1559
      %1585 = vmatprep.subr.bf16.mxu0 0
      %1586 = vmatpush1.bf16.msra.mxu0 %v1558
      %1587 = vmatprep.subr.bf16.mxu0 0
      %1588 = vmatpush1.bf16.msra.mxu0 %v1557
      %1589 = vmatprep.subr.bf16.mxu0 0
      %1590 = vmatpush2.bf16.msra.mxu0 0
      %1591 = vmatprep.subr.bf16.mxu0 0
      %1592 = vmatpush2.bf16.msra.mxu0 0
      %1593 = vmatprep.subr.bf16.mxu0 0
      %1594 = vmatpush2.bf16.msra.mxu0 0
      %1595 = vmatprep.subr.bf16.mxu0 0
      %1596 = vmatpush2.bf16.msra.mxu0 0
      %1597 = vmatprep.subr.bf16.mxu0 0
      %1598 = vmatpush2.bf16.msra.mxu0 0
      %1599 = vmatprep.subr.bf16.mxu0 0
      %1600 = vmatpush2.bf16.msra.mxu0 0
      %1601 = vmatprep.subr.bf16.mxu0 0
      %1602 = vmatpush2.bf16.msra.mxu0 0
      %1603 = vmatprep.subr.bf16.mxu0 0
      %1604 = vmatpush2.bf16.msra.mxu0 0
      %1605 = vmatprep.mubr.bf16.mxu0 0
      %1606 = vmatmul.mubr.bf16.gmra.mxu0 %v1509
      %v1607 = vpop.f32.mrf.mxu0
      %v1608 = vadd.f32 0.0, %v1607
      %v1609 = vpop.f32.mrf.mxu0
      %v1610 = vpop.f32.mrf.mxu0
      %v1611 = vadd.f32 0.0, %v1610
      %v1612 = vpop.f32.mrf.mxu0
      %1613 = vmatprep.mubr.bf16.mxu0 0
      %1614 = vmatmul.mubr.bf16.gmra.mxu0 %v1510
      %v1615 = vpop.f32.mrf.mxu0
      %v1616 = vadd.f32 0.0, %v1615
      %v1617 = vpop.f32.mrf.mxu0
      %v1618 = vpop.f32.mrf.mxu0
      %v1619 = vadd.f32 0.0, %v1618
      %v1620 = vpop.f32.mrf.mxu0
      %1621 = vmatprep.mubr.bf16.mxu0 0
      %1622 = vmatmul.mubr.bf16.gmra.mxu0 %v1511
      %v1623 = vpop.f32.mrf.mxu0
      %v1624 = vadd.f32 0.0, %v1623
      %v1625 = vpop.f32.mrf.mxu0
      %v1626 = vpop.f32.mrf.mxu0
      %v1627 = vadd.f32 0.0, %v1626
      %v1628 = vpop.f32.mrf.mxu0
      %1629 = vmatprep.mubr.bf16.mxu0 0
      %1630 = vmatmul.mubr.bf16.gmra.mxu0 %v1512
      %v1631 = vpop.f32.mrf.mxu0
      %v1632 = vadd.f32 0.0, %v1631
      %v1633 = vpop.f32.mrf.mxu0
      %v1634 = vpop.f32.mrf.mxu0
      %v1635 = vadd.f32 0.0, %v1634
      %v1636 = vpop.f32.mrf.mxu0
      %1637 = vmatprep.mubr.bf16.mxu0 0
      %1638 = vmatmul.mubr.bf16.gmra.mxu0 %v1513
      %v1639 = vpop.f32.mrf.mxu0
      %v1640 = vadd.f32 0.0, %v1639
      %v1641 = vpop.f32.mrf.mxu0
      %v1642 = vpop.f32.mrf.mxu0
      %v1643 = vadd.f32 0.0, %v1642
      %v1644 = vpop.f32.mrf.mxu0
      %1645 = vmatprep.mubr.bf16.mxu0 0
      %1646 = vmatmul.mubr.bf16.gmra.mxu0 %v1514
      %v1647 = vpop.f32.mrf.mxu0
      %v1648 = vadd.f32 0.0, %v1647
      %v1649 = vpop.f32.mrf.mxu0
      %v1650 = vpop.f32.mrf.mxu0
      %v1651 = vadd.f32 0.0, %v1650
      %v1652 = vpop.f32.mrf.mxu0
      %1653 = vmatprep.mubr.bf16.mxu0 0
      %1654 = vmatmul.mubr.bf16.gmra.mxu0 %v1515
      %v1655 = vpop.f32.mrf.mxu0
      %v1656 = vadd.f32 0.0, %v1655
      %v1657 = vpop.f32.mrf.mxu0
      %v1658 = vpop.f32.mrf.mxu0
      %v1659 = vadd.f32 0.0, %v1658
      %v1660 = vpop.f32.mrf.mxu0
      %1661 = vmatprep.mubr.bf16.mxu0 0
      %1662 = vmatmul.mubr.bf16.gmra.mxu0 %v1516
      %v1663 = vpop.f32.mrf.mxu0
      %v1664 = vadd.f32 0.0, %v1663
      %v1665 = vpop.f32.mrf.mxu0
      %v1666 = vpop.f32.mrf.mxu0
      %v1667 = vadd.f32 0.0, %v1666
      %v1668 = vpop.f32.mrf.mxu0
      %1669 = vdwg.mxu0
      %v1670 = vadd.f32 %v1331, %v1608
      %v1671 = vadd.f32 %v1334, %v1611
      %v1672 = vadd.f32 %v1339, %v1616
      %v1673 = vadd.f32 %v1342, %v1619
      %v1674 = vadd.f32 %v1347, %v1624
      %v1675 = vadd.f32 %v1350, %v1627
      %v1676 = vadd.f32 %v1355, %v1632
      %v1677 = vadd.f32 %v1358, %v1635
      %v1678 = vadd.f32 %v1363, %v1640
      %v1679 = vadd.f32 %v1366, %v1643
      %v1680 = vadd.f32 %v1371, %v1648
      %v1681 = vadd.f32 %v1374, %v1651
      %v1682 = vadd.f32 %v1379, %v1656
      %v1683 = vadd.f32 %v1382, %v1659
      %v1684 = vadd.f32 %v1387, %v1664
      %v1685 = vadd.f32 %v1390, %v1667
      %s1686 = scalar_lea.vmem [#allocation2], 12
      %v1687 = vld [vmem:[%s1686] sm:$0xf]
      %v1688 = vld [vmem:[%s1686 + $0x4] sm:$0xf]
      %v1689 = vld [vmem:[%s1686 + $0xc] sm:$0xf]
      %v1690 = vld [vmem:[%s1686 + $0x10] sm:$0xf]
      %v1691 = vld [vmem:[%s1686 + $0x18] sm:$0xf]
      %v1692 = vld [vmem:[%s1686 + $0x1c] sm:$0xf]
      %v1693 = vld [vmem:[%s1686 + $0x24] sm:$0xf]
      %v1694 = vld [vmem:[%s1686 + $0x28] sm:$0xf]
      %v1695 = vld [vmem:[%s1686 + $0x30] sm:$0xf]
      %v1696 = vld [vmem:[%s1686 + $0x34] sm:$0xf]
      %v1697 = vld [vmem:[%s1686 + $0x3c] sm:$0xf]
      %v1698 = vld [vmem:[%s1686 + $0x40] sm:$0xf]
      %v1699 = vld [vmem:[%s1686 + $0x48] sm:$0xf]
      %v1700 = vld [vmem:[%s1686 + $0x4c] sm:$0xf]
      %v1701 = vld [vmem:[%s1686 + $0x54] sm:$0xf]
      %v1702 = vld [vmem:[%s1686 + $0x58] sm:$0xf]
      %s1703 = scalar_lea.vmem %s1, 192
      %v1704 = vld [vmem:[%s1703] sm:$0xf]
      %v1705 = vld [vmem:[%s1703 + $0x4] sm:$0xf]
      %v1706 = vld [vmem:[%s1703 + $0x8] sm:$0xf]
      %v1707 = vld [vmem:[%s1703 + $0xc] sm:$0xf]
      %v1708 = vld [vmem:[%s1703 + $0x10] sm:$0xf]
      %v1709 = vld [vmem:[%s1703 + $0x14] sm:$0xf]
      %v1710 = vld [vmem:[%s1703 + $0x18] sm:$0xf]
      %v1711 = vld [vmem:[%s1703 + $0x1c] sm:$0xf]
      %v1712 = vld [vmem:[%s1703 + $0x20] sm:$0xf]
      %v1713 = vld [vmem:[%s1703 + $0x24] sm:$0xf]
      %v1714 = vld [vmem:[%s1703 + $0x28] sm:$0xf]
      %v1715 = vld [vmem:[%s1703 + $0x2c] sm:$0xf]
      %v1716 = vld [vmem:[%s1703 + $0x30] sm:$0xf]
      %v1717 = vld [vmem:[%s1703 + $0x34] sm:$0xf]
      %v1718 = vld [vmem:[%s1703 + $0x38] sm:$0xf]
      %v1719 = vld [vmem:[%s1703 + $0x3c] sm:$0xf]
      %v1736 = vunpack.c.l.b16 %v1687
      %v1737 = vunpack.c.l.b16 %v1688
      %v1738 = vunpack.c.l.b16 %v1689
      %v1739 = vunpack.c.l.b16 %v1690
      %v1740 = vunpack.c.l.b16 %v1691
      %v1741 = vunpack.c.l.b16 %v1692
      %v1742 = vunpack.c.l.b16 %v1693
      %v1743 = vunpack.c.l.b16 %v1694
      %v1744 = vunpack.c.l.b16 %v1695
      %v1745 = vunpack.c.l.b16 %v1696
      %v1746 = vunpack.c.l.b16 %v1697
      %v1747 = vunpack.c.l.b16 %v1698
      %v1748 = vunpack.c.l.b16 %v1699
      %v1749 = vunpack.c.l.b16 %v1700
      %v1750 = vunpack.c.l.b16 %v1701
      %v1751 = vunpack.c.l.b16 %v1702
      %v1752 = vpack.c.b16 %v1737, %v1736
      %v1753 = vpack.c.b16 %v1739, %v1738
      %v1754 = vpack.c.b16 %v1741, %v1740
      %v1755 = vpack.c.b16 %v1743, %v1742
      %v1756 = vpack.c.b16 %v1745, %v1744
      %v1757 = vpack.c.b16 %v1747, %v1746
      %v1758 = vpack.c.b16 %v1749, %v1748
      %v1759 = vpack.c.b16 %v1751, %v1750
      %v1784 = vunpack.c.l.b16 %v1704
      %v1785 = vunpack.c.l.b16 %v1705
      %v1786 = vunpack.c.l.b16 %v1706
      %v1787 = vunpack.c.l.b16 %v1707
      %v1788 = vunpack.c.l.b16 %v1708
      %v1789 = vunpack.c.l.b16 %v1709
      %v1790 = vunpack.c.l.b16 %v1710
      %v1791 = vunpack.c.l.b16 %v1711
      %v1792 = vunpack.c.l.b16 %v1712
      %v1793 = vunpack.c.l.b16 %v1713
      %v1794 = vunpack.c.l.b16 %v1714
      %v1795 = vunpack.c.l.b16 %v1715
      %v1796 = vunpack.c.l.b16 %v1716
      %v1797 = vunpack.c.l.b16 %v1717
      %v1798 = vunpack.c.l.b16 %v1718
      %v1799 = vunpack.c.l.b16 %v1719
      %v1800 = vpack.c.b16 %v1785, %v1784
      %v1801 = vpack.c.b16 %v1787, %v1786
      %v1802 = vpack.c.b16 %v1789, %v1788
      %v1803 = vpack.c.b16 %v1791, %v1790
      %v1804 = vpack.c.b16 %v1793, %v1792
      %v1805 = vpack.c.b16 %v1795, %v1794
      %v1806 = vpack.c.b16 %v1797, %v1796
      %v1807 = vpack.c.b16 %v1799, %v1798
      %1816 = vmatprep.subr.bf16.mxu0 0
      %1817 = vmatpush1.bf16.msra.mxu0 %v1807
      %1818 = vmatprep.subr.bf16.mxu0 0
      %1819 = vmatpush1.bf16.msra.mxu0 %v1806
      %1820 = vmatprep.subr.bf16.mxu0 0
      %1821 = vmatpush1.bf16.msra.mxu0 %v1805
      %1822 = vmatprep.subr.bf16.mxu0 0
      %1823 = vmatpush1.bf16.msra.mxu0 %v1804
      %1824 = vmatprep.subr.bf16.mxu0 0
      %1825 = vmatpush1.bf16.msra.mxu0 %v1803
      %1826 = vmatprep.subr.bf16.mxu0 0
      %1827 = vmatpush1.bf16.msra.mxu0 %v1802
      %1828 = vmatprep.subr.bf16.mxu0 0
      %1829 = vmatpush1.bf16.msra.mxu0 %v1801
      %1830 = vmatprep.subr.bf16.mxu0 0
      %1831 = vmatpush1.bf16.msra.mxu0 %v1800
      %1832 = vmatprep.subr.bf16.mxu0 0
      %1833 = vmatpush2.bf16.msra.mxu0 0
      %1834 = vmatprep.subr.bf16.mxu0 0
      %1835 = vmatpush2.bf16.msra.mxu0 0
      %1836 = vmatprep.subr.bf16.mxu0 0
      %1837 = vmatpush2.bf16.msra.mxu0 0
      %1838 = vmatprep.subr.bf16.mxu0 0
      %1839 = vmatpush2.bf16.msra.mxu0 0
      %1840 = vmatprep.subr.bf16.mxu0 0
      %1841 = vmatpush2.bf16.msra.mxu0 0
      %1842 = vmatprep.subr.bf16.mxu0 0
      %1843 = vmatpush2.bf16.msra.mxu0 0
      %1844 = vmatprep.subr.bf16.mxu0 0
      %1845 = vmatpush2.bf16.msra.mxu0 0
      %1846 = vmatprep.subr.bf16.mxu0 0
      %1847 = vmatpush2.bf16.msra.mxu0 0
      %1848 = vmatprep.mubr.bf16.mxu0 0
      %1849 = vmatmul.mubr.bf16.gmra.mxu0 %v1752
      %v1850 = vpop.f32.mrf.mxu0
      %v1851 = vadd.f32 0.0, %v1850
      %v1852 = vpop.f32.mrf.mxu0
      %v1853 = vpop.f32.mrf.mxu0
      %v1854 = vadd.f32 0.0, %v1853
      %v1855 = vpop.f32.mrf.mxu0
      %1856 = vmatprep.mubr.bf16.mxu0 0
      %1857 = vmatmul.mubr.bf16.gmra.mxu0 %v1753
      %v1858 = vpop.f32.mrf.mxu0
      %v1859 = vadd.f32 0.0, %v1858
      %v1860 = vpop.f32.mrf.mxu0
      %v1861 = vpop.f32.mrf.mxu0
      %v1862 = vadd.f32 0.0, %v1861
      %v1863 = vpop.f32.mrf.mxu0
      %1864 = vmatprep.mubr.bf16.mxu0 0
      %1865 = vmatmul.mubr.bf16.gmra.mxu0 %v1754
      %v1866 = vpop.f32.mrf.mxu0
      %v1867 = vadd.f32 0.0, %v1866
      %v1868 = vpop.f32.mrf.mxu0
      %v1869 = vpop.f32.mrf.mxu0
      %v1870 = vadd.f32 0.0, %v1869
      %v1871 = vpop.f32.mrf.mxu0
      %1872 = vmatprep.mubr.bf16.mxu0 0
      %1873 = vmatmul.mubr.bf16.gmra.mxu0 %v1755
      %v1874 = vpop.f32.mrf.mxu0
      %v1875 = vadd.f32 0.0, %v1874
      %v1876 = vpop.f32.mrf.mxu0
      %v1877 = vpop.f32.mrf.mxu0
      %v1878 = vadd.f32 0.0, %v1877
      %v1879 = vpop.f32.mrf.mxu0
      %1880 = vmatprep.mubr.bf16.mxu0 0
      %1881 = vmatmul.mubr.bf16.gmra.mxu0 %v1756
      %v1882 = vpop.f32.mrf.mxu0
      %v1883 = vadd.f32 0.0, %v1882
      %v1884 = vpop.f32.mrf.mxu0
      %v1885 = vpop.f32.mrf.mxu0
      %v1886 = vadd.f32 0.0, %v1885
      %v1887 = vpop.f32.mrf.mxu0
      %1888 = vmatprep.mubr.bf16.mxu0 0
      %1889 = vmatmul.mubr.bf16.gmra.mxu0 %v1757
      %v1890 = vpop.f32.mrf.mxu0
      %v1891 = vadd.f32 0.0, %v1890
      %v1892 = vpop.f32.mrf.mxu0
      %v1893 = vpop.f32.mrf.mxu0
      %v1894 = vadd.f32 0.0, %v1893
      %v1895 = vpop.f32.mrf.mxu0
      %1896 = vmatprep.mubr.bf16.mxu0 0
      %1897 = vmatmul.mubr.bf16.gmra.mxu0 %v1758
      %v1898 = vpop.f32.mrf.mxu0
      %v1899 = vadd.f32 0.0, %v1898
      %v1900 = vpop.f32.mrf.mxu0
      %v1901 = vpop.f32.mrf.mxu0
      %v1902 = vadd.f32 0.0, %v1901
      %v1903 = vpop.f32.mrf.mxu0
      %1904 = vmatprep.mubr.bf16.mxu0 0
      %1905 = vmatmul.mubr.bf16.gmra.mxu0 %v1759
      %v1906 = vpop.f32.mrf.mxu0
      %v1907 = vadd.f32 0.0, %v1906
      %v1908 = vpop.f32.mrf.mxu0
      %v1909 = vpop.f32.mrf.mxu0
      %v1910 = vadd.f32 0.0, %v1909
      %v1911 = vpop.f32.mrf.mxu0
      %1912 = vdwg.mxu0
      %v1913 = vadd.f32 %v1670, %v1851
      %v1914 = vadd.f32 %v1671, %v1854
      %v1915 = vadd.f32 %v1672, %v1859
      %v1916 = vadd.f32 %v1673, %v1862
      %v1917 = vadd.f32 %v1674, %v1867
      %v1918 = vadd.f32 %v1675, %v1870
      %v1919 = vadd.f32 %v1676, %v1875
      %v1920 = vadd.f32 %v1677, %v1878
      %v1921 = vadd.f32 %v1678, %v1883
      %v1922 = vadd.f32 %v1679, %v1886
      %v1923 = vadd.f32 %v1680, %v1891
      %v1924 = vadd.f32 %v1681, %v1894
      %v1925 = vadd.f32 %v1682, %v1899
      %v1926 = vadd.f32 %v1683, %v1902
      %v1927 = vadd.f32 %v1684, %v1907
      %v1928 = vadd.f32 %v1685, %v1910
      %v1929 = vld [vmem:[%s1686] sm:$0xf]
      %v1930 = vld [vmem:[%s1686 + $0x4] sm:$0xf]
      %v1931 = vld [vmem:[%s1686 + $0x8] sm:$0x1]
      %v1932 = vld [vmem:[%s1686 + $0xc] sm:$0xf]
      %v1933 = vld [vmem:[%s1686 + $0x10] sm:$0xf]
      %v1934 = vld [vmem:[%s1686 + $0x14] sm:$0x1]
      %v1935 = vld [vmem:[%s1686 + $0x18] sm:$0xf]
      %v1936 = vld [vmem:[%s1686 + $0x1c] sm:$0xf]
      %v1937 = vld [vmem:[%s1686 + $0x20] sm:$0x1]
      %v1938 = vld [vmem:[%s1686 + $0x24] sm:$0xf]
      %v1939 = vld [vmem:[%s1686 + $0x28] sm:$0xf]
      %v1940 = vld [vmem:[%s1686 + $0x2c] sm:$0x1]
      %v1941 = vld [vmem:[%s1686 + $0x30] sm:$0xf]
      %v1942 = vld [vmem:[%s1686 + $0x34] sm:$0xf]
      %v1943 = vld [vmem:[%s1686 + $0x38] sm:$0x1]
      %v1944 = vld [vmem:[%s1686 + $0x3c] sm:$0xf]
      %v1945 = vld [vmem:[%s1686 + $0x40] sm:$0xf]
      %v1946 = vld [vmem:[%s1686 + $0x44] sm:$0x1]
      %v1947 = vld [vmem:[%s1686 + $0x48] sm:$0xf]
      %v1948 = vld [vmem:[%s1686 + $0x4c] sm:$0xf]
      %v1949 = vld [vmem:[%s1686 + $0x50] sm:$0x1]
      %v1950 = vld [vmem:[%s1686 + $0x54] sm:$0xf]
      %v1951 = vld [vmem:[%s1686 + $0x58] sm:$0xf]
      %v1952 = vld [vmem:[%s1686 + $0x5c] sm:$0x1]
      %v1954 = vshrl.u32 %v1929, 16
      %v1956 = vrot.slane %v1954, 4
      %v1957 = vshll.u32 %v1929, 16
      %v1959 = vrot.slane %v1957, 5
      %v1960 = vor.u32 %v1956, %v1959
      %v1961 = vrot.slane %v1960, 4
      %v1963 = vshll.u32 %v1930, 16
      %v1965 = vrot.slane %v1963, 5
      %v1966 = vsel %vm813, %v1961, %v1965
      %v1967 = vshrl.u32 %v1930, 16
      %v1969 = vrot.slane %v1967, 4
      %v1970 = vor.u32 %v1969, %v1965
      %v1971 = vrot.slane %v1970, 4
      %v1973 = vshll.u32 %v1931, 16
      %v1975 = vrot.slane %v1973, 5
      %v1976 = vsel %vm813, %v1971, %v1975
      %v1978 = vshrl.u32 %v1932, 16
      %v1980 = vrot.slane %v1978, 4
      %v1981 = vshll.u32 %v1932, 16
      %v1983 = vrot.slane %v1981, 5
      %v1984 = vor.u32 %v1980, %v1983
      %v1985 = vrot.slane %v1984, 4
      %v1987 = vshll.u32 %v1933, 16
      %v1989 = vrot.slane %v1987, 5
      %v1990 = vsel %vm813, %v1985, %v1989
      %v1991 = vshrl.u32 %v1933, 16
      %v1993 = vrot.slane %v1991, 4
      %v1994 = vor.u32 %v1993, %v1989
      %v1995 = vrot.slane %v1994, 4
      %v1997 = vshll.u32 %v1934, 16
      %v1999 = vrot.slane %v1997, 5
      %v2000 = vsel %vm813, %v1995, %v1999
      %v2002 = vshrl.u32 %v1935, 16
      %v2004 = vrot.slane %v2002, 4
      %v2005 = vshll.u32 %v1935, 16
      %v2007 = vrot.slane %v2005, 5
      %v2008 = vor.u32 %v2004, %v2007
      %v2009 = vrot.slane %v2008, 4
      %v2011 = vshll.u32 %v1936, 16
      %v2013 = vrot.slane %v2011, 5
      %v2014 = vsel %vm813, %v2009, %v2013
      %v2015 = vshrl.u32 %v1936, 16
      %v2017 = vrot.slane %v2015, 4
      %v2018 = vor.u32 %v2017, %v2013
      %v2019 = vrot.slane %v2018, 4
      %v2021 = vshll.u32 %v1937, 16
      %v2023 = vrot.slane %v2021, 5
      %v2024 = vsel %vm813, %v2019, %v2023
      %v2026 = vshrl.u32 %v1938, 16
      %v2028 = vrot.slane %v2026, 4
      %v2029 = vshll.u32 %v1938, 16
      %v2031 = vrot.slane %v2029, 5
      %v2032 = vor.u32 %v2028, %v2031
      %v2033 = vrot.slane %v2032, 4
      %v2035 = vshll.u32 %v1939, 16
      %v2037 = vrot.slane %v2035, 5
      %v2038 = vsel %vm813, %v2033, %v2037
      %v2039 = vshrl.u32 %v1939, 16
      %v2041 = vrot.slane %v2039, 4
      %v2042 = vor.u32 %v2041, %v2037
      %v2043 = vrot.slane %v2042, 4
      %v2045 = vshll.u32 %v1940, 16
      %v2047 = vrot.slane %v2045, 5
      %v2048 = vsel %vm813, %v2043, %v2047
      %v2050 = vshrl.u32 %v1941, 16
      %v2052 = vrot.slane %v2050, 4
      %v2053 = vshll.u32 %v1941, 16
      %v2055 = vrot.slane %v2053, 5
      %v2056 = vor.u32 %v2052, %v2055
      %v2057 = vrot.slane %v2056, 4
      %v2059 = vshll.u32 %v1942, 16
      %v2061 = vrot.slane %v2059, 5
      %v2062 = vsel %vm813, %v2057, %v2061
      %v2063 = vshrl.u32 %v1942, 16
      %v2065 = vrot.slane %v2063, 4
      %v2066 = vor.u32 %v2065, %v2061
      %v2067 = vrot.slane %v2066, 4
      %v2069 = vshll.u32 %v1943, 16
      %v2071 = vrot.slane %v2069, 5
      %v2072 = vsel %vm813, %v2067, %v2071
      %v2074 = vshrl.u32 %v1944, 16
      %v2076 = vrot.slane %v2074, 4
      %v2077 = vshll.u32 %v1944, 16
      %v2079 = vrot.slane %v2077, 5
      %v2080 = vor.u32 %v2076, %v2079
      %v2081 = vrot.slane %v2080, 4
      %v2083 = vshll.u32 %v1945, 16
      %v2085 = vrot.slane %v2083, 5
      %v2086 = vsel %vm813, %v2081, %v2085
      %v2087 = vshrl.u32 %v1945, 16
      %v2089 = vrot.slane %v2087, 4
      %v2090 = vor.u32 %v2089, %v2085
      %v2091 = vrot.slane %v2090, 4
      %v2093 = vshll.u32 %v1946, 16
      %v2095 = vrot.slane %v2093, 5
      %v2096 = vsel %vm813, %v2091, %v2095
      %v2098 = vshrl.u32 %v1947, 16
      %v2100 = vrot.slane %v2098, 4
      %v2101 = vshll.u32 %v1947, 16
      %v2103 = vrot.slane %v2101, 5
      %v2104 = vor.u32 %v2100, %v2103
      %v2105 = vrot.slane %v2104, 4
      %v2107 = vshll.u32 %v1948, 16
      %v2109 = vrot.slane %v2107, 5
      %v2110 = vsel %vm813, %v2105, %v2109
      %v2111 = vshrl.u32 %v1948, 16
      %v2113 = vrot.slane %v2111, 4
      %v2114 = vor.u32 %v2113, %v2109
      %v2115 = vrot.slane %v2114, 4
      %v2117 = vshll.u32 %v1949, 16
      %v2119 = vrot.slane %v2117, 5
      %v2120 = vsel %vm813, %v2115, %v2119
      %v2122 = vshrl.u32 %v1950, 16
      %v2124 = vrot.slane %v2122, 4
      %v2125 = vshll.u32 %v1950, 16
      %v2127 = vrot.slane %v2125, 5
      %v2128 = vor.u32 %v2124, %v2127
      %v2129 = vrot.slane %v2128, 4
      %v2131 = vshll.u32 %v1951, 16
      %v2133 = vrot.slane %v2131, 5
      %v2134 = vsel %vm813, %v2129, %v2133
      %v2135 = vshrl.u32 %v1951, 16
      %v2137 = vrot.slane %v2135, 4
      %v2138 = vor.u32 %v2137, %v2133
      %v2139 = vrot.slane %v2138, 4
      %v2141 = vshll.u32 %v1952, 16
      %v2143 = vrot.slane %v2141, 5
      %v2144 = vsel %vm813, %v2139, %v2143
      %s2145 = scalar_lea.vmem %s1, 256
      %v2146 = vld [vmem:[%s2145] sm:$0xf]
      %v2147 = vld [vmem:[%s2145 + $0x4] sm:$0xf]
      %v2148 = vld [vmem:[%s2145 + $0x8] sm:$0xf]
      %v2149 = vld [vmem:[%s2145 + $0xc] sm:$0xf]
      %v2150 = vld [vmem:[%s2145 + $0x10] sm:$0xf]
      %v2151 = vld [vmem:[%s2145 + $0x14] sm:$0xf]
      %v2152 = vld [vmem:[%s2145 + $0x18] sm:$0xf]
      %v2153 = vld [vmem:[%s2145 + $0x1c] sm:$0xf]
      %v2154 = vld [vmem:[%s2145 + $0x20] sm:$0xf]
      %v2155 = vld [vmem:[%s2145 + $0x24] sm:$0xf]
      %v2156 = vld [vmem:[%s2145 + $0x28] sm:$0xf]
      %v2157 = vld [vmem:[%s2145 + $0x2c] sm:$0xf]
      %v2158 = vld [vmem:[%s2145 + $0x30] sm:$0xf]
      %v2159 = vld [vmem:[%s2145 + $0x34] sm:$0xf]
      %v2160 = vld [vmem:[%s2145 + $0x38] sm:$0xf]
      %v2161 = vld [vmem:[%s2145 + $0x3c] sm:$0xf]
      %v2162 = vunpack.c.l.b16 %v1966
      %v2163 = vunpack.c.l.b16 %v1976
      %v2164 = vunpack.c.l.b16 %v1990
      %v2165 = vunpack.c.l.b16 %v2000
      %v2166 = vunpack.c.l.b16 %v2014
      %v2167 = vunpack.c.l.b16 %v2024
      %v2168 = vunpack.c.l.b16 %v2038
      %v2169 = vunpack.c.l.b16 %v2048
      %v2170 = vunpack.c.l.b16 %v2062
      %v2171 = vunpack.c.l.b16 %v2072
      %v2172 = vunpack.c.l.b16 %v2086
      %v2173 = vunpack.c.l.b16 %v2096
      %v2174 = vunpack.c.l.b16 %v2110
      %v2175 = vunpack.c.l.b16 %v2120
      %v2176 = vunpack.c.l.b16 %v2134
      %v2177 = vunpack.c.l.b16 %v2144
      %v2178 = vpack.c.b16 %v2163, %v2162
      %v2179 = vpack.c.b16 %v2165, %v2164
      %v2180 = vpack.c.b16 %v2167, %v2166
      %v2181 = vpack.c.b16 %v2169, %v2168
      %v2182 = vpack.c.b16 %v2171, %v2170
      %v2183 = vpack.c.b16 %v2173, %v2172
      %v2184 = vpack.c.b16 %v2175, %v2174
      %v2185 = vpack.c.b16 %v2177, %v2176
      %v2210 = vunpack.c.l.b16 %v2146
      %v2211 = vunpack.c.l.b16 %v2147
      %v2212 = vunpack.c.l.b16 %v2148
      %v2213 = vunpack.c.l.b16 %v2149
      %v2214 = vunpack.c.l.b16 %v2150
      %v2215 = vunpack.c.l.b16 %v2151
      %v2216 = vunpack.c.l.b16 %v2152
      %v2217 = vunpack.c.l.b16 %v2153
      %v2218 = vunpack.c.l.b16 %v2154
      %v2219 = vunpack.c.l.b16 %v2155
      %v2220 = vunpack.c.l.b16 %v2156
      %v2221 = vunpack.c.l.b16 %v2157
      %v2222 = vunpack.c.l.b16 %v2158
      %v2223 = vunpack.c.l.b16 %v2159
      %v2224 = vunpack.c.l.b16 %v2160
      %v2225 = vunpack.c.l.b16 %v2161
      %v2226 = vpack.c.b16 %v2211, %v2210
      %v2227 = vpack.c.b16 %v2213, %v2212
      %v2228 = vpack.c.b16 %v2215, %v2214
      %v2229 = vpack.c.b16 %v2217, %v2216
      %v2230 = vpack.c.b16 %v2219, %v2218
      %v2231 = vpack.c.b16 %v2221, %v2220
      %v2232 = vpack.c.b16 %v2223, %v2222
      %v2233 = vpack.c.b16 %v2225, %v2224
      %2242 = vmatprep.subr.bf16.mxu0 0
      %2243 = vmatpush1.bf16.msra.mxu0 %v2233
      %2244 = vmatprep.subr.bf16.mxu0 0
      %2245 = vmatpush1.bf16.msra.mxu0 %v2232
      %2246 = vmatprep.subr.bf16.mxu0 0
      %2247 = vmatpush1.bf16.msra.mxu0 %v2231
      %2248 = vmatprep.subr.bf16.mxu0 0
      %2249 = vmatpush1.bf16.msra.mxu0 %v2230
      %2250 = vmatprep.subr.bf16.mxu0 0
      %2251 = vmatpush1.bf16.msra.mxu0 %v2229
      %2252 = vmatprep.subr.bf16.mxu0 0
      %2253 = vmatpush1.bf16.msra.mxu0 %v2228
      %2254 = vmatprep.subr.bf16.mxu0 0
      %2255 = vmatpush1.bf16.msra.mxu0 %v2227
      %2256 = vmatprep.subr.bf16.mxu0 0
      %2257 = vmatpush1.bf16.msra.mxu0 %v2226
      %2258 = vmatprep.subr.bf16.mxu0 0
      %2259 = vmatpush2.bf16.msra.mxu0 0
      %2260 = vmatprep.subr.bf16.mxu0 0
      %2261 = vmatpush2.bf16.msra.mxu0 0
      %2262 = vmatprep.subr.bf16.mxu0 0
      %2263 = vmatpush2.bf16.msra.mxu0 0
      %2264 = vmatprep.subr.bf16.mxu0 0
      %2265 = vmatpush2.bf16.msra.mxu0 0
      %2266 = vmatprep.subr.bf16.mxu0 0
      %2267 = vmatpush2.bf16.msra.mxu0 0
      %2268 = vmatprep.subr.bf16.mxu0 0
      %2269 = vmatpush2.bf16.msra.mxu0 0
      %2270 = vmatprep.subr.bf16.mxu0 0
      %2271 = vmatpush2.bf16.msra.mxu0 0
      %2272 = vmatprep.subr.bf16.mxu0 0
      %2273 = vmatpush2.bf16.msra.mxu0 0
      %2274 = vmatprep.mubr.bf16.mxu0 0
      %2275 = vmatmul.mubr.bf16.gmra.mxu0 %v2178
      %v2276 = vpop.f32.mrf.mxu0
      %v2277 = vadd.f32 0.0, %v2276
      %v2278 = vpop.f32.mrf.mxu0
      %v2279 = vpop.f32.mrf.mxu0
      %v2280 = vadd.f32 0.0, %v2279
      %v2281 = vpop.f32.mrf.mxu0
      %2282 = vmatprep.mubr.bf16.mxu0 0
      %2283 = vmatmul.mubr.bf16.gmra.mxu0 %v2179
      %v2284 = vpop.f32.mrf.mxu0
      %v2285 = vadd.f32 0.0, %v2284
      %v2286 = vpop.f32.mrf.mxu0
      %v2287 = vpop.f32.mrf.mxu0
      %v2288 = vadd.f32 0.0, %v2287
      %v2289 = vpop.f32.mrf.mxu0
      %2290 = vmatprep.mubr.bf16.mxu0 0
      %2291 = vmatmul.mubr.bf16.gmra.mxu0 %v2180
      %v2292 = vpop.f32.mrf.mxu0
      %v2293 = vadd.f32 0.0, %v2292
      %v2294 = vpop.f32.mrf.mxu0
      %v2295 = vpop.f32.mrf.mxu0
      %v2296 = vadd.f32 0.0, %v2295
      %v2297 = vpop.f32.mrf.mxu0
      %2298 = vmatprep.mubr.bf16.mxu0 0
      %2299 = vmatmul.mubr.bf16.gmra.mxu0 %v2181
      %v2300 = vpop.f32.mrf.mxu0
      %v2301 = vadd.f32 0.0, %v2300
      %v2302 = vpop.f32.mrf.mxu0
      %v2303 = vpop.f32.mrf.mxu0
      %v2304 = vadd.f32 0.0, %v2303
      %v2305 = vpop.f32.mrf.mxu0
      %2306 = vmatprep.mubr.bf16.mxu0 0
      %2307 = vmatmul.mubr.bf16.gmra.mxu0 %v2182
      %v2308 = vpop.f32.mrf.mxu0
      %v2309 = vadd.f32 0.0, %v2308
      %v2310 = vpop.f32.mrf.mxu0
      %v2311 = vpop.f32.mrf.mxu0
      %v2312 = vadd.f32 0.0, %v2311
      %v2313 = vpop.f32.mrf.mxu0
      %2314 = vmatprep.mubr.bf16.mxu0 0
      %2315 = vmatmul.mubr.bf16.gmra.mxu0 %v2183
      %v2316 = vpop.f32.mrf.mxu0
      %v2317 = vadd.f32 0.0, %v2316
      %v2318 = vpop.f32.mrf.mxu0
      %v2319 = vpop.f32.mrf.mxu0
      %v2320 = vadd.f32 0.0, %v2319
      %v2321 = vpop.f32.mrf.mxu0
      %2322 = vmatprep.mubr.bf16.mxu0 0
      %2323 = vmatmul.mubr.bf16.gmra.mxu0 %v2184
      %v2324 = vpop.f32.mrf.mxu0
      %v2325 = vadd.f32 0.0, %v2324
      %v2326 = vpop.f32.mrf.mxu0
      %v2327 = vpop.f32.mrf.mxu0
      %v2328 = vadd.f32 0.0, %v2327
      %v2329 = vpop.f32.mrf.mxu0
      %2330 = vmatprep.mubr.bf16.mxu0 0
      %2331 = vmatmul.mubr.bf16.gmra.mxu0 %v2185
      %v2332 = vpop.f32.mrf.mxu0
      %v2333 = vadd.f32 0.0, %v2332
      %v2334 = vpop.f32.mrf.mxu0
      %v2335 = vpop.f32.mrf.mxu0
      %v2336 = vadd.f32 0.0, %v2335
      %v2337 = vpop.f32.mrf.mxu0
      %2338 = vdwg.mxu0
      %v2339 = vadd.f32 %v1913, %v2277
      %v2340 = vadd.f32 %v1914, %v2280
      %v2341 = vadd.f32 %v1915, %v2285
      %v2342 = vadd.f32 %v1916, %v2288
      %v2343 = vadd.f32 %v1917, %v2293
      %v2344 = vadd.f32 %v1918, %v2296
      %v2345 = vadd.f32 %v1919, %v2301
      %v2346 = vadd.f32 %v1920, %v2304
      %v2347 = vadd.f32 %v1921, %v2309
      %v2348 = vadd.f32 %v1922, %v2312
      %v2349 = vadd.f32 %v1923, %v2317
      %v2350 = vadd.f32 %v1924, %v2320
      %v2351 = vadd.f32 %v1925, %v2325
      %v2352 = vadd.f32 %v1926, %v2328
      %v2353 = vadd.f32 %v1927, %v2333
      %v2354 = vadd.f32 %v1928, %v2336
      %v2355 = vld [vmem:[%s1686] sm:$0xe]
      %v2356 = vld [vmem:[%s1686 + $0xc] sm:$0xe]
      %v2357 = vld [vmem:[%s1686 + $0x18] sm:$0xe]
      %v2358 = vld [vmem:[%s1686 + $0x24] sm:$0xe]
      %v2359 = vld [vmem:[%s1686 + $0x30] sm:$0xe]
      %v2360 = vld [vmem:[%s1686 + $0x3c] sm:$0xe]
      %v2361 = vld [vmem:[%s1686 + $0x48] sm:$0xe]
      %v2362 = vld [vmem:[%s1686 + $0x54] sm:$0xe]
      %v2387 = vrot.slane %v2355, 5
      %v2388 = vrot.slane %v2387, 4
      %v2389 = vrot.slane %v1930, 5
      %v2390 = vsel %vm1419, %v2388, %v2389
      %v2391 = vrot.slane %v2389, 4
      %v2392 = vrot.slane %v1931, 5
      %v2393 = vsel %vm1419, %v2391, %v2392
      %v2394 = vrot.slane %v2356, 5
      %v2395 = vrot.slane %v2394, 4
      %v2396 = vrot.slane %v1933, 5
      %v2397 = vsel %vm1419, %v2395, %v2396
      %v2398 = vrot.slane %v2396, 4
      %v2399 = vrot.slane %v1934, 5
      %v2400 = vsel %vm1419, %v2398, %v2399
      %v2401 = vrot.slane %v2357, 5
      %v2402 = vrot.slane %v2401, 4
      %v2403 = vrot.slane %v1936, 5
      %v2404 = vsel %vm1419, %v2402, %v2403
      %v2405 = vrot.slane %v2403, 4
      %v2406 = vrot.slane %v1937, 5
      %v2407 = vsel %vm1419, %v2405, %v2406
      %v2408 = vrot.slane %v2358, 5
      %v2409 = vrot.slane %v2408, 4
      %v2410 = vrot.slane %v1939, 5
      %v2411 = vsel %vm1419, %v2409, %v2410
      %v2412 = vrot.slane %v2410, 4
      %v2413 = vrot.slane %v1940, 5
      %v2414 = vsel %vm1419, %v2412, %v2413
      %v2415 = vrot.slane %v2359, 5
      %v2416 = vrot.slane %v2415, 4
      %v2417 = vrot.slane %v1942, 5
      %v2418 = vsel %vm1419, %v2416, %v2417
      %v2419 = vrot.slane %v2417, 4
      %v2420 = vrot.slane %v1943, 5
      %v2421 = vsel %vm1419, %v2419, %v2420
      %v2422 = vrot.slane %v2360, 5
      %v2423 = vrot.slane %v2422, 4
      %v2424 = vrot.slane %v1945, 5
      %v2425 = vsel %vm1419, %v2423, %v2424
      %v2426 = vrot.slane %v2424, 4
      %v2427 = vrot.slane %v1946, 5
      %v2428 = vsel %vm1419, %v2426, %v2427
      %v2429 = vrot.slane %v2361, 5
      %v2430 = vrot.slane %v2429, 4
      %v2431 = vrot.slane %v1948, 5
      %v2432 = vsel %vm1419, %v2430, %v2431
      %v2433 = vrot.slane %v2431, 4
      %v2434 = vrot.slane %v1949, 5
      %v2435 = vsel %vm1419, %v2433, %v2434
      %v2436 = vrot.slane %v2362, 5
      %v2437 = vrot.slane %v2436, 4
      %v2438 = vrot.slane %v1951, 5
      %v2439 = vsel %vm1419, %v2437, %v2438
      %v2440 = vrot.slane %v2438, 4
      %v2441 = vrot.slane %v1952, 5
      %v2442 = vsel %vm1419, %v2440, %v2441
      %s2443 = scalar_lea.vmem %s1, 320
      %v2444 = vld [vmem:[%s2443] sm:$0xf]
      %v2445 = vld [vmem:[%s2443 + $0x4] sm:$0xf]
      %v2446 = vld [vmem:[%s2443 + $0x8] sm:$0xf]
      %v2447 = vld [vmem:[%s2443 + $0xc] sm:$0xf]
      %v2448 = vld [vmem:[%s2443 + $0x10] sm:$0xf]
      %v2449 = vld [vmem:[%s2443 + $0x14] sm:$0xf]
      %v2450 = vld [vmem:[%s2443 + $0x18] sm:$0xf]
      %v2451 = vld [vmem:[%s2443 + $0x1c] sm:$0xf]
      %v2452 = vld [vmem:[%s2443 + $0x20] sm:$0xf]
      %v2453 = vld [vmem:[%s2443 + $0x24] sm:$0xf]
      %v2454 = vld [vmem:[%s2443 + $0x28] sm:$0xf]
      %v2455 = vld [vmem:[%s2443 + $0x2c] sm:$0xf]
      %v2456 = vld [vmem:[%s2443 + $0x30] sm:$0xf]
      %v2457 = vld [vmem:[%s2443 + $0x34] sm:$0xf]
      %v2458 = vld [vmem:[%s2443 + $0x38] sm:$0xf]
      %v2459 = vld [vmem:[%s2443 + $0x3c] sm:$0xf]
      %v2460 = vunpack.c.l.b16 %v2390
      %v2461 = vunpack.c.l.b16 %v2393
      %v2462 = vunpack.c.l.b16 %v2397
      %v2463 = vunpack.c.l.b16 %v2400
      %v2464 = vunpack.c.l.b16 %v2404
      %v2465 = vunpack.c.l.b16 %v2407
      %v2466 = vunpack.c.l.b16 %v2411
      %v2467 = vunpack.c.l.b16 %v2414
      %v2468 = vunpack.c.l.b16 %v2418
      %v2469 = vunpack.c.l.b16 %v2421
      %v2470 = vunpack.c.l.b16 %v2425
      %v2471 = vunpack.c.l.b16 %v2428
      %v2472 = vunpack.c.l.b16 %v2432
      %v2473 = vunpack.c.l.b16 %v2435
      %v2474 = vunpack.c.l.b16 %v2439
      %v2475 = vunpack.c.l.b16 %v2442
      %v2476 = vpack.c.b16 %v2461, %v2460
      %v2477 = vpack.c.b16 %v2463, %v2462
      %v2478 = vpack.c.b16 %v2465, %v2464
      %v2479 = vpack.c.b16 %v2467, %v2466
      %v2480 = vpack.c.b16 %v2469, %v2468
      %v2481 = vpack.c.b16 %v2471, %v2470
      %v2482 = vpack.c.b16 %v2473, %v2472
      %v2483 = vpack.c.b16 %v2475, %v2474
      %v2508 = vunpack.c.l.b16 %v2444
      %v2509 = vunpack.c.l.b16 %v2445
      %v2510 = vunpack.c.l.b16 %v2446
      %v2511 = vunpack.c.l.b16 %v2447
      %v2512 = vunpack.c.l.b16 %v2448
      %v2513 = vunpack.c.l.b16 %v2449
      %v2514 = vunpack.c.l.b16 %v2450
      %v2515 = vunpack.c.l.b16 %v2451
      %v2516 = vunpack.c.l.b16 %v2452
      %v2517 = vunpack.c.l.b16 %v2453
      %v2518 = vunpack.c.l.b16 %v2454
      %v2519 = vunpack.c.l.b16 %v2455
      %v2520 = vunpack.c.l.b16 %v2456
      %v2521 = vunpack.c.l.b16 %v2457
      %v2522 = vunpack.c.l.b16 %v2458
      %v2523 = vunpack.c.l.b16 %v2459
      %v2524 = vpack.c.b16 %v2509, %v2508
      %v2525 = vpack.c.b16 %v2511, %v2510
      %v2526 = vpack.c.b16 %v2513, %v2512
      %v2527 = vpack.c.b16 %v2515, %v2514
      %v2528 = vpack.c.b16 %v2517, %v2516
      %v2529 = vpack.c.b16 %v2519, %v2518
      %v2530 = vpack.c.b16 %v2521, %v2520
      %v2531 = vpack.c.b16 %v2523, %v2522
      %2540 = vmatprep.subr.bf16.mxu0 0
      %2541 = vmatpush1.bf16.msra.mxu0 %v2531
      %2542 = vmatprep.subr.bf16.mxu0 0
      %2543 = vmatpush1.bf16.msra.mxu0 %v2530
      %2544 = vmatprep.subr.bf16.mxu0 0
      %2545 = vmatpush1.bf16.msra.mxu0 %v2529
      %2546 = vmatprep.subr.bf16.mxu0 0
      %2547 = vmatpush1.bf16.msra.mxu0 %v2528
      %2548 = vmatprep.subr.bf16.mxu0 0
      %2549 = vmatpush1.bf16.msra.mxu0 %v2527
      %2550 = vmatprep.subr.bf16.mxu0 0
      %2551 = vmatpush1.bf16.msra.mxu0 %v2526
      %2552 = vmatprep.subr.bf16.mxu0 0
      %2553 = vmatpush1.bf16.msra.mxu0 %v2525
      %2554 = vmatprep.subr.bf16.mxu0 0
      %2555 = vmatpush1.bf16.msra.mxu0 %v2524
      %2556 = vmatprep.subr.bf16.mxu0 0
      %2557 = vmatpush2.bf16.msra.mxu0 0
      %2558 = vmatprep.subr.bf16.mxu0 0
      %2559 = vmatpush2.bf16.msra.mxu0 0
      %2560 = vmatprep.subr.bf16.mxu0 0
      %2561 = vmatpush2.bf16.msra.mxu0 0
      %2562 = vmatprep.subr.bf16.mxu0 0
      %2563 = vmatpush2.bf16.msra.mxu0 0
      %2564 = vmatprep.subr.bf16.mxu0 0
      %2565 = vmatpush2.bf16.msra.mxu0 0
      %2566 = vmatprep.subr.bf16.mxu0 0
      %2567 = vmatpush2.bf16.msra.mxu0 0
      %2568 = vmatprep.subr.bf16.mxu0 0
      %2569 = vmatpush2.bf16.msra.mxu0 0
      %2570 = vmatprep.subr.bf16.mxu0 0
      %2571 = vmatpush2.bf16.msra.mxu0 0
      %2572 = vmatprep.mubr.bf16.mxu0 0
      %2573 = vmatmul.mubr.bf16.gmra.mxu0 %v2476
      %v2574 = vpop.f32.mrf.mxu0
      %v2575 = vadd.f32 0.0, %v2574
      %v2576 = vpop.f32.mrf.mxu0
      %v2577 = vpop.f32.mrf.mxu0
      %v2578 = vadd.f32 0.0, %v2577
      %v2579 = vpop.f32.mrf.mxu0
      %2580 = vmatprep.mubr.bf16.mxu0 0
      %2581 = vmatmul.mubr.bf16.gmra.mxu0 %v2477
      %v2582 = vpop.f32.mrf.mxu0
      %v2583 = vadd.f32 0.0, %v2582
      %v2584 = vpop.f32.mrf.mxu0
      %v2585 = vpop.f32.mrf.mxu0
      %v2586 = vadd.f32 0.0, %v2585
      %v2587 = vpop.f32.mrf.mxu0
      %2588 = vmatprep.mubr.bf16.mxu0 0
      %2589 = vmatmul.mubr.bf16.gmra.mxu0 %v2478
      %v2590 = vpop.f32.mrf.mxu0
      %v2591 = vadd.f32 0.0, %v2590
      %v2592 = vpop.f32.mrf.mxu0
      %v2593 = vpop.f32.mrf.mxu0
      %v2594 = vadd.f32 0.0, %v2593
      %v2595 = vpop.f32.mrf.mxu0
      %2596 = vmatprep.mubr.bf16.mxu0 0
      %2597 = vmatmul.mubr.bf16.gmra.mxu0 %v2479
      %v2598 = vpop.f32.mrf.mxu0
      %v2599 = vadd.f32 0.0, %v2598
      %v2600 = vpop.f32.mrf.mxu0
      %v2601 = vpop.f32.mrf.mxu0
      %v2602 = vadd.f32 0.0, %v2601
      %v2603 = vpop.f32.mrf.mxu0
      %2604 = vmatprep.mubr.bf16.mxu0 0
      %2605 = vmatmul.mubr.bf16.gmra.mxu0 %v2480
      %v2606 = vpop.f32.mrf.mxu0
      %v2607 = vadd.f32 0.0, %v2606
      %v2608 = vpop.f32.mrf.mxu0
      %v2609 = vpop.f32.mrf.mxu0
      %v2610 = vadd.f32 0.0, %v2609
      %v2611 = vpop.f32.mrf.mxu0
      %2612 = vmatprep.mubr.bf16.mxu0 0
      %2613 = vmatmul.mubr.bf16.gmra.mxu0 %v2481
      %v2614 = vpop.f32.mrf.mxu0
      %v2615 = vadd.f32 0.0, %v2614
      %v2616 = vpop.f32.mrf.mxu0
      %v2617 = vpop.f32.mrf.mxu0
      %v2618 = vadd.f32 0.0, %v2617
      %v2619 = vpop.f32.mrf.mxu0
      %2620 = vmatprep.mubr.bf16.mxu0 0
      %2621 = vmatmul.mubr.bf16.gmra.mxu0 %v2482
      %v2622 = vpop.f32.mrf.mxu0
      %v2623 = vadd.f32 0.0, %v2622
      %v2624 = vpop.f32.mrf.mxu0
      %v2625 = vpop.f32.mrf.mxu0
      %v2626 = vadd.f32 0.0, %v2625
      %v2627 = vpop.f32.mrf.mxu0
      %2628 = vmatprep.mubr.bf16.mxu0 0
      %2629 = vmatmul.mubr.bf16.gmra.mxu0 %v2483
      %v2630 = vpop.f32.mrf.mxu0
      %v2631 = vadd.f32 0.0, %v2630
      %v2632 = vpop.f32.mrf.mxu0
      %v2633 = vpop.f32.mrf.mxu0
      %v2634 = vadd.f32 0.0, %v2633
      %v2635 = vpop.f32.mrf.mxu0
      %2636 = vdwg.mxu0
      %v2637 = vadd.f32 %v2339, %v2575
      %v2638 = vadd.f32 %v2340, %v2578
      %v2639 = vadd.f32 %v2341, %v2583
      %v2640 = vadd.f32 %v2342, %v2586
      %v2641 = vadd.f32 %v2343, %v2591
      %v2642 = vadd.f32 %v2344, %v2594
      %v2643 = vadd.f32 %v2345, %v2599
      %v2644 = vadd.f32 %v2346, %v2602
      %v2645 = vadd.f32 %v2347, %v2607
      %v2646 = vadd.f32 %v2348, %v2610
      %v2647 = vadd.f32 %v2349, %v2615
      %v2648 = vadd.f32 %v2350, %v2618
      %v2649 = vadd.f32 %v2351, %v2623
      %v2650 = vadd.f32 %v2352, %v2626
      %v2651 = vadd.f32 %v2353, %v2631
      %v2652 = vadd.f32 %v2354, %v2634
      %s2653 = scalar_lea.vmem [#allocation2], 24
      %v2654 = vld [vmem:[%s2653] sm:$0xf]
      %v2655 = vld [vmem:[%s2653 + $0x4] sm:$0xf]
      %v2656 = vld [vmem:[%s2653 + $0xc] sm:$0xf]
      %v2657 = vld [vmem:[%s2653 + $0x10] sm:$0xf]
      %v2658 = vld [vmem:[%s2653 + $0x18] sm:$0xf]
      %v2659 = vld [vmem:[%s2653 + $0x1c] sm:$0xf]
      %v2660 = vld [vmem:[%s2653 + $0x24] sm:$0xf]
      %v2661 = vld [vmem:[%s2653 + $0x28] sm:$0xf]
      %v2662 = vld [vmem:[%s2653 + $0x30] sm:$0xf]
      %v2663 = vld [vmem:[%s2653 + $0x34] sm:$0xf]
      %v2664 = vld [vmem:[%s2653 + $0x3c] sm:$0xf]
      %v2665 = vld [vmem:[%s2653 + $0x40] sm:$0xf]
      %v2666 = vld [vmem:[%s2653 + $0x48] sm:$0xf]
      %v2667 = vld [vmem:[%s2653 + $0x4c] sm:$0xf]
      %v2668 = vld [vmem:[%s2653 + $0x54] sm:$0xf]
      %v2669 = vld [vmem:[%s2653 + $0x58] sm:$0xf]
      %s2670 = scalar_lea.vmem %s1, 384
      %v2671 = vld [vmem:[%s2670] sm:$0xf]
      %v2672 = vld [vmem:[%s2670 + $0x4] sm:$0xf]
      %v2673 = vld [vmem:[%s2670 + $0x8] sm:$0xf]
      %v2674 = vld [vmem:[%s2670 + $0xc] sm:$0xf]
      %v2675 = vld [vmem:[%s2670 + $0x10] sm:$0xf]
      %v2676 = vld [vmem:[%s2670 + $0x14] sm:$0xf]
      %v2677 = vld [vmem:[%s2670 + $0x18] sm:$0xf]
      %v2678 = vld [vmem:[%s2670 + $0x1c] sm:$0xf]
      %v2679 = vld [vmem:[%s2670 + $0x20] sm:$0xf]
      %v2680 = vld [vmem:[%s2670 + $0x24] sm:$0xf]
      %v2681 = vld [vmem:[%s2670 + $0x28] sm:$0xf]
      %v2682 = vld [vmem:[%s2670 + $0x2c] sm:$0xf]
      %v2683 = vld [vmem:[%s2670 + $0x30] sm:$0xf]
      %v2684 = vld [vmem:[%s2670 + $0x34] sm:$0xf]
      %v2685 = vld [vmem:[%s2670 + $0x38] sm:$0xf]
      %v2686 = vld [vmem:[%s2670 + $0x3c] sm:$0xf]
      %v2703 = vunpack.c.l.b16 %v2654
      %v2704 = vunpack.c.l.b16 %v2655
      %v2705 = vunpack.c.l.b16 %v2656
      %v2706 = vunpack.c.l.b16 %v2657
      %v2707 = vunpack.c.l.b16 %v2658
      %v2708 = vunpack.c.l.b16 %v2659
      %v2709 = vunpack.c.l.b16 %v2660
      %v2710 = vunpack.c.l.b16 %v2661
      %v2711 = vunpack.c.l.b16 %v2662
      %v2712 = vunpack.c.l.b16 %v2663
      %v2713 = vunpack.c.l.b16 %v2664
      %v2714 = vunpack.c.l.b16 %v2665
      %v2715 = vunpack.c.l.b16 %v2666
      %v2716 = vunpack.c.l.b16 %v2667
      %v2717 = vunpack.c.l.b16 %v2668
      %v2718 = vunpack.c.l.b16 %v2669
      %v2719 = vpack.c.b16 %v2704, %v2703
      %v2720 = vpack.c.b16 %v2706, %v2705
      %v2721 = vpack.c.b16 %v2708, %v2707
      %v2722 = vpack.c.b16 %v2710, %v2709
      %v2723 = vpack.c.b16 %v2712, %v2711
      %v2724 = vpack.c.b16 %v2714, %v2713
      %v2725 = vpack.c.b16 %v2716, %v2715
      %v2726 = vpack.c.b16 %v2718, %v2717
      %v2751 = vunpack.c.l.b16 %v2671
      %v2752 = vunpack.c.l.b16 %v2672
      %v2753 = vunpack.c.l.b16 %v2673
      %v2754 = vunpack.c.l.b16 %v2674
      %v2755 = vunpack.c.l.b16 %v2675
      %v2756 = vunpack.c.l.b16 %v2676
      %v2757 = vunpack.c.l.b16 %v2677
      %v2758 = vunpack.c.l.b16 %v2678
      %v2759 = vunpack.c.l.b16 %v2679
      %v2760 = vunpack.c.l.b16 %v2680
      %v2761 = vunpack.c.l.b16 %v2681
      %v2762 = vunpack.c.l.b16 %v2682
      %v2763 = vunpack.c.l.b16 %v2683
      %v2764 = vunpack.c.l.b16 %v2684
      %v2765 = vunpack.c.l.b16 %v2685
      %v2766 = vunpack.c.l.b16 %v2686
      %v2767 = vpack.c.b16 %v2752, %v2751
      %v2768 = vpack.c.b16 %v2754, %v2753
      %v2769 = vpack.c.b16 %v2756, %v2755
      %v2770 = vpack.c.b16 %v2758, %v2757
      %v2771 = vpack.c.b16 %v2760, %v2759
      %v2772 = vpack.c.b16 %v2762, %v2761
      %v2773 = vpack.c.b16 %v2764, %v2763
      %v2774 = vpack.c.b16 %v2766, %v2765
      %2783 = vmatprep.subr.bf16.mxu0 0
      %2784 = vmatpush1.bf16.msra.mxu0 %v2774
      %2785 = vmatprep.subr.bf16.mxu0 0
      %2786 = vmatpush1.bf16.msra.mxu0 %v2773
      %2787 = vmatprep.subr.bf16.mxu0 0
      %2788 = vmatpush1.bf16.msra.mxu0 %v2772
      %2789 = vmatprep.subr.bf16.mxu0 0
      %2790 = vmatpush1.bf16.msra.mxu0 %v2771
      %2791 = vmatprep.subr.bf16.mxu0 0
      %2792 = vmatpush1.bf16.msra.mxu0 %v2770
      %2793 = vmatprep.subr.bf16.mxu0 0
      %2794 = vmatpush1.bf16.msra.mxu0 %v2769
      %2795 = vmatprep.subr.bf16.mxu0 0
      %2796 = vmatpush1.bf16.msra.mxu0 %v2768
      %2797 = vmatprep.subr.bf16.mxu0 0
      %2798 = vmatpush1.bf16.msra.mxu0 %v2767
      %2799 = vmatprep.subr.bf16.mxu0 0
      %2800 = vmatpush2.bf16.msra.mxu0 0
      %2801 = vmatprep.subr.bf16.mxu0 0
      %2802 = vmatpush2.bf16.msra.mxu0 0
      %2803 = vmatprep.subr.bf16.mxu0 0
      %2804 = vmatpush2.bf16.msra.mxu0 0
      %2805 = vmatprep.subr.bf16.mxu0 0
      %2806 = vmatpush2.bf16.msra.mxu0 0
      %2807 = vmatprep.subr.bf16.mxu0 0
      %2808 = vmatpush2.bf16.msra.mxu0 0
      %2809 = vmatprep.subr.bf16.mxu0 0
      %2810 = vmatpush2.bf16.msra.mxu0 0
      %2811 = vmatprep.subr.bf16.mxu0 0
      %2812 = vmatpush2.bf16.msra.mxu0 0
      %2813 = vmatprep.subr.bf16.mxu0 0
      %2814 = vmatpush2.bf16.msra.mxu0 0
      %2815 = vmatprep.mubr.bf16.mxu0 0
      %2816 = vmatmul.mubr.bf16.gmra.mxu0 %v2719
      %v2817 = vpop.f32.mrf.mxu0
      %v2818 = vadd.f32 0.0, %v2817
      %v2819 = vpop.f32.mrf.mxu0
      %v2820 = vpop.f32.mrf.mxu0
      %v2821 = vadd.f32 0.0, %v2820
      %v2822 = vpop.f32.mrf.mxu0
      %2823 = vmatprep.mubr.bf16.mxu0 0
      %2824 = vmatmul.mubr.bf16.gmra.mxu0 %v2720
      %v2825 = vpop.f32.mrf.mxu0
      %v2826 = vadd.f32 0.0, %v2825
      %v2827 = vpop.f32.mrf.mxu0
      %v2828 = vpop.f32.mrf.mxu0
      %v2829 = vadd.f32 0.0, %v2828
      %v2830 = vpop.f32.mrf.mxu0
      %2831 = vmatprep.mubr.bf16.mxu0 0
      %2832 = vmatmul.mubr.bf16.gmra.mxu0 %v2721
      %v2833 = vpop.f32.mrf.mxu0
      %v2834 = vadd.f32 0.0, %v2833
      %v2835 = vpop.f32.mrf.mxu0
      %v2836 = vpop.f32.mrf.mxu0
      %v2837 = vadd.f32 0.0, %v2836
      %v2838 = vpop.f32.mrf.mxu0
      %2839 = vmatprep.mubr.bf16.mxu0 0
      %2840 = vmatmul.mubr.bf16.gmra.mxu0 %v2722
      %v2841 = vpop.f32.mrf.mxu0
      %v2842 = vadd.f32 0.0, %v2841
      %v2843 = vpop.f32.mrf.mxu0
      %v2844 = vpop.f32.mrf.mxu0
      %v2845 = vadd.f32 0.0, %v2844
      %v2846 = vpop.f32.mrf.mxu0
      %2847 = vmatprep.mubr.bf16.mxu0 0
      %2848 = vmatmul.mubr.bf16.gmra.mxu0 %v2723
      %v2849 = vpop.f32.mrf.mxu0
      %v2850 = vadd.f32 0.0, %v2849
      %v2851 = vpop.f32.mrf.mxu0
      %v2852 = vpop.f32.mrf.mxu0
      %v2853 = vadd.f32 0.0, %v2852
      %v2854 = vpop.f32.mrf.mxu0
      %2855 = vmatprep.mubr.bf16.mxu0 0
      %2856 = vmatmul.mubr.bf16.gmra.mxu0 %v2724
      %v2857 = vpop.f32.mrf.mxu0
      %v2858 = vadd.f32 0.0, %v2857
      %v2859 = vpop.f32.mrf.mxu0
      %v2860 = vpop.f32.mrf.mxu0
      %v2861 = vadd.f32 0.0, %v2860
      %v2862 = vpop.f32.mrf.mxu0
      %2863 = vmatprep.mubr.bf16.mxu0 0
      %2864 = vmatmul.mubr.bf16.gmra.mxu0 %v2725
      %v2865 = vpop.f32.mrf.mxu0
      %v2866 = vadd.f32 0.0, %v2865
      %v2867 = vpop.f32.mrf.mxu0
      %v2868 = vpop.f32.mrf.mxu0
      %v2869 = vadd.f32 0.0, %v2868
      %v2870 = vpop.f32.mrf.mxu0
      %2871 = vmatprep.mubr.bf16.mxu0 0
      %2872 = vmatmul.mubr.bf16.gmra.mxu0 %v2726
      %v2873 = vpop.f32.mrf.mxu0
      %v2874 = vadd.f32 0.0, %v2873
      %v2875 = vpop.f32.mrf.mxu0
      %v2876 = vpop.f32.mrf.mxu0
      %v2877 = vadd.f32 0.0, %v2876
      %v2878 = vpop.f32.mrf.mxu0
      %2879 = vdwg.mxu0
      %v2880 = vadd.f32 %v2637, %v2818
      %v2881 = vadd.f32 %v2638, %v2821
      %v2882 = vadd.f32 %v2639, %v2826
      %v2883 = vadd.f32 %v2640, %v2829
      %v2884 = vadd.f32 %v2641, %v2834
      %v2885 = vadd.f32 %v2642, %v2837
      %v2886 = vadd.f32 %v2643, %v2842
      %v2887 = vadd.f32 %v2644, %v2845
      %v2888 = vadd.f32 %v2645, %v2850
      %v2889 = vadd.f32 %v2646, %v2853
      %v2890 = vadd.f32 %v2647, %v2858
      %v2891 = vadd.f32 %v2648, %v2861
      %v2892 = vadd.f32 %v2649, %v2866
      %v2893 = vadd.f32 %v2650, %v2869
      %v2894 = vadd.f32 %v2651, %v2874
      %v2895 = vadd.f32 %v2652, %v2877
      %v2896 = vld [vmem:[%s2653] sm:$0xf]
      %v2897 = vld [vmem:[%s2653 + $0x4] sm:$0xf]
      %v2898 = vld [vmem:[%s2653 + $0x8] sm:$0x1]
      %v2899 = vld [vmem:[%s2653 + $0xc] sm:$0xf]
      %v2900 = vld [vmem:[%s2653 + $0x10] sm:$0xf]
      %v2901 = vld [vmem:[%s2653 + $0x14] sm:$0x1]
      %v2902 = vld [vmem:[%s2653 + $0x18] sm:$0xf]
      %v2903 = vld [vmem:[%s2653 + $0x1c] sm:$0xf]
      %v2904 = vld [vmem:[%s2653 + $0x20] sm:$0x1]
      %v2905 = vld [vmem:[%s2653 + $0x24] sm:$0xf]
      %v2906 = vld [vmem:[%s2653 + $0x28] sm:$0xf]
      %v2907 = vld [vmem:[%s2653 + $0x2c] sm:$0x1]
      %v2908 = vld [vmem:[%s2653 + $0x30] sm:$0xf]
      %v2909 = vld [vmem:[%s2653 + $0x34] sm:$0xf]
      %v2910 = vld [vmem:[%s2653 + $0x38] sm:$0x1]
      %v2911 = vld [vmem:[%s2653 + $0x3c] sm:$0xf]
      %v2912 = vld [vmem:[%s2653 + $0x40] sm:$0xf]
      %v2913 = vld [vmem:[%s2653 + $0x44] sm:$0x1]
      %v2914 = vld [vmem:[%s2653 + $0x48] sm:$0xf]
      %v2915 = vld [vmem:[%s2653 + $0x4c] sm:$0xf]
      %v2916 = vld [vmem:[%s2653 + $0x50] sm:$0x1]
      %v2917 = vld [vmem:[%s2653 + $0x54] sm:$0xf]
      %v2918 = vld [vmem:[%s2653 + $0x58] sm:$0xf]
      %v2919 = vld [vmem:[%s2653 + $0x5c] sm:$0x1]
      %v2921 = vshrl.u32 %v2896, 16
      %v2923 = vrot.slane %v2921, 4
      %v2924 = vshll.u32 %v2896, 16
      %v2926 = vrot.slane %v2924, 5
      %v2927 = vor.u32 %v2923, %v2926
      %v2928 = vrot.slane %v2927, 4
      %v2930 = vshll.u32 %v2897, 16
      %v2932 = vrot.slane %v2930, 5
      %v2933 = vsel %vm813, %v2928, %v2932
      %v2934 = vshrl.u32 %v2897, 16
      %v2936 = vrot.slane %v2934, 4
      %v2937 = vor.u32 %v2936, %v2932
      %v2938 = vrot.slane %v2937, 4
      %v2940 = vshll.u32 %v2898, 16
      %v2942 = vrot.slane %v2940, 5
      %v2943 = vsel %vm813, %v2938, %v2942
      %v2945 = vshrl.u32 %v2899, 16
      %v2947 = vrot.slane %v2945, 4
      %v2948 = vshll.u32 %v2899, 16
      %v2950 = vrot.slane %v2948, 5
      %v2951 = vor.u32 %v2947, %v2950
      %v2952 = vrot.slane %v2951, 4
      %v2954 = vshll.u32 %v2900, 16
      %v2956 = vrot.slane %v2954, 5
      %v2957 = vsel %vm813, %v2952, %v2956
      %v2958 = vshrl.u32 %v2900, 16
      %v2960 = vrot.slane %v2958, 4
      %v2961 = vor.u32 %v2960, %v2956
      %v2962 = vrot.slane %v2961, 4
      %v2964 = vshll.u32 %v2901, 16
      %v2966 = vrot.slane %v2964, 5
      %v2967 = vsel %vm813, %v2962, %v2966
      %v2969 = vshrl.u32 %v2902, 16
      %v2971 = vrot.slane %v2969, 4
      %v2972 = vshll.u32 %v2902, 16
      %v2974 = vrot.slane %v2972, 5
      %v2975 = vor.u32 %v2971, %v2974
      %v2976 = vrot.slane %v2975, 4
      %v2978 = vshll.u32 %v2903, 16
      %v2980 = vrot.slane %v2978, 5
      %v2981 = vsel %vm813, %v2976, %v2980
      %v2982 = vshrl.u32 %v2903, 16
      %v2984 = vrot.slane %v2982, 4
      %v2985 = vor.u32 %v2984, %v2980
      %v2986 = vrot.slane %v2985, 4
      %v2988 = vshll.u32 %v2904, 16
      %v2990 = vrot.slane %v2988, 5
      %v2991 = vsel %vm813, %v2986, %v2990
      %v2993 = vshrl.u32 %v2905, 16
      %v2995 = vrot.slane %v2993, 4
      %v2996 = vshll.u32 %v2905, 16
      %v2998 = vrot.slane %v2996, 5
      %v2999 = vor.u32 %v2995, %v2998
      %v3000 = vrot.slane %v2999, 4
      %v3002 = vshll.u32 %v2906, 16
      %v3004 = vrot.slane %v3002, 5
      %v3005 = vsel %vm813, %v3000, %v3004
      %v3006 = vshrl.u32 %v2906, 16
      %v3008 = vrot.slane %v3006, 4
      %v3009 = vor.u32 %v3008, %v3004
      %v3010 = vrot.slane %v3009, 4
      %v3012 = vshll.u32 %v2907, 16
      %v3014 = vrot.slane %v3012, 5
      %v3015 = vsel %vm813, %v3010, %v3014
      %v3017 = vshrl.u32 %v2908, 16
      %v3019 = vrot.slane %v3017, 4
      %v3020 = vshll.u32 %v2908, 16
      %v3022 = vrot.slane %v3020, 5
      %v3023 = vor.u32 %v3019, %v3022
      %v3024 = vrot.slane %v3023, 4
      %v3026 = vshll.u32 %v2909, 16
      %v3028 = vrot.slane %v3026, 5
      %v3029 = vsel %vm813, %v3024, %v3028
      %v3030 = vshrl.u32 %v2909, 16
      %v3032 = vrot.slane %v3030, 4
      %v3033 = vor.u32 %v3032, %v3028
      %v3034 = vrot.slane %v3033, 4
      %v3036 = vshll.u32 %v2910, 16
      %v3038 = vrot.slane %v3036, 5
      %v3039 = vsel %vm813, %v3034, %v3038
      %v3041 = vshrl.u32 %v2911, 16
      %v3043 = vrot.slane %v3041, 4
      %v3044 = vshll.u32 %v2911, 16
      %v3046 = vrot.slane %v3044, 5
      %v3047 = vor.u32 %v3043, %v3046
      %v3048 = vrot.slane %v3047, 4
      %v3050 = vshll.u32 %v2912, 16
      %v3052 = vrot.slane %v3050, 5
      %v3053 = vsel %vm813, %v3048, %v3052
      %v3054 = vshrl.u32 %v2912, 16
      %v3056 = vrot.slane %v3054, 4
      %v3057 = vor.u32 %v3056, %v3052
      %v3058 = vrot.slane %v3057, 4
      %v3060 = vshll.u32 %v2913, 16
      %v3062 = vrot.slane %v3060, 5
      %v3063 = vsel %vm813, %v3058, %v3062
      %v3065 = vshrl.u32 %v2914, 16
      %v3067 = vrot.slane %v3065, 4
      %v3068 = vshll.u32 %v2914, 16
      %v3070 = vrot.slane %v3068, 5
      %v3071 = vor.u32 %v3067, %v3070
      %v3072 = vrot.slane %v3071, 4
      %v3074 = vshll.u32 %v2915, 16
      %v3076 = vrot.slane %v3074, 5
      %v3077 = vsel %vm813, %v3072, %v3076
      %v3078 = vshrl.u32 %v2915, 16
      %v3080 = vrot.slane %v3078, 4
      %v3081 = vor.u32 %v3080, %v3076
      %v3082 = vrot.slane %v3081, 4
      %v3084 = vshll.u32 %v2916, 16
      %v3086 = vrot.slane %v3084, 5
      %v3087 = vsel %vm813, %v3082, %v3086
      %v3089 = vshrl.u32 %v2917, 16
      %v3091 = vrot.slane %v3089, 4
      %v3092 = vshll.u32 %v2917, 16
      %v3094 = vrot.slane %v3092, 5
      %v3095 = vor.u32 %v3091, %v3094
      %v3096 = vrot.slane %v3095, 4
      %v3098 = vshll.u32 %v2918, 16
      %v3100 = vrot.slane %v3098, 5
      %v3101 = vsel %vm813, %v3096, %v3100
      %v3102 = vshrl.u32 %v2918, 16
      %v3104 = vrot.slane %v3102, 4
      %v3105 = vor.u32 %v3104, %v3100
      %v3106 = vrot.slane %v3105, 4
      %v3108 = vshll.u32 %v2919, 16
      %v3110 = vrot.slane %v3108, 5
      %v3111 = vsel %vm813, %v3106, %v3110
      %s3112 = scalar_lea.vmem %s1, 448
      %v3113 = vld [vmem:[%s3112] sm:$0xf]
      %v3114 = vld [vmem:[%s3112 + $0x4] sm:$0xf]
      %v3115 = vld [vmem:[%s3112 + $0x8] sm:$0xf]
      %v3116 = vld [vmem:[%s3112 + $0xc] sm:$0xf]
      %v3117 = vld [vmem:[%s3112 + $0x10] sm:$0xf]
      %v3118 = vld [vmem:[%s3112 + $0x14] sm:$0xf]
      %v3119 = vld [vmem:[%s3112 + $0x18] sm:$0xf]
      %v3120 = vld [vmem:[%s3112 + $0x1c] sm:$0xf]
      %v3121 = vld [vmem:[%s3112 + $0x20] sm:$0xf]
      %v3122 = vld [vmem:[%s3112 + $0x24] sm:$0xf]
      %v3123 = vld [vmem:[%s3112 + $0x28] sm:$0xf]
      %v3124 = vld [vmem:[%s3112 + $0x2c] sm:$0xf]
      %v3125 = vld [vmem:[%s3112 + $0x30] sm:$0xf]
      %v3126 = vld [vmem:[%s3112 + $0x34] sm:$0xf]
      %v3127 = vld [vmem:[%s3112 + $0x38] sm:$0xf]
      %v3128 = vld [vmem:[%s3112 + $0x3c] sm:$0xf]
      %v3129 = vunpack.c.l.b16 %v2933
      %v3130 = vunpack.c.l.b16 %v2943
      %v3131 = vunpack.c.l.b16 %v2957
      %v3132 = vunpack.c.l.b16 %v2967
      %v3133 = vunpack.c.l.b16 %v2981
      %v3134 = vunpack.c.l.b16 %v2991
      %v3135 = vunpack.c.l.b16 %v3005
      %v3136 = vunpack.c.l.b16 %v3015
      %v3137 = vunpack.c.l.b16 %v3029
      %v3138 = vunpack.c.l.b16 %v3039
      %v3139 = vunpack.c.l.b16 %v3053
      %v3140 = vunpack.c.l.b16 %v3063
      %v3141 = vunpack.c.l.b16 %v3077
      %v3142 = vunpack.c.l.b16 %v3087
      %v3143 = vunpack.c.l.b16 %v3101
      %v3144 = vunpack.c.l.b16 %v3111
      %v3145 = vpack.c.b16 %v3130, %v3129
      %v3146 = vpack.c.b16 %v3132, %v3131
      %v3147 = vpack.c.b16 %v3134, %v3133
      %v3148 = vpack.c.b16 %v3136, %v3135
      %v3149 = vpack.c.b16 %v3138, %v3137
      %v3150 = vpack.c.b16 %v3140, %v3139
      %v3151 = vpack.c.b16 %v3142, %v3141
      %v3152 = vpack.c.b16 %v3144, %v3143
      %v3177 = vunpack.c.l.b16 %v3113
      %v3178 = vunpack.c.l.b16 %v3114
      %v3179 = vunpack.c.l.b16 %v3115
      %v3180 = vunpack.c.l.b16 %v3116
      %v3181 = vunpack.c.l.b16 %v3117
      %v3182 = vunpack.c.l.b16 %v3118
      %v3183 = vunpack.c.l.b16 %v3119
      %v3184 = vunpack.c.l.b16 %v3120
      %v3185 = vunpack.c.l.b16 %v3121
      %v3186 = vunpack.c.l.b16 %v3122
      %v3187 = vunpack.c.l.b16 %v3123
      %v3188 = vunpack.c.l.b16 %v3124
      %v3189 = vunpack.c.l.b16 %v3125
      %v3190 = vunpack.c.l.b16 %v3126
      %v3191 = vunpack.c.l.b16 %v3127
      %v3192 = vunpack.c.l.b16 %v3128
      %v3193 = vpack.c.b16 %v3178, %v3177
      %v3194 = vpack.c.b16 %v3180, %v3179
      %v3195 = vpack.c.b16 %v3182, %v3181
      %v3196 = vpack.c.b16 %v3184, %v3183
      %v3197 = vpack.c.b16 %v3186, %v3185
      %v3198 = vpack.c.b16 %v3188, %v3187
      %v3199 = vpack.c.b16 %v3190, %v3189
      %v3200 = vpack.c.b16 %v3192, %v3191
      %3209 = vmatprep.subr.bf16.mxu0 0
      %3210 = vmatpush1.bf16.msra.mxu0 %v3200
      %3211 = vmatprep.subr.bf16.mxu0 0
      %3212 = vmatpush1.bf16.msra.mxu0 %v3199
      %3213 = vmatprep.subr.bf16.mxu0 0
      %3214 = vmatpush1.bf16.msra.mxu0 %v3198
      %3215 = vmatprep.subr.bf16.mxu0 0
      %3216 = vmatpush1.bf16.msra.mxu0 %v3197
      %3217 = vmatprep.subr.bf16.mxu0 0
      %3218 = vmatpush1.bf16.msra.mxu0 %v3196
      %3219 = vmatprep.subr.bf16.mxu0 0
      %3220 = vmatpush1.bf16.msra.mxu0 %v3195
      %3221 = vmatprep.subr.bf16.mxu0 0
      %3222 = vmatpush1.bf16.msra.mxu0 %v3194
      %3223 = vmatprep.subr.bf16.mxu0 0
      %3224 = vmatpush1.bf16.msra.mxu0 %v3193
      %3225 = vmatprep.subr.bf16.mxu0 0
      %3226 = vmatpush2.bf16.msra.mxu0 0
      %3227 = vmatprep.subr.bf16.mxu0 0
      %3228 = vmatpush2.bf16.msra.mxu0 0
      %3229 = vmatprep.subr.bf16.mxu0 0
      %3230 = vmatpush2.bf16.msra.mxu0 0
      %3231 = vmatprep.subr.bf16.mxu0 0
      %3232 = vmatpush2.bf16.msra.mxu0 0
      %3233 = vmatprep.subr.bf16.mxu0 0
      %3234 = vmatpush2.bf16.msra.mxu0 0
      %3235 = vmatprep.subr.bf16.mxu0 0
      %3236 = vmatpush2.bf16.msra.mxu0 0
      %3237 = vmatprep.subr.bf16.mxu0 0
      %3238 = vmatpush2.bf16.msra.mxu0 0
      %3239 = vmatprep.subr.bf16.mxu0 0
      %3240 = vmatpush2.bf16.msra.mxu0 0
      %3241 = vmatprep.mubr.bf16.mxu0 0
      %3242 = vmatmul.mubr.bf16.gmra.mxu0 %v3145
      %v3243 = vpop.f32.mrf.mxu0
      %v3244 = vadd.f32 0.0, %v3243
      %v3245 = vpop.f32.mrf.mxu0
      %v3246 = vpop.f32.mrf.mxu0
      %v3247 = vadd.f32 0.0, %v3246
      %v3248 = vpop.f32.mrf.mxu0
      %3249 = vmatprep.mubr.bf16.mxu0 0
      %3250 = vmatmul.mubr.bf16.gmra.mxu0 %v3146
      %v3251 = vpop.f32.mrf.mxu0
      %v3252 = vadd.f32 0.0, %v3251
      %v3253 = vpop.f32.mrf.mxu0
      %v3254 = vpop.f32.mrf.mxu0
      %v3255 = vadd.f32 0.0, %v3254
      %v3256 = vpop.f32.mrf.mxu0
      %3257 = vmatprep.mubr.bf16.mxu0 0
      %3258 = vmatmul.mubr.bf16.gmra.mxu0 %v3147
      %v3259 = vpop.f32.mrf.mxu0
      %v3260 = vadd.f32 0.0, %v3259
      %v3261 = vpop.f32.mrf.mxu0
      %v3262 = vpop.f32.mrf.mxu0
      %v3263 = vadd.f32 0.0, %v3262
      %v3264 = vpop.f32.mrf.mxu0
      %3265 = vmatprep.mubr.bf16.mxu0 0
      %3266 = vmatmul.mubr.bf16.gmra.mxu0 %v3148
      %v3267 = vpop.f32.mrf.mxu0
      %v3268 = vadd.f32 0.0, %v3267
      %v3269 = vpop.f32.mrf.mxu0
      %v3270 = vpop.f32.mrf.mxu0
      %v3271 = vadd.f32 0.0, %v3270
      %v3272 = vpop.f32.mrf.mxu0
      %3273 = vmatprep.mubr.bf16.mxu0 0
      %3274 = vmatmul.mubr.bf16.gmra.mxu0 %v3149
      %v3275 = vpop.f32.mrf.mxu0
      %v3276 = vadd.f32 0.0, %v3275
      %v3277 = vpop.f32.mrf.mxu0
      %v3278 = vpop.f32.mrf.mxu0
      %v3279 = vadd.f32 0.0, %v3278
      %v3280 = vpop.f32.mrf.mxu0
      %3281 = vmatprep.mubr.bf16.mxu0 0
      %3282 = vmatmul.mubr.bf16.gmra.mxu0 %v3150
      %v3283 = vpop.f32.mrf.mxu0
      %v3284 = vadd.f32 0.0, %v3283
      %v3285 = vpop.f32.mrf.mxu0
      %v3286 = vpop.f32.mrf.mxu0
      %v3287 = vadd.f32 0.0, %v3286
      %v3288 = vpop.f32.mrf.mxu0
      %3289 = vmatprep.mubr.bf16.mxu0 0
      %3290 = vmatmul.mubr.bf16.gmra.mxu0 %v3151
      %v3291 = vpop.f32.mrf.mxu0
      %v3292 = vadd.f32 0.0, %v3291
      %v3293 = vpop.f32.mrf.mxu0
      %v3294 = vpop.f32.mrf.mxu0
      %v3295 = vadd.f32 0.0, %v3294
      %v3296 = vpop.f32.mrf.mxu0
      %3297 = vmatprep.mubr.bf16.mxu0 0
      %3298 = vmatmul.mubr.bf16.gmra.mxu0 %v3152
      %v3299 = vpop.f32.mrf.mxu0
      %v3300 = vadd.f32 0.0, %v3299
      %v3301 = vpop.f32.mrf.mxu0
      %v3302 = vpop.f32.mrf.mxu0
      %v3303 = vadd.f32 0.0, %v3302
      %v3304 = vpop.f32.mrf.mxu0
      %3305 = vdwg.mxu0
      %v3306 = vadd.f32 %v2880, %v3244
      %v3307 = vadd.f32 %v2881, %v3247
      %v3308 = vadd.f32 %v2882, %v3252
      %v3309 = vadd.f32 %v2883, %v3255
      %v3310 = vadd.f32 %v2884, %v3260
      %v3311 = vadd.f32 %v2885, %v3263
      %v3312 = vadd.f32 %v2886, %v3268
      %v3313 = vadd.f32 %v2887, %v3271
      %v3314 = vadd.f32 %v2888, %v3276
      %v3315 = vadd.f32 %v2889, %v3279
      %v3316 = vadd.f32 %v2890, %v3284
      %v3317 = vadd.f32 %v2891, %v3287
      %v3318 = vadd.f32 %v2892, %v3292
      %v3319 = vadd.f32 %v2893, %v3295
      %v3320 = vadd.f32 %v2894, %v3300
      %v3321 = vadd.f32 %v2895, %v3303
      %v3322 = vld [vmem:[%s2653] sm:$0xe]
      %v3323 = vld [vmem:[%s2653 + $0xc] sm:$0xe]
      %v3324 = vld [vmem:[%s2653 + $0x18] sm:$0xe]
      %v3325 = vld [vmem:[%s2653 + $0x24] sm:$0xe]
      %v3326 = vld [vmem:[%s2653 + $0x30] sm:$0xe]
      %v3327 = vld [vmem:[%s2653 + $0x3c] sm:$0xe]
      %v3328 = vld [vmem:[%s2653 + $0x48] sm:$0xe]
      %v3329 = vld [vmem:[%s2653 + $0x54] sm:$0xe]
      %v3354 = vrot.slane %v3322, 5
      %v3355 = vrot.slane %v3354, 4
      %v3356 = vrot.slane %v2897, 5
      %v3357 = vsel %vm1419, %v3355, %v3356
      %v3358 = vrot.slane %v3356, 4
      %v3359 = vrot.slane %v2898, 5
      %v3360 = vsel %vm1419, %v3358, %v3359
      %v3361 = vrot.slane %v3323, 5
      %v3362 = vrot.slane %v3361, 4
      %v3363 = vrot.slane %v2900, 5
      %v3364 = vsel %vm1419, %v3362, %v3363
      %v3365 = vrot.slane %v3363, 4
      %v3366 = vrot.slane %v2901, 5
      %v3367 = vsel %vm1419, %v3365, %v3366
      %v3368 = vrot.slane %v3324, 5
      %v3369 = vrot.slane %v3368, 4
      %v3370 = vrot.slane %v2903, 5
      %v3371 = vsel %vm1419, %v3369, %v3370
      %v3372 = vrot.slane %v3370, 4
      %v3373 = vrot.slane %v2904, 5
      %v3374 = vsel %vm1419, %v3372, %v3373
      %v3375 = vrot.slane %v3325, 5
      %v3376 = vrot.slane %v3375, 4
      %v3377 = vrot.slane %v2906, 5
      %v3378 = vsel %vm1419, %v3376, %v3377
      %v3379 = vrot.slane %v3377, 4
      %v3380 = vrot.slane %v2907, 5
      %v3381 = vsel %vm1419, %v3379, %v3380
      %v3382 = vrot.slane %v3326, 5
      %v3383 = vrot.slane %v3382, 4
      %v3384 = vrot.slane %v2909, 5
      %v3385 = vsel %vm1419, %v3383, %v3384
      %v3386 = vrot.slane %v3384, 4
      %v3387 = vrot.slane %v2910, 5
      %v3388 = vsel %vm1419, %v3386, %v3387
      %v3389 = vrot.slane %v3327, 5
      %v3390 = vrot.slane %v3389, 4
      %v3391 = vrot.slane %v2912, 5
      %v3392 = vsel %vm1419, %v3390, %v3391
      %v3393 = vrot.slane %v3391, 4
      %v3394 = vrot.slane %v2913, 5
      %v3395 = vsel %vm1419, %v3393, %v3394
      %v3396 = vrot.slane %v3328, 5
      %v3397 = vrot.slane %v3396, 4
      %v3398 = vrot.slane %v2915, 5
      %v3399 = vsel %vm1419, %v3397, %v3398
      %v3400 = vrot.slane %v3398, 4
      %v3401 = vrot.slane %v2916, 5
      %v3402 = vsel %vm1419, %v3400, %v3401
      %v3403 = vrot.slane %v3329, 5
      %v3404 = vrot.slane %v3403, 4
      %v3405 = vrot.slane %v2918, 5
      %v3406 = vsel %vm1419, %v3404, %v3405
      %v3407 = vrot.slane %v3405, 4
      %v3408 = vrot.slane %v2919, 5
      %v3409 = vsel %vm1419, %v3407, %v3408
      %s3410 = scalar_lea.vmem %s1, 512
      %v3411 = vld [vmem:[%s3410] sm:$0xf]
      %v3412 = vld [vmem:[%s3410 + $0x4] sm:$0xf]
      %v3413 = vld [vmem:[%s3410 + $0x8] sm:$0xf]
      %v3414 = vld [vmem:[%s3410 + $0xc] sm:$0xf]
      %v3415 = vld [vmem:[%s3410 + $0x10] sm:$0xf]
      %v3416 = vld [vmem:[%s3410 + $0x14] sm:$0xf]
      %v3417 = vld [vmem:[%s3410 + $0x18] sm:$0xf]
      %v3418 = vld [vmem:[%s3410 + $0x1c] sm:$0xf]
      %v3419 = vld [vmem:[%s3410 + $0x20] sm:$0xf]
      %v3420 = vld [vmem:[%s3410 + $0x24] sm:$0xf]
      %v3421 = vld [vmem:[%s3410 + $0x28] sm:$0xf]
      %v3422 = vld [vmem:[%s3410 + $0x2c] sm:$0xf]
      %v3423 = vld [vmem:[%s3410 + $0x30] sm:$0xf]
      %v3424 = vld [vmem:[%s3410 + $0x34] sm:$0xf]
      %v3425 = vld [vmem:[%s3410 + $0x38] sm:$0xf]
      %v3426 = vld [vmem:[%s3410 + $0x3c] sm:$0xf]
      %v3427 = vunpack.c.l.b16 %v3357
      %v3428 = vunpack.c.l.b16 %v3360
      %v3429 = vunpack.c.l.b16 %v3364
      %v3430 = vunpack.c.l.b16 %v3367
      %v3431 = vunpack.c.l.b16 %v3371
      %v3432 = vunpack.c.l.b16 %v3374
      %v3433 = vunpack.c.l.b16 %v3378
      %v3434 = vunpack.c.l.b16 %v3381
      %v3435 = vunpack.c.l.b16 %v3385
      %v3436 = vunpack.c.l.b16 %v3388
      %v3437 = vunpack.c.l.b16 %v3392
      %v3438 = vunpack.c.l.b16 %v3395
      %v3439 = vunpack.c.l.b16 %v3399
      %v3440 = vunpack.c.l.b16 %v3402
      %v3441 = vunpack.c.l.b16 %v3406
      %v3442 = vunpack.c.l.b16 %v3409
      %v3443 = vpack.c.b16 %v3428, %v3427
      %v3444 = vpack.c.b16 %v3430, %v3429
      %v3445 = vpack.c.b16 %v3432, %v3431
      %v3446 = vpack.c.b16 %v3434, %v3433
      %v3447 = vpack.c.b16 %v3436, %v3435
      %v3448 = vpack.c.b16 %v3438, %v3437
      %v3449 = vpack.c.b16 %v3440, %v3439
      %v3450 = vpack.c.b16 %v3442, %v3441
      %v3475 = vunpack.c.l.b16 %v3411
      %v3476 = vunpack.c.l.b16 %v3412
      %v3477 = vunpack.c.l.b16 %v3413
      %v3478 = vunpack.c.l.b16 %v3414
      %v3479 = vunpack.c.l.b16 %v3415
      %v3480 = vunpack.c.l.b16 %v3416
      %v3481 = vunpack.c.l.b16 %v3417
      %v3482 = vunpack.c.l.b16 %v3418
      %v3483 = vunpack.c.l.b16 %v3419
      %v3484 = vunpack.c.l.b16 %v3420
      %v3485 = vunpack.c.l.b16 %v3421
      %v3486 = vunpack.c.l.b16 %v3422
      %v3487 = vunpack.c.l.b16 %v3423
      %v3488 = vunpack.c.l.b16 %v3424
      %v3489 = vunpack.c.l.b16 %v3425
      %v3490 = vunpack.c.l.b16 %v3426
      %v3491 = vpack.c.b16 %v3476, %v3475
      %v3492 = vpack.c.b16 %v3478, %v3477
      %v3493 = vpack.c.b16 %v3480, %v3479
      %v3494 = vpack.c.b16 %v3482, %v3481
      %v3495 = vpack.c.b16 %v3484, %v3483
      %v3496 = vpack.c.b16 %v3486, %v3485
      %v3497 = vpack.c.b16 %v3488, %v3487
      %v3498 = vpack.c.b16 %v3490, %v3489
      %3507 = vmatprep.subr.bf16.mxu0 0
      %3508 = vmatpush1.bf16.msra.mxu0 %v3498
      %3509 = vmatprep.subr.bf16.mxu0 0
      %3510 = vmatpush1.bf16.msra.mxu0 %v3497
      %3511 = vmatprep.subr.bf16.mxu0 0
      %3512 = vmatpush1.bf16.msra.mxu0 %v3496
      %3513 = vmatprep.subr.bf16.mxu0 0
      %3514 = vmatpush1.bf16.msra.mxu0 %v3495
      %3515 = vmatprep.subr.bf16.mxu0 0
      %3516 = vmatpush1.bf16.msra.mxu0 %v3494
      %3517 = vmatprep.subr.bf16.mxu0 0
      %3518 = vmatpush1.bf16.msra.mxu0 %v3493
      %3519 = vmatprep.subr.bf16.mxu0 0
      %3520 = vmatpush1.bf16.msra.mxu0 %v3492
      %3521 = vmatprep.subr.bf16.mxu0 0
      %3522 = vmatpush1.bf16.msra.mxu0 %v3491
      %3523 = vmatprep.subr.bf16.mxu0 0
      %3524 = vmatpush2.bf16.msra.mxu0 0
      %3525 = vmatprep.subr.bf16.mxu0 0
      %3526 = vmatpush2.bf16.msra.mxu0 0
      %3527 = vmatprep.subr.bf16.mxu0 0
      %3528 = vmatpush2.bf16.msra.mxu0 0
      %3529 = vmatprep.subr.bf16.mxu0 0
      %3530 = vmatpush2.bf16.msra.mxu0 0
      %3531 = vmatprep.subr.bf16.mxu0 0
      %3532 = vmatpush2.bf16.msra.mxu0 0
      %3533 = vmatprep.subr.bf16.mxu0 0
      %3534 = vmatpush2.bf16.msra.mxu0 0
      %3535 = vmatprep.subr.bf16.mxu0 0
      %3536 = vmatpush2.bf16.msra.mxu0 0
      %3537 = vmatprep.subr.bf16.mxu0 0
      %3538 = vmatpush2.bf16.msra.mxu0 0
      %3539 = vmatprep.mubr.bf16.mxu0 0
      %3540 = vmatmul.mubr.bf16.gmra.mxu0 %v3443
      %v3541 = vpop.f32.mrf.mxu0
      %v3542 = vadd.f32 0.0, %v3541
      %v3543 = vpop.f32.mrf.mxu0
      %v3544 = vpop.f32.mrf.mxu0
      %v3545 = vadd.f32 0.0, %v3544
      %v3546 = vpop.f32.mrf.mxu0
      %3547 = vmatprep.mubr.bf16.mxu0 0
      %3548 = vmatmul.mubr.bf16.gmra.mxu0 %v3444
      %v3549 = vpop.f32.mrf.mxu0
      %v3550 = vadd.f32 0.0, %v3549
      %v3551 = vpop.f32.mrf.mxu0
      %v3552 = vpop.f32.mrf.mxu0
      %v3553 = vadd.f32 0.0, %v3552
      %v3554 = vpop.f32.mrf.mxu0
      %3555 = vmatprep.mubr.bf16.mxu0 0
      %3556 = vmatmul.mubr.bf16.gmra.mxu0 %v3445
      %v3557 = vpop.f32.mrf.mxu0
      %v3558 = vadd.f32 0.0, %v3557
      %v3559 = vpop.f32.mrf.mxu0
      %v3560 = vpop.f32.mrf.mxu0
      %v3561 = vadd.f32 0.0, %v3560
      %v3562 = vpop.f32.mrf.mxu0
      %3563 = vmatprep.mubr.bf16.mxu0 0
      %3564 = vmatmul.mubr.bf16.gmra.mxu0 %v3446
      %v3565 = vpop.f32.mrf.mxu0
      %v3566 = vadd.f32 0.0, %v3565
      %v3567 = vpop.f32.mrf.mxu0
      %v3568 = vpop.f32.mrf.mxu0
      %v3569 = vadd.f32 0.0, %v3568
      %v3570 = vpop.f32.mrf.mxu0
      %3571 = vmatprep.mubr.bf16.mxu0 0
      %3572 = vmatmul.mubr.bf16.gmra.mxu0 %v3447
      %v3573 = vpop.f32.mrf.mxu0
      %v3574 = vadd.f32 0.0, %v3573
      %v3575 = vpop.f32.mrf.mxu0
      %v3576 = vpop.f32.mrf.mxu0
      %v3577 = vadd.f32 0.0, %v3576
      %v3578 = vpop.f32.mrf.mxu0
      %3579 = vmatprep.mubr.bf16.mxu0 0
      %3580 = vmatmul.mubr.bf16.gmra.mxu0 %v3448
      %v3581 = vpop.f32.mrf.mxu0
      %v3582 = vadd.f32 0.0, %v3581
      %v3583 = vpop.f32.mrf.mxu0
      %v3584 = vpop.f32.mrf.mxu0
      %v3585 = vadd.f32 0.0, %v3584
      %v3586 = vpop.f32.mrf.mxu0
      %3587 = vmatprep.mubr.bf16.mxu0 0
      %3588 = vmatmul.mubr.bf16.gmra.mxu0 %v3449
      %v3589 = vpop.f32.mrf.mxu0
      %v3590 = vadd.f32 0.0, %v3589
      %v3591 = vpop.f32.mrf.mxu0
      %v3592 = vpop.f32.mrf.mxu0
      %v3593 = vadd.f32 0.0, %v3592
      %v3594 = vpop.f32.mrf.mxu0
      %3595 = vmatprep.mubr.bf16.mxu0 0
      %3596 = vmatmul.mubr.bf16.gmra.mxu0 %v3450
      %v3597 = vpop.f32.mrf.mxu0
      %v3598 = vadd.f32 0.0, %v3597
      %v3599 = vpop.f32.mrf.mxu0
      %v3600 = vpop.f32.mrf.mxu0
      %v3601 = vadd.f32 0.0, %v3600
      %v3602 = vpop.f32.mrf.mxu0
      %3603 = vdwg.mxu0
      %v3604 = vadd.f32 %v3306, %v3542
      %v3605 = vadd.f32 %v3307, %v3545
      %v3606 = vadd.f32 %v3308, %v3550
      %v3607 = vadd.f32 %v3309, %v3553
      %v3608 = vadd.f32 %v3310, %v3558
      %v3609 = vadd.f32 %v3311, %v3561
      %v3610 = vadd.f32 %v3312, %v3566
      %v3611 = vadd.f32 %v3313, %v3569
      %v3612 = vadd.f32 %v3314, %v3574
      %v3613 = vadd.f32 %v3315, %v3577
      %v3614 = vadd.f32 %v3316, %v3582
      %v3615 = vadd.f32 %v3317, %v3585
      %v3616 = vadd.f32 %v3318, %v3590
      %v3617 = vadd.f32 %v3319, %v3593
      %v3618 = vadd.f32 %v3320, %v3598
      %v3619 = vadd.f32 %v3321, %v3601
      %v3620 = vld [vmem:[%s2] sm:$0x1]
      %v3622 = vlaneseq
      %v3623 = vshrl.u32 %v3622, 7
      %v3624 = vsub.s32 0, %v3623
      %v3625 = vrot.slane %v3620, %v3624
      %v3627 = vadd.f32 %v3604, %v3625
      %v3628 = vadd.f32 %v3605, %v3625
      %v3629 = vadd.f32 %v3606, %v3625
      %v3630 = vadd.f32 %v3607, %v3625
      %v3631 = vadd.f32 %v3608, %v3625
      %v3632 = vadd.f32 %v3609, %v3625
      %v3633 = vadd.f32 %v3610, %v3625
      %v3634 = vadd.f32 %v3611, %v3625
      %v3635 = vadd.f32 %v3612, %v3625
      %v3636 = vadd.f32 %v3613, %v3625
      %v3637 = vadd.f32 %v3614, %v3625
      %v3638 = vadd.f32 %v3615, %v3625
      %v3639 = vadd.f32 %v3616, %v3625
      %v3640 = vadd.f32 %v3617, %v3625
      %v3641 = vadd.f32 %v3618, %v3625
      %v3642 = vadd.f32 %v3619, %v3625
      %3643 = vst [vmem:[%s258] sm:$0xff] %v3627
      %3644 = vst [vmem:[%s258 + $0x8] sm:$0xff] %v3628
      %3645 = vst [vmem:[%s258 + $0x10] sm:$0xff] %v3629
      %3646 = vst [vmem:[%s258 + $0x18] sm:$0xff] %v3630
      %3647 = vst [vmem:[%s258 + $0x20] sm:$0xff] %v3631
      %3648 = vst [vmem:[%s258 + $0x28] sm:$0xff] %v3632
      %3649 = vst [vmem:[%s258 + $0x30] sm:$0xff] %v3633
      %3650 = vst [vmem:[%s258 + $0x38] sm:$0xff] %v3634
      %3651 = vst [vmem:[%s258 + $0x40] sm:$0xff] %v3635
      %3652 = vst [vmem:[%s258 + $0x48] sm:$0xff] %v3636
      %3653 = vst [vmem:[%s258 + $0x50] sm:$0xff] %v3637
      %3654 = vst [vmem:[%s258 + $0x58] sm:$0xff] %v3638
      %3655 = vst [vmem:[%s258 + $0x60] sm:$0xff] %v3639
      %3656 = vst [vmem:[%s258 + $0x68] sm:$0xff] %v3640
      %3657 = vst [vmem:[%s258 + $0x70] sm:$0xff] %v3641
      %3658 = vst [vmem:[%s258 + $0x78] sm:$0xff] %v3642
      %v3659 = vadd.f32 %v3627, %v3628
      %v3660 = vadd.f32 %v3659, %v3629
      %v3661 = vadd.f32 %v3660, %v3630
      %v3662 = vadd.f32 %v3661, %v3631
      %v3663 = vadd.f32 %v3662, %v3632
      %v3664 = vadd.f32 %v3663, %v3633
      %v3665 = vadd.f32 %v3664, %v3634
      %v3666 = vadd.f32 %v3665, %v3635
      %v3667 = vadd.f32 %v3666, %v3636
      %v3668 = vadd.f32 %v3667, %v3637
      %v3669 = vadd.f32 %v3668, %v3638
      %v3670 = vadd.f32 %v3669, %v3639
      %v3671 = vadd.f32 %v3670, %v3640
      %v3672 = vadd.f32 %v3671, %v3641
      %v3673 = vadd.f32 %v3672, %v3642
      %v3674 = vrot.slane %v3673, 4
      %v3675 = vadd.f32 %v3673, %v3674
      %v3676 = vrot.slane %v3675, 2
      %v3677 = vadd.f32 %v3675, %v3676
      %v3678 = vrot.slane %v3677, 1
      %v3679 = vadd.f32 %v3677, %v3678
      %3680 = vst [vmem:[%s262] sm:$0x1] %v3679
      %v3681 = vmul.f32 %v3627, %v3627
      %v3682 = vmul.f32 %v3628, %v3628
      %v3683 = vmul.f32 %v3629, %v3629
      %v3684 = vmul.f32 %v3630, %v3630
      %v3685 = vmul.f32 %v3631, %v3631
      %v3686 = vmul.f32 %v3632, %v3632
      %v3687 = vmul.f32 %v3633, %v3633
      %v3688 = vmul.f32 %v3634, %v3634
      %v3689 = vmul.f32 %v3635, %v3635
      %v3690 = vmul.f32 %v3636, %v3636
      %v3691 = vmul.f32 %v3637, %v3637
      %v3692 = vmul.f32 %v3638, %v3638
      %v3693 = vmul.f32 %v3639, %v3639
      %v3694 = vmul.f32 %v3640, %v3640
      %v3695 = vmul.f32 %v3641, %v3641
      %v3696 = vmul.f32 %v3642, %v3642
      %v3697 = vadd.f32 %v3681, %v3682
      %v3698 = vadd.f32 %v3697, %v3683
      %v3699 = vadd.f32 %v3698, %v3684
      %v3700 = vadd.f32 %v3699, %v3685
      %v3701 = vadd.f32 %v3700, %v3686
      %v3702 = vadd.f32 %v3701, %v3687
      %v3703 = vadd.f32 %v3702, %v3688
      %v3704 = vadd.f32 %v3703, %v3689
      %v3705 = vadd.f32 %v3704, %v3690
      %v3706 = vadd.f32 %v3705, %v3691
      %v3707 = vadd.f32 %v3706, %v3692
      %v3708 = vadd.f32 %v3707, %v3693
      %v3709 = vadd.f32 %v3708, %v3694
      %v3710 = vadd.f32 %v3709, %v3695
      %v3711 = vadd.f32 %v3710, %v3696
      %v3712 = vrot.slane %v3711, 4
      %v3713 = vadd.f32 %v3711, %v3712
      %v3714 = vrot.slane %v3713, 2
      %v3715 = vadd.f32 %v3713, %v3714
      %v3716 = vrot.slane %v3715, 1
      %v3717 = vadd.f32 %v3715, %v3716
      %3718 = vst [vmem:[%s262 + $0x1] sm:$0x1] %v3717
      %p3719 = scmp.lt.s32.totalorder %s18, 3
      %s3720 = scalar_select %p3719, %s18, 3
      %s3721 = smul.addr %s3720, 16
      %s3722 = smul.addr %s3721, 8
      %s3723 = scalar_lea.vmem %s5, %s3722
      %p3724 = scmp.lt.s32.totalorder %s18, 3
      %s3725 = scalar_select %p3724, %s18, 3
      %s3726 = smul.addr %s3725, 2
      %s3727 = scalar_lea.vmem %s6, %s3726
      // Predicated region
      $region41: #{vgg_block_pallas.4} parent=39 // pred_check
        %p3728 = pneg %p146
      $region42: #{vgg_block_pallas.4} parent=39 // pred_check_branch
        %3730 = sbr.rel (%p3728) target = $region44
      $region43: #{vgg_block_pallas.4} parent=39 // pred_region
        _
      $region44: #{vgg_block_pallas.4} parent=39 // pred_fallthru
        _
      // Predicated region
      $region45: #{vgg_block_pallas.4} parent=39 // pred_check
        %p3731 = pneg %p172
      $region46: #{vgg_block_pallas.4} parent=39 // pred_check_branch
        %3733 = sbr.rel (%p3731) target = $region48
      $region47: #{vgg_block_pallas.4} parent=39 // pred_region
        _
      $region48: #{vgg_block_pallas.4} parent=39 // pred_fallthru
        _
    $region40: #{vgg_block_pallas.4} parent=5 // pred_fallthru
      _
    %p3734 = scmp.le.s32.totalorder 2, %s13
    // Predicated region
    $region49: #{vgg_block_pallas.4} parent=5 // pred_check
      %p3735 = pneg %p3734
    $region50: #{vgg_block_pallas.4} parent=5 // pred_check_branch
      %3737 = sbr.rel (%p3735) target = $region52
    $region51: #{vgg_block_pallas.4} parent=5 // pred_region
      %s3738 = ssub.s32 %s13, 2
      // Predicated region
      $region53: #{vgg_block_pallas.4} parent=51 // pred_check
        %p3739 = pneg %p152
      $region54: #{vgg_block_pallas.4} parent=51 // pred_check_branch
        %3741 = sbr.rel (%p3739) target = $region56
      $region55: #{vgg_block_pallas.4} parent=51 // pred_region
        %p3742 = scmp.lt.s32.totalorder %s19, 3
        %s3743 = scalar_select %p3742, %s19, 3
        %s3744 = smul.addr %s3743, 16
        %s3745 = smul.addr %s3744, 8
        %s3746 = scalar_lea.vmem %s5, %s3745
      $region56: #{vgg_block_pallas.4} parent=51 // pred_fallthru
        _
      // Predicated region
      $region57: #{vgg_block_pallas.4} parent=51 // pred_check
        %p3747 = pneg %p178
      $region58: #{vgg_block_pallas.4} parent=51 // pred_check_branch
        %3749 = sbr.rel (%p3747) target = $region60
      $region59: #{vgg_block_pallas.4} parent=51 // pred_region
        %p3750 = scmp.lt.s32.totalorder %s19, 3
        %s3751 = scalar_select %p3750, %s19, 3
        %s3752 = smul.addr %s3751, 2
        %s3753 = scalar_lea.vmem %s6, %s3752
      $region60: #{vgg_block_pallas.4} parent=51 // pred_fallthru
        _
    $region52: #{vgg_block_pallas.4} parent=5 // pred_fallthru
      _
  $region6: #{vgg_block_pallas.4} parent=0 // loop_footer
    %s17 = sadd.s32 1, %s13
  $region7: #{vgg_block_pallas.4} parent=0 // loop_footer_branch
    %12 = sbr.rel target = $region3
  $region8: #{vgg_block_pallas.4} parent=0 // loop_exit
    _

</llo_original>
